<compile_context>
chip_gen: v6e
topology: v6e:2x2x1
jax: 0.10.0
libtpu: 0.0.40
codegen_flags: <defaults>
</compile_context>

<pallas_src>
import functools

import jax
import jax.numpy as jnp
from jax.experimental import pallas as pl
from jax.experimental.pallas import tpu as pltpu

IN_EPS = 1e-5  # nn.InstanceNorm2d default eps


# ----------------------------------------------------------------------------
# Pallas kernel: one full ResnetBlock for one image (grid over batch)
# ----------------------------------------------------------------------------
def _resnet_block_kernel(x_ref, w1_ref, b1_ref, w2_ref, b2_ref, o_ref, pad_ref,
                         *, H, W, C, padding_type):
    """x_ref/o_ref: [H, W, C] f32 (NHWC).  w*_ref: [9, Cin, Cout] bf16 taps
    (w_t[dy*3+dx, cin, cout] = w_torch[cout, cin, dy, dx]).  b*_ref: [1, C] f32.
    pad_ref: flat [(H+3)*(W+2), C] bf16 VMEM scratch (row r*(W+2)+c = padded(r, c);
    last (W+2) rows are slack only ever read into discarded matmul rows)."""
    bf16 = jnp.bfloat16
    Wq = W + 2          # padded row width
    M = H * Wq          # flat matmul M (includes 2 discarded columns per row)

    # pad-source indices (PyTorch ReflectionPad2d / ReplicationPad2d / zero)
    if padding_type == "reflect":
        tsrc, bsrc, lsrc, rsrc = 1, H - 2, 1, W - 2
    elif padding_type == "replicate":
        tsrc, bsrc, lsrc, rsrc = 0, H - 1, 0, W - 1
    else:  # zero
        tsrc = bsrc = lsrc = rsrc = 0  # unused

    zero1 = jnp.zeros((1, C), bf16)
    zeroWq = jnp.zeros((Wq, C), bf16)

    def fill_edges(row, elem, *, skip_body):
        """row(h)->[W,C] bf16 interior of source row h; elem(h,w)->[1,C] bf16 pixel.
        Writes body rows (unless skip_body), left/right pad columns and the
        top/bottom pad rows (corners = reflect-of-reflect, matching PyTorch)."""
        for h in range(H):
            base = (h + 1) * Wq
            if not skip_body:
                pad_ref[base + 1:base + 1 + W, :] = row(h)
            if padding_type == "zero":
                pad_ref[base:base + 1, :] = zero1
                pad_ref[base + W + 1:base + W + 2, :] = zero1
            else:
                pad_ref[base:base + 1, :] = elem(h, lsrc)
                pad_ref[base + W + 1:base + W + 2, :] = elem(h, rsrc)
        for prow, srow in ((0, tsrc), (H + 1, bsrc)):
            base = prow * Wq
            if padding_type == "zero":
                pad_ref[base:base + Wq, :] = zeroWq
            else:
                pad_ref[base + 1:base + 1 + W, :] = row(srow)
                pad_ref[base:base + 1, :] = elem(srow, lsrc)
                pad_ref[base + W + 1:base + W + 2, :] = elem(srow, rsrc)

    def conv3x3(w_ref, b_ref):
        # 9 bf16 MXU matmuls on contiguous flat views of the padded buffer:
        # no im2col, no tap copies, no per-tap casts.  f32 accumulation.
        partials = []
        for dy in range(3):
            p = None
            for dx in range(3):
                off = dy * Wq + dx
                lhs = pad_ref[off:off + M, :]                     # [M, C] bf16
                d = jnp.dot(lhs, w_ref[dy * 3 + dx],
                            preferred_element_type=jnp.float32)
                p = d if p is None else p + d
            partials.append(p)
        # independent per-dy partials overlap MXU drains with the VALU adds
        return (partials[0] + partials[1]) + partials[2] + b_ref[...]

    # valid-column mask for the flat layout (columns >= W are discarded garbage)
    col = jax.lax.broadcasted_iota(jnp.int32, (M, 1), 0) % Wq
    valid = col < W
    inv_n = 1.0 / float(H * W)

    def masked_instance_norm(y):        # y: [M, C] f32; affine=False, biased var
        yv = jnp.where(valid, y, 0.0)
        mean = jnp.sum(yv, axis=0, keepdims=True) * inv_n
        msq = jnp.sum(jnp.where(valid, y * y, 0.0), axis=0, keepdims=True) * inv_n
        var = msq - mean * mean         # single-pass stats, f32 accumulation
        return (y - mean) * jax.lax.rsqrt(var + IN_EPS)

    # ---- stage 1: pad(x) into the flat scratch -----------------------------
    pad_ref[(H + 2) * Wq:(H + 3) * Wq, :] = zeroWq      # slack rows (read-only junk)
    xb = x_ref[...].astype(bf16)                        # single f32->bf16 pass
    fill_edges(lambda h: xb[h],
               lambda h, w: xb[h, w:w + 1, :],
               skip_body=False)

    # ---- stage 2: y1 = ReLU(IN(conv1 + b1)) --------------------------------
    y1 = jnp.maximum(masked_instance_norm(conv3x3(w1_ref, b1_ref)), 0.0)
    y1b = y1.astype(bf16)                               # single f32->bf16 pass
    # TODO(synk): nn.Dropout(0.5) (use_dropout=True) intentionally omitted.

    # ---- stage 3: pad(y1) written straight into the pad buffer -------------
    # flat row m = h*Wq + w  ->  padded position (h+1, w+1) = flat row m + Wq + 1,
    # so one contiguous store places every valid pixel; the garbage columns it
    # drags along only land on pad columns, which fill_edges rewrites below.
    pad_ref[Wq + 1:Wq + 1 + M, :] = y1b
    fill_edges(lambda h: y1b[h * Wq:h * Wq + W, :],
               lambda h, w: y1b[h * Wq + w:h * Wq + w + 1, :],
               skip_body=True)

    # ---- stage 4: y2 = IN(conv2 + b2);  out = x + y2 ------------------------
    y2 = masked_instance_norm(conv3x3(w2_ref, b2_ref))
    for h in range(H):
        o_ref[h] = x_ref[h] + y2[h * Wq:h * Wq + W, :]  # drop garbage cols, residual


# ----------------------------------------------------------------------------
# Wrappers: pre-packed params + NHWC hot path, NCHW convenience entry point
# ----------------------------------------------------------------------------
def pack_resnet_block_params(w1, b1, w2, b2):
    """OIHW f32 weights -> tap-major [9, Cin, Cout] bf16 (pack once, reuse)."""
    C = w1.shape[0]

    def pack_w(w):
        return jnp.transpose(w, (2, 3, 1, 0)).reshape(9, C, C).astype(jnp.bfloat16)

    return (pack_w(w1), jnp.asarray(b1, jnp.float32).reshape(1, C),
            pack_w(w2), jnp.asarray(b2, jnp.float32).reshape(1, C))


def resnet_block_apply_nhwc(x_nhwc, wt1, b1r, wt2, b2r, padding_type="reflect"):
    """Hot path: NHWC activations, pre-packed bf16 weights (no boundary transposes)."""
    assert padding_type in ("reflect", "replicate", "zero")
    N, H, W, C = x_nhwc.shape
    Wq = W + 2

    kernel = functools.partial(_resnet_block_kernel, H=H, W=W, C=C,
                               padding_type=padding_type)

    # Explicit VMEM budget (review item): pipelined blocks are double-buffered.
    io_bytes = 2 * 2 * (H * W * C * 4)                       # x + out blocks
    w_bytes = 2 * 2 * (9 * C * C * 2) + 2 * 2 * (C * 4)      # weights + biases
    pad_bytes = (H + 3) * Wq * C * 2                         # bf16 pad scratch
    spill_head = 8 * (H * Wq) * C * 4                        # flat f32 temporaries
    vmem_limit = int(min(64 * 2 ** 20,
                         max(32 * 2 ** 20,
                             1.5 * (io_bytes + w_bytes + pad_bytes + spill_head))))

    return pl.pallas_call(
        kernel,
        out_shape=jax.ShapeDtypeStruct((N, H, W, C), jnp.float32),
        grid=(N,),
        in_specs=[
            pl.BlockSpec((pl.Squeezed(), H, W, C), lambda n: (n, 0, 0, 0)),
            pl.BlockSpec((9, C, C), lambda n: (0, 0, 0)),
            pl.BlockSpec((1, C), lambda n: (0, 0)),
            pl.BlockSpec((9, C, C), lambda n: (0, 0, 0)),
            pl.BlockSpec((1, C), lambda n: (0, 0)),
        ],
        out_specs=pl.BlockSpec((pl.Squeezed(), H, W, C), lambda n: (n, 0, 0, 0)),
        scratch_shapes=[pltpu.VMEM(((H + 3) * Wq, C), jnp.bfloat16)],
        compiler_params=pltpu.CompilerParams(
            dimension_semantics=("parallel",),
            vmem_limit_bytes=vmem_limit),
    )(x_nhwc, wt1, b1r, wt2, b2r)


def resnet_block_forward(x_nchw, w1, b1, w2, b2, padding_type="reflect"):
    """PyTorch-layout convenience wrapper: NCHW x, OIHW weights.
    Chained blocks should instead pack params once and call resnet_block_apply_nhwc
    directly to keep the NCHW<->NHWC transposes out of the hot path."""
    wt1, b1r, wt2, b2r = pack_resnet_block_params(w1, b1, w2, b2)
    x = jnp.transpose(x_nchw, (0, 2, 3, 1))
    out = resnet_block_apply_nhwc(x, wt1, b1r, wt2, b2r, padding_type=padding_type)
    return jnp.transpose(out, (0, 3, 1, 2))


# ----------------------------------------------------------------------------
# Pure-JAX reference (same bf16 matmul operands) for a sanity check
# ----------------------------------------------------------------------------
def _reference_forward(x_nchw, w1, b1, w2, b2, padding_type="reflect"):
    mode = {"reflect": "reflect", "replicate": "edge", "zero": "constant"}[padding_type]

    def conv_in(x, w, b):
        xp = jnp.pad(x, ((0, 0), (0, 0), (1, 1), (1, 1)), mode=mode)
        y = jax.lax.conv_general_dilated(
            xp.astype(jnp.bfloat16), w.astype(jnp.bfloat16),
            window_strides=(1, 1), padding="VALID",
            dimension_numbers=("NCHW", "OIHW", "NCHW"),
            preferred_element_type=jnp.float32)
        y = y + b.reshape(1, -1, 1, 1)
        mean = jnp.mean(y, axis=(2, 3), keepdims=True)
        var = jnp.mean(jnp.square(y - mean), axis=(2, 3), keepdims=True)
        return (y - mean) * jax.lax.rsqrt(var + IN_EPS)

    h = jnp.maximum(conv_in(x_nchw, w1, b1), 0.0)
    h = conv_in(h, w2, b2)
    return x_nchw + h


if __name__ == "__main__":
    key = jax.random.PRNGKey(0)
    N, C, H, W = 2, 128, 16, 16          # dim=128 ResnetBlock at 16x16 (small demo)
    k1, k2, k3, k4, k5 = jax.random.split(key, 5)
    x = jax.random.normal(k1, (N, C, H, W), jnp.float32)
    w1 = 0.05 * jax.random.normal(k2, (C, C, 3, 3), jnp.float32)
    b1 = 0.05 * jax.random.normal(k3, (C,), jnp.float32)
    w2 = 0.05 * jax.random.normal(k4, (C, C, 3, 3), jnp.float32)
    b2 = 0.05 * jax.random.normal(k5, (C,), jnp.float32)

    fwd = jax.jit(functools.partial(resnet_block_forward, padding_type="reflect"))
    out = fwd(x, w1, b1, w2, b2)
    jax.block_until_ready(out)
    assert out.shape == (N, C, H, W)

    ref = jax.jit(functools.partial(_reference_forward, padding_type="reflect"))(
        x, w1, b1, w2, b2)
    max_err = float(jnp.max(jnp.abs(out - ref)))
    assert max_err < 5e-2, f"max abs error vs reference: {max_err}"
    print("KERNEL_OK")
</pallas_src>

<mosaic_0001>
module attributes {stable_mosaic.version = 11 : i64} {
  func.func @_resnet_block_kernel(%arg0: i32, %arg1: memref<1x16x16x128xf32, #tpu.memory_space<vmem>>, %arg2: memref<9x128x128xbf16, #tpu.memory_space<vmem>>, %arg3: memref<1x128xf32, #tpu.memory_space<vmem>>, %arg4: memref<9x128x128xbf16, #tpu.memory_space<vmem>>, %arg5: memref<1x128xf32, #tpu.memory_space<vmem>>, %arg6: memref<1x16x16x128xf32, #tpu.memory_space<vmem>>, %arg7: memref<342x128xbf16, #tpu.memory_space<vmem>>) attributes {dimension_semantics = [#tpu.dimension_semantics<parallel>], iteration_bounds = array<i64: 2>, scalar_prefetch = 0 : i64, scratch_operands = 1 : i64, tpu.core_type = #tpu.core_type<tc>, window_params = [{transform_indices = @transform_0, window_bounds = array<i64: 1, 16, 16, 128>}, {pipeline_mode = #tpu.pipeline_mode<synchronous>, transform_indices = @transform_1, window_bounds = array<i64: 9, 128, 128>}, {pipeline_mode = #tpu.pipeline_mode<synchronous>, transform_indices = @transform_2, window_bounds = array<i64: 1, 128>}, {pipeline_mode = #tpu.pipeline_mode<synchronous>, transform_indices = @transform_3, window_bounds = array<i64: 9, 128, 128>}, {pipeline_mode = #tpu.pipeline_mode<synchronous>, transform_indices = @transform_4, window_bounds = array<i64: 1, 128>}, {transform_indices = @transform_5, window_bounds = array<i64: 1, 16, 16, 128>}]} {
    %cst = arith.constant 0.000000e+00 : bf16
    %0 = vector.broadcast %cst : bf16 to vector<18x128xbf16>
    %1 = tpu.iota {dimensions = array<i32: 0>} : vector<288x1xi32>
    %c18_i32 = arith.constant 18 : i32
    %c0_i32 = arith.constant 0 : i32
    %2 = arith.cmpi eq, %c18_i32, %c0_i32 : i32
    %c1_i32 = arith.constant 1 : i32
    %3 = arith.select %2, %c1_i32, %c18_i32 : i32
    %4 = vector.broadcast %3 : i32 to vector<288x1xi32>
    %5 = arith.remsi %1, %4 : vector<288x1xi32>
    %c0_i32_0 = arith.constant 0 : i32
    %6 = vector.broadcast %c0_i32_0 : i32 to vector<288x1xi32>
    %7 = arith.cmpi ne, %5, %6 : vector<288x1xi32>
    %c0_i32_1 = arith.constant 0 : i32
    %8 = vector.broadcast %c0_i32_1 : i32 to vector<288x1xi32>
    %9 = arith.cmpi slt, %5, %8 : vector<288x1xi32>
    %c0_i32_2 = arith.constant 0 : i32
    %10 = arith.cmpi slt, %3, %c0_i32_2 : i32
    %11 = vector.broadcast %10 : i1 to vector<288x1xi1>
    %12 = vector.broadcast %11 : vector<288x1xi1> to vector<288x1xi1>
    %13 = arith.xori %9, %12 : vector<288x1xi1>
    %14 = arith.andi %13, %7 : vector<288x1xi1>
    %15 = vector.broadcast %3 : i32 to vector<288x1xi32>
    %16 = arith.addi %5, %15 : vector<288x1xi32>
    %17 = arith.select %14, %16, %5 : vector<288x1xi1>, vector<288x1xi32>
    %c16_i32 = arith.constant 16 : i32
    %18 = vector.broadcast %c16_i32 : i32 to vector<288x1xi32>
    %19 = arith.cmpi slt, %17, %18 : vector<288x1xi32>
    %c324 = arith.constant 324 : index
    %c0 = arith.constant 0 : index
    %20 = vector.load %arg7[%c324, %c0] : memref<342x128xbf16, #tpu.memory_space<vmem>>, vector<18x128xbf16>
    tpu.vector_store %arg7[%c324, %c0], %0 {strides = array<i32>} : memref<342x128xbf16, #tpu.memory_space<vmem>>, vector<18x128xbf16>,
    %c0_3 = arith.constant 0 : index
    %c0_4 = arith.constant 0 : index
    %c0_5 = arith.constant 0 : index
    %c0_6 = arith.constant 0 : index
    %21 = vector.load %arg1[%c0_3, %c0_4, %c0_5, %c0_6] : memref<1x16x16x128xf32, #tpu.memory_space<vmem>>, vector<1x16x16x128xf32>
    %22 = vector.shape_cast %21 : vector<1x16x16x128xf32> to vector<16x16x128xf32>
    %23 = arith.truncf %22 : vector<16x16x128xf32> to vector<16x16x128xbf16>
    %24 = vector.extract_strided_slice %23 {offsets = [0, 0, 0], sizes = [1, 16, 128], strides = [1, 1, 1]} : vector<16x16x128xbf16> to vector<1x16x128xbf16>
    %25 = vector.shape_cast %24 : vector<1x16x128xbf16> to vector<16x128xbf16>
    %c19 = arith.constant 19 : index
    %c0_7 = arith.constant 0 : index
    %26 = vector.load %arg7[%c19, %c0_7] : memref<342x128xbf16, #tpu.memory_space<vmem>>, vector<16x128xbf16>
    tpu.vector_store %arg7[%c19, %c0_7], %25 {strides = array<i32>} : memref<342x128xbf16, #tpu.memory_space<vmem>>, vector<16x128xbf16>,
    %27 = vector.extract_strided_slice %23 {offsets = [0, 1, 0], sizes = [1, 1, 128], strides = [1, 1, 1]} : vector<16x16x128xbf16> to vector<1x1x128xbf16>
    %28 = vector.shape_cast %27 : vector<1x1x128xbf16> to vector<1x128xbf16>
    %c18 = arith.constant 18 : index
    %c0_8 = arith.constant 0 : index
    %29 = vector.load %arg7[%c18, %c0_8] : memref<342x128xbf16, #tpu.memory_space<vmem>>, vector<1x128xbf16>
    tpu.vector_store %arg7[%c18, %c0_8], %28 {strides = array<i32>} : memref<342x128xbf16, #tpu.memory_space<vmem>>, vector<1x128xbf16>,
    %30 = vector.extract_strided_slice %23 {offsets = [0, 14, 0], sizes = [1, 1, 128], strides = [1, 1, 1]} : vector<16x16x128xbf16> to vector<1x1x128xbf16>
    %31 = vector.shape_cast %30 : vector<1x1x128xbf16> to vector<1x128xbf16>
    %c35 = arith.constant 35 : index
    %c0_9 = arith.constant 0 : index
    %32 = vector.load %arg7[%c35, %c0_9] : memref<342x128xbf16, #tpu.memory_space<vmem>>, vector<1x128xbf16>
    tpu.vector_store %arg7[%c35, %c0_9], %31 {strides = array<i32>} : memref<342x128xbf16, #tpu.memory_space<vmem>>, vector<1x128xbf16>,
    %33 = vector.extract_strided_slice %23 {offsets = [1, 0, 0], sizes = [1, 16, 128], strides = [1, 1, 1]} : vector<16x16x128xbf16> to vector<1x16x128xbf16>
    %34 = vector.shape_cast %33 : vector<1x16x128xbf16> to vector<16x128xbf16>
    %c37 = arith.constant 37 : index
    %c0_10 = arith.constant 0 : index
    %35 = vector.load %arg7[%c37, %c0_10] : memref<342x128xbf16, #tpu.memory_space<vmem>>, vector<16x128xbf16>
    tpu.vector_store %arg7[%c37, %c0_10], %34 {strides = array<i32>} : memref<342x128xbf16, #tpu.memory_space<vmem>>, vector<16x128xbf16>,
    %36 = vector.extract_strided_slice %23 {offsets = [1, 1, 0], sizes = [1, 1, 128], strides = [1, 1, 1]} : vector<16x16x128xbf16> to vector<1x1x128xbf16>
    %37 = vector.shape_cast %36 : vector<1x1x128xbf16> to vector<1x128xbf16>
    %c36 = arith.constant 36 : index
    %c0_11 = arith.constant 0 : index
    %38 = vector.load %arg7[%c36, %c0_11] : memref<342x128xbf16, #tpu.memory_space<vmem>>, vector<1x128xbf16>
    tpu.vector_store %arg7[%c36, %c0_11], %37 {strides = array<i32>} : memref<342x128xbf16, #tpu.memory_space<vmem>>, vector<1x128xbf16>,
    %39 = vector.extract_strided_slice %23 {offsets = [1, 14, 0], sizes = [1, 1, 128], strides = [1, 1, 1]} : vector<16x16x128xbf16> to vector<1x1x128xbf16>
    %40 = vector.shape_cast %39 : vector<1x1x128xbf16> to vector<1x128xbf16>
    %c53 = arith.constant 53 : index
    %c0_12 = arith.constant 0 : index
    %41 = vector.load %arg7[%c53, %c0_12] : memref<342x128xbf16, #tpu.memory_space<vmem>>, vector<1x128xbf16>
    tpu.vector_store %arg7[%c53, %c0_12], %40 {strides = array<i32>} : memref<342x128xbf16, #tpu.memory_space<vmem>>, vector<1x128xbf16>,
    %42 = vector.extract_strided_slice %23 {offsets = [2, 0, 0], sizes = [1, 16, 128], strides = [1, 1, 1]} : vector<16x16x128xbf16> to vector<1x16x128xbf16>
    %43 = vector.shape_cast %42 : vector<1x16x128xbf16> to vector<16x128xbf16>
    %c55 = arith.constant 55 : index
    %c0_13 = arith.constant 0 : index
    %44 = vector.load %arg7[%c55, %c0_13] : memref<342x128xbf16, #tpu.memory_space<vmem>>, vector<16x128xbf16>
    tpu.vector_store %arg7[%c55, %c0_13], %43 {strides = array<i32>} : memref<342x128xbf16, #tpu.memory_space<vmem>>, vector<16x128xbf16>,
    %45 = vector.extract_strided_slice %23 {offsets = [2, 1, 0], sizes = [1, 1, 128], strides = [1, 1, 1]} : vector<16x16x128xbf16> to vector<1x1x128xbf16>
    %46 = vector.shape_cast %45 : vector<1x1x128xbf16> to vector<1x128xbf16>
    %c54 = arith.constant 54 : index
    %c0_14 = arith.constant 0 : index
    %47 = vector.load %arg7[%c54, %c0_14] : memref<342x128xbf16, #tpu.memory_space<vmem>>, vector<1x128xbf16>
    tpu.vector_store %arg7[%c54, %c0_14], %46 {strides = array<i32>} : memref<342x128xbf16, #tpu.memory_space<vmem>>, vector<1x128xbf16>,
    %48 = vector.extract_strided_slice %23 {offsets = [2, 14, 0], sizes = [1, 1, 128], strides = [1, 1, 1]} : vector<16x16x128xbf16> to vector<1x1x128xbf16>
    %49 = vector.shape_cast %48 : vector<1x1x128xbf16> to vector<1x128xbf16>
    %c71 = arith.constant 71 : index
    %c0_15 = arith.constant 0 : index
    %50 = vector.load %arg7[%c71, %c0_15] : memref<342x128xbf16, #tpu.memory_space<vmem>>, vector<1x128xbf16>
    tpu.vector_store %arg7[%c71, %c0_15], %49 {strides = array<i32>} : memref<342x128xbf16, #tpu.memory_space<vmem>>, vector<1x128xbf16>,
    %51 = vector.extract_strided_slice %23 {offsets = [3, 0, 0], sizes = [1, 16, 128], strides = [1, 1, 1]} : vector<16x16x128xbf16> to vector<1x16x128xbf16>
    %52 = vector.shape_cast %51 : vector<1x16x128xbf16> to vector<16x128xbf16>
    %c73 = arith.constant 73 : index
    %c0_16 = arith.constant 0 : index
    %53 = vector.load %arg7[%c73, %c0_16] : memref<342x128xbf16, #tpu.memory_space<vmem>>, vector<16x128xbf16>
    tpu.vector_store %arg7[%c73, %c0_16], %52 {strides = array<i32>} : memref<342x128xbf16, #tpu.memory_space<vmem>>, vector<16x128xbf16>,
    %54 = vector.extract_strided_slice %23 {offsets = [3, 1, 0], sizes = [1, 1, 128], strides = [1, 1, 1]} : vector<16x16x128xbf16> to vector<1x1x128xbf16>
    %55 = vector.shape_cast %54 : vector<1x1x128xbf16> to vector<1x128xbf16>
    %c72 = arith.constant 72 : index
    %c0_17 = arith.constant 0 : index
    %56 = vector.load %arg7[%c72, %c0_17] : memref<342x128xbf16, #tpu.memory_space<vmem>>, vector<1x128xbf16>
    tpu.vector_store %arg7[%c72, %c0_17], %55 {strides = array<i32>} : memref<342x128xbf16, #tpu.memory_space<vmem>>, vector<1x128xbf16>,
    %57 = vector.extract_strided_slice %23 {offsets = [3, 14, 0], sizes = [1, 1, 128], strides = [1, 1, 1]} : vector<16x16x128xbf16> to vector<1x1x128xbf16>
    %58 = vector.shape_cast %57 : vector<1x1x128xbf16> to vector<1x128xbf16>
    %c89 = arith.constant 89 : index
    %c0_18 = arith.constant 0 : index
    %59 = vector.load %arg7[%c89, %c0_18] : memref<342x128xbf16, #tpu.memory_space<vmem>>, vector<1x128xbf16>
    tpu.vector_store %arg7[%c89, %c0_18], %58 {strides = array<i32>} : memref<342x128xbf16, #tpu.memory_space<vmem>>, vector<1x128xbf16>,
    %60 = vector.extract_strided_slice %23 {offsets = [4, 0, 0], sizes = [1, 16, 128], strides = [1, 1, 1]} : vector<16x16x128xbf16> to vector<1x16x128xbf16>
    %61 = vector.shape_cast %60 : vector<1x16x128xbf16> to vector<16x128xbf16>
    %c91 = arith.constant 91 : index
    %c0_19 = arith.constant 0 : index
    %62 = vector.load %arg7[%c91, %c0_19] : memref<342x128xbf16, #tpu.memory_space<vmem>>, vector<16x128xbf16>
    tpu.vector_store %arg7[%c91, %c0_19], %61 {strides = array<i32>} : memref<342x128xbf16, #tpu.memory_space<vmem>>, vector<16x128xbf16>,
    %63 = vector.extract_strided_slice %23 {offsets = [4, 1, 0], sizes = [1, 1, 128], strides = [1, 1, 1]} : vector<16x16x128xbf16> to vector<1x1x128xbf16>
    %64 = vector.shape_cast %63 : vector<1x1x128xbf16> to vector<1x128xbf16>
    %c90 = arith.constant 90 : index
    %c0_20 = arith.constant 0 : index
    %65 = vector.load %arg7[%c90, %c0_20] : memref<342x128xbf16, #tpu.memory_space<vmem>>, vector<1x128xbf16>
    tpu.vector_store %arg7[%c90, %c0_20], %64 {strides = array<i32>} : memref<342x128xbf16, #tpu.memory_space<vmem>>, vector<1x128xbf16>,
    %66 = vector.extract_strided_slice %23 {offsets = [4, 14, 0], sizes = [1, 1, 128], strides = [1, 1, 1]} : vector<16x16x128xbf16> to vector<1x1x128xbf16>
    %67 = vector.shape_cast %66 : vector<1x1x128xbf16> to vector<1x128xbf16>
    %c107 = arith.constant 107 : index
    %c0_21 = arith.constant 0 : index
    %68 = vector.load %arg7[%c107, %c0_21] : memref<342x128xbf16, #tpu.memory_space<vmem>>, vector<1x128xbf16>
    tpu.vector_store %arg7[%c107, %c0_21], %67 {strides = array<i32>} : memref<342x128xbf16, #tpu.memory_space<vmem>>, vector<1x128xbf16>,
    %69 = vector.extract_strided_slice %23 {offsets = [5, 0, 0], sizes = [1, 16, 128], strides = [1, 1, 1]} : vector<16x16x128xbf16> to vector<1x16x128xbf16>
    %70 = vector.shape_cast %69 : vector<1x16x128xbf16> to vector<16x128xbf16>
    %c109 = arith.constant 109 : index
    %c0_22 = arith.constant 0 : index
    %71 = vector.load %arg7[%c109, %c0_22] : memref<342x128xbf16, #tpu.memory_space<vmem>>, vector<16x128xbf16>
    tpu.vector_store %arg7[%c109, %c0_22], %70 {strides = array<i32>} : memref<342x128xbf16, #tpu.memory_space<vmem>>, vector<16x128xbf16>,
    %72 = vector.extract_strided_slice %23 {offsets = [5, 1, 0], sizes = [1, 1, 128], strides = [1, 1, 1]} : vector<16x16x128xbf16> to vector<1x1x128xbf16>
    %73 = vector.shape_cast %72 : vector<1x1x128xbf16> to vector<1x128xbf16>
    %c108 = arith.constant 108 : index
    %c0_23 = arith.constant 0 : index
    %74 = vector.load %arg7[%c108, %c0_23] : memref<342x128xbf16, #tpu.memory_space<vmem>>, vector<1x128xbf16>
    tpu.vector_store %arg7[%c108, %c0_23], %73 {strides = array<i32>} : memref<342x128xbf16, #tpu.memory_space<vmem>>, vector<1x128xbf16>,
    %75 = vector.extract_strided_slice %23 {offsets = [5, 14, 0], sizes = [1, 1, 128], strides = [1, 1, 1]} : vector<16x16x128xbf16> to vector<1x1x128xbf16>
    %76 = vector.shape_cast %75 : vector<1x1x128xbf16> to vector<1x128xbf16>
    %c125 = arith.constant 125 : index
    %c0_24 = arith.constant 0 : index
    %77 = vector.load %arg7[%c125, %c0_24] : memref<342x128xbf16, #tpu.memory_space<vmem>>, vector<1x128xbf16>
    tpu.vector_store %arg7[%c125, %c0_24], %76 {strides = array<i32>} : memref<342x128xbf16, #tpu.memory_space<vmem>>, vector<1x128xbf16>,
    %78 = vector.extract_strided_slice %23 {offsets = [6, 0, 0], sizes = [1, 16, 128], strides = [1, 1, 1]} : vector<16x16x128xbf16> to vector<1x16x128xbf16>
    %79 = vector.shape_cast %78 : vector<1x16x128xbf16> to vector<16x128xbf16>
    %c127 = arith.constant 127 : index
    %c0_25 = arith.constant 0 : index
    %80 = vector.load %arg7[%c127, %c0_25] : memref<342x128xbf16, #tpu.memory_space<vmem>>, vector<16x128xbf16>
    tpu.vector_store %arg7[%c127, %c0_25], %79 {strides = array<i32>} : memref<342x128xbf16, #tpu.memory_space<vmem>>, vector<16x128xbf16>,
    %81 = vector.extract_strided_slice %23 {offsets = [6, 1, 0], sizes = [1, 1, 128], strides = [1, 1, 1]} : vector<16x16x128xbf16> to vector<1x1x128xbf16>
    %82 = vector.shape_cast %81 : vector<1x1x128xbf16> to vector<1x128xbf16>
    %c126 = arith.constant 126 : index
    %c0_26 = arith.constant 0 : index
    %83 = vector.load %arg7[%c126, %c0_26] : memref<342x128xbf16, #tpu.memory_space<vmem>>, vector<1x128xbf16>
    tpu.vector_store %arg7[%c126, %c0_26], %82 {strides = array<i32>} : memref<342x128xbf16, #tpu.memory_space<vmem>>, vector<1x128xbf16>,
    %84 = vector.extract_strided_slice %23 {offsets = [6, 14, 0], sizes = [1, 1, 128], strides = [1, 1, 1]} : vector<16x16x128xbf16> to vector<1x1x128xbf16>
    %85 = vector.shape_cast %84 : vector<1x1x128xbf16> to vector<1x128xbf16>
    %c143 = arith.constant 143 : index
    %c0_27 = arith.constant 0 : index
    %86 = vector.load %arg7[%c143, %c0_27] : memref<342x128xbf16, #tpu.memory_space<vmem>>, vector<1x128xbf16>
    tpu.vector_store %arg7[%c143, %c0_27], %85 {strides = array<i32>} : memref<342x128xbf16, #tpu.memory_space<vmem>>, vector<1x128xbf16>,
    %87 = vector.extract_strided_slice %23 {offsets = [7, 0, 0], sizes = [1, 16, 128], strides = [1, 1, 1]} : vector<16x16x128xbf16> to vector<1x16x128xbf16>
    %88 = vector.shape_cast %87 : vector<1x16x128xbf16> to vector<16x128xbf16>
    %c145 = arith.constant 145 : index
    %c0_28 = arith.constant 0 : index
    %89 = vector.load %arg7[%c145, %c0_28] : memref<342x128xbf16, #tpu.memory_space<vmem>>, vector<16x128xbf16>
    tpu.vector_store %arg7[%c145, %c0_28], %88 {strides = array<i32>} : memref<342x128xbf16, #tpu.memory_space<vmem>>, vector<16x128xbf16>,
    %90 = vector.extract_strided_slice %23 {offsets = [7, 1, 0], sizes = [1, 1, 128], strides = [1, 1, 1]} : vector<16x16x128xbf16> to vector<1x1x128xbf16>
    %91 = vector.shape_cast %90 : vector<1x1x128xbf16> to vector<1x128xbf16>
    %c144 = arith.constant 144 : index
    %c0_29 = arith.constant 0 : index
    %92 = vector.load %arg7[%c144, %c0_29] : memref<342x128xbf16, #tpu.memory_space<vmem>>, vector<1x128xbf16>
    tpu.vector_store %arg7[%c144, %c0_29], %91 {strides = array<i32>} : memref<342x128xbf16, #tpu.memory_space<vmem>>, vector<1x128xbf16>,
    %93 = vector.extract_strided_slice %23 {offsets = [7, 14, 0], sizes = [1, 1, 128], strides = [1, 1, 1]} : vector<16x16x128xbf16> to vector<1x1x128xbf16>
    %94 = vector.shape_cast %93 : vector<1x1x128xbf16> to vector<1x128xbf16>
    %c161 = arith.constant 161 : index
    %c0_30 = arith.constant 0 : index
    %95 = vector.load %arg7[%c161, %c0_30] : memref<342x128xbf16, #tpu.memory_space<vmem>>, vector<1x128xbf16>
    tpu.vector_store %arg7[%c161, %c0_30], %94 {strides = array<i32>} : memref<342x128xbf16, #tpu.memory_space<vmem>>, vector<1x128xbf16>,
    %96 = vector.extract_strided_slice %23 {offsets = [8, 0, 0], sizes = [1, 16, 128], strides = [1, 1, 1]} : vector<16x16x128xbf16> to vector<1x16x128xbf16>
    %97 = vector.shape_cast %96 : vector<1x16x128xbf16> to vector<16x128xbf16>
    %c163 = arith.constant 163 : index
    %c0_31 = arith.constant 0 : index
    %98 = vector.load %arg7[%c163, %c0_31] : memref<342x128xbf16, #tpu.memory_space<vmem>>, vector<16x128xbf16>
    tpu.vector_store %arg7[%c163, %c0_31], %97 {strides = array<i32>} : memref<342x128xbf16, #tpu.memory_space<vmem>>, vector<16x128xbf16>,
    %99 = vector.extract_strided_slice %23 {offsets = [8, 1, 0], sizes = [1, 1, 128], strides = [1, 1, 1]} : vector<16x16x128xbf16> to vector<1x1x128xbf16>
    %100 = vector.shape_cast %99 : vector<1x1x128xbf16> to vector<1x128xbf16>
    %c162 = arith.constant 162 : index
    %c0_32 = arith.constant 0 : index
    %101 = vector.load %arg7[%c162, %c0_32] : memref<342x128xbf16, #tpu.memory_space<vmem>>, vector<1x128xbf16>
    tpu.vector_store %arg7[%c162, %c0_32], %100 {strides = array<i32>} : memref<342x128xbf16, #tpu.memory_space<vmem>>, vector<1x128xbf16>,
    %102 = vector.extract_strided_slice %23 {offsets = [8, 14, 0], sizes = [1, 1, 128], strides = [1, 1, 1]} : vector<16x16x128xbf16> to vector<1x1x128xbf16>
    %103 = vector.shape_cast %102 : vector<1x1x128xbf16> to vector<1x128xbf16>
    %c179 = arith.constant 179 : index
    %c0_33 = arith.constant 0 : index
    %104 = vector.load %arg7[%c179, %c0_33] : memref<342x128xbf16, #tpu.memory_space<vmem>>, vector<1x128xbf16>
    tpu.vector_store %arg7[%c179, %c0_33], %103 {strides = array<i32>} : memref<342x128xbf16, #tpu.memory_space<vmem>>, vector<1x128xbf16>,
    %105 = vector.extract_strided_slice %23 {offsets = [9, 0, 0], sizes = [1, 16, 128], strides = [1, 1, 1]} : vector<16x16x128xbf16> to vector<1x16x128xbf16>
    %106 = vector.shape_cast %105 : vector<1x16x128xbf16> to vector<16x128xbf16>
    %c181 = arith.constant 181 : index
    %c0_34 = arith.constant 0 : index
    %107 = vector.load %arg7[%c181, %c0_34] : memref<342x128xbf16, #tpu.memory_space<vmem>>, vector<16x128xbf16>
    tpu.vector_store %arg7[%c181, %c0_34], %106 {strides = array<i32>} : memref<342x128xbf16, #tpu.memory_space<vmem>>, vector<16x128xbf16>,
    %108 = vector.extract_strided_slice %23 {offsets = [9, 1, 0], sizes = [1, 1, 128], strides = [1, 1, 1]} : vector<16x16x128xbf16> to vector<1x1x128xbf16>
    %109 = vector.shape_cast %108 : vector<1x1x128xbf16> to vector<1x128xbf16>
    %c180 = arith.constant 180 : index
    %c0_35 = arith.constant 0 : index
    %110 = vector.load %arg7[%c180, %c0_35] : memref<342x128xbf16, #tpu.memory_space<vmem>>, vector<1x128xbf16>
    tpu.vector_store %arg7[%c180, %c0_35], %109 {strides = array<i32>} : memref<342x128xbf16, #tpu.memory_space<vmem>>, vector<1x128xbf16>,
    %111 = vector.extract_strided_slice %23 {offsets = [9, 14, 0], sizes = [1, 1, 128], strides = [1, 1, 1]} : vector<16x16x128xbf16> to vector<1x1x128xbf16>
    %112 = vector.shape_cast %111 : vector<1x1x128xbf16> to vector<1x128xbf16>
    %c197 = arith.constant 197 : index
    %c0_36 = arith.constant 0 : index
    %113 = vector.load %arg7[%c197, %c0_36] : memref<342x128xbf16, #tpu.memory_space<vmem>>, vector<1x128xbf16>
    tpu.vector_store %arg7[%c197, %c0_36], %112 {strides = array<i32>} : memref<342x128xbf16, #tpu.memory_space<vmem>>, vector<1x128xbf16>,
    %114 = vector.extract_strided_slice %23 {offsets = [10, 0, 0], sizes = [1, 16, 128], strides = [1, 1, 1]} : vector<16x16x128xbf16> to vector<1x16x128xbf16>
    %115 = vector.shape_cast %114 : vector<1x16x128xbf16> to vector<16x128xbf16>
    %c199 = arith.constant 199 : index
    %c0_37 = arith.constant 0 : index
    %116 = vector.load %arg7[%c199, %c0_37] : memref<342x128xbf16, #tpu.memory_space<vmem>>, vector<16x128xbf16>
    tpu.vector_store %arg7[%c199, %c0_37], %115 {strides = array<i32>} : memref<342x128xbf16, #tpu.memory_space<vmem>>, vector<16x128xbf16>,
    %117 = vector.extract_strided_slice %23 {offsets = [10, 1, 0], sizes = [1, 1, 128], strides = [1, 1, 1]} : vector<16x16x128xbf16> to vector<1x1x128xbf16>
    %118 = vector.shape_cast %117 : vector<1x1x128xbf16> to vector<1x128xbf16>
    %c198 = arith.constant 198 : index
    %c0_38 = arith.constant 0 : index
    %119 = vector.load %arg7[%c198, %c0_38] : memref<342x128xbf16, #tpu.memory_space<vmem>>, vector<1x128xbf16>
    tpu.vector_store %arg7[%c198, %c0_38], %118 {strides = array<i32>} : memref<342x128xbf16, #tpu.memory_space<vmem>>, vector<1x128xbf16>,
    %120 = vector.extract_strided_slice %23 {offsets = [10, 14, 0], sizes = [1, 1, 128], strides = [1, 1, 1]} : vector<16x16x128xbf16> to vector<1x1x128xbf16>
    %121 = vector.shape_cast %120 : vector<1x1x128xbf16> to vector<1x128xbf16>
    %c215 = arith.constant 215 : index
    %c0_39 = arith.constant 0 : index
    %122 = vector.load %arg7[%c215, %c0_39] : memref<342x128xbf16, #tpu.memory_space<vmem>>, vector<1x128xbf16>
    tpu.vector_store %arg7[%c215, %c0_39], %121 {strides = array<i32>} : memref<342x128xbf16, #tpu.memory_space<vmem>>, vector<1x128xbf16>,
    %123 = vector.extract_strided_slice %23 {offsets = [11, 0, 0], sizes = [1, 16, 128], strides = [1, 1, 1]} : vector<16x16x128xbf16> to vector<1x16x128xbf16>
    %124 = vector.shape_cast %123 : vector<1x16x128xbf16> to vector<16x128xbf16>
    %c217 = arith.constant 217 : index
    %c0_40 = arith.constant 0 : index
    %125 = vector.load %arg7[%c217, %c0_40] : memref<342x128xbf16, #tpu.memory_space<vmem>>, vector<16x128xbf16>
    tpu.vector_store %arg7[%c217, %c0_40], %124 {strides = array<i32>} : memref<342x128xbf16, #tpu.memory_space<vmem>>, vector<16x128xbf16>,
    %126 = vector.extract_strided_slice %23 {offsets = [11, 1, 0], sizes = [1, 1, 128], strides = [1, 1, 1]} : vector<16x16x128xbf16> to vector<1x1x128xbf16>
    %127 = vector.shape_cast %126 : vector<1x1x128xbf16> to vector<1x128xbf16>
    %c216 = arith.constant 216 : index
    %c0_41 = arith.constant 0 : index
    %128 = vector.load %arg7[%c216, %c0_41] : memref<342x128xbf16, #tpu.memory_space<vmem>>, vector<1x128xbf16>
    tpu.vector_store %arg7[%c216, %c0_41], %127 {strides = array<i32>} : memref<342x128xbf16, #tpu.memory_space<vmem>>, vector<1x128xbf16>,
    %129 = vector.extract_strided_slice %23 {offsets = [11, 14, 0], sizes = [1, 1, 128], strides = [1, 1, 1]} : vector<16x16x128xbf16> to vector<1x1x128xbf16>
    %130 = vector.shape_cast %129 : vector<1x1x128xbf16> to vector<1x128xbf16>
    %c233 = arith.constant 233 : index
    %c0_42 = arith.constant 0 : index
    %131 = vector.load %arg7[%c233, %c0_42] : memref<342x128xbf16, #tpu.memory_space<vmem>>, vector<1x128xbf16>
    tpu.vector_store %arg7[%c233, %c0_42], %130 {strides = array<i32>} : memref<342x128xbf16, #tpu.memory_space<vmem>>, vector<1x128xbf16>,
    %132 = vector.extract_strided_slice %23 {offsets = [12, 0, 0], sizes = [1, 16, 128], strides = [1, 1, 1]} : vector<16x16x128xbf16> to vector<1x16x128xbf16>
    %133 = vector.shape_cast %132 : vector<1x16x128xbf16> to vector<16x128xbf16>
    %c235 = arith.constant 235 : index
    %c0_43 = arith.constant 0 : index
    %134 = vector.load %arg7[%c235, %c0_43] : memref<342x128xbf16, #tpu.memory_space<vmem>>, vector<16x128xbf16>
    tpu.vector_store %arg7[%c235, %c0_43], %133 {strides = array<i32>} : memref<342x128xbf16, #tpu.memory_space<vmem>>, vector<16x128xbf16>,
    %135 = vector.extract_strided_slice %23 {offsets = [12, 1, 0], sizes = [1, 1, 128], strides = [1, 1, 1]} : vector<16x16x128xbf16> to vector<1x1x128xbf16>
    %136 = vector.shape_cast %135 : vector<1x1x128xbf16> to vector<1x128xbf16>
    %c234 = arith.constant 234 : index
    %c0_44 = arith.constant 0 : index
    %137 = vector.load %arg7[%c234, %c0_44] : memref<342x128xbf16, #tpu.memory_space<vmem>>, vector<1x128xbf16>
    tpu.vector_store %arg7[%c234, %c0_44], %136 {strides = array<i32>} : memref<342x128xbf16, #tpu.memory_space<vmem>>, vector<1x128xbf16>,
    %138 = vector.extract_strided_slice %23 {offsets = [12, 14, 0], sizes = [1, 1, 128], strides = [1, 1, 1]} : vector<16x16x128xbf16> to vector<1x1x128xbf16>
    %139 = vector.shape_cast %138 : vector<1x1x128xbf16> to vector<1x128xbf16>
    %c251 = arith.constant 251 : index
    %c0_45 = arith.constant 0 : index
    %140 = vector.load %arg7[%c251, %c0_45] : memref<342x128xbf16, #tpu.memory_space<vmem>>, vector<1x128xbf16>
    tpu.vector_store %arg7[%c251, %c0_45], %139 {strides = array<i32>} : memref<342x128xbf16, #tpu.memory_space<vmem>>, vector<1x128xbf16>,
    %141 = vector.extract_strided_slice %23 {offsets = [13, 0, 0], sizes = [1, 16, 128], strides = [1, 1, 1]} : vector<16x16x128xbf16> to vector<1x16x128xbf16>
    %142 = vector.shape_cast %141 : vector<1x16x128xbf16> to vector<16x128xbf16>
    %c253 = arith.constant 253 : index
    %c0_46 = arith.constant 0 : index
    %143 = vector.load %arg7[%c253, %c0_46] : memref<342x128xbf16, #tpu.memory_space<vmem>>, vector<16x128xbf16>
    tpu.vector_store %arg7[%c253, %c0_46], %142 {strides = array<i32>} : memref<342x128xbf16, #tpu.memory_space<vmem>>, vector<16x128xbf16>,
    %144 = vector.extract_strided_slice %23 {offsets = [13, 1, 0], sizes = [1, 1, 128], strides = [1, 1, 1]} : vector<16x16x128xbf16> to vector<1x1x128xbf16>
    %145 = vector.shape_cast %144 : vector<1x1x128xbf16> to vector<1x128xbf16>
    %c252 = arith.constant 252 : index
    %c0_47 = arith.constant 0 : index
    %146 = vector.load %arg7[%c252, %c0_47] : memref<342x128xbf16, #tpu.memory_space<vmem>>, vector<1x128xbf16>
    tpu.vector_store %arg7[%c252, %c0_47], %145 {strides = array<i32>} : memref<342x128xbf16, #tpu.memory_space<vmem>>, vector<1x128xbf16>,
    %147 = vector.extract_strided_slice %23 {offsets = [13, 14, 0], sizes = [1, 1, 128], strides = [1, 1, 1]} : vector<16x16x128xbf16> to vector<1x1x128xbf16>
    %148 = vector.shape_cast %147 : vector<1x1x128xbf16> to vector<1x128xbf16>
    %c269 = arith.constant 269 : index
    %c0_48 = arith.constant 0 : index
    %149 = vector.load %arg7[%c269, %c0_48] : memref<342x128xbf16, #tpu.memory_space<vmem>>, vector<1x128xbf16>
    tpu.vector_store %arg7[%c269, %c0_48], %148 {strides = array<i32>} : memref<342x128xbf16, #tpu.memory_space<vmem>>, vector<1x128xbf16>,
    %150 = vector.extract_strided_slice %23 {offsets = [14, 0, 0], sizes = [1, 16, 128], strides = [1, 1, 1]} : vector<16x16x128xbf16> to vector<1x16x128xbf16>
    %151 = vector.shape_cast %150 : vector<1x16x128xbf16> to vector<16x128xbf16>
    %c271 = arith.constant 271 : index
    %c0_49 = arith.constant 0 : index
    %152 = vector.load %arg7[%c271, %c0_49] : memref<342x128xbf16, #tpu.memory_space<vmem>>, vector<16x128xbf16>
    tpu.vector_store %arg7[%c271, %c0_49], %151 {strides = array<i32>} : memref<342x128xbf16, #tpu.memory_space<vmem>>, vector<16x128xbf16>,
    %153 = vector.extract_strided_slice %23 {offsets = [14, 1, 0], sizes = [1, 1, 128], strides = [1, 1, 1]} : vector<16x16x128xbf16> to vector<1x1x128xbf16>
    %154 = vector.shape_cast %153 : vector<1x1x128xbf16> to vector<1x128xbf16>
    %c270 = arith.constant 270 : index
    %c0_50 = arith.constant 0 : index
    %155 = vector.load %arg7[%c270, %c0_50] : memref<342x128xbf16, #tpu.memory_space<vmem>>, vector<1x128xbf16>
    tpu.vector_store %arg7[%c270, %c0_50], %154 {strides = array<i32>} : memref<342x128xbf16, #tpu.memory_space<vmem>>, vector<1x128xbf16>,
    %156 = vector.extract_strided_slice %23 {offsets = [14, 14, 0], sizes = [1, 1, 128], strides = [1, 1, 1]} : vector<16x16x128xbf16> to vector<1x1x128xbf16>
    %157 = vector.shape_cast %156 : vector<1x1x128xbf16> to vector<1x128xbf16>
    %c287 = arith.constant 287 : index
    %c0_51 = arith.constant 0 : index
    %158 = vector.load %arg7[%c287, %c0_51] : memref<342x128xbf16, #tpu.memory_space<vmem>>, vector<1x128xbf16>
    tpu.vector_store %arg7[%c287, %c0_51], %157 {strides = array<i32>} : memref<342x128xbf16, #tpu.memory_space<vmem>>, vector<1x128xbf16>,
    %159 = vector.extract_strided_slice %23 {offsets = [15, 0, 0], sizes = [1, 16, 128], strides = [1, 1, 1]} : vector<16x16x128xbf16> to vector<1x16x128xbf16>
    %160 = vector.shape_cast %159 : vector<1x16x128xbf16> to vector<16x128xbf16>
    %c289 = arith.constant 289 : index
    %c0_52 = arith.constant 0 : index
    %161 = vector.load %arg7[%c289, %c0_52] : memref<342x128xbf16, #tpu.memory_space<vmem>>, vector<16x128xbf16>
    tpu.vector_store %arg7[%c289, %c0_52], %160 {strides = array<i32>} : memref<342x128xbf16, #tpu.memory_space<vmem>>, vector<16x128xbf16>,
    %162 = vector.extract_strided_slice %23 {offsets = [15, 1, 0], sizes = [1, 1, 128], strides = [1, 1, 1]} : vector<16x16x128xbf16> to vector<1x1x128xbf16>
    %163 = vector.shape_cast %162 : vector<1x1x128xbf16> to vector<1x128xbf16>
    %c288 = arith.constant 288 : index
    %c0_53 = arith.constant 0 : index
    %164 = vector.load %arg7[%c288, %c0_53] : memref<342x128xbf16, #tpu.memory_space<vmem>>, vector<1x128xbf16>
    tpu.vector_store %arg7[%c288, %c0_53], %163 {strides = array<i32>} : memref<342x128xbf16, #tpu.memory_space<vmem>>, vector<1x128xbf16>,
    %165 = vector.extract_strided_slice %23 {offsets = [15, 14, 0], sizes = [1, 1, 128], strides = [1, 1, 1]} : vector<16x16x128xbf16> to vector<1x1x128xbf16>
    %166 = vector.shape_cast %165 : vector<1x1x128xbf16> to vector<1x128xbf16>
    %c305 = arith.constant 305 : index
    %c0_54 = arith.constant 0 : index
    %167 = vector.load %arg7[%c305, %c0_54] : memref<342x128xbf16, #tpu.memory_space<vmem>>, vector<1x128xbf16>
    tpu.vector_store %arg7[%c305, %c0_54], %166 {strides = array<i32>} : memref<342x128xbf16, #tpu.memory_space<vmem>>, vector<1x128xbf16>,
    %168 = vector.extract_strided_slice %23 {offsets = [1, 0, 0], sizes = [1, 16, 128], strides = [1, 1, 1]} : vector<16x16x128xbf16> to vector<1x16x128xbf16>
    %169 = vector.shape_cast %168 : vector<1x16x128xbf16> to vector<16x128xbf16>
    %c1 = arith.constant 1 : index
    %c0_55 = arith.constant 0 : index
    %170 = vector.load %arg7[%c1, %c0_55] : memref<342x128xbf16, #tpu.memory_space<vmem>>, vector<16x128xbf16>
    tpu.vector_store %arg7[%c1, %c0_55], %169 {strides = array<i32>} : memref<342x128xbf16, #tpu.memory_space<vmem>>, vector<16x128xbf16>,
    %171 = vector.extract_strided_slice %23 {offsets = [1, 1, 0], sizes = [1, 1, 128], strides = [1, 1, 1]} : vector<16x16x128xbf16> to vector<1x1x128xbf16>
    %172 = vector.shape_cast %171 : vector<1x1x128xbf16> to vector<1x128xbf16>
    %c0_56 = arith.constant 0 : index
    %c0_57 = arith.constant 0 : index
    %173 = vector.load %arg7[%c0_56, %c0_57] : memref<342x128xbf16, #tpu.memory_space<vmem>>, vector<1x128xbf16>
    tpu.vector_store %arg7[%c0_56, %c0_57], %172 {strides = array<i32>} : memref<342x128xbf16, #tpu.memory_space<vmem>>, vector<1x128xbf16>,
    %174 = vector.extract_strided_slice %23 {offsets = [1, 14, 0], sizes = [1, 1, 128], strides = [1, 1, 1]} : vector<16x16x128xbf16> to vector<1x1x128xbf16>
    %175 = vector.shape_cast %174 : vector<1x1x128xbf16> to vector<1x128xbf16>
    %c17 = arith.constant 17 : index
    %c0_58 = arith.constant 0 : index
    %176 = vector.load %arg7[%c17, %c0_58] : memref<342x128xbf16, #tpu.memory_space<vmem>>, vector<1x128xbf16>
    tpu.vector_store %arg7[%c17, %c0_58], %175 {strides = array<i32>} : memref<342x128xbf16, #tpu.memory_space<vmem>>, vector<1x128xbf16>,
    %177 = vector.extract_strided_slice %23 {offsets = [14, 0, 0], sizes = [1, 16, 128], strides = [1, 1, 1]} : vector<16x16x128xbf16> to vector<1x16x128xbf16>
    %178 = vector.shape_cast %177 : vector<1x16x128xbf16> to vector<16x128xbf16>
    %c307 = arith.constant 307 : index
    %c0_59 = arith.constant 0 : index
    %179 = vector.load %arg7[%c307, %c0_59] : memref<342x128xbf16, #tpu.memory_space<vmem>>, vector<16x128xbf16>
    tpu.vector_store %arg7[%c307, %c0_59], %178 {strides = array<i32>} : memref<342x128xbf16, #tpu.memory_space<vmem>>, vector<16x128xbf16>,
    %180 = vector.extract_strided_slice %23 {offsets = [14, 1, 0], sizes = [1, 1, 128], strides = [1, 1, 1]} : vector<16x16x128xbf16> to vector<1x1x128xbf16>
    %181 = vector.shape_cast %180 : vector<1x1x128xbf16> to vector<1x128xbf16>
    %c306 = arith.constant 306 : index
    %c0_60 = arith.constant 0 : index
    %182 = vector.load %arg7[%c306, %c0_60] : memref<342x128xbf16, #tpu.memory_space<vmem>>, vector<1x128xbf16>
    tpu.vector_store %arg7[%c306, %c0_60], %181 {strides = array<i32>} : memref<342x128xbf16, #tpu.memory_space<vmem>>, vector<1x128xbf16>,
    %183 = vector.extract_strided_slice %23 {offsets = [14, 14, 0], sizes = [1, 1, 128], strides = [1, 1, 1]} : vector<16x16x128xbf16> to vector<1x1x128xbf16>
    %184 = vector.shape_cast %183 : vector<1x1x128xbf16> to vector<1x128xbf16>
    %c323 = arith.constant 323 : index
    %c0_61 = arith.constant 0 : index
    %185 = vector.load %arg7[%c323, %c0_61] : memref<342x128xbf16, #tpu.memory_space<vmem>>, vector<1x128xbf16>
    tpu.vector_store %arg7[%c323, %c0_61], %184 {strides = array<i32>} : memref<342x128xbf16, #tpu.memory_space<vmem>>, vector<1x128xbf16>,
    %c0_62 = arith.constant 0 : index
    %c0_63 = arith.constant 0 : index
    %186 = vector.load %arg7[%c0_62, %c0_63] : memref<342x128xbf16, #tpu.memory_space<vmem>>, vector<288x128xbf16>
    %c0_64 = arith.constant 0 : index
    %c0_65 = arith.constant 0 : index
    %c0_66 = arith.constant 0 : index
    %187 = vector.load %arg2[%c0_64, %c0_65, %c0_66] : memref<9x128x128xbf16, #tpu.memory_space<vmem>>, vector<1x128x128xbf16>
    %188 = vector.shape_cast %187 : vector<1x128x128xbf16> to vector<128x128xbf16>
    %cst_67 = arith.constant dense<0.000000e+00> : vector<288x128xf32>
    %189 = tpu.matmul %186, %188, %cst_67 {dimension_numbers = #tpu.dot_dimension_numbers<[1], [0], [0], [1], [0, 0, 1, 1], [], []>} : vector<288x128xbf16>, vector<128x128xbf16>, vector<288x128xf32> -> vector<288x128xf32>
    %c1_68 = arith.constant 1 : index
    %c0_69 = arith.constant 0 : index
    %190 = vector.load %arg7[%c1_68, %c0_69] : memref<342x128xbf16, #tpu.memory_space<vmem>>, vector<288x128xbf16>
    %c1_70 = arith.constant 1 : index
    %c0_71 = arith.constant 0 : index
    %c0_72 = arith.constant 0 : index
    %191 = vector.load %arg2[%c1_70, %c0_71, %c0_72] : memref<9x128x128xbf16, #tpu.memory_space<vmem>>, vector<1x128x128xbf16>
    %192 = vector.shape_cast %191 : vector<1x128x128xbf16> to vector<128x128xbf16>
    %cst_73 = arith.constant dense<0.000000e+00> : vector<288x128xf32>
    %193 = tpu.matmul %190, %192, %cst_73 {dimension_numbers = #tpu.dot_dimension_numbers<[1], [0], [0], [1], [0, 0, 1, 1], [], []>} : vector<288x128xbf16>, vector<128x128xbf16>, vector<288x128xf32> -> vector<288x128xf32>
    %194 = arith.addf %189, %193 : vector<288x128xf32>
    %c2 = arith.constant 2 : index
    %c0_74 = arith.constant 0 : index
    %195 = vector.load %arg7[%c2, %c0_74] : memref<342x128xbf16, #tpu.memory_space<vmem>>, vector<288x128xbf16>
    %c2_75 = arith.constant 2 : index
    %c0_76 = arith.constant 0 : index
    %c0_77 = arith.constant 0 : index
    %196 = vector.load %arg2[%c2_75, %c0_76, %c0_77] : memref<9x128x128xbf16, #tpu.memory_space<vmem>>, vector<1x128x128xbf16>
    %197 = vector.shape_cast %196 : vector<1x128x128xbf16> to vector<128x128xbf16>
    %cst_78 = arith.constant dense<0.000000e+00> : vector<288x128xf32>
    %198 = tpu.matmul %195, %197, %cst_78 {dimension_numbers = #tpu.dot_dimension_numbers<[1], [0], [0], [1], [0, 0, 1, 1], [], []>} : vector<288x128xbf16>, vector<128x128xbf16>, vector<288x128xf32> -> vector<288x128xf32>
    %199 = arith.addf %194, %198 : vector<288x128xf32>
    %c18_79 = arith.constant 18 : index
    %c0_80 = arith.constant 0 : index
    %200 = vector.load %arg7[%c18_79, %c0_80] : memref<342x128xbf16, #tpu.memory_space<vmem>>, vector<288x128xbf16>
    %c3 = arith.constant 3 : index
    %c0_81 = arith.constant 0 : index
    %c0_82 = arith.constant 0 : index
    %201 = vector.load %arg2[%c3, %c0_81, %c0_82] : memref<9x128x128xbf16, #tpu.memory_space<vmem>>, vector<1x128x128xbf16>
    %202 = vector.shape_cast %201 : vector<1x128x128xbf16> to vector<128x128xbf16>
    %cst_83 = arith.constant dense<0.000000e+00> : vector<288x128xf32>
    %203 = tpu.matmul %200, %202, %cst_83 {dimension_numbers = #tpu.dot_dimension_numbers<[1], [0], [0], [1], [0, 0, 1, 1], [], []>} : vector<288x128xbf16>, vector<128x128xbf16>, vector<288x128xf32> -> vector<288x128xf32>
    %c19_84 = arith.constant 19 : index
    %c0_85 = arith.constant 0 : index
    %204 = vector.load %arg7[%c19_84, %c0_85] : memref<342x128xbf16, #tpu.memory_space<vmem>>, vector<288x128xbf16>
    %c4 = arith.constant 4 : index
    %c0_86 = arith.constant 0 : index
    %c0_87 = arith.constant 0 : index
    %205 = vector.load %arg2[%c4, %c0_86, %c0_87] : memref<9x128x128xbf16, #tpu.memory_space<vmem>>, vector<1x128x128xbf16>
    %206 = vector.shape_cast %205 : vector<1x128x128xbf16> to vector<128x128xbf16>
    %cst_88 = arith.constant dense<0.000000e+00> : vector<288x128xf32>
    %207 = tpu.matmul %204, %206, %cst_88 {dimension_numbers = #tpu.dot_dimension_numbers<[1], [0], [0], [1], [0, 0, 1, 1], [], []>} : vector<288x128xbf16>, vector<128x128xbf16>, vector<288x128xf32> -> vector<288x128xf32>
    %208 = arith.addf %203, %207 : vector<288x128xf32>
    %c20 = arith.constant 20 : index
    %c0_89 = arith.constant 0 : index
    %209 = vector.load %arg7[%c20, %c0_89] : memref<342x128xbf16, #tpu.memory_space<vmem>>, vector<288x128xbf16>
    %c5 = arith.constant 5 : index
    %c0_90 = arith.constant 0 : index
    %c0_91 = arith.constant 0 : index
    %210 = vector.load %arg2[%c5, %c0_90, %c0_91] : memref<9x128x128xbf16, #tpu.memory_space<vmem>>, vector<1x128x128xbf16>
    %211 = vector.shape_cast %210 : vector<1x128x128xbf16> to vector<128x128xbf16>
    %cst_92 = arith.constant dense<0.000000e+00> : vector<288x128xf32>
    %212 = tpu.matmul %209, %211, %cst_92 {dimension_numbers = #tpu.dot_dimension_numbers<[1], [0], [0], [1], [0, 0, 1, 1], [], []>} : vector<288x128xbf16>, vector<128x128xbf16>, vector<288x128xf32> -> vector<288x128xf32>
    %213 = arith.addf %208, %212 : vector<288x128xf32>
    %c36_93 = arith.constant 36 : index
    %c0_94 = arith.constant 0 : index
    %214 = vector.load %arg7[%c36_93, %c0_94] : memref<342x128xbf16, #tpu.memory_space<vmem>>, vector<288x128xbf16>
    %c6 = arith.constant 6 : index
    %c0_95 = arith.constant 0 : index
    %c0_96 = arith.constant 0 : index
    %215 = vector.load %arg2[%c6, %c0_95, %c0_96] : memref<9x128x128xbf16, #tpu.memory_space<vmem>>, vector<1x128x128xbf16>
    %216 = vector.shape_cast %215 : vector<1x128x128xbf16> to vector<128x128xbf16>
    %cst_97 = arith.constant dense<0.000000e+00> : vector<288x128xf32>
    %217 = tpu.matmul %214, %216, %cst_97 {dimension_numbers = #tpu.dot_dimension_numbers<[1], [0], [0], [1], [0, 0, 1, 1], [], []>} : vector<288x128xbf16>, vector<128x128xbf16>, vector<288x128xf32> -> vector<288x128xf32>
    %c37_98 = arith.constant 37 : index
    %c0_99 = arith.constant 0 : index
    %218 = vector.load %arg7[%c37_98, %c0_99] : memref<342x128xbf16, #tpu.memory_space<vmem>>, vector<288x128xbf16>
    %c7 = arith.constant 7 : index
    %c0_100 = arith.constant 0 : index
    %c0_101 = arith.constant 0 : index
    %219 = vector.load %arg2[%c7, %c0_100, %c0_101] : memref<9x128x128xbf16, #tpu.memory_space<vmem>>, vector<1x128x128xbf16>
    %220 = vector.shape_cast %219 : vector<1x128x128xbf16> to vector<128x128xbf16>
    %cst_102 = arith.constant dense<0.000000e+00> : vector<288x128xf32>
    %221 = tpu.matmul %218, %220, %cst_102 {dimension_numbers = #tpu.dot_dimension_numbers<[1], [0], [0], [1], [0, 0, 1, 1], [], []>} : vector<288x128xbf16>, vector<128x128xbf16>, vector<288x128xf32> -> vector<288x128xf32>
    %222 = arith.addf %217, %221 : vector<288x128xf32>
    %c38 = arith.constant 38 : index
    %c0_103 = arith.constant 0 : index
    %223 = vector.load %arg7[%c38, %c0_103] : memref<342x128xbf16, #tpu.memory_space<vmem>>, vector<288x128xbf16>
    %c8 = arith.constant 8 : index
    %c0_104 = arith.constant 0 : index
    %c0_105 = arith.constant 0 : index
    %224 = vector.load %arg2[%c8, %c0_104, %c0_105] : memref<9x128x128xbf16, #tpu.memory_space<vmem>>, vector<1x128x128xbf16>
    %225 = vector.shape_cast %224 : vector<1x128x128xbf16> to vector<128x128xbf16>
    %cst_106 = arith.constant dense<0.000000e+00> : vector<288x128xf32>
    %226 = tpu.matmul %223, %225, %cst_106 {dimension_numbers = #tpu.dot_dimension_numbers<[1], [0], [0], [1], [0, 0, 1, 1], [], []>} : vector<288x128xbf16>, vector<128x128xbf16>, vector<288x128xf32> -> vector<288x128xf32>
    %227 = arith.addf %222, %226 : vector<288x128xf32>
    %228 = arith.addf %199, %213 : vector<288x128xf32>
    %229 = arith.addf %228, %227 : vector<288x128xf32>
    %c0_107 = arith.constant 0 : index
    %c0_108 = arith.constant 0 : index
    %230 = vector.load %arg3[%c0_107, %c0_108] : memref<1x128xf32, #tpu.memory_space<vmem>>, vector<1x128xf32>
    %231 = vector.broadcast %230 : vector<1x128xf32> to vector<288x128xf32>
    %232 = arith.addf %229, %231 : vector<288x128xf32>
    %cst_109 = arith.constant 0.000000e+00 : f32
    %233 = vector.shape_cast %19 : vector<288x1xi1> to vector<288x1xi1>
    %234 = vector.broadcast %233 : vector<288x1xi1> to vector<288x128xi1>
    %235 = vector.broadcast %cst_109 : f32 to vector<288x128xf32>
    %236 = arith.select %234, %232, %235 : vector<288x128xi1>, vector<288x128xf32>
    %cst_110 = arith.constant dense<0.000000e+00> : vector<128xf32>
    %237 = vector.multi_reduction <add>, %236, %cst_110 [0] : vector<288x128xf32> to vector<128xf32>
    %238 = vector.shape_cast %237 : vector<128xf32> to vector<1x128xf32>
    %cst_111 = arith.constant 3.906250e-03 : f32
    %239 = vector.broadcast %cst_111 : f32 to vector<1x128xf32>
    %240 = arith.mulf %238, %239 : vector<1x128xf32>
    %241 = arith.mulf %232, %232 : vector<288x128xf32>
    %cst_112 = arith.constant 0.000000e+00 : f32
    %242 = vector.shape_cast %19 : vector<288x1xi1> to vector<288x1xi1>
    %243 = vector.broadcast %242 : vector<288x1xi1> to vector<288x128xi1>
    %244 = vector.broadcast %cst_112 : f32 to vector<288x128xf32>
    %245 = arith.select %243, %241, %244 : vector<288x128xi1>, vector<288x128xf32>
    %cst_113 = arith.constant dense<0.000000e+00> : vector<128xf32>
    %246 = vector.multi_reduction <add>, %245, %cst_113 [0] : vector<288x128xf32> to vector<128xf32>
    %247 = vector.shape_cast %246 : vector<128xf32> to vector<1x128xf32>
    %cst_114 = arith.constant 3.906250e-03 : f32
    %248 = vector.broadcast %cst_114 : f32 to vector<1x128xf32>
    %249 = arith.mulf %247, %248 : vector<1x128xf32>
    %250 = arith.mulf %240, %240 : vector<1x128xf32>
    %251 = arith.subf %249, %250 : vector<1x128xf32>
    %252 = vector.broadcast %240 : vector<1x128xf32> to vector<288x128xf32>
    %253 = arith.subf %232, %252 : vector<288x128xf32>
    %cst_115 = arith.constant 9.99999974E-6 : f32
    %254 = vector.broadcast %cst_115 : f32 to vector<1x128xf32>
    %255 = arith.addf %251, %254 : vector<1x128xf32>
    %256 = math.rsqrt %255 : vector<1x128xf32>
    %257 = vector.broadcast %256 : vector<1x128xf32> to vector<288x128xf32>
    %258 = arith.mulf %253, %257 : vector<288x128xf32>
    %cst_116 = arith.constant 0.000000e+00 : f32
    %259 = vector.broadcast %cst_116 : f32 to vector<288x128xf32>
    %260 = arith.maximumf %258, %259 : vector<288x128xf32>
    %261 = arith.truncf %260 : vector<288x128xf32> to vector<288x128xbf16>
    %c19_117 = arith.constant 19 : index
    %c0_118 = arith.constant 0 : index
    %262 = vector.load %arg7[%c19_117, %c0_118] : memref<342x128xbf16, #tpu.memory_space<vmem>>, vector<288x128xbf16>
    tpu.vector_store %arg7[%c19_117, %c0_118], %261 {strides = array<i32>} : memref<342x128xbf16, #tpu.memory_space<vmem>>, vector<288x128xbf16>,
    %263 = vector.extract_strided_slice %261 {offsets = [1, 0], sizes = [1, 128], strides = [1, 1]} : vector<288x128xbf16> to vector<1x128xbf16>
    %c18_119 = arith.constant 18 : index
    %c0_120 = arith.constant 0 : index
    %264 = vector.load %arg7[%c18_119, %c0_120] : memref<342x128xbf16, #tpu.memory_space<vmem>>, vector<1x128xbf16>
    tpu.vector_store %arg7[%c18_119, %c0_120], %263 {strides = array<i32>} : memref<342x128xbf16, #tpu.memory_space<vmem>>, vector<1x128xbf16>,
    %265 = vector.extract_strided_slice %261 {offsets = [14, 0], sizes = [1, 128], strides = [1, 1]} : vector<288x128xbf16> to vector<1x128xbf16>
    %c35_121 = arith.constant 35 : index
    %c0_122 = arith.constant 0 : index
    %266 = vector.load %arg7[%c35_121, %c0_122] : memref<342x128xbf16, #tpu.memory_space<vmem>>, vector<1x128xbf16>
    tpu.vector_store %arg7[%c35_121, %c0_122], %265 {strides = array<i32>} : memref<342x128xbf16, #tpu.memory_space<vmem>>, vector<1x128xbf16>,
    %267 = vector.extract_strided_slice %261 {offsets = [19, 0], sizes = [1, 128], strides = [1, 1]} : vector<288x128xbf16> to vector<1x128xbf16>
    %c36_123 = arith.constant 36 : index
    %c0_124 = arith.constant 0 : index
    %268 = vector.load %arg7[%c36_123, %c0_124] : memref<342x128xbf16, #tpu.memory_space<vmem>>, vector<1x128xbf16>
    tpu.vector_store %arg7[%c36_123, %c0_124], %267 {strides = array<i32>} : memref<342x128xbf16, #tpu.memory_space<vmem>>, vector<1x128xbf16>,
    %269 = vector.extract_strided_slice %261 {offsets = [32, 0], sizes = [1, 128], strides = [1, 1]} : vector<288x128xbf16> to vector<1x128xbf16>
    %c53_125 = arith.constant 53 : index
    %c0_126 = arith.constant 0 : index
    %270 = vector.load %arg7[%c53_125, %c0_126] : memref<342x128xbf16, #tpu.memory_space<vmem>>, vector<1x128xbf16>
    tpu.vector_store %arg7[%c53_125, %c0_126], %269 {strides = array<i32>} : memref<342x128xbf16, #tpu.memory_space<vmem>>, vector<1x128xbf16>,
    %271 = vector.extract_strided_slice %261 {offsets = [37, 0], sizes = [1, 128], strides = [1, 1]} : vector<288x128xbf16> to vector<1x128xbf16>
    %c54_127 = arith.constant 54 : index
    %c0_128 = arith.constant 0 : index
    %272 = vector.load %arg7[%c54_127, %c0_128] : memref<342x128xbf16, #tpu.memory_space<vmem>>, vector<1x128xbf16>
    tpu.vector_store %arg7[%c54_127, %c0_128], %271 {strides = array<i32>} : memref<342x128xbf16, #tpu.memory_space<vmem>>, vector<1x128xbf16>,
    %273 = vector.extract_strided_slice %261 {offsets = [50, 0], sizes = [1, 128], strides = [1, 1]} : vector<288x128xbf16> to vector<1x128xbf16>
    %c71_129 = arith.constant 71 : index
    %c0_130 = arith.constant 0 : index
    %274 = vector.load %arg7[%c71_129, %c0_130] : memref<342x128xbf16, #tpu.memory_space<vmem>>, vector<1x128xbf16>
    tpu.vector_store %arg7[%c71_129, %c0_130], %273 {strides = array<i32>} : memref<342x128xbf16, #tpu.memory_space<vmem>>, vector<1x128xbf16>,
    %275 = vector.extract_strided_slice %261 {offsets = [55, 0], sizes = [1, 128], strides = [1, 1]} : vector<288x128xbf16> to vector<1x128xbf16>
    %c72_131 = arith.constant 72 : index
    %c0_132 = arith.constant 0 : index
    %276 = vector.load %arg7[%c72_131, %c0_132] : memref<342x128xbf16, #tpu.memory_space<vmem>>, vector<1x128xbf16>
    tpu.vector_store %arg7[%c72_131, %c0_132], %275 {strides = array<i32>} : memref<342x128xbf16, #tpu.memory_space<vmem>>, vector<1x128xbf16>,
    %277 = vector.extract_strided_slice %261 {offsets = [68, 0], sizes = [1, 128], strides = [1, 1]} : vector<288x128xbf16> to vector<1x128xbf16>
    %c89_133 = arith.constant 89 : index
    %c0_134 = arith.constant 0 : index
    %278 = vector.load %arg7[%c89_133, %c0_134] : memref<342x128xbf16, #tpu.memory_space<vmem>>, vector<1x128xbf16>
    tpu.vector_store %arg7[%c89_133, %c0_134], %277 {strides = array<i32>} : memref<342x128xbf16, #tpu.memory_space<vmem>>, vector<1x128xbf16>,
    %279 = vector.extract_strided_slice %261 {offsets = [73, 0], sizes = [1, 128], strides = [1, 1]} : vector<288x128xbf16> to vector<1x128xbf16>
    %c90_135 = arith.constant 90 : index
    %c0_136 = arith.constant 0 : index
    %280 = vector.load %arg7[%c90_135, %c0_136] : memref<342x128xbf16, #tpu.memory_space<vmem>>, vector<1x128xbf16>
    tpu.vector_store %arg7[%c90_135, %c0_136], %279 {strides = array<i32>} : memref<342x128xbf16, #tpu.memory_space<vmem>>, vector<1x128xbf16>,
    %281 = vector.extract_strided_slice %261 {offsets = [86, 0], sizes = [1, 128], strides = [1, 1]} : vector<288x128xbf16> to vector<1x128xbf16>
    %c107_137 = arith.constant 107 : index
    %c0_138 = arith.constant 0 : index
    %282 = vector.load %arg7[%c107_137, %c0_138] : memref<342x128xbf16, #tpu.memory_space<vmem>>, vector<1x128xbf16>
    tpu.vector_store %arg7[%c107_137, %c0_138], %281 {strides = array<i32>} : memref<342x128xbf16, #tpu.memory_space<vmem>>, vector<1x128xbf16>,
    %283 = vector.extract_strided_slice %261 {offsets = [91, 0], sizes = [1, 128], strides = [1, 1]} : vector<288x128xbf16> to vector<1x128xbf16>
    %c108_139 = arith.constant 108 : index
    %c0_140 = arith.constant 0 : index
    %284 = vector.load %arg7[%c108_139, %c0_140] : memref<342x128xbf16, #tpu.memory_space<vmem>>, vector<1x128xbf16>
    tpu.vector_store %arg7[%c108_139, %c0_140], %283 {strides = array<i32>} : memref<342x128xbf16, #tpu.memory_space<vmem>>, vector<1x128xbf16>,
    %285 = vector.extract_strided_slice %261 {offsets = [104, 0], sizes = [1, 128], strides = [1, 1]} : vector<288x128xbf16> to vector<1x128xbf16>
    %c125_141 = arith.constant 125 : index
    %c0_142 = arith.constant 0 : index
    %286 = vector.load %arg7[%c125_141, %c0_142] : memref<342x128xbf16, #tpu.memory_space<vmem>>, vector<1x128xbf16>
    tpu.vector_store %arg7[%c125_141, %c0_142], %285 {strides = array<i32>} : memref<342x128xbf16, #tpu.memory_space<vmem>>, vector<1x128xbf16>,
    %287 = vector.extract_strided_slice %261 {offsets = [109, 0], sizes = [1, 128], strides = [1, 1]} : vector<288x128xbf16> to vector<1x128xbf16>
    %c126_143 = arith.constant 126 : index
    %c0_144 = arith.constant 0 : index
    %288 = vector.load %arg7[%c126_143, %c0_144] : memref<342x128xbf16, #tpu.memory_space<vmem>>, vector<1x128xbf16>
    tpu.vector_store %arg7[%c126_143, %c0_144], %287 {strides = array<i32>} : memref<342x128xbf16, #tpu.memory_space<vmem>>, vector<1x128xbf16>,
    %289 = vector.extract_strided_slice %261 {offsets = [122, 0], sizes = [1, 128], strides = [1, 1]} : vector<288x128xbf16> to vector<1x128xbf16>
    %c143_145 = arith.constant 143 : index
    %c0_146 = arith.constant 0 : index
    %290 = vector.load %arg7[%c143_145, %c0_146] : memref<342x128xbf16, #tpu.memory_space<vmem>>, vector<1x128xbf16>
    tpu.vector_store %arg7[%c143_145, %c0_146], %289 {strides = array<i32>} : memref<342x128xbf16, #tpu.memory_space<vmem>>, vector<1x128xbf16>,
    %291 = vector.extract_strided_slice %261 {offsets = [127, 0], sizes = [1, 128], strides = [1, 1]} : vector<288x128xbf16> to vector<1x128xbf16>
    %c144_147 = arith.constant 144 : index
    %c0_148 = arith.constant 0 : index
    %292 = vector.load %arg7[%c144_147, %c0_148] : memref<342x128xbf16, #tpu.memory_space<vmem>>, vector<1x128xbf16>
    tpu.vector_store %arg7[%c144_147, %c0_148], %291 {strides = array<i32>} : memref<342x128xbf16, #tpu.memory_space<vmem>>, vector<1x128xbf16>,
    %293 = vector.extract_strided_slice %261 {offsets = [140, 0], sizes = [1, 128], strides = [1, 1]} : vector<288x128xbf16> to vector<1x128xbf16>
    %c161_149 = arith.constant 161 : index
    %c0_150 = arith.constant 0 : index
    %294 = vector.load %arg7[%c161_149, %c0_150] : memref<342x128xbf16, #tpu.memory_space<vmem>>, vector<1x128xbf16>
    tpu.vector_store %arg7[%c161_149, %c0_150], %293 {strides = array<i32>} : memref<342x128xbf16, #tpu.memory_space<vmem>>, vector<1x128xbf16>,
    %295 = vector.extract_strided_slice %261 {offsets = [145, 0], sizes = [1, 128], strides = [1, 1]} : vector<288x128xbf16> to vector<1x128xbf16>
    %c162_151 = arith.constant 162 : index
    %c0_152 = arith.constant 0 : index
    %296 = vector.load %arg7[%c162_151, %c0_152] : memref<342x128xbf16, #tpu.memory_space<vmem>>, vector<1x128xbf16>
    tpu.vector_store %arg7[%c162_151, %c0_152], %295 {strides = array<i32>} : memref<342x128xbf16, #tpu.memory_space<vmem>>, vector<1x128xbf16>,
    %297 = vector.extract_strided_slice %261 {offsets = [158, 0], sizes = [1, 128], strides = [1, 1]} : vector<288x128xbf16> to vector<1x128xbf16>
    %c179_153 = arith.constant 179 : index
    %c0_154 = arith.constant 0 : index
    %298 = vector.load %arg7[%c179_153, %c0_154] : memref<342x128xbf16, #tpu.memory_space<vmem>>, vector<1x128xbf16>
    tpu.vector_store %arg7[%c179_153, %c0_154], %297 {strides = array<i32>} : memref<342x128xbf16, #tpu.memory_space<vmem>>, vector<1x128xbf16>,
    %299 = vector.extract_strided_slice %261 {offsets = [163, 0], sizes = [1, 128], strides = [1, 1]} : vector<288x128xbf16> to vector<1x128xbf16>
    %c180_155 = arith.constant 180 : index
    %c0_156 = arith.constant 0 : index
    %300 = vector.load %arg7[%c180_155, %c0_156] : memref<342x128xbf16, #tpu.memory_space<vmem>>, vector<1x128xbf16>
    tpu.vector_store %arg7[%c180_155, %c0_156], %299 {strides = array<i32>} : memref<342x128xbf16, #tpu.memory_space<vmem>>, vector<1x128xbf16>,
    %301 = vector.extract_strided_slice %261 {offsets = [176, 0], sizes = [1, 128], strides = [1, 1]} : vector<288x128xbf16> to vector<1x128xbf16>
    %c197_157 = arith.constant 197 : index
    %c0_158 = arith.constant 0 : index
    %302 = vector.load %arg7[%c197_157, %c0_158] : memref<342x128xbf16, #tpu.memory_space<vmem>>, vector<1x128xbf16>
    tpu.vector_store %arg7[%c197_157, %c0_158], %301 {strides = array<i32>} : memref<342x128xbf16, #tpu.memory_space<vmem>>, vector<1x128xbf16>,
    %303 = vector.extract_strided_slice %261 {offsets = [181, 0], sizes = [1, 128], strides = [1, 1]} : vector<288x128xbf16> to vector<1x128xbf16>
    %c198_159 = arith.constant 198 : index
    %c0_160 = arith.constant 0 : index
    %304 = vector.load %arg7[%c198_159, %c0_160] : memref<342x128xbf16, #tpu.memory_space<vmem>>, vector<1x128xbf16>
    tpu.vector_store %arg7[%c198_159, %c0_160], %303 {strides = array<i32>} : memref<342x128xbf16, #tpu.memory_space<vmem>>, vector<1x128xbf16>,
    %305 = vector.extract_strided_slice %261 {offsets = [194, 0], sizes = [1, 128], strides = [1, 1]} : vector<288x128xbf16> to vector<1x128xbf16>
    %c215_161 = arith.constant 215 : index
    %c0_162 = arith.constant 0 : index
    %306 = vector.load %arg7[%c215_161, %c0_162] : memref<342x128xbf16, #tpu.memory_space<vmem>>, vector<1x128xbf16>
    tpu.vector_store %arg7[%c215_161, %c0_162], %305 {strides = array<i32>} : memref<342x128xbf16, #tpu.memory_space<vmem>>, vector<1x128xbf16>,
    %307 = vector.extract_strided_slice %261 {offsets = [199, 0], sizes = [1, 128], strides = [1, 1]} : vector<288x128xbf16> to vector<1x128xbf16>
    %c216_163 = arith.constant 216 : index
    %c0_164 = arith.constant 0 : index
    %308 = vector.load %arg7[%c216_163, %c0_164] : memref<342x128xbf16, #tpu.memory_space<vmem>>, vector<1x128xbf16>
    tpu.vector_store %arg7[%c216_163, %c0_164], %307 {strides = array<i32>} : memref<342x128xbf16, #tpu.memory_space<vmem>>, vector<1x128xbf16>,
    %309 = vector.extract_strided_slice %261 {offsets = [212, 0], sizes = [1, 128], strides = [1, 1]} : vector<288x128xbf16> to vector<1x128xbf16>
    %c233_165 = arith.constant 233 : index
    %c0_166 = arith.constant 0 : index
    %310 = vector.load %arg7[%c233_165, %c0_166] : memref<342x128xbf16, #tpu.memory_space<vmem>>, vector<1x128xbf16>
    tpu.vector_store %arg7[%c233_165, %c0_166], %309 {strides = array<i32>} : memref<342x128xbf16, #tpu.memory_space<vmem>>, vector<1x128xbf16>,
    %311 = vector.extract_strided_slice %261 {offsets = [217, 0], sizes = [1, 128], strides = [1, 1]} : vector<288x128xbf16> to vector<1x128xbf16>
    %c234_167 = arith.constant 234 : index
    %c0_168 = arith.constant 0 : index
    %312 = vector.load %arg7[%c234_167, %c0_168] : memref<342x128xbf16, #tpu.memory_space<vmem>>, vector<1x128xbf16>
    tpu.vector_store %arg7[%c234_167, %c0_168], %311 {strides = array<i32>} : memref<342x128xbf16, #tpu.memory_space<vmem>>, vector<1x128xbf16>,
    %313 = vector.extract_strided_slice %261 {offsets = [230, 0], sizes = [1, 128], strides = [1, 1]} : vector<288x128xbf16> to vector<1x128xbf16>
    %c251_169 = arith.constant 251 : index
    %c0_170 = arith.constant 0 : index
    %314 = vector.load %arg7[%c251_169, %c0_170] : memref<342x128xbf16, #tpu.memory_space<vmem>>, vector<1x128xbf16>
    tpu.vector_store %arg7[%c251_169, %c0_170], %313 {strides = array<i32>} : memref<342x128xbf16, #tpu.memory_space<vmem>>, vector<1x128xbf16>,
    %315 = vector.extract_strided_slice %261 {offsets = [235, 0], sizes = [1, 128], strides = [1, 1]} : vector<288x128xbf16> to vector<1x128xbf16>
    %c252_171 = arith.constant 252 : index
    %c0_172 = arith.constant 0 : index
    %316 = vector.load %arg7[%c252_171, %c0_172] : memref<342x128xbf16, #tpu.memory_space<vmem>>, vector<1x128xbf16>
    tpu.vector_store %arg7[%c252_171, %c0_172], %315 {strides = array<i32>} : memref<342x128xbf16, #tpu.memory_space<vmem>>, vector<1x128xbf16>,
    %317 = vector.extract_strided_slice %261 {offsets = [248, 0], sizes = [1, 128], strides = [1, 1]} : vector<288x128xbf16> to vector<1x128xbf16>
    %c269_173 = arith.constant 269 : index
    %c0_174 = arith.constant 0 : index
    %318 = vector.load %arg7[%c269_173, %c0_174] : memref<342x128xbf16, #tpu.memory_space<vmem>>, vector<1x128xbf16>
    tpu.vector_store %arg7[%c269_173, %c0_174], %317 {strides = array<i32>} : memref<342x128xbf16, #tpu.memory_space<vmem>>, vector<1x128xbf16>,
    %319 = vector.extract_strided_slice %261 {offsets = [253, 0], sizes = [1, 128], strides = [1, 1]} : vector<288x128xbf16> to vector<1x128xbf16>
    %c270_175 = arith.constant 270 : index
    %c0_176 = arith.constant 0 : index
    %320 = vector.load %arg7[%c270_175, %c0_176] : memref<342x128xbf16, #tpu.memory_space<vmem>>, vector<1x128xbf16>
    tpu.vector_store %arg7[%c270_175, %c0_176], %319 {strides = array<i32>} : memref<342x128xbf16, #tpu.memory_space<vmem>>, vector<1x128xbf16>,
    %321 = vector.extract_strided_slice %261 {offsets = [266, 0], sizes = [1, 128], strides = [1, 1]} : vector<288x128xbf16> to vector<1x128xbf16>
    %c287_177 = arith.constant 287 : index
    %c0_178 = arith.constant 0 : index
    %322 = vector.load %arg7[%c287_177, %c0_178] : memref<342x128xbf16, #tpu.memory_space<vmem>>, vector<1x128xbf16>
    tpu.vector_store %arg7[%c287_177, %c0_178], %321 {strides = array<i32>} : memref<342x128xbf16, #tpu.memory_space<vmem>>, vector<1x128xbf16>,
    %323 = vector.extract_strided_slice %261 {offsets = [271, 0], sizes = [1, 128], strides = [1, 1]} : vector<288x128xbf16> to vector<1x128xbf16>
    %c288_179 = arith.constant 288 : index
    %c0_180 = arith.constant 0 : index
    %324 = vector.load %arg7[%c288_179, %c0_180] : memref<342x128xbf16, #tpu.memory_space<vmem>>, vector<1x128xbf16>
    tpu.vector_store %arg7[%c288_179, %c0_180], %323 {strides = array<i32>} : memref<342x128xbf16, #tpu.memory_space<vmem>>, vector<1x128xbf16>,
    %325 = vector.extract_strided_slice %261 {offsets = [284, 0], sizes = [1, 128], strides = [1, 1]} : vector<288x128xbf16> to vector<1x128xbf16>
    %c305_181 = arith.constant 305 : index
    %c0_182 = arith.constant 0 : index
    %326 = vector.load %arg7[%c305_181, %c0_182] : memref<342x128xbf16, #tpu.memory_space<vmem>>, vector<1x128xbf16>
    tpu.vector_store %arg7[%c305_181, %c0_182], %325 {strides = array<i32>} : memref<342x128xbf16, #tpu.memory_space<vmem>>, vector<1x128xbf16>,
    %327 = vector.extract_strided_slice %261 {offsets = [18, 0], sizes = [16, 128], strides = [1, 1]} : vector<288x128xbf16> to vector<16x128xbf16>
    %c1_183 = arith.constant 1 : index
    %c0_184 = arith.constant 0 : index
    %328 = vector.load %arg7[%c1_183, %c0_184] : memref<342x128xbf16, #tpu.memory_space<vmem>>, vector<16x128xbf16>
    tpu.vector_store %arg7[%c1_183, %c0_184], %327 {strides = array<i32>} : memref<342x128xbf16, #tpu.memory_space<vmem>>, vector<16x128xbf16>,
    %329 = vector.extract_strided_slice %261 {offsets = [19, 0], sizes = [1, 128], strides = [1, 1]} : vector<288x128xbf16> to vector<1x128xbf16>
    %c0_185 = arith.constant 0 : index
    %c0_186 = arith.constant 0 : index
    %330 = vector.load %arg7[%c0_185, %c0_186] : memref<342x128xbf16, #tpu.memory_space<vmem>>, vector<1x128xbf16>
    tpu.vector_store %arg7[%c0_185, %c0_186], %329 {strides = array<i32>} : memref<342x128xbf16, #tpu.memory_space<vmem>>, vector<1x128xbf16>,
    %331 = vector.extract_strided_slice %261 {offsets = [32, 0], sizes = [1, 128], strides = [1, 1]} : vector<288x128xbf16> to vector<1x128xbf16>
    %c17_187 = arith.constant 17 : index
    %c0_188 = arith.constant 0 : index
    %332 = vector.load %arg7[%c17_187, %c0_188] : memref<342x128xbf16, #tpu.memory_space<vmem>>, vector<1x128xbf16>
    tpu.vector_store %arg7[%c17_187, %c0_188], %331 {strides = array<i32>} : memref<342x128xbf16, #tpu.memory_space<vmem>>, vector<1x128xbf16>,
    %333 = vector.extract_strided_slice %261 {offsets = [252, 0], sizes = [16, 128], strides = [1, 1]} : vector<288x128xbf16> to vector<16x128xbf16>
    %c307_189 = arith.constant 307 : index
    %c0_190 = arith.constant 0 : index
    %334 = vector.load %arg7[%c307_189, %c0_190] : memref<342x128xbf16, #tpu.memory_space<vmem>>, vector<16x128xbf16>
    tpu.vector_store %arg7[%c307_189, %c0_190], %333 {strides = array<i32>} : memref<342x128xbf16, #tpu.memory_space<vmem>>, vector<16x128xbf16>,
    %335 = vector.extract_strided_slice %261 {offsets = [253, 0], sizes = [1, 128], strides = [1, 1]} : vector<288x128xbf16> to vector<1x128xbf16>
    %c306_191 = arith.constant 306 : index
    %c0_192 = arith.constant 0 : index
    %336 = vector.load %arg7[%c306_191, %c0_192] : memref<342x128xbf16, #tpu.memory_space<vmem>>, vector<1x128xbf16>
    tpu.vector_store %arg7[%c306_191, %c0_192], %335 {strides = array<i32>} : memref<342x128xbf16, #tpu.memory_space<vmem>>, vector<1x128xbf16>,
    %337 = vector.extract_strided_slice %261 {offsets = [266, 0], sizes = [1, 128], strides = [1, 1]} : vector<288x128xbf16> to vector<1x128xbf16>
    %c323_193 = arith.constant 323 : index
    %c0_194 = arith.constant 0 : index
    %338 = vector.load %arg7[%c323_193, %c0_194] : memref<342x128xbf16, #tpu.memory_space<vmem>>, vector<1x128xbf16>
    tpu.vector_store %arg7[%c323_193, %c0_194], %337 {strides = array<i32>} : memref<342x128xbf16, #tpu.memory_space<vmem>>, vector<1x128xbf16>,
    %c0_195 = arith.constant 0 : index
    %c0_196 = arith.constant 0 : index
    %339 = vector.load %arg7[%c0_195, %c0_196] : memref<342x128xbf16, #tpu.memory_space<vmem>>, vector<288x128xbf16>
    %c0_197 = arith.constant 0 : index
    %c0_198 = arith.constant 0 : index
    %c0_199 = arith.constant 0 : index
    %340 = vector.load %arg4[%c0_197, %c0_198, %c0_199] : memref<9x128x128xbf16, #tpu.memory_space<vmem>>, vector<1x128x128xbf16>
    %341 = vector.shape_cast %340 : vector<1x128x128xbf16> to vector<128x128xbf16>
    %cst_200 = arith.constant dense<0.000000e+00> : vector<288x128xf32>
    %342 = tpu.matmul %339, %341, %cst_200 {dimension_numbers = #tpu.dot_dimension_numbers<[1], [0], [0], [1], [0, 0, 1, 1], [], []>} : vector<288x128xbf16>, vector<128x128xbf16>, vector<288x128xf32> -> vector<288x128xf32>
    %c1_201 = arith.constant 1 : index
    %c0_202 = arith.constant 0 : index
    %343 = vector.load %arg7[%c1_201, %c0_202] : memref<342x128xbf16, #tpu.memory_space<vmem>>, vector<288x128xbf16>
    %c1_203 = arith.constant 1 : index
    %c0_204 = arith.constant 0 : index
    %c0_205 = arith.constant 0 : index
    %344 = vector.load %arg4[%c1_203, %c0_204, %c0_205] : memref<9x128x128xbf16, #tpu.memory_space<vmem>>, vector<1x128x128xbf16>
    %345 = vector.shape_cast %344 : vector<1x128x128xbf16> to vector<128x128xbf16>
    %cst_206 = arith.constant dense<0.000000e+00> : vector<288x128xf32>
    %346 = tpu.matmul %343, %345, %cst_206 {dimension_numbers = #tpu.dot_dimension_numbers<[1], [0], [0], [1], [0, 0, 1, 1], [], []>} : vector<288x128xbf16>, vector<128x128xbf16>, vector<288x128xf32> -> vector<288x128xf32>
    %347 = arith.addf %342, %346 : vector<288x128xf32>
    %c2_207 = arith.constant 2 : index
    %c0_208 = arith.constant 0 : index
    %348 = vector.load %arg7[%c2_207, %c0_208] : memref<342x128xbf16, #tpu.memory_space<vmem>>, vector<288x128xbf16>
    %c2_209 = arith.constant 2 : index
    %c0_210 = arith.constant 0 : index
    %c0_211 = arith.constant 0 : index
    %349 = vector.load %arg4[%c2_209, %c0_210, %c0_211] : memref<9x128x128xbf16, #tpu.memory_space<vmem>>, vector<1x128x128xbf16>
    %350 = vector.shape_cast %349 : vector<1x128x128xbf16> to vector<128x128xbf16>
    %cst_212 = arith.constant dense<0.000000e+00> : vector<288x128xf32>
    %351 = tpu.matmul %348, %350, %cst_212 {dimension_numbers = #tpu.dot_dimension_numbers<[1], [0], [0], [1], [0, 0, 1, 1], [], []>} : vector<288x128xbf16>, vector<128x128xbf16>, vector<288x128xf32> -> vector<288x128xf32>
    %352 = arith.addf %347, %351 : vector<288x128xf32>
    %c18_213 = arith.constant 18 : index
    %c0_214 = arith.constant 0 : index
    %353 = vector.load %arg7[%c18_213, %c0_214] : memref<342x128xbf16, #tpu.memory_space<vmem>>, vector<288x128xbf16>
    %c3_215 = arith.constant 3 : index
    %c0_216 = arith.constant 0 : index
    %c0_217 = arith.constant 0 : index
    %354 = vector.load %arg4[%c3_215, %c0_216, %c0_217] : memref<9x128x128xbf16, #tpu.memory_space<vmem>>, vector<1x128x128xbf16>
    %355 = vector.shape_cast %354 : vector<1x128x128xbf16> to vector<128x128xbf16>
    %cst_218 = arith.constant dense<0.000000e+00> : vector<288x128xf32>
    %356 = tpu.matmul %353, %355, %cst_218 {dimension_numbers = #tpu.dot_dimension_numbers<[1], [0], [0], [1], [0, 0, 1, 1], [], []>} : vector<288x128xbf16>, vector<128x128xbf16>, vector<288x128xf32> -> vector<288x128xf32>
    %c19_219 = arith.constant 19 : index
    %c0_220 = arith.constant 0 : index
    %357 = vector.load %arg7[%c19_219, %c0_220] : memref<342x128xbf16, #tpu.memory_space<vmem>>, vector<288x128xbf16>
    %c4_221 = arith.constant 4 : index
    %c0_222 = arith.constant 0 : index
    %c0_223 = arith.constant 0 : index
    %358 = vector.load %arg4[%c4_221, %c0_222, %c0_223] : memref<9x128x128xbf16, #tpu.memory_space<vmem>>, vector<1x128x128xbf16>
    %359 = vector.shape_cast %358 : vector<1x128x128xbf16> to vector<128x128xbf16>
    %cst_224 = arith.constant dense<0.000000e+00> : vector<288x128xf32>
    %360 = tpu.matmul %357, %359, %cst_224 {dimension_numbers = #tpu.dot_dimension_numbers<[1], [0], [0], [1], [0, 0, 1, 1], [], []>} : vector<288x128xbf16>, vector<128x128xbf16>, vector<288x128xf32> -> vector<288x128xf32>
    %361 = arith.addf %356, %360 : vector<288x128xf32>
    %c20_225 = arith.constant 20 : index
    %c0_226 = arith.constant 0 : index
    %362 = vector.load %arg7[%c20_225, %c0_226] : memref<342x128xbf16, #tpu.memory_space<vmem>>, vector<288x128xbf16>
    %c5_227 = arith.constant 5 : index
    %c0_228 = arith.constant 0 : index
    %c0_229 = arith.constant 0 : index
    %363 = vector.load %arg4[%c5_227, %c0_228, %c0_229] : memref<9x128x128xbf16, #tpu.memory_space<vmem>>, vector<1x128x128xbf16>
    %364 = vector.shape_cast %363 : vector<1x128x128xbf16> to vector<128x128xbf16>
    %cst_230 = arith.constant dense<0.000000e+00> : vector<288x128xf32>
    %365 = tpu.matmul %362, %364, %cst_230 {dimension_numbers = #tpu.dot_dimension_numbers<[1], [0], [0], [1], [0, 0, 1, 1], [], []>} : vector<288x128xbf16>, vector<128x128xbf16>, vector<288x128xf32> -> vector<288x128xf32>
    %366 = arith.addf %361, %365 : vector<288x128xf32>
    %c36_231 = arith.constant 36 : index
    %c0_232 = arith.constant 0 : index
    %367 = vector.load %arg7[%c36_231, %c0_232] : memref<342x128xbf16, #tpu.memory_space<vmem>>, vector<288x128xbf16>
    %c6_233 = arith.constant 6 : index
    %c0_234 = arith.constant 0 : index
    %c0_235 = arith.constant 0 : index
    %368 = vector.load %arg4[%c6_233, %c0_234, %c0_235] : memref<9x128x128xbf16, #tpu.memory_space<vmem>>, vector<1x128x128xbf16>
    %369 = vector.shape_cast %368 : vector<1x128x128xbf16> to vector<128x128xbf16>
    %cst_236 = arith.constant dense<0.000000e+00> : vector<288x128xf32>
    %370 = tpu.matmul %367, %369, %cst_236 {dimension_numbers = #tpu.dot_dimension_numbers<[1], [0], [0], [1], [0, 0, 1, 1], [], []>} : vector<288x128xbf16>, vector<128x128xbf16>, vector<288x128xf32> -> vector<288x128xf32>
    %c37_237 = arith.constant 37 : index
    %c0_238 = arith.constant 0 : index
    %371 = vector.load %arg7[%c37_237, %c0_238] : memref<342x128xbf16, #tpu.memory_space<vmem>>, vector<288x128xbf16>
    %c7_239 = arith.constant 7 : index
    %c0_240 = arith.constant 0 : index
    %c0_241 = arith.constant 0 : index
    %372 = vector.load %arg4[%c7_239, %c0_240, %c0_241] : memref<9x128x128xbf16, #tpu.memory_space<vmem>>, vector<1x128x128xbf16>
    %373 = vector.shape_cast %372 : vector<1x128x128xbf16> to vector<128x128xbf16>
    %cst_242 = arith.constant dense<0.000000e+00> : vector<288x128xf32>
    %374 = tpu.matmul %371, %373, %cst_242 {dimension_numbers = #tpu.dot_dimension_numbers<[1], [0], [0], [1], [0, 0, 1, 1], [], []>} : vector<288x128xbf16>, vector<128x128xbf16>, vector<288x128xf32> -> vector<288x128xf32>
    %375 = arith.addf %370, %374 : vector<288x128xf32>
    %c38_243 = arith.constant 38 : index
    %c0_244 = arith.constant 0 : index
    %376 = vector.load %arg7[%c38_243, %c0_244] : memref<342x128xbf16, #tpu.memory_space<vmem>>, vector<288x128xbf16>
    %c8_245 = arith.constant 8 : index
    %c0_246 = arith.constant 0 : index
    %c0_247 = arith.constant 0 : index
    %377 = vector.load %arg4[%c8_245, %c0_246, %c0_247] : memref<9x128x128xbf16, #tpu.memory_space<vmem>>, vector<1x128x128xbf16>
    %378 = vector.shape_cast %377 : vector<1x128x128xbf16> to vector<128x128xbf16>
    %cst_248 = arith.constant dense<0.000000e+00> : vector<288x128xf32>
    %379 = tpu.matmul %376, %378, %cst_248 {dimension_numbers = #tpu.dot_dimension_numbers<[1], [0], [0], [1], [0, 0, 1, 1], [], []>} : vector<288x128xbf16>, vector<128x128xbf16>, vector<288x128xf32> -> vector<288x128xf32>
    %380 = arith.addf %375, %379 : vector<288x128xf32>
    %381 = arith.addf %352, %366 : vector<288x128xf32>
    %382 = arith.addf %381, %380 : vector<288x128xf32>
    %c0_249 = arith.constant 0 : index
    %c0_250 = arith.constant 0 : index
    %383 = vector.load %arg5[%c0_249, %c0_250] : memref<1x128xf32, #tpu.memory_space<vmem>>, vector<1x128xf32>
    %384 = vector.broadcast %383 : vector<1x128xf32> to vector<288x128xf32>
    %385 = arith.addf %382, %384 : vector<288x128xf32>
    %cst_251 = arith.constant 0.000000e+00 : f32
    %386 = vector.shape_cast %19 : vector<288x1xi1> to vector<288x1xi1>
    %387 = vector.broadcast %386 : vector<288x1xi1> to vector<288x128xi1>
    %388 = vector.broadcast %cst_251 : f32 to vector<288x128xf32>
    %389 = arith.select %387, %385, %388 : vector<288x128xi1>, vector<288x128xf32>
    %cst_252 = arith.constant dense<0.000000e+00> : vector<128xf32>
    %390 = vector.multi_reduction <add>, %389, %cst_252 [0] : vector<288x128xf32> to vector<128xf32>
    %391 = vector.shape_cast %390 : vector<128xf32> to vector<1x128xf32>
    %cst_253 = arith.constant 3.906250e-03 : f32
    %392 = vector.broadcast %cst_253 : f32 to vector<1x128xf32>
    %393 = arith.mulf %391, %392 : vector<1x128xf32>
    %394 = arith.mulf %385, %385 : vector<288x128xf32>
    %cst_254 = arith.constant 0.000000e+00 : f32
    %395 = vector.shape_cast %19 : vector<288x1xi1> to vector<288x1xi1>
    %396 = vector.broadcast %395 : vector<288x1xi1> to vector<288x128xi1>
    %397 = vector.broadcast %cst_254 : f32 to vector<288x128xf32>
    %398 = arith.select %396, %394, %397 : vector<288x128xi1>, vector<288x128xf32>
    %cst_255 = arith.constant dense<0.000000e+00> : vector<128xf32>
    %399 = vector.multi_reduction <add>, %398, %cst_255 [0] : vector<288x128xf32> to vector<128xf32>
    %400 = vector.shape_cast %399 : vector<128xf32> to vector<1x128xf32>
    %cst_256 = arith.constant 3.906250e-03 : f32
    %401 = vector.broadcast %cst_256 : f32 to vector<1x128xf32>
    %402 = arith.mulf %400, %401 : vector<1x128xf32>
    %403 = arith.mulf %393, %393 : vector<1x128xf32>
    %404 = arith.subf %402, %403 : vector<1x128xf32>
    %405 = vector.broadcast %393 : vector<1x128xf32> to vector<288x128xf32>
    %406 = arith.subf %385, %405 : vector<288x128xf32>
    %cst_257 = arith.constant 9.99999974E-6 : f32
    %407 = vector.broadcast %cst_257 : f32 to vector<1x128xf32>
    %408 = arith.addf %404, %407 : vector<1x128xf32>
    %409 = math.rsqrt %408 : vector<1x128xf32>
    %410 = vector.broadcast %409 : vector<1x128xf32> to vector<288x128xf32>
    %411 = arith.mulf %406, %410 : vector<288x128xf32>
    %c0_258 = arith.constant 0 : index
    %c0_259 = arith.constant 0 : index
    %c0_260 = arith.constant 0 : index
    %c0_261 = arith.constant 0 : index
    %412 = vector.load %arg1[%c0_258, %c0_259, %c0_260, %c0_261] : memref<1x16x16x128xf32, #tpu.memory_space<vmem>>, vector<1x1x16x128xf32>
    %413 = vector.shape_cast %412 : vector<1x1x16x128xf32> to vector<16x128xf32>
    %414 = vector.extract_strided_slice %411 {offsets = [0, 0], sizes = [16, 128], strides = [1, 1]} : vector<288x128xf32> to vector<16x128xf32>
    %415 = arith.addf %413, %414 : vector<16x128xf32>
    %c0_262 = arith.constant 0 : index
    %c0_263 = arith.constant 0 : index
    %c0_264 = arith.constant 0 : index
    %c0_265 = arith.constant 0 : index
    %416 = vector.load %arg6[%c0_262, %c0_263, %c0_264, %c0_265] : memref<1x16x16x128xf32, #tpu.memory_space<vmem>>, vector<1x1x16x128xf32>
    %417 = vector.shape_cast %416 : vector<1x1x16x128xf32> to vector<16x128xf32>
    %418 = vector.shape_cast %415 : vector<16x128xf32> to vector<1x1x16x128xf32>
    tpu.vector_store %arg6[%c0_262, %c0_263, %c0_264, %c0_265], %418 {strides = array<i32>} : memref<1x16x16x128xf32, #tpu.memory_space<vmem>>, vector<1x1x16x128xf32>,
    %c0_266 = arith.constant 0 : index
    %c1_267 = arith.constant 1 : index
    %c0_268 = arith.constant 0 : index
    %c0_269 = arith.constant 0 : index
    %419 = vector.load %arg1[%c0_266, %c1_267, %c0_268, %c0_269] : memref<1x16x16x128xf32, #tpu.memory_space<vmem>>, vector<1x1x16x128xf32>
    %420 = vector.shape_cast %419 : vector<1x1x16x128xf32> to vector<16x128xf32>
    %421 = vector.extract_strided_slice %411 {offsets = [18, 0], sizes = [16, 128], strides = [1, 1]} : vector<288x128xf32> to vector<16x128xf32>
    %422 = arith.addf %420, %421 : vector<16x128xf32>
    %c0_270 = arith.constant 0 : index
    %c1_271 = arith.constant 1 : index
    %c0_272 = arith.constant 0 : index
    %c0_273 = arith.constant 0 : index
    %423 = vector.load %arg6[%c0_270, %c1_271, %c0_272, %c0_273] : memref<1x16x16x128xf32, #tpu.memory_space<vmem>>, vector<1x1x16x128xf32>
    %424 = vector.shape_cast %423 : vector<1x1x16x128xf32> to vector<16x128xf32>
    %425 = vector.shape_cast %422 : vector<16x128xf32> to vector<1x1x16x128xf32>
    tpu.vector_store %arg6[%c0_270, %c1_271, %c0_272, %c0_273], %425 {strides = array<i32>} : memref<1x16x16x128xf32, #tpu.memory_space<vmem>>, vector<1x1x16x128xf32>,
    %c0_274 = arith.constant 0 : index
    %c2_275 = arith.constant 2 : index
    %c0_276 = arith.constant 0 : index
    %c0_277 = arith.constant 0 : index
    %426 = vector.load %arg1[%c0_274, %c2_275, %c0_276, %c0_277] : memref<1x16x16x128xf32, #tpu.memory_space<vmem>>, vector<1x1x16x128xf32>
    %427 = vector.shape_cast %426 : vector<1x1x16x128xf32> to vector<16x128xf32>
    %428 = vector.extract_strided_slice %411 {offsets = [36, 0], sizes = [16, 128], strides = [1, 1]} : vector<288x128xf32> to vector<16x128xf32>
    %429 = arith.addf %427, %428 : vector<16x128xf32>
    %c0_278 = arith.constant 0 : index
    %c2_279 = arith.constant 2 : index
    %c0_280 = arith.constant 0 : index
    %c0_281 = arith.constant 0 : index
    %430 = vector.load %arg6[%c0_278, %c2_279, %c0_280, %c0_281] : memref<1x16x16x128xf32, #tpu.memory_space<vmem>>, vector<1x1x16x128xf32>
    %431 = vector.shape_cast %430 : vector<1x1x16x128xf32> to vector<16x128xf32>
    %432 = vector.shape_cast %429 : vector<16x128xf32> to vector<1x1x16x128xf32>
    tpu.vector_store %arg6[%c0_278, %c2_279, %c0_280, %c0_281], %432 {strides = array<i32>} : memref<1x16x16x128xf32, #tpu.memory_space<vmem>>, vector<1x1x16x128xf32>,
    %c0_282 = arith.constant 0 : index
    %c3_283 = arith.constant 3 : index
    %c0_284 = arith.constant 0 : index
    %c0_285 = arith.constant 0 : index
    %433 = vector.load %arg1[%c0_282, %c3_283, %c0_284, %c0_285] : memref<1x16x16x128xf32, #tpu.memory_space<vmem>>, vector<1x1x16x128xf32>
    %434 = vector.shape_cast %433 : vector<1x1x16x128xf32> to vector<16x128xf32>
    %435 = vector.extract_strided_slice %411 {offsets = [54, 0], sizes = [16, 128], strides = [1, 1]} : vector<288x128xf32> to vector<16x128xf32>
    %436 = arith.addf %434, %435 : vector<16x128xf32>
    %c0_286 = arith.constant 0 : index
    %c3_287 = arith.constant 3 : index
    %c0_288 = arith.constant 0 : index
    %c0_289 = arith.constant 0 : index
    %437 = vector.load %arg6[%c0_286, %c3_287, %c0_288, %c0_289] : memref<1x16x16x128xf32, #tpu.memory_space<vmem>>, vector<1x1x16x128xf32>
    %438 = vector.shape_cast %437 : vector<1x1x16x128xf32> to vector<16x128xf32>
    %439 = vector.shape_cast %436 : vector<16x128xf32> to vector<1x1x16x128xf32>
    tpu.vector_store %arg6[%c0_286, %c3_287, %c0_288, %c0_289], %439 {strides = array<i32>} : memref<1x16x16x128xf32, #tpu.memory_space<vmem>>, vector<1x1x16x128xf32>,
    %c0_290 = arith.constant 0 : index
    %c4_291 = arith.constant 4 : index
    %c0_292 = arith.constant 0 : index
    %c0_293 = arith.constant 0 : index
    %440 = vector.load %arg1[%c0_290, %c4_291, %c0_292, %c0_293] : memref<1x16x16x128xf32, #tpu.memory_space<vmem>>, vector<1x1x16x128xf32>
    %441 = vector.shape_cast %440 : vector<1x1x16x128xf32> to vector<16x128xf32>
    %442 = vector.extract_strided_slice %411 {offsets = [72, 0], sizes = [16, 128], strides = [1, 1]} : vector<288x128xf32> to vector<16x128xf32>
    %443 = arith.addf %441, %442 : vector<16x128xf32>
    %c0_294 = arith.constant 0 : index
    %c4_295 = arith.constant 4 : index
    %c0_296 = arith.constant 0 : index
    %c0_297 = arith.constant 0 : index
    %444 = vector.load %arg6[%c0_294, %c4_295, %c0_296, %c0_297] : memref<1x16x16x128xf32, #tpu.memory_space<vmem>>, vector<1x1x16x128xf32>
    %445 = vector.shape_cast %444 : vector<1x1x16x128xf32> to vector<16x128xf32>
    %446 = vector.shape_cast %443 : vector<16x128xf32> to vector<1x1x16x128xf32>
    tpu.vector_store %arg6[%c0_294, %c4_295, %c0_296, %c0_297], %446 {strides = array<i32>} : memref<1x16x16x128xf32, #tpu.memory_space<vmem>>, vector<1x1x16x128xf32>,
    %c0_298 = arith.constant 0 : index
    %c5_299 = arith.constant 5 : index
    %c0_300 = arith.constant 0 : index
    %c0_301 = arith.constant 0 : index
    %447 = vector.load %arg1[%c0_298, %c5_299, %c0_300, %c0_301] : memref<1x16x16x128xf32, #tpu.memory_space<vmem>>, vector<1x1x16x128xf32>
    %448 = vector.shape_cast %447 : vector<1x1x16x128xf32> to vector<16x128xf32>
    %449 = vector.extract_strided_slice %411 {offsets = [90, 0], sizes = [16, 128], strides = [1, 1]} : vector<288x128xf32> to vector<16x128xf32>
    %450 = arith.addf %448, %449 : vector<16x128xf32>
    %c0_302 = arith.constant 0 : index
    %c5_303 = arith.constant 5 : index
    %c0_304 = arith.constant 0 : index
    %c0_305 = arith.constant 0 : index
    %451 = vector.load %arg6[%c0_302, %c5_303, %c0_304, %c0_305] : memref<1x16x16x128xf32, #tpu.memory_space<vmem>>, vector<1x1x16x128xf32>
    %452 = vector.shape_cast %451 : vector<1x1x16x128xf32> to vector<16x128xf32>
    %453 = vector.shape_cast %450 : vector<16x128xf32> to vector<1x1x16x128xf32>
    tpu.vector_store %arg6[%c0_302, %c5_303, %c0_304, %c0_305], %453 {strides = array<i32>} : memref<1x16x16x128xf32, #tpu.memory_space<vmem>>, vector<1x1x16x128xf32>,
    %c0_306 = arith.constant 0 : index
    %c6_307 = arith.constant 6 : index
    %c0_308 = arith.constant 0 : index
    %c0_309 = arith.constant 0 : index
    %454 = vector.load %arg1[%c0_306, %c6_307, %c0_308, %c0_309] : memref<1x16x16x128xf32, #tpu.memory_space<vmem>>, vector<1x1x16x128xf32>
    %455 = vector.shape_cast %454 : vector<1x1x16x128xf32> to vector<16x128xf32>
    %456 = vector.extract_strided_slice %411 {offsets = [108, 0], sizes = [16, 128], strides = [1, 1]} : vector<288x128xf32> to vector<16x128xf32>
    %457 = arith.addf %455, %456 : vector<16x128xf32>
    %c0_310 = arith.constant 0 : index
    %c6_311 = arith.constant 6 : index
    %c0_312 = arith.constant 0 : index
    %c0_313 = arith.constant 0 : index
    %458 = vector.load %arg6[%c0_310, %c6_311, %c0_312, %c0_313] : memref<1x16x16x128xf32, #tpu.memory_space<vmem>>, vector<1x1x16x128xf32>
    %459 = vector.shape_cast %458 : vector<1x1x16x128xf32> to vector<16x128xf32>
    %460 = vector.shape_cast %457 : vector<16x128xf32> to vector<1x1x16x128xf32>
    tpu.vector_store %arg6[%c0_310, %c6_311, %c0_312, %c0_313], %460 {strides = array<i32>} : memref<1x16x16x128xf32, #tpu.memory_space<vmem>>, vector<1x1x16x128xf32>,
    %c0_314 = arith.constant 0 : index
    %c7_315 = arith.constant 7 : index
    %c0_316 = arith.constant 0 : index
    %c0_317 = arith.constant 0 : index
    %461 = vector.load %arg1[%c0_314, %c7_315, %c0_316, %c0_317] : memref<1x16x16x128xf32, #tpu.memory_space<vmem>>, vector<1x1x16x128xf32>
    %462 = vector.shape_cast %461 : vector<1x1x16x128xf32> to vector<16x128xf32>
    %463 = vector.extract_strided_slice %411 {offsets = [126, 0], sizes = [16, 128], strides = [1, 1]} : vector<288x128xf32> to vector<16x128xf32>
    %464 = arith.addf %462, %463 : vector<16x128xf32>
    %c0_318 = arith.constant 0 : index
    %c7_319 = arith.constant 7 : index
    %c0_320 = arith.constant 0 : index
    %c0_321 = arith.constant 0 : index
    %465 = vector.load %arg6[%c0_318, %c7_319, %c0_320, %c0_321] : memref<1x16x16x128xf32, #tpu.memory_space<vmem>>, vector<1x1x16x128xf32>
    %466 = vector.shape_cast %465 : vector<1x1x16x128xf32> to vector<16x128xf32>
    %467 = vector.shape_cast %464 : vector<16x128xf32> to vector<1x1x16x128xf32>
    tpu.vector_store %arg6[%c0_318, %c7_319, %c0_320, %c0_321], %467 {strides = array<i32>} : memref<1x16x16x128xf32, #tpu.memory_space<vmem>>, vector<1x1x16x128xf32>,
    %c0_322 = arith.constant 0 : index
    %c8_323 = arith.constant 8 : index
    %c0_324 = arith.constant 0 : index
    %c0_325 = arith.constant 0 : index
    %468 = vector.load %arg1[%c0_322, %c8_323, %c0_324, %c0_325] : memref<1x16x16x128xf32, #tpu.memory_space<vmem>>, vector<1x1x16x128xf32>
    %469 = vector.shape_cast %468 : vector<1x1x16x128xf32> to vector<16x128xf32>
    %470 = vector.extract_strided_slice %411 {offsets = [144, 0], sizes = [16, 128], strides = [1, 1]} : vector<288x128xf32> to vector<16x128xf32>
    %471 = arith.addf %469, %470 : vector<16x128xf32>
    %c0_326 = arith.constant 0 : index
    %c8_327 = arith.constant 8 : index
    %c0_328 = arith.constant 0 : index
    %c0_329 = arith.constant 0 : index
    %472 = vector.load %arg6[%c0_326, %c8_327, %c0_328, %c0_329] : memref<1x16x16x128xf32, #tpu.memory_space<vmem>>, vector<1x1x16x128xf32>
    %473 = vector.shape_cast %472 : vector<1x1x16x128xf32> to vector<16x128xf32>
    %474 = vector.shape_cast %471 : vector<16x128xf32> to vector<1x1x16x128xf32>
    tpu.vector_store %arg6[%c0_326, %c8_327, %c0_328, %c0_329], %474 {strides = array<i32>} : memref<1x16x16x128xf32, #tpu.memory_space<vmem>>, vector<1x1x16x128xf32>,
    %c0_330 = arith.constant 0 : index
    %c9 = arith.constant 9 : index
    %c0_331 = arith.constant 0 : index
    %c0_332 = arith.constant 0 : index
    %475 = vector.load %arg1[%c0_330, %c9, %c0_331, %c0_332] : memref<1x16x16x128xf32, #tpu.memory_space<vmem>>, vector<1x1x16x128xf32>
    %476 = vector.shape_cast %475 : vector<1x1x16x128xf32> to vector<16x128xf32>
    %477 = vector.extract_strided_slice %411 {offsets = [162, 0], sizes = [16, 128], strides = [1, 1]} : vector<288x128xf32> to vector<16x128xf32>
    %478 = arith.addf %476, %477 : vector<16x128xf32>
    %c0_333 = arith.constant 0 : index
    %c9_334 = arith.constant 9 : index
    %c0_335 = arith.constant 0 : index
    %c0_336 = arith.constant 0 : index
    %479 = vector.load %arg6[%c0_333, %c9_334, %c0_335, %c0_336] : memref<1x16x16x128xf32, #tpu.memory_space<vmem>>, vector<1x1x16x128xf32>
    %480 = vector.shape_cast %479 : vector<1x1x16x128xf32> to vector<16x128xf32>
    %481 = vector.shape_cast %478 : vector<16x128xf32> to vector<1x1x16x128xf32>
    tpu.vector_store %arg6[%c0_333, %c9_334, %c0_335, %c0_336], %481 {strides = array<i32>} : memref<1x16x16x128xf32, #tpu.memory_space<vmem>>, vector<1x1x16x128xf32>,
    %c0_337 = arith.constant 0 : index
    %c10 = arith.constant 10 : index
    %c0_338 = arith.constant 0 : index
    %c0_339 = arith.constant 0 : index
    %482 = vector.load %arg1[%c0_337, %c10, %c0_338, %c0_339] : memref<1x16x16x128xf32, #tpu.memory_space<vmem>>, vector<1x1x16x128xf32>
    %483 = vector.shape_cast %482 : vector<1x1x16x128xf32> to vector<16x128xf32>
    %484 = vector.extract_strided_slice %411 {offsets = [180, 0], sizes = [16, 128], strides = [1, 1]} : vector<288x128xf32> to vector<16x128xf32>
    %485 = arith.addf %483, %484 : vector<16x128xf32>
    %c0_340 = arith.constant 0 : index
    %c10_341 = arith.constant 10 : index
    %c0_342 = arith.constant 0 : index
    %c0_343 = arith.constant 0 : index
    %486 = vector.load %arg6[%c0_340, %c10_341, %c0_342, %c0_343] : memref<1x16x16x128xf32, #tpu.memory_space<vmem>>, vector<1x1x16x128xf32>
    %487 = vector.shape_cast %486 : vector<1x1x16x128xf32> to vector<16x128xf32>
    %488 = vector.shape_cast %485 : vector<16x128xf32> to vector<1x1x16x128xf32>
    tpu.vector_store %arg6[%c0_340, %c10_341, %c0_342, %c0_343], %488 {strides = array<i32>} : memref<1x16x16x128xf32, #tpu.memory_space<vmem>>, vector<1x1x16x128xf32>,
    %c0_344 = arith.constant 0 : index
    %c11 = arith.constant 11 : index
    %c0_345 = arith.constant 0 : index
    %c0_346 = arith.constant 0 : index
    %489 = vector.load %arg1[%c0_344, %c11, %c0_345, %c0_346] : memref<1x16x16x128xf32, #tpu.memory_space<vmem>>, vector<1x1x16x128xf32>
    %490 = vector.shape_cast %489 : vector<1x1x16x128xf32> to vector<16x128xf32>
    %491 = vector.extract_strided_slice %411 {offsets = [198, 0], sizes = [16, 128], strides = [1, 1]} : vector<288x128xf32> to vector<16x128xf32>
    %492 = arith.addf %490, %491 : vector<16x128xf32>
    %c0_347 = arith.constant 0 : index
    %c11_348 = arith.constant 11 : index
    %c0_349 = arith.constant 0 : index
    %c0_350 = arith.constant 0 : index
    %493 = vector.load %arg6[%c0_347, %c11_348, %c0_349, %c0_350] : memref<1x16x16x128xf32, #tpu.memory_space<vmem>>, vector<1x1x16x128xf32>
    %494 = vector.shape_cast %493 : vector<1x1x16x128xf32> to vector<16x128xf32>
    %495 = vector.shape_cast %492 : vector<16x128xf32> to vector<1x1x16x128xf32>
    tpu.vector_store %arg6[%c0_347, %c11_348, %c0_349, %c0_350], %495 {strides = array<i32>} : memref<1x16x16x128xf32, #tpu.memory_space<vmem>>, vector<1x1x16x128xf32>,
    %c0_351 = arith.constant 0 : index
    %c12 = arith.constant 12 : index
    %c0_352 = arith.constant 0 : index
    %c0_353 = arith.constant 0 : index
    %496 = vector.load %arg1[%c0_351, %c12, %c0_352, %c0_353] : memref<1x16x16x128xf32, #tpu.memory_space<vmem>>, vector<1x1x16x128xf32>
    %497 = vector.shape_cast %496 : vector<1x1x16x128xf32> to vector<16x128xf32>
    %498 = vector.extract_strided_slice %411 {offsets = [216, 0], sizes = [16, 128], strides = [1, 1]} : vector<288x128xf32> to vector<16x128xf32>
    %499 = arith.addf %497, %498 : vector<16x128xf32>
    %c0_354 = arith.constant 0 : index
    %c12_355 = arith.constant 12 : index
    %c0_356 = arith.constant 0 : index
    %c0_357 = arith.constant 0 : index
    %500 = vector.load %arg6[%c0_354, %c12_355, %c0_356, %c0_357] : memref<1x16x16x128xf32, #tpu.memory_space<vmem>>, vector<1x1x16x128xf32>
    %501 = vector.shape_cast %500 : vector<1x1x16x128xf32> to vector<16x128xf32>
    %502 = vector.shape_cast %499 : vector<16x128xf32> to vector<1x1x16x128xf32>
    tpu.vector_store %arg6[%c0_354, %c12_355, %c0_356, %c0_357], %502 {strides = array<i32>} : memref<1x16x16x128xf32, #tpu.memory_space<vmem>>, vector<1x1x16x128xf32>,
    %c0_358 = arith.constant 0 : index
    %c13 = arith.constant 13 : index
    %c0_359 = arith.constant 0 : index
    %c0_360 = arith.constant 0 : index
    %503 = vector.load %arg1[%c0_358, %c13, %c0_359, %c0_360] : memref<1x16x16x128xf32, #tpu.memory_space<vmem>>, vector<1x1x16x128xf32>
    %504 = vector.shape_cast %503 : vector<1x1x16x128xf32> to vector<16x128xf32>
    %505 = vector.extract_strided_slice %411 {offsets = [234, 0], sizes = [16, 128], strides = [1, 1]} : vector<288x128xf32> to vector<16x128xf32>
    %506 = arith.addf %504, %505 : vector<16x128xf32>
    %c0_361 = arith.constant 0 : index
    %c13_362 = arith.constant 13 : index
    %c0_363 = arith.constant 0 : index
    %c0_364 = arith.constant 0 : index
    %507 = vector.load %arg6[%c0_361, %c13_362, %c0_363, %c0_364] : memref<1x16x16x128xf32, #tpu.memory_space<vmem>>, vector<1x1x16x128xf32>
    %508 = vector.shape_cast %507 : vector<1x1x16x128xf32> to vector<16x128xf32>
    %509 = vector.shape_cast %506 : vector<16x128xf32> to vector<1x1x16x128xf32>
    tpu.vector_store %arg6[%c0_361, %c13_362, %c0_363, %c0_364], %509 {strides = array<i32>} : memref<1x16x16x128xf32, #tpu.memory_space<vmem>>, vector<1x1x16x128xf32>,
    %c0_365 = arith.constant 0 : index
    %c14 = arith.constant 14 : index
    %c0_366 = arith.constant 0 : index
    %c0_367 = arith.constant 0 : index
    %510 = vector.load %arg1[%c0_365, %c14, %c0_366, %c0_367] : memref<1x16x16x128xf32, #tpu.memory_space<vmem>>, vector<1x1x16x128xf32>
    %511 = vector.shape_cast %510 : vector<1x1x16x128xf32> to vector<16x128xf32>
    %512 = vector.extract_strided_slice %411 {offsets = [252, 0], sizes = [16, 128], strides = [1, 1]} : vector<288x128xf32> to vector<16x128xf32>
    %513 = arith.addf %511, %512 : vector<16x128xf32>
    %c0_368 = arith.constant 0 : index
    %c14_369 = arith.constant 14 : index
    %c0_370 = arith.constant 0 : index
    %c0_371 = arith.constant 0 : index
    %514 = vector.load %arg6[%c0_368, %c14_369, %c0_370, %c0_371] : memref<1x16x16x128xf32, #tpu.memory_space<vmem>>, vector<1x1x16x128xf32>
    %515 = vector.shape_cast %514 : vector<1x1x16x128xf32> to vector<16x128xf32>
    %516 = vector.shape_cast %513 : vector<16x128xf32> to vector<1x1x16x128xf32>
    tpu.vector_store %arg6[%c0_368, %c14_369, %c0_370, %c0_371], %516 {strides = array<i32>} : memref<1x16x16x128xf32, #tpu.memory_space<vmem>>, vector<1x1x16x128xf32>,
    %c0_372 = arith.constant 0 : index
    %c15 = arith.constant 15 : index
    %c0_373 = arith.constant 0 : index
    %c0_374 = arith.constant 0 : index
    %517 = vector.load %arg1[%c0_372, %c15, %c0_373, %c0_374] : memref<1x16x16x128xf32, #tpu.memory_space<vmem>>, vector<1x1x16x128xf32>
    %518 = vector.shape_cast %517 : vector<1x1x16x128xf32> to vector<16x128xf32>
    %519 = vector.extract_strided_slice %411 {offsets = [270, 0], sizes = [16, 128], strides = [1, 1]} : vector<288x128xf32> to vector<16x128xf32>
    %520 = arith.addf %518, %519 : vector<16x128xf32>
    %c0_375 = arith.constant 0 : index
    %c15_376 = arith.constant 15 : index
    %c0_377 = arith.constant 0 : index
    %c0_378 = arith.constant 0 : index
    %521 = vector.load %arg6[%c0_375, %c15_376, %c0_377, %c0_378] : memref<1x16x16x128xf32, #tpu.memory_space<vmem>>, vector<1x1x16x128xf32>
    %522 = vector.shape_cast %521 : vector<1x1x16x128xf32> to vector<16x128xf32>
    %523 = vector.shape_cast %520 : vector<16x128xf32> to vector<1x1x16x128xf32>
    tpu.vector_store %arg6[%c0_375, %c15_376, %c0_377, %c0_378], %523 {strides = array<i32>} : memref<1x16x16x128xf32, #tpu.memory_space<vmem>>, vector<1x1x16x128xf32>,
    return
  }
  func.func @transform_0(%arg0: i32) -> (i32, i32, i32, i32) {
    %c0_i32 = arith.constant 0 : i32
    %c0_i32_0 = arith.constant 0 : i32
    %c0_i32_1 = arith.constant 0 : i32
    %c0_i32_2 = arith.constant 0 : i32
    return %arg0, %c0_i32, %c0_i32_0, %c0_i32_1 : i32, i32, i32, i32
  }
  func.func @transform_1(%arg0: i32) -> (i32, i32, i32) {
    %c0_i32 = arith.constant 0 : i32
    %c0_i32_0 = arith.constant 0 : i32
    %c0_i32_1 = arith.constant 0 : i32
    %c0_i32_2 = arith.constant 0 : i32
    return %c0_i32, %c0_i32_0, %c0_i32_1 : i32, i32, i32
  }
  func.func @transform_2(%arg0: i32) -> (i32, i32) {
    %c0_i32 = arith.constant 0 : i32
    %c0_i32_0 = arith.constant 0 : i32
    %c0_i32_1 = arith.constant 0 : i32
    return %c0_i32, %c0_i32_0 : i32, i32
  }
  func.func @transform_3(%arg0: i32) -> (i32, i32, i32) {
    %c0_i32 = arith.constant 0 : i32
    %c0_i32_0 = arith.constant 0 : i32
    %c0_i32_1 = arith.constant 0 : i32
    %c0_i32_2 = arith.constant 0 : i32
    return %c0_i32, %c0_i32_0, %c0_i32_1 : i32, i32, i32
  }
  func.func @transform_4(%arg0: i32) -> (i32, i32) {
    %c0_i32 = arith.constant 0 : i32
    %c0_i32_0 = arith.constant 0 : i32
    %c0_i32_1 = arith.constant 0 : i32
    return %c0_i32, %c0_i32_0 : i32, i32
  }
  func.func @transform_5(%arg0: i32) -> (i32, i32, i32, i32) {
    %c0_i32 = arith.constant 0 : i32
    %c0_i32_0 = arith.constant 0 : i32
    %c0_i32_1 = arith.constant 0 : i32
    %c0_i32_2 = arith.constant 0 : i32
    return %arg0, %c0_i32, %c0_i32_0, %c0_i32_1 : i32, i32, i32, i32
  }
}

</mosaic_0001>

<llo_original>
// kernel: resnet_block_forward.1
$region0: #{resnet_block_forward.1}
  #allocation0 [shape = 'u32[]', space=smem, size = 0x4, offset = 0x4, fixed_abs, tag = 'smem constant byte address 0x4 - core index']
  #allocation1 [shape = 'u32[144,128]{1,0:T(1,128)}', space=vmem, size = 0x12000, scoped, tag = 'internal scratch']
  #allocation2 [shape = 'bf16[342,128]{1,0:T(8,128)(2,1)}', space=vmem, size = 0x15800, scoped, tag = 'scratch operand']
  %s0 = inlined_call_operand.vmem [shape: f32[2,16,16,128], index: 0, kind: input, shape index: {}]
  %s1 = inlined_call_operand.vmem [shape: bf16[9,128,128], index: 1, kind: input, shape index: {}]
  %s2 = inlined_call_operand.vmem [shape: f32[1,128], index: 2, kind: input, shape index: {}]
  %s3 = inlined_call_operand.vmem [shape: bf16[9,128,128], index: 3, kind: input, shape index: {}]
  %s4 = inlined_call_operand.vmem [shape: f32[1,128], index: 4, kind: input, shape index: {}]
  %s5 = inlined_call_operand.hbm [shape: f32[2,16,16,128], index: 5, kind: output, shape index: {}]
  %s6 = sld [smem:[#allocation0]]
  $region53: #{resnet_block_forward.1} parent=0
    _
  %s8 = ssub.s32 1, %s6
  %s9 = scalar_select 0, %s8, %s6
  $region1: #{resnet_block_forward.1} parent=0
    #allocation3 [shape = 'u8[262144]{0}', space=vmem, size = 0x40000, scoped, tag = 'output window, operand 0']
    #allocation4 [shape = 's32[2]{0}', space=sflag, size = 0x8, scoped, tag = 'scoped memory for resnet_block_forward.1']
    %10 = vsyncpa [#allocation4], 0
    %s11 = scalar_lea.sflag [#allocation4], 1
    %12 = vsyncpa %s11, 0
    loop: start=0, step=1, limit=4
    $region2: #{resnet_block_forward.1} parent=1 // loop_pre_header
      _
    $region3: #{resnet_block_forward.1} parent=1 // loop_header
      %s14 = sphi 0, %s18
      %p15 = scmp.ge.s32.totalorder %s14, 4
      %s24 = sphi 0, %s26
      %s27 = sphi 0, %s24
      %s28 = sphi 0, %s27
      %s44 = sphi 0, %s28
      %s48 = sphi 0, %s48
      %s50 = sphi 0, %s48
      %s51 = sphi 0, %s50
      %s65 = sphi 0, %s51
      %s69 = sphi 0, %s69
      %s71 = sphi 0, %s69
      %s72 = sphi 0, %s71
      %s86 = sphi 0, %s72
      %s90 = sphi 0, %s90
      %s92 = sphi 0, %s90
      %s93 = sphi 0, %s92
      %s107 = sphi 0, %s93
      %s111 = sphi 0, %s111
      %s113 = sphi 0, %s111
      %s114 = sphi 0, %s113
      %s128 = sphi 0, %s114
      %s134 = sphi 0, %s136
      %s137 = sphi 0, %s134
      %s138 = sphi 0, %s137
      %s154 = sphi 0, %s138
    $region4: #{resnet_block_forward.1} parent=1 // loop_header_branch
      %17 = sbr.rel (%p15) target = $region8
    $region5: #{resnet_block_forward.1} parent=1 // loop_body
      %s19 = ssub.s32 %s14, 1
      %s20 = ssub.s32 %s14, 2
      %s21 = sadd.s32 %s14, 1
      %s22 = ssub.s32 %s14, %s21
      %p23 = scmp.eq.s32.totalorder %s22, 0
      %s25 = sadd.s32 %s24, 1
      %s26 = scalar_select %p23, %s24, %s25
      %p29 = pneg %p23
      %p30 = scmp.eq.s32.totalorder %s14, 1
      %p31 = por %p29, %p30
      %p32 = scmp.ne.s32.totalorder %s24, %s27
      %p33 = scmp.eq.s32.totalorder %s14, 0
      %p34 = por %p32, %p33
      %p35 = scmp.ne.s32.totalorder %s24, %s27
      %p36 = scmp.eq.s32.totalorder %s19, 1
      %p37 = por %p35, %p36
      %p38 = scmp.ne.s32.totalorder %s27, %s28
      %p39 = scmp.eq.s32.totalorder %s19, 0
      %p40 = por %p38, %p39
      %p41 = scmp.ne.s32.totalorder %s27, %s28
      %p42 = scmp.eq.s32.totalorder %s20, 1
      %p43 = por %p41, %p42
      %p45 = scmp.ne.s32.totalorder %s28, %s44
      %p46 = scmp.eq.s32.totalorder %s20, 0
      %p47 = por %p45, %p46
      %s49 = sadd.s32 %s48, 1
      %p52 = scmp.eq.s32.totalorder %s14, 1
      %p53 = scmp.ne.s32.totalorder %s48, %s50
      %p54 = scmp.eq.s32.totalorder %s14, 0
      %p55 = por %p53, %p54
      %p56 = scmp.ne.s32.totalorder %s48, %s50
      %p57 = scmp.eq.s32.totalorder %s19, 1
      %p58 = por %p56, %p57
      %p59 = scmp.ne.s32.totalorder %s50, %s51
      %p60 = scmp.eq.s32.totalorder %s19, 0
      %p61 = por %p59, %p60
      %p62 = scmp.ne.s32.totalorder %s50, %s51
      %p63 = scmp.eq.s32.totalorder %s20, 1
      %p64 = por %p62, %p63
      %p66 = scmp.ne.s32.totalorder %s51, %s65
      %p67 = scmp.eq.s32.totalorder %s20, 0
      %p68 = por %p66, %p67
      %s70 = sadd.s32 %s69, 1
      %p73 = scmp.eq.s32.totalorder %s14, 1
      %p74 = scmp.ne.s32.totalorder %s69, %s71
      %p75 = scmp.eq.s32.totalorder %s14, 0
      %p76 = por %p74, %p75
      %p77 = scmp.ne.s32.totalorder %s69, %s71
      %p78 = scmp.eq.s32.totalorder %s19, 1
      %p79 = por %p77, %p78
      %p80 = scmp.ne.s32.totalorder %s71, %s72
      %p81 = scmp.eq.s32.totalorder %s19, 0
      %p82 = por %p80, %p81
      %p83 = scmp.ne.s32.totalorder %s71, %s72
      %p84 = scmp.eq.s32.totalorder %s20, 1
      %p85 = por %p83, %p84
      %p87 = scmp.ne.s32.totalorder %s72, %s86
      %p88 = scmp.eq.s32.totalorder %s20, 0
      %p89 = por %p87, %p88
      %s91 = sadd.s32 %s90, 1
      %p94 = scmp.eq.s32.totalorder %s14, 1
      %p95 = scmp.ne.s32.totalorder %s90, %s92
      %p96 = scmp.eq.s32.totalorder %s14, 0
      %p97 = por %p95, %p96
      %p98 = scmp.ne.s32.totalorder %s90, %s92
      %p99 = scmp.eq.s32.totalorder %s19, 1
      %p100 = por %p98, %p99
      %p101 = scmp.ne.s32.totalorder %s92, %s93
      %p102 = scmp.eq.s32.totalorder %s19, 0
      %p103 = por %p101, %p102
      %p104 = scmp.ne.s32.totalorder %s92, %s93
      %p105 = scmp.eq.s32.totalorder %s20, 1
      %p106 = por %p104, %p105
      %p108 = scmp.ne.s32.totalorder %s93, %s107
      %p109 = scmp.eq.s32.totalorder %s20, 0
      %p110 = por %p108, %p109
      %s112 = sadd.s32 %s111, 1
      %p115 = scmp.eq.s32.totalorder %s14, 1
      %p116 = scmp.ne.s32.totalorder %s111, %s113
      %p117 = scmp.eq.s32.totalorder %s14, 0
      %p118 = por %p116, %p117
      %p119 = scmp.ne.s32.totalorder %s111, %s113
      %p120 = scmp.eq.s32.totalorder %s19, 1
      %p121 = por %p119, %p120
      %p122 = scmp.ne.s32.totalorder %s113, %s114
      %p123 = scmp.eq.s32.totalorder %s19, 0
      %p124 = por %p122, %p123
      %p125 = scmp.ne.s32.totalorder %s113, %s114
      %p126 = scmp.eq.s32.totalorder %s20, 1
      %p127 = por %p125, %p126
      %p129 = scmp.ne.s32.totalorder %s114, %s128
      %p130 = scmp.eq.s32.totalorder %s20, 0
      %p131 = por %p129, %p130
      %s132 = ssub.s32 %s14, %s21
      %p133 = scmp.eq.s32.totalorder %s132, 0
      %s135 = sadd.s32 %s134, 1
      %s136 = scalar_select %p133, %s134, %s135
      %p139 = pneg %p133
      %p140 = scmp.eq.s32.totalorder %s14, 1
      %p141 = por %p139, %p140
      %p142 = scmp.ne.s32.totalorder %s134, %s137
      %p143 = scmp.eq.s32.totalorder %s14, 0
      %p144 = por %p142, %p143
      %p145 = scmp.ne.s32.totalorder %s134, %s137
      %p146 = scmp.eq.s32.totalorder %s19, 1
      %p147 = por %p145, %p146
      %p148 = scmp.ne.s32.totalorder %s137, %s138
      %p149 = scmp.eq.s32.totalorder %s19, 0
      %p150 = por %p148, %p149
      %p151 = scmp.ne.s32.totalorder %s137, %s138
      %p152 = scmp.eq.s32.totalorder %s20, 1
      %p153 = por %p151, %p152
      %p155 = scmp.ne.s32.totalorder %s138, %s154
      %p156 = scmp.eq.s32.totalorder %s20, 0
      %p157 = por %p155, %p156
      %p158 = scmp.le.s32.totalorder 1, %s14
      %p159 = scmp.lt.s32.totalorder %s14, 3
      %p160 = pnand %p158, %p159
      %p161 = pneg %p160
      // Predicated region
      $region9: #{resnet_block_forward.1} parent=5 // pred_check
        _
      $region10: #{resnet_block_forward.1} parent=5 // pred_check_branch
        %163 = sbr.rel (%p160) target = $region12
      $region11: #{resnet_block_forward.1} parent=5 // pred_region
        %s164 = ssub.s32 %s14, 1
        // Predicated region
        $region13: #{resnet_block_forward.1} parent=11 // pred_check
          %p165 = pneg %p61
        $region14: #{resnet_block_forward.1} parent=11 // pred_check_branch
          %167 = sbr.rel (%p165) target = $region16
        $region15: #{resnet_block_forward.1} parent=11 // pred_region
          _
        $region16: #{resnet_block_forward.1} parent=11 // pred_fallthru
          _
        // Predicated region
        $region17: #{resnet_block_forward.1} parent=11 // pred_check
          %p168 = pneg %p82
        $region18: #{resnet_block_forward.1} parent=11 // pred_check_branch
          %170 = sbr.rel (%p168) target = $region20
        $region19: #{resnet_block_forward.1} parent=11 // pred_region
          _
        $region20: #{resnet_block_forward.1} parent=11 // pred_fallthru
          _
        // Predicated region
        $region21: #{resnet_block_forward.1} parent=11 // pred_check
          %p171 = pneg %p103
        $region22: #{resnet_block_forward.1} parent=11 // pred_check_branch
          %173 = sbr.rel (%p171) target = $region24
        $region23: #{resnet_block_forward.1} parent=11 // pred_region
          _
        $region24: #{resnet_block_forward.1} parent=11 // pred_fallthru
          _
        // Predicated region
        $region25: #{resnet_block_forward.1} parent=11 // pred_check
          %p174 = pneg %p124
        $region26: #{resnet_block_forward.1} parent=11 // pred_check_branch
          %176 = sbr.rel (%p174) target = $region28
        $region27: #{resnet_block_forward.1} parent=11 // pred_region
          _
        $region28: #{resnet_block_forward.1} parent=11 // pred_fallthru
          _
      $region12: #{resnet_block_forward.1} parent=5 // pred_fallthru
        _
      %p177 = scmp.lt.s32.totalorder %s14, 2
      // Predicated region
      $region29: #{resnet_block_forward.1} parent=5 // pred_check
        %p178 = pneg %p177
      $region30: #{resnet_block_forward.1} parent=5 // pred_check_branch
        %180 = sbr.rel (%p178) target = $region32
      $region31: #{resnet_block_forward.1} parent=5 // pred_region
        // Predicated region
        $region33: #{resnet_block_forward.1} parent=31 // pred_check
          %p181 = pneg %p34
        $region34: #{resnet_block_forward.1} parent=31 // pred_check_branch
          %183 = sbr.rel (%p181) target = $region36
        $region35: #{resnet_block_forward.1} parent=31 // pred_region
          %p184 = scmp.lt.s32.totalorder %s14, 1
          %s185 = scalar_select %p184, %s14, 1
          %s186 = smul.addr %s185, 32
          %s187 = smul.addr %s186, 8
          %s188 = scalar_lea.vmem %s0, %s187
        $region36: #{resnet_block_forward.1} parent=31 // pred_fallthru
          _
      $region32: #{resnet_block_forward.1} parent=5 // pred_fallthru
        _
      %p189 = scmp.le.s32.totalorder 1, %s14
      %p190 = scmp.lt.s32.totalorder %s14, 3
      %p191 = pnand %p189, %p190
      %p192 = pneg %p191
      // Predicated region
      $region37: #{resnet_block_forward.1} parent=5 // pred_check
        _
      $region38: #{resnet_block_forward.1} parent=5 // pred_check_branch
        %194 = sbr.rel (%p191) target = $region40
      $region39: #{resnet_block_forward.1} parent=5 // pred_region
        %s195 = ssub.s32 %s14, 1
        %p196 = scmp.lt.s32.totalorder %s19, 1
        %s197 = scalar_select %p196, %s19, 1
        %s198 = smul.addr %s197, 32
        %s199 = smul.addr %s198, 8
        %s200 = scalar_lea.vmem %s0, %s199
        %p201 = pneg %p40
        %p202 = pneg %p37
        %p203 = pneg %p61
        %p204 = pneg %p58
        %p205 = pneg %p82
        %p206 = pneg %p79
        %p207 = pneg %p103
        %p208 = pneg %p100
        %p209 = pneg %p124
        %p210 = pneg %p121
        %p211 = pneg %p150
        %p212 = pneg %p147
        %s213 = sand.u32 %s137, 1
        %s214 = scalar_lea.sflag [#allocation4], %s213
        %s215 = sand.u32 %s137, 1
        %s216 = smul.addr %s215, 256
        %s217 = scalar_lea.vmem [#allocation3], %s216
        %p218 = scmp.lt.s32.totalorder %s19, 1
        %s219 = scalar_select %p218, %s19, 1
        %s220 = smul.addr %s219, 32
        %s221 = smul.addr %s220, 8
        %s222 = scalar_lea.vmem %s0, %s221
        %v224 = vlaneseq
        %v225 = vshrl.u32 %v224, 7
        %v226 = vadd.s32 %v225, 8
        %v227 = vadd.s32 %v225, 16
        %v228 = vadd.s32 %v225, 24
        %v229 = vadd.s32 %v225, 32
        %v230 = vadd.s32 %v225, 40
        %v231 = vadd.s32 %v225, 48
        %v232 = vadd.s32 %v225, 56
        %v233 = vadd.s32 %v225, 64
        %v234 = vadd.s32 %v225, 72
        %v235 = vadd.s32 %v225, 80
        %v236 = vadd.s32 %v225, 88
        %v237 = vadd.s32 %v225, 96
        %v238 = vadd.s32 %v225, 104
        %v239 = vadd.s32 %v225, 112
        %v240 = vadd.s32 %v225, 120
        %v241 = vadd.s32 %v225, 128
        %v242 = vadd.s32 %v225, 136
        %v243 = vadd.s32 %v225, 144
        %v244 = vadd.s32 %v225, 152
        %v245 = vadd.s32 %v225, 160
        %v246 = vadd.s32 %v225, 168
        %v247 = vadd.s32 %v225, 176
        %v248 = vadd.s32 %v225, 184
        %v249 = vadd.s32 %v225, 192
        %v250 = vadd.s32 %v225, 200
        %v251 = vadd.s32 %v225, 208
        %v252 = vadd.s32 %v225, 216
        %v253 = vadd.s32 %v225, 224
        %v254 = vadd.s32 %v225, 232
        %v255 = vadd.s32 %v225, 240
        %v256 = vadd.s32 %v225, 248
        %v257 = vadd.s32 %v225, 256
        %v258 = vadd.s32 %v225, 264
        %v259 = vadd.s32 %v225, 272
        %v260 = vadd.s32 %v225, 280
        %vm261 = vcmp.lt.s32.totalorder %v225, 0
        %v262 = vsub.s32 0, %v225
        %v263 = vsel %vm261, %v262, %v225
        %v264 = vmul.u32.u64.compose %v263, 3817748708
        %v265 = vextract.low.u32 %v264
        %v266 = vextract.high.u32 %v264
        %v267 = vshrl.u32 %v266, 4
        %v268 = vmul.u32 %v267, 18
        %v269 = vsub.s32 %v263, %v268
        %v270 = vsub.s32 0, %v269
        %v271 = vsel %vm261, %v270, %v269
        %vm272 = vcmp.lt.s32.totalorder %v226, 0
        %v273 = vsub.s32 0, %v226
        %v274 = vsel %vm272, %v273, %v226
        %v275 = vmul.u32.u64.compose %v274, 3817748708
        %v276 = vextract.low.u32 %v275
        %v277 = vextract.high.u32 %v275
        %v278 = vshrl.u32 %v277, 4
        %v279 = vmul.u32 %v278, 18
        %v280 = vsub.s32 %v274, %v279
        %v281 = vsub.s32 0, %v280
        %v282 = vsel %vm272, %v281, %v280
        %vm283 = vcmp.lt.s32.totalorder %v227, 0
        %v284 = vsub.s32 0, %v227
        %v285 = vsel %vm283, %v284, %v227
        %v286 = vmul.u32.u64.compose %v285, 3817748708
        %v287 = vextract.low.u32 %v286
        %v288 = vextract.high.u32 %v286
        %v289 = vshrl.u32 %v288, 4
        %v290 = vmul.u32 %v289, 18
        %v291 = vsub.s32 %v285, %v290
        %v292 = vsub.s32 0, %v291
        %v293 = vsel %vm283, %v292, %v291
        %vm294 = vcmp.lt.s32.totalorder %v228, 0
        %v295 = vsub.s32 0, %v228
        %v296 = vsel %vm294, %v295, %v228
        %v297 = vmul.u32.u64.compose %v296, 3817748708
        %v298 = vextract.low.u32 %v297
        %v299 = vextract.high.u32 %v297
        %v300 = vshrl.u32 %v299, 4
        %v301 = vmul.u32 %v300, 18
        %v302 = vsub.s32 %v296, %v301
        %v303 = vsub.s32 0, %v302
        %v304 = vsel %vm294, %v303, %v302
        %vm305 = vcmp.lt.s32.totalorder %v229, 0
        %v306 = vsub.s32 0, %v229
        %v307 = vsel %vm305, %v306, %v229
        %v308 = vmul.u32.u64.compose %v307, 3817748708
        %v309 = vextract.low.u32 %v308
        %v310 = vextract.high.u32 %v308
        %v311 = vshrl.u32 %v310, 4
        %v312 = vmul.u32 %v311, 18
        %v313 = vsub.s32 %v307, %v312
        %v314 = vsub.s32 0, %v313
        %v315 = vsel %vm305, %v314, %v313
        %vm316 = vcmp.lt.s32.totalorder %v230, 0
        %v317 = vsub.s32 0, %v230
        %v318 = vsel %vm316, %v317, %v230
        %v319 = vmul.u32.u64.compose %v318, 3817748708
        %v320 = vextract.low.u32 %v319
        %v321 = vextract.high.u32 %v319
        %v322 = vshrl.u32 %v321, 4
        %v323 = vmul.u32 %v322, 18
        %v324 = vsub.s32 %v318, %v323
        %v325 = vsub.s32 0, %v324
        %v326 = vsel %vm316, %v325, %v324
        %vm327 = vcmp.lt.s32.totalorder %v231, 0
        %v328 = vsub.s32 0, %v231
        %v329 = vsel %vm327, %v328, %v231
        %v330 = vmul.u32.u64.compose %v329, 3817748708
        %v331 = vextract.low.u32 %v330
        %v332 = vextract.high.u32 %v330
        %v333 = vshrl.u32 %v332, 4
        %v334 = vmul.u32 %v333, 18
        %v335 = vsub.s32 %v329, %v334
        %v336 = vsub.s32 0, %v335
        %v337 = vsel %vm327, %v336, %v335
        %vm338 = vcmp.lt.s32.totalorder %v232, 0
        %v339 = vsub.s32 0, %v232
        %v340 = vsel %vm338, %v339, %v232
        %v341 = vmul.u32.u64.compose %v340, 3817748708
        %v342 = vextract.low.u32 %v341
        %v343 = vextract.high.u32 %v341
        %v344 = vshrl.u32 %v343, 4
        %v345 = vmul.u32 %v344, 18
        %v346 = vsub.s32 %v340, %v345
        %v347 = vsub.s32 0, %v346
        %v348 = vsel %vm338, %v347, %v346
        %vm349 = vcmp.lt.s32.totalorder %v233, 0
        %v350 = vsub.s32 0, %v233
        %v351 = vsel %vm349, %v350, %v233
        %v352 = vmul.u32.u64.compose %v351, 3817748708
        %v353 = vextract.low.u32 %v352
        %v354 = vextract.high.u32 %v352
        %v355 = vshrl.u32 %v354, 4
        %v356 = vmul.u32 %v355, 18
        %v357 = vsub.s32 %v351, %v356
        %v358 = vsub.s32 0, %v357
        %v359 = vsel %vm349, %v358, %v357
        %vm360 = vcmp.lt.s32.totalorder %v234, 0
        %v361 = vsub.s32 0, %v234
        %v362 = vsel %vm360, %v361, %v234
        %v363 = vmul.u32.u64.compose %v362, 3817748708
        %v364 = vextract.low.u32 %v363
        %v365 = vextract.high.u32 %v363
        %v366 = vshrl.u32 %v365, 4
        %v367 = vmul.u32 %v366, 18
        %v368 = vsub.s32 %v362, %v367
        %v369 = vsub.s32 0, %v368
        %v370 = vsel %vm360, %v369, %v368
        %vm371 = vcmp.lt.s32.totalorder %v235, 0
        %v372 = vsub.s32 0, %v235
        %v373 = vsel %vm371, %v372, %v235
        %v374 = vmul.u32.u64.compose %v373, 3817748708
        %v375 = vextract.low.u32 %v374
        %v376 = vextract.high.u32 %v374
        %v377 = vshrl.u32 %v376, 4
        %v378 = vmul.u32 %v377, 18
        %v379 = vsub.s32 %v373, %v378
        %v380 = vsub.s32 0, %v379
        %v381 = vsel %vm371, %v380, %v379
        %vm382 = vcmp.lt.s32.totalorder %v236, 0
        %v383 = vsub.s32 0, %v236
        %v384 = vsel %vm382, %v383, %v236
        %v385 = vmul.u32.u64.compose %v384, 3817748708
        %v386 = vextract.low.u32 %v385
        %v387 = vextract.high.u32 %v385
        %v388 = vshrl.u32 %v387, 4
        %v389 = vmul.u32 %v388, 18
        %v390 = vsub.s32 %v384, %v389
        %v391 = vsub.s32 0, %v390
        %v392 = vsel %vm382, %v391, %v390
        %vm393 = vcmp.lt.s32.totalorder %v237, 0
        %v394 = vsub.s32 0, %v237
        %v395 = vsel %vm393, %v394, %v237
        %v396 = vmul.u32.u64.compose %v395, 3817748708
        %v397 = vextract.low.u32 %v396
        %v398 = vextract.high.u32 %v396
        %v399 = vshrl.u32 %v398, 4
        %v400 = vmul.u32 %v399, 18
        %v401 = vsub.s32 %v395, %v400
        %v402 = vsub.s32 0, %v401
        %v403 = vsel %vm393, %v402, %v401
        %vm404 = vcmp.lt.s32.totalorder %v238, 0
        %v405 = vsub.s32 0, %v238
        %v406 = vsel %vm404, %v405, %v238
        %v407 = vmul.u32.u64.compose %v406, 3817748708
        %v408 = vextract.low.u32 %v407
        %v409 = vextract.high.u32 %v407
        %v410 = vshrl.u32 %v409, 4
        %v411 = vmul.u32 %v410, 18
        %v412 = vsub.s32 %v406, %v411
        %v413 = vsub.s32 0, %v412
        %v414 = vsel %vm404, %v413, %v412
        %vm415 = vcmp.lt.s32.totalorder %v239, 0
        %v416 = vsub.s32 0, %v239
        %v417 = vsel %vm415, %v416, %v239
        %v418 = vmul.u32.u64.compose %v417, 3817748708
        %v419 = vextract.low.u32 %v418
        %v420 = vextract.high.u32 %v418
        %v421 = vshrl.u32 %v420, 4
        %v422 = vmul.u32 %v421, 18
        %v423 = vsub.s32 %v417, %v422
        %v424 = vsub.s32 0, %v423
        %v425 = vsel %vm415, %v424, %v423
        %vm426 = vcmp.lt.s32.totalorder %v240, 0
        %v427 = vsub.s32 0, %v240
        %v428 = vsel %vm426, %v427, %v240
        %v429 = vmul.u32.u64.compose %v428, 3817748708
        %v430 = vextract.low.u32 %v429
        %v431 = vextract.high.u32 %v429
        %v432 = vshrl.u32 %v431, 4
        %v433 = vmul.u32 %v432, 18
        %v434 = vsub.s32 %v428, %v433
        %v435 = vsub.s32 0, %v434
        %v436 = vsel %vm426, %v435, %v434
        %vm437 = vcmp.lt.s32.totalorder %v241, 0
        %v438 = vsub.s32 0, %v241
        %v439 = vsel %vm437, %v438, %v241
        %v440 = vmul.u32.u64.compose %v439, 3817748708
        %v441 = vextract.low.u32 %v440
        %v442 = vextract.high.u32 %v440
        %v443 = vshrl.u32 %v442, 4
        %v444 = vmul.u32 %v443, 18
        %v445 = vsub.s32 %v439, %v444
        %v446 = vsub.s32 0, %v445
        %v447 = vsel %vm437, %v446, %v445
        %vm448 = vcmp.lt.s32.totalorder %v242, 0
        %v449 = vsub.s32 0, %v242
        %v450 = vsel %vm448, %v449, %v242
        %v451 = vmul.u32.u64.compose %v450, 3817748708
        %v452 = vextract.low.u32 %v451
        %v453 = vextract.high.u32 %v451
        %v454 = vshrl.u32 %v453, 4
        %v455 = vmul.u32 %v454, 18
        %v456 = vsub.s32 %v450, %v455
        %v457 = vsub.s32 0, %v456
        %v458 = vsel %vm448, %v457, %v456
        %vm459 = vcmp.lt.s32.totalorder %v243, 0
        %v460 = vsub.s32 0, %v243
        %v461 = vsel %vm459, %v460, %v243
        %v462 = vmul.u32.u64.compose %v461, 3817748708
        %v463 = vextract.low.u32 %v462
        %v464 = vextract.high.u32 %v462
        %v465 = vshrl.u32 %v464, 4
        %v466 = vmul.u32 %v465, 18
        %v467 = vsub.s32 %v461, %v466
        %v468 = vsub.s32 0, %v467
        %v469 = vsel %vm459, %v468, %v467
        %vm470 = vcmp.lt.s32.totalorder %v244, 0
        %v471 = vsub.s32 0, %v244
        %v472 = vsel %vm470, %v471, %v244
        %v473 = vmul.u32.u64.compose %v472, 3817748708
        %v474 = vextract.low.u32 %v473
        %v475 = vextract.high.u32 %v473
        %v476 = vshrl.u32 %v475, 4
        %v477 = vmul.u32 %v476, 18
        %v478 = vsub.s32 %v472, %v477
        %v479 = vsub.s32 0, %v478
        %v480 = vsel %vm470, %v479, %v478
        %vm481 = vcmp.lt.s32.totalorder %v245, 0
        %v482 = vsub.s32 0, %v245
        %v483 = vsel %vm481, %v482, %v245
        %v484 = vmul.u32.u64.compose %v483, 3817748708
        %v485 = vextract.low.u32 %v484
        %v486 = vextract.high.u32 %v484
        %v487 = vshrl.u32 %v486, 4
        %v488 = vmul.u32 %v487, 18
        %v489 = vsub.s32 %v483, %v488
        %v490 = vsub.s32 0, %v489
        %v491 = vsel %vm481, %v490, %v489
        %vm492 = vcmp.lt.s32.totalorder %v246, 0
        %v493 = vsub.s32 0, %v246
        %v494 = vsel %vm492, %v493, %v246
        %v495 = vmul.u32.u64.compose %v494, 3817748708
        %v496 = vextract.low.u32 %v495
        %v497 = vextract.high.u32 %v495
        %v498 = vshrl.u32 %v497, 4
        %v499 = vmul.u32 %v498, 18
        %v500 = vsub.s32 %v494, %v499
        %v501 = vsub.s32 0, %v500
        %v502 = vsel %vm492, %v501, %v500
        %vm503 = vcmp.lt.s32.totalorder %v247, 0
        %v504 = vsub.s32 0, %v247
        %v505 = vsel %vm503, %v504, %v247
        %v506 = vmul.u32.u64.compose %v505, 3817748708
        %v507 = vextract.low.u32 %v506
        %v508 = vextract.high.u32 %v506
        %v509 = vshrl.u32 %v508, 4
        %v510 = vmul.u32 %v509, 18
        %v511 = vsub.s32 %v505, %v510
        %v512 = vsub.s32 0, %v511
        %v513 = vsel %vm503, %v512, %v511
        %vm514 = vcmp.lt.s32.totalorder %v248, 0
        %v515 = vsub.s32 0, %v248
        %v516 = vsel %vm514, %v515, %v248
        %v517 = vmul.u32.u64.compose %v516, 3817748708
        %v518 = vextract.low.u32 %v517
        %v519 = vextract.high.u32 %v517
        %v520 = vshrl.u32 %v519, 4
        %v521 = vmul.u32 %v520, 18
        %v522 = vsub.s32 %v516, %v521
        %v523 = vsub.s32 0, %v522
        %v524 = vsel %vm514, %v523, %v522
        %vm525 = vcmp.lt.s32.totalorder %v249, 0
        %v526 = vsub.s32 0, %v249
        %v527 = vsel %vm525, %v526, %v249
        %v528 = vmul.u32.u64.compose %v527, 3817748708
        %v529 = vextract.low.u32 %v528
        %v530 = vextract.high.u32 %v528
        %v531 = vshrl.u32 %v530, 4
        %v532 = vmul.u32 %v531, 18
        %v533 = vsub.s32 %v527, %v532
        %v534 = vsub.s32 0, %v533
        %v535 = vsel %vm525, %v534, %v533
        %vm536 = vcmp.lt.s32.totalorder %v250, 0
        %v537 = vsub.s32 0, %v250
        %v538 = vsel %vm536, %v537, %v250
        %v539 = vmul.u32.u64.compose %v538, 3817748708
        %v540 = vextract.low.u32 %v539
        %v541 = vextract.high.u32 %v539
        %v542 = vshrl.u32 %v541, 4
        %v543 = vmul.u32 %v542, 18
        %v544 = vsub.s32 %v538, %v543
        %v545 = vsub.s32 0, %v544
        %v546 = vsel %vm536, %v545, %v544
        %vm547 = vcmp.lt.s32.totalorder %v251, 0
        %v548 = vsub.s32 0, %v251
        %v549 = vsel %vm547, %v548, %v251
        %v550 = vmul.u32.u64.compose %v549, 3817748708
        %v551 = vextract.low.u32 %v550
        %v552 = vextract.high.u32 %v550
        %v553 = vshrl.u32 %v552, 4
        %v554 = vmul.u32 %v553, 18
        %v555 = vsub.s32 %v549, %v554
        %v556 = vsub.s32 0, %v555
        %v557 = vsel %vm547, %v556, %v555
        %vm558 = vcmp.lt.s32.totalorder %v252, 0
        %v559 = vsub.s32 0, %v252
        %v560 = vsel %vm558, %v559, %v252
        %v561 = vmul.u32.u64.compose %v560, 3817748708
        %v562 = vextract.low.u32 %v561
        %v563 = vextract.high.u32 %v561
        %v564 = vshrl.u32 %v563, 4
        %v565 = vmul.u32 %v564, 18
        %v566 = vsub.s32 %v560, %v565
        %v567 = vsub.s32 0, %v566
        %v568 = vsel %vm558, %v567, %v566
        %vm569 = vcmp.lt.s32.totalorder %v253, 0
        %v570 = vsub.s32 0, %v253
        %v571 = vsel %vm569, %v570, %v253
        %v572 = vmul.u32.u64.compose %v571, 3817748708
        %v573 = vextract.low.u32 %v572
        %v574 = vextract.high.u32 %v572
        %v575 = vshrl.u32 %v574, 4
        %v576 = vmul.u32 %v575, 18
        %v577 = vsub.s32 %v571, %v576
        %v578 = vsub.s32 0, %v577
        %v579 = vsel %vm569, %v578, %v577
        %vm580 = vcmp.lt.s32.totalorder %v254, 0
        %v581 = vsub.s32 0, %v254
        %v582 = vsel %vm580, %v581, %v254
        %v583 = vmul.u32.u64.compose %v582, 3817748708
        %v584 = vextract.low.u32 %v583
        %v585 = vextract.high.u32 %v583
        %v586 = vshrl.u32 %v585, 4
        %v587 = vmul.u32 %v586, 18
        %v588 = vsub.s32 %v582, %v587
        %v589 = vsub.s32 0, %v588
        %v590 = vsel %vm580, %v589, %v588
        %vm591 = vcmp.lt.s32.totalorder %v255, 0
        %v592 = vsub.s32 0, %v255
        %v593 = vsel %vm591, %v592, %v255
        %v594 = vmul.u32.u64.compose %v593, 3817748708
        %v595 = vextract.low.u32 %v594
        %v596 = vextract.high.u32 %v594
        %v597 = vshrl.u32 %v596, 4
        %v598 = vmul.u32 %v597, 18
        %v599 = vsub.s32 %v593, %v598
        %v600 = vsub.s32 0, %v599
        %v601 = vsel %vm591, %v600, %v599
        %vm602 = vcmp.lt.s32.totalorder %v256, 0
        %v603 = vsub.s32 0, %v256
        %v604 = vsel %vm602, %v603, %v256
        %v605 = vmul.u32.u64.compose %v604, 3817748708
        %v606 = vextract.low.u32 %v605
        %v607 = vextract.high.u32 %v605
        %v608 = vshrl.u32 %v607, 4
        %v609 = vmul.u32 %v608, 18
        %v610 = vsub.s32 %v604, %v609
        %v611 = vsub.s32 0, %v610
        %v612 = vsel %vm602, %v611, %v610
        %vm613 = vcmp.lt.s32.totalorder %v257, 0
        %v614 = vsub.s32 0, %v257
        %v615 = vsel %vm613, %v614, %v257
        %v616 = vmul.u32.u64.compose %v615, 3817748708
        %v617 = vextract.low.u32 %v616
        %v618 = vextract.high.u32 %v616
        %v619 = vshrl.u32 %v618, 4
        %v620 = vmul.u32 %v619, 18
        %v621 = vsub.s32 %v615, %v620
        %v622 = vsub.s32 0, %v621
        %v623 = vsel %vm613, %v622, %v621
        %vm624 = vcmp.lt.s32.totalorder %v258, 0
        %v625 = vsub.s32 0, %v258
        %v626 = vsel %vm624, %v625, %v258
        %v627 = vmul.u32.u64.compose %v626, 3817748708
        %v628 = vextract.low.u32 %v627
        %v629 = vextract.high.u32 %v627
        %v630 = vshrl.u32 %v629, 4
        %v631 = vmul.u32 %v630, 18
        %v632 = vsub.s32 %v626, %v631
        %v633 = vsub.s32 0, %v632
        %v634 = vsel %vm624, %v633, %v632
        %vm635 = vcmp.lt.s32.totalorder %v259, 0
        %v636 = vsub.s32 0, %v259
        %v637 = vsel %vm635, %v636, %v259
        %v638 = vmul.u32.u64.compose %v637, 3817748708
        %v639 = vextract.low.u32 %v638
        %v640 = vextract.high.u32 %v638
        %v641 = vshrl.u32 %v640, 4
        %v642 = vmul.u32 %v641, 18
        %v643 = vsub.s32 %v637, %v642
        %v644 = vsub.s32 0, %v643
        %v645 = vsel %vm635, %v644, %v643
        %vm646 = vcmp.lt.s32.totalorder %v260, 0
        %v647 = vsub.s32 0, %v260
        %v648 = vsel %vm646, %v647, %v260
        %v649 = vmul.u32.u64.compose %v648, 3817748708
        %v650 = vextract.low.u32 %v649
        %v651 = vextract.high.u32 %v649
        %v652 = vshrl.u32 %v651, 4
        %v653 = vmul.u32 %v652, 18
        %v654 = vsub.s32 %v648, %v653
        %v655 = vsub.s32 0, %v654
        %v656 = vsel %vm646, %v655, %v654
        %vm657 = vcmp.ne.s32.totalorder %v271, 0
        %vm658 = vcmp.ne.s32.totalorder %v282, 0
        %vm659 = vcmp.ne.s32.totalorder %v293, 0
        %vm660 = vcmp.ne.s32.totalorder %v304, 0
        %vm661 = vcmp.ne.s32.totalorder %v315, 0
        %vm662 = vcmp.ne.s32.totalorder %v326, 0
        %vm663 = vcmp.ne.s32.totalorder %v337, 0
        %vm664 = vcmp.ne.s32.totalorder %v348, 0
        %vm665 = vcmp.ne.s32.totalorder %v359, 0
        %vm666 = vcmp.ne.s32.totalorder %v370, 0
        %vm667 = vcmp.ne.s32.totalorder %v381, 0
        %vm668 = vcmp.ne.s32.totalorder %v392, 0
        %vm669 = vcmp.ne.s32.totalorder %v403, 0
        %vm670 = vcmp.ne.s32.totalorder %v414, 0
        %vm671 = vcmp.ne.s32.totalorder %v425, 0
        %vm672 = vcmp.ne.s32.totalorder %v436, 0
        %vm673 = vcmp.ne.s32.totalorder %v447, 0
        %vm674 = vcmp.ne.s32.totalorder %v458, 0
        %vm675 = vcmp.ne.s32.totalorder %v469, 0
        %vm676 = vcmp.ne.s32.totalorder %v480, 0
        %vm677 = vcmp.ne.s32.totalorder %v491, 0
        %vm678 = vcmp.ne.s32.totalorder %v502, 0
        %vm679 = vcmp.ne.s32.totalorder %v513, 0
        %vm680 = vcmp.ne.s32.totalorder %v524, 0
        %vm681 = vcmp.ne.s32.totalorder %v535, 0
        %vm682 = vcmp.ne.s32.totalorder %v546, 0
        %vm683 = vcmp.ne.s32.totalorder %v557, 0
        %vm684 = vcmp.ne.s32.totalorder %v568, 0
        %vm685 = vcmp.ne.s32.totalorder %v579, 0
        %vm686 = vcmp.ne.s32.totalorder %v590, 0
        %vm687 = vcmp.ne.s32.totalorder %v601, 0
        %vm688 = vcmp.ne.s32.totalorder %v612, 0
        %vm689 = vcmp.ne.s32.totalorder %v623, 0
        %vm690 = vcmp.ne.s32.totalorder %v634, 0
        %vm691 = vcmp.ne.s32.totalorder %v645, 0
        %vm692 = vcmp.ne.s32.totalorder %v656, 0
        %vm693 = vcmp.lt.s32.totalorder %v271, 0
        %vm694 = vcmp.lt.s32.totalorder %v282, 0
        %vm695 = vcmp.lt.s32.totalorder %v293, 0
        %vm696 = vcmp.lt.s32.totalorder %v304, 0
        %vm697 = vcmp.lt.s32.totalorder %v315, 0
        %vm698 = vcmp.lt.s32.totalorder %v326, 0
        %vm699 = vcmp.lt.s32.totalorder %v337, 0
        %vm700 = vcmp.lt.s32.totalorder %v348, 0
        %vm701 = vcmp.lt.s32.totalorder %v359, 0
        %vm702 = vcmp.lt.s32.totalorder %v370, 0
        %vm703 = vcmp.lt.s32.totalorder %v381, 0
        %vm704 = vcmp.lt.s32.totalorder %v392, 0
        %vm705 = vcmp.lt.s32.totalorder %v403, 0
        %vm706 = vcmp.lt.s32.totalorder %v414, 0
        %vm707 = vcmp.lt.s32.totalorder %v425, 0
        %vm708 = vcmp.lt.s32.totalorder %v436, 0
        %vm709 = vcmp.lt.s32.totalorder %v447, 0
        %vm710 = vcmp.lt.s32.totalorder %v458, 0
        %vm711 = vcmp.lt.s32.totalorder %v469, 0
        %vm712 = vcmp.lt.s32.totalorder %v480, 0
        %vm713 = vcmp.lt.s32.totalorder %v491, 0
        %vm714 = vcmp.lt.s32.totalorder %v502, 0
        %vm715 = vcmp.lt.s32.totalorder %v513, 0
        %vm716 = vcmp.lt.s32.totalorder %v524, 0
        %vm717 = vcmp.lt.s32.totalorder %v535, 0
        %vm718 = vcmp.lt.s32.totalorder %v546, 0
        %vm719 = vcmp.lt.s32.totalorder %v557, 0
        %vm720 = vcmp.lt.s32.totalorder %v568, 0
        %vm721 = vcmp.lt.s32.totalorder %v579, 0
        %vm722 = vcmp.lt.s32.totalorder %v590, 0
        %vm723 = vcmp.lt.s32.totalorder %v601, 0
        %vm724 = vcmp.lt.s32.totalorder %v612, 0
        %vm725 = vcmp.lt.s32.totalorder %v623, 0
        %vm726 = vcmp.lt.s32.totalorder %v634, 0
        %vm727 = vcmp.lt.s32.totalorder %v645, 0
        %vm728 = vcmp.lt.s32.totalorder %v656, 0
        %vm729 = vmand %vm693, %vm657
        %vm730 = vmand %vm694, %vm658
        %vm731 = vmand %vm695, %vm659
        %vm732 = vmand %vm696, %vm660
        %vm733 = vmand %vm697, %vm661
        %vm734 = vmand %vm698, %vm662
        %vm735 = vmand %vm699, %vm663
        %vm736 = vmand %vm700, %vm664
        %vm737 = vmand %vm701, %vm665
        %vm738 = vmand %vm702, %vm666
        %vm739 = vmand %vm703, %vm667
        %vm740 = vmand %vm704, %vm668
        %vm741 = vmand %vm705, %vm669
        %vm742 = vmand %vm706, %vm670
        %vm743 = vmand %vm707, %vm671
        %vm744 = vmand %vm708, %vm672
        %vm745 = vmand %vm709, %vm673
        %vm746 = vmand %vm710, %vm674
        %vm747 = vmand %vm711, %vm675
        %vm748 = vmand %vm712, %vm676
        %vm749 = vmand %vm713, %vm677
        %vm750 = vmand %vm714, %vm678
        %vm751 = vmand %vm715, %vm679
        %vm752 = vmand %vm716, %vm680
        %vm753 = vmand %vm717, %vm681
        %vm754 = vmand %vm718, %vm682
        %vm755 = vmand %vm719, %vm683
        %vm756 = vmand %vm720, %vm684
        %vm757 = vmand %vm721, %vm685
        %vm758 = vmand %vm722, %vm686
        %vm759 = vmand %vm723, %vm687
        %vm760 = vmand %vm724, %vm688
        %vm761 = vmand %vm725, %vm689
        %vm762 = vmand %vm726, %vm690
        %vm763 = vmand %vm727, %vm691
        %vm764 = vmand %vm728, %vm692
        %v765 = vadd.s32 %v271, 18
        %v766 = vadd.s32 %v282, 18
        %v767 = vadd.s32 %v293, 18
        %v768 = vadd.s32 %v304, 18
        %v769 = vadd.s32 %v315, 18
        %v770 = vadd.s32 %v326, 18
        %v771 = vadd.s32 %v337, 18
        %v772 = vadd.s32 %v348, 18
        %v773 = vadd.s32 %v359, 18
        %v774 = vadd.s32 %v370, 18
        %v775 = vadd.s32 %v381, 18
        %v776 = vadd.s32 %v392, 18
        %v777 = vadd.s32 %v403, 18
        %v778 = vadd.s32 %v414, 18
        %v779 = vadd.s32 %v425, 18
        %v780 = vadd.s32 %v436, 18
        %v781 = vadd.s32 %v447, 18
        %v782 = vadd.s32 %v458, 18
        %v783 = vadd.s32 %v469, 18
        %v784 = vadd.s32 %v480, 18
        %v785 = vadd.s32 %v491, 18
        %v786 = vadd.s32 %v502, 18
        %v787 = vadd.s32 %v513, 18
        %v788 = vadd.s32 %v524, 18
        %v789 = vadd.s32 %v535, 18
        %v790 = vadd.s32 %v546, 18
        %v791 = vadd.s32 %v557, 18
        %v792 = vadd.s32 %v568, 18
        %v793 = vadd.s32 %v579, 18
        %v794 = vadd.s32 %v590, 18
        %v795 = vadd.s32 %v601, 18
        %v796 = vadd.s32 %v612, 18
        %v797 = vadd.s32 %v623, 18
        %v798 = vadd.s32 %v634, 18
        %v799 = vadd.s32 %v645, 18
        %v800 = vadd.s32 %v656, 18
        %v801 = vsel %vm729, %v765, %v271
        %v802 = vsel %vm730, %v766, %v282
        %v803 = vsel %vm731, %v767, %v293
        %v804 = vsel %vm732, %v768, %v304
        %v805 = vsel %vm733, %v769, %v315
        %v806 = vsel %vm734, %v770, %v326
        %v807 = vsel %vm735, %v771, %v337
        %v808 = vsel %vm736, %v772, %v348
        %v809 = vsel %vm737, %v773, %v359
        %v810 = vsel %vm738, %v774, %v370
        %v811 = vsel %vm739, %v775, %v381
        %v812 = vsel %vm740, %v776, %v392
        %v813 = vsel %vm741, %v777, %v403
        %v814 = vsel %vm742, %v778, %v414
        %v815 = vsel %vm743, %v779, %v425
        %v816 = vsel %vm744, %v780, %v436
        %v817 = vsel %vm745, %v781, %v447
        %v818 = vsel %vm746, %v782, %v458
        %v819 = vsel %vm747, %v783, %v469
        %v820 = vsel %vm748, %v784, %v480
        %v821 = vsel %vm749, %v785, %v491
        %v822 = vsel %vm750, %v786, %v502
        %v823 = vsel %vm751, %v787, %v513
        %v824 = vsel %vm752, %v788, %v524
        %v825 = vsel %vm753, %v789, %v535
        %v826 = vsel %vm754, %v790, %v546
        %v827 = vsel %vm755, %v791, %v557
        %v828 = vsel %vm756, %v792, %v568
        %v829 = vsel %vm757, %v793, %v579
        %v830 = vsel %vm758, %v794, %v590
        %v831 = vsel %vm759, %v795, %v601
        %v832 = vsel %vm760, %v796, %v612
        %v833 = vsel %vm761, %v797, %v623
        %v834 = vsel %vm762, %v798, %v634
        %v835 = vsel %vm763, %v799, %v645
        %v836 = vsel %vm764, %v800, %v656
        %vm837 = vcmp.lt.s32.totalorder %v801, 16
        %vm838 = vcmp.lt.s32.totalorder %v802, 16
        %vm839 = vcmp.lt.s32.totalorder %v803, 16
        %vm840 = vcmp.lt.s32.totalorder %v804, 16
        %vm841 = vcmp.lt.s32.totalorder %v805, 16
        %vm842 = vcmp.lt.s32.totalorder %v806, 16
        %vm843 = vcmp.lt.s32.totalorder %v807, 16
        %vm844 = vcmp.lt.s32.totalorder %v808, 16
        %vm845 = vcmp.lt.s32.totalorder %v809, 16
        %vm846 = vcmp.lt.s32.totalorder %v810, 16
        %vm847 = vcmp.lt.s32.totalorder %v811, 16
        %vm848 = vcmp.lt.s32.totalorder %v812, 16
        %vm849 = vcmp.lt.s32.totalorder %v813, 16
        %vm850 = vcmp.lt.s32.totalorder %v814, 16
        %vm851 = vcmp.lt.s32.totalorder %v815, 16
        %vm852 = vcmp.lt.s32.totalorder %v816, 16
        %vm853 = vcmp.lt.s32.totalorder %v817, 16
        %vm854 = vcmp.lt.s32.totalorder %v818, 16
        %vm855 = vcmp.lt.s32.totalorder %v819, 16
        %vm856 = vcmp.lt.s32.totalorder %v820, 16
        %vm857 = vcmp.lt.s32.totalorder %v821, 16
        %vm858 = vcmp.lt.s32.totalorder %v822, 16
        %vm859 = vcmp.lt.s32.totalorder %v823, 16
        %vm860 = vcmp.lt.s32.totalorder %v824, 16
        %vm861 = vcmp.lt.s32.totalorder %v825, 16
        %vm862 = vcmp.lt.s32.totalorder %v826, 16
        %vm863 = vcmp.lt.s32.totalorder %v827, 16
        %vm864 = vcmp.lt.s32.totalorder %v828, 16
        %vm865 = vcmp.lt.s32.totalorder %v829, 16
        %vm866 = vcmp.lt.s32.totalorder %v830, 16
        %vm867 = vcmp.lt.s32.totalorder %v831, 16
        %vm868 = vcmp.lt.s32.totalorder %v832, 16
        %vm869 = vcmp.lt.s32.totalorder %v833, 16
        %vm870 = vcmp.lt.s32.totalorder %v834, 16
        %vm871 = vcmp.lt.s32.totalorder %v835, 16
        %vm872 = vcmp.lt.s32.totalorder %v836, 16
        %873 = vst [vmem:[#allocation2 + $0xa0] sm:$0xc] 0
        %874 = vst [vmem:[#allocation2 + $0xa4] sm:$0xf] 0
        %875 = vst [vmem:[#allocation2 + $0xa8] sm:$0x7] 0
        %v876 = vld [vmem:[%s222] sm:$0xff]
        %v877 = vld [vmem:[%s222 + $0x8] sm:$0xff]
        %v878 = vld [vmem:[%s222 + $0x10] sm:$0xff]
        %v879 = vld [vmem:[%s222 + $0x18] sm:$0xff]
        %v880 = vld [vmem:[%s222 + $0x20] sm:$0xff]
        %v881 = vld [vmem:[%s222 + $0x28] sm:$0xff]
        %v882 = vld [vmem:[%s222 + $0x30] sm:$0xff]
        %v883 = vld [vmem:[%s222 + $0x38] sm:$0xff]
        %v884 = vld [vmem:[%s222 + $0x40] sm:$0xff]
        %v885 = vld [vmem:[%s222 + $0x48] sm:$0xff]
        %v886 = vld [vmem:[%s222 + $0x50] sm:$0xff]
        %v887 = vld [vmem:[%s222 + $0x58] sm:$0xff]
        %v888 = vld [vmem:[%s222 + $0x60] sm:$0xff]
        %v889 = vld [vmem:[%s222 + $0x68] sm:$0xff]
        %v890 = vld [vmem:[%s222 + $0x70] sm:$0xff]
        %v891 = vld [vmem:[%s222 + $0x78] sm:$0xff]
        %v892 = vld [vmem:[%s222 + $0x80] sm:$0xff]
        %v893 = vld [vmem:[%s222 + $0x88] sm:$0xff]
        %v894 = vld [vmem:[%s222 + $0x90] sm:$0xff]
        %v895 = vld [vmem:[%s222 + $0x98] sm:$0xff]
        %v896 = vld [vmem:[%s222 + $0xa0] sm:$0xff]
        %v897 = vld [vmem:[%s222 + $0xa8] sm:$0xff]
        %v898 = vld [vmem:[%s222 + $0xb0] sm:$0xff]
        %v899 = vld [vmem:[%s222 + $0xb8] sm:$0xff]
        %v900 = vld [vmem:[%s222 + $0xc0] sm:$0xff]
        %v901 = vld [vmem:[%s222 + $0xc8] sm:$0xff]
        %v902 = vld [vmem:[%s222 + $0xd0] sm:$0xff]
        %v903 = vld [vmem:[%s222 + $0xd8] sm:$0xff]
        %v904 = vld [vmem:[%s222 + $0xe0] sm:$0xff]
        %v905 = vld [vmem:[%s222 + $0xe8] sm:$0xff]
        %v906 = vld [vmem:[%s222 + $0xf0] sm:$0xff]
        %v907 = vld [vmem:[%s222 + $0xf8] sm:$0xff]
        %v908 = vpack.c.bf16 %v877, %v876
        %v909 = vpack.c.bf16 %v879, %v878
        %v910 = vpack.c.bf16 %v881, %v880
        %v911 = vpack.c.bf16 %v883, %v882
        %v912 = vpack.c.bf16 %v885, %v884
        %v913 = vpack.c.bf16 %v887, %v886
        %v914 = vpack.c.bf16 %v889, %v888
        %v915 = vpack.c.bf16 %v891, %v890
        %v916 = vpack.c.bf16 %v893, %v892
        %v917 = vpack.c.bf16 %v895, %v894
        %v918 = vpack.c.bf16 %v897, %v896
        %v919 = vpack.c.bf16 %v899, %v898
        %v920 = vpack.c.bf16 %v901, %v900
        %v921 = vpack.c.bf16 %v903, %v902
        %v922 = vpack.c.bf16 %v905, %v904
        %v923 = vpack.c.bf16 %v907, %v906
        %v925 = vunpack.c.l.b16 %v908
        %v926 = vunpack.c.h.b16 %v908
        %v927 = vpack.c.b16 %v925, %v925
        %v928 = vpack.c.b16 %v926, %v926
        %vm929 = vsmask.f32 1280
        %vm930 = vsmask.f32 5392
        %vm931 = vmor %vm929, %vm930
        %v933 = vshrl.u32 %v927, 16
        %v935 = vrot.slane %v933, 6
        %v936 = vshll.u32 %v927, 16
        %v938 = vrot.slane %v936, 7
        %v939 = vor.u32 %v935, %v938
        %v940 = vrot.slane %v939, 4
        %v942 = vshrl.u32 %v928, 16
        %v944 = vrot.slane %v942, 6
        %v945 = vshll.u32 %v928, 16
        %v947 = vrot.slane %v945, 7
        %v948 = vor.u32 %v944, %v947
        %v949 = vsel %vm931, %v940, %v948
        %v950 = vrot.slane %v948, 4
        %vm954 = vcmask 1043457
        %vm955 = vsmask.f32 7942
        %vm956 = vmand %vm954, %vm955
        %v957 = vld [vmem:[#allocation2 + $0x8] sm:$0xe]
        %v958 = vsel %vm956, %v939, %v957
        %959 = vst [vmem:[#allocation2 + $0x8] sm:$0xe] %v958
        %960 = vst [vmem:[#allocation2 + $0xc] sm:$0xf] %v949
        %vm961 = vcmask 1041408
        %vm962 = vmand %vm961, %vm929
        %v963 = vld [vmem:[#allocation2 + $0x10] sm:$0x3]
        %v964 = vsel %vm962, %v950, %v963
        %965 = vst [vmem:[#allocation2 + $0x10] sm:$0x3] %v964
        %v966 = vrot.slane %v933, 7
        %vm968 = vcmask 1041409
        %vm969 = vmand %vm968, %vm929
        %v970 = vld [vmem:[#allocation2 + $0x8] sm:$0x2]
        %v971 = vsel %vm969, %v966, %v970
        %972 = vst [vmem:[#allocation2 + $0x8] sm:$0x2] %v971
        %v973 = vrot.slane %v945, 6
        %v974 = vrot.slane %v973, 4
        %vm976 = vmand %vm968, %vm955
        %v977 = vld [vmem:[#allocation2 + $0x10] sm:$0x2]
        %v978 = vsel %vm976, %v974, %v977
        %979 = vst [vmem:[#allocation2 + $0x10] sm:$0x2] %v978
        %v981 = vunpack.c.l.b16 %v909
        %v982 = vunpack.c.h.b16 %v909
        %v983 = vpack.c.b16 %v981, %v981
        %v984 = vpack.c.b16 %v982, %v982
        %vm985 = vsmask.f32 2304
        %vm986 = vsmask.f32 6416
        %vm987 = vmor %vm985, %vm986
        %v989 = vshrl.u32 %v983, 16
        %v991 = vrot.slane %v989, 5
        %v992 = vshll.u32 %v983, 16
        %v994 = vrot.slane %v992, 6
        %v995 = vor.u32 %v991, %v994
        %v996 = vrot.slane %v995, 4
        %v998 = vshrl.u32 %v984, 16
        %v1000 = vrot.slane %v998, 5
        %v1001 = vshll.u32 %v984, 16
        %v1003 = vrot.slane %v1001, 6
        %v1004 = vor.u32 %v1000, %v1003
        %v1005 = vsel %vm987, %v996, %v1004
        %v1006 = vrot.slane %v1004, 4
        %vm1010 = vcmask 1043458
        %vm1011 = vsmask.f32 7946
        %vm1012 = vmand %vm1010, %vm1011
        %v1013 = vld [vmem:[#allocation2 + $0x10] sm:$0xc]
        %v1014 = vsel %vm1012, %v995, %v1013
        %1015 = vst [vmem:[#allocation2 + $0x10] sm:$0xc] %v1014
        %1016 = vst [vmem:[#allocation2 + $0x14] sm:$0xf] %v1005
        %vm1017 = vcmask 1042432
        %vm1018 = vmand %vm1017, %vm985
        %v1019 = vld [vmem:[#allocation2 + $0x18] sm:$0x7]
        %v1020 = vsel %vm1018, %v1006, %v1019
        %1021 = vst [vmem:[#allocation2 + $0x18] sm:$0x7] %v1020
        %v1022 = vrot.slane %v989, 6
        %vm1024 = vcmask 1042434
        %vm1025 = vmand %vm1024, %vm985
        %v1026 = vld [vmem:[#allocation2 + $0x10] sm:$0x4]
        %v1027 = vsel %vm1025, %v1022, %v1026
        %1028 = vst [vmem:[#allocation2 + $0x10] sm:$0x4] %v1027
        %v1029 = vrot.slane %v1001, 5
        %v1030 = vrot.slane %v1029, 4
        %vm1032 = vmand %vm1024, %vm1011
        %v1033 = vld [vmem:[#allocation2 + $0x18] sm:$0x4]
        %v1034 = vsel %vm1032, %v1030, %v1033
        %1035 = vst [vmem:[#allocation2 + $0x18] sm:$0x4] %v1034
        %v1037 = vunpack.c.l.b16 %v910
        %v1038 = vunpack.c.h.b16 %v910
        %v1039 = vpack.c.b16 %v1037, %v1037
        %v1040 = vpack.c.b16 %v1038, %v1038
        %vm1041 = vsmask.f32 3328
        %vm1042 = vsmask.f32 7440
        %vm1043 = vmor %vm1041, %vm1042
        %v1045 = vshll.u32 %v1039, 16
        %v1047 = vrot.slane %v1045, 5
        %v1048 = vshrl.u32 %v1039, 16
        %v1050 = vrot.slane %v1048, 4
        %v1051 = vor.u32 %v1050, %v1047
        %v1052 = vrot.slane %v1051, 4
        %v1054 = vshll.u32 %v1040, 16
        %v1056 = vrot.slane %v1054, 5
        %v1057 = vsel %vm1043, %v1052, %v1056
        %v1058 = vshrl.u32 %v1040, 16
        %v1060 = vrot.slane %v1058, 4
        %v1061 = vor.u32 %v1060, %v1056
        %v1062 = vrot.slane %v1061, 4
        %vm1066 = vcmask 1043459
        %vm1067 = vsmask.f32 7950
        %vm1068 = vmand %vm1066, %vm1067
        %v1069 = vld [vmem:[#allocation2 + $0x18] sm:$0x8]
        %v1070 = vsel %vm1068, %v1047, %v1069
        %1071 = vst [vmem:[#allocation2 + $0x18] sm:$0x8] %v1070
        %1072 = vst [vmem:[#allocation2 + $0x1c] sm:$0xf] %v1057
        %vm1073 = vcmask 1043456
        %vm1074 = vmand %vm1073, %vm1041
        %v1075 = vld [vmem:[#allocation2 + $0x20] sm:$0xf]
        %v1076 = vsel %vm1074, %v1062, %v1075
        %1077 = vst [vmem:[#allocation2 + $0x20] sm:$0xf] %v1076
        %v1078 = vrot.slane %v1048, 5
        %vm1080 = vmand %vm1066, %vm1041
        %v1081 = vld [vmem:[#allocation2 + $0x18] sm:$0x8]
        %v1082 = vsel %vm1080, %v1078, %v1081
        %1083 = vst [vmem:[#allocation2 + $0x18] sm:$0x8] %v1082
        %v1085 = vld [vmem:[#allocation2 + $0x20] sm:$0x8]
        %v1086 = vsel %vm1068, %v1054, %v1085
        %1087 = vst [vmem:[#allocation2 + $0x20] sm:$0x8] %v1086
        %v1089 = vunpack.c.l.b16 %v911
        %v1090 = vunpack.c.h.b16 %v911
        %v1091 = vpack.c.b16 %v1089, %v1089
        %v1092 = vpack.c.b16 %v1090, %v1090
        %vm1093 = vsmask.f32 256
        %vm1094 = vsmask.f32 4368
        %vm1095 = vmor %vm1093, %vm1094
        %v1097 = vshrl.u32 %v1091, 16
        %v1099 = vrot.slane %v1097, 7
        %v1100 = vshll.u32 %v1091, 16
        %v1102 = vor.u32 %v1099, %v1100
        %v1103 = vrot.slane %v1099, 4
        %v1105 = vshrl.u32 %v1092, 16
        %v1107 = vrot.slane %v1105, 7
        %v1108 = vshll.u32 %v1092, 16
        %v1110 = vor.u32 %v1107, %v1108
        %v1111 = vsel %vm1095, %v1103, %v1110
        %v1112 = vrot.slane %v1107, 4
        %vm1116 = vsmask.f32 7938
        %vm1117 = vmand %vm1073, %vm1116
        %v1118 = vld [vmem:[#allocation2 + $0x24] sm:$0xf]
        %v1119 = vsel %vm1117, %v1102, %v1118
        %1120 = vst [vmem:[#allocation2 + $0x24] sm:$0xf] %v1119
        %1121 = vst [vmem:[#allocation2 + $0x28] sm:$0xf] %v1111
        %vm1122 = vcmask 1040384
        %vm1123 = vmand %vm1122, %vm1093
        %v1124 = vld [vmem:[#allocation2 + $0x2c] sm:$0x1]
        %v1125 = vsel %vm1123, %v1112, %v1124
        %1126 = vst [vmem:[#allocation2 + $0x2c] sm:$0x1] %v1125
        %v1127 = vrot.slane %v1097, 4
        %v1128 = vrot.slane %v1127, 4
        %v1130 = vld [vmem:[#allocation2 + $0x24] sm:$0x1]
        %v1131 = vsel %vm1123, %v1128, %v1130
        %1132 = vst [vmem:[#allocation2 + $0x24] sm:$0x1] %v1131
        %v1133 = vrot.slane %v1108, 7
        %v1134 = vrot.slane %v1133, 4
        %vm1136 = vmand %vm1122, %vm1116
        %v1137 = vld [vmem:[#allocation2 + $0x2c] sm:$0x1]
        %v1138 = vsel %vm1136, %v1134, %v1137
        %1139 = vst [vmem:[#allocation2 + $0x2c] sm:$0x1] %v1138
        %v1141 = vunpack.c.l.b16 %v912
        %v1142 = vunpack.c.h.b16 %v912
        %v1143 = vpack.c.b16 %v1141, %v1141
        %v1144 = vpack.c.b16 %v1142, %v1142
        %v1146 = vshrl.u32 %v1143, 16
        %v1148 = vrot.slane %v1146, 6
        %v1149 = vshll.u32 %v1143, 16
        %v1151 = vrot.slane %v1149, 7
        %v1152 = vor.u32 %v1148, %v1151
        %v1153 = vrot.slane %v1152, 4
        %v1155 = vshrl.u32 %v1144, 16
        %v1157 = vrot.slane %v1155, 6
        %v1158 = vshll.u32 %v1144, 16
        %v1160 = vrot.slane %v1158, 7
        %v1161 = vor.u32 %v1157, %v1160
        %v1162 = vsel %vm931, %v1153, %v1161
        %v1163 = vrot.slane %v1161, 4
        %v1167 = vld [vmem:[#allocation2 + $0x2c] sm:$0xe]
        %v1168 = vsel %vm956, %v1152, %v1167
        %1169 = vst [vmem:[#allocation2 + $0x2c] sm:$0xe] %v1168
        %1170 = vst [vmem:[#allocation2 + $0x30] sm:$0xf] %v1162
        %v1171 = vld [vmem:[#allocation2 + $0x34] sm:$0x3]
        %v1172 = vsel %vm962, %v1163, %v1171
        %1173 = vst [vmem:[#allocation2 + $0x34] sm:$0x3] %v1172
        %v1174 = vrot.slane %v1146, 7
        %v1176 = vld [vmem:[#allocation2 + $0x2c] sm:$0x2]
        %v1177 = vsel %vm969, %v1174, %v1176
        %1178 = vst [vmem:[#allocation2 + $0x2c] sm:$0x2] %v1177
        %v1179 = vrot.slane %v1158, 6
        %v1180 = vrot.slane %v1179, 4
        %v1182 = vld [vmem:[#allocation2 + $0x34] sm:$0x2]
        %v1183 = vsel %vm976, %v1180, %v1182
        %1184 = vst [vmem:[#allocation2 + $0x34] sm:$0x2] %v1183
        %v1186 = vunpack.c.l.b16 %v913
        %v1187 = vunpack.c.h.b16 %v913
        %v1188 = vpack.c.b16 %v1186, %v1186
        %v1189 = vpack.c.b16 %v1187, %v1187
        %v1191 = vshrl.u32 %v1188, 16
        %v1193 = vrot.slane %v1191, 5
        %v1194 = vshll.u32 %v1188, 16
        %v1196 = vrot.slane %v1194, 6
        %v1197 = vor.u32 %v1193, %v1196
        %v1198 = vrot.slane %v1197, 4
        %v1200 = vshrl.u32 %v1189, 16
        %v1202 = vrot.slane %v1200, 5
        %v1203 = vshll.u32 %v1189, 16
        %v1205 = vrot.slane %v1203, 6
        %v1206 = vor.u32 %v1202, %v1205
        %v1207 = vsel %vm987, %v1198, %v1206
        %v1208 = vrot.slane %v1206, 4
        %v1212 = vld [vmem:[#allocation2 + $0x34] sm:$0xc]
        %v1213 = vsel %vm1012, %v1197, %v1212
        %1214 = vst [vmem:[#allocation2 + $0x34] sm:$0xc] %v1213
        %1215 = vst [vmem:[#allocation2 + $0x38] sm:$0xf] %v1207
        %v1216 = vld [vmem:[#allocation2 + $0x3c] sm:$0x7]
        %v1217 = vsel %vm1018, %v1208, %v1216
        %1218 = vst [vmem:[#allocation2 + $0x3c] sm:$0x7] %v1217
        %v1219 = vrot.slane %v1191, 6
        %v1221 = vld [vmem:[#allocation2 + $0x34] sm:$0x4]
        %v1222 = vsel %vm1025, %v1219, %v1221
        %1223 = vst [vmem:[#allocation2 + $0x34] sm:$0x4] %v1222
        %v1224 = vrot.slane %v1203, 5
        %v1225 = vrot.slane %v1224, 4
        %v1227 = vld [vmem:[#allocation2 + $0x3c] sm:$0x4]
        %v1228 = vsel %vm1032, %v1225, %v1227
        %1229 = vst [vmem:[#allocation2 + $0x3c] sm:$0x4] %v1228
        %v1231 = vunpack.c.l.b16 %v914
        %v1232 = vunpack.c.h.b16 %v914
        %v1233 = vpack.c.b16 %v1231, %v1231
        %v1234 = vpack.c.b16 %v1232, %v1232
        %v1236 = vshll.u32 %v1233, 16
        %v1238 = vrot.slane %v1236, 5
        %v1239 = vshrl.u32 %v1233, 16
        %v1241 = vrot.slane %v1239, 4
        %v1242 = vor.u32 %v1241, %v1238
        %v1243 = vrot.slane %v1242, 4
        %v1245 = vshll.u32 %v1234, 16
        %v1247 = vrot.slane %v1245, 5
        %v1248 = vsel %vm1043, %v1243, %v1247
        %v1249 = vshrl.u32 %v1234, 16
        %v1251 = vrot.slane %v1249, 4
        %v1252 = vor.u32 %v1251, %v1247
        %v1253 = vrot.slane %v1252, 4
        %v1257 = vld [vmem:[#allocation2 + $0x3c] sm:$0x8]
        %v1258 = vsel %vm1068, %v1238, %v1257
        %1259 = vst [vmem:[#allocation2 + $0x3c] sm:$0x8] %v1258
        %1260 = vst [vmem:[#allocation2 + $0x40] sm:$0xf] %v1248
        %v1261 = vld [vmem:[#allocation2 + $0x44] sm:$0xf]
        %v1262 = vsel %vm1074, %v1253, %v1261
        %1263 = vst [vmem:[#allocation2 + $0x44] sm:$0xf] %v1262
        %v1264 = vrot.slane %v1239, 5
        %v1266 = vld [vmem:[#allocation2 + $0x3c] sm:$0x8]
        %v1267 = vsel %vm1080, %v1264, %v1266
        %1268 = vst [vmem:[#allocation2 + $0x3c] sm:$0x8] %v1267
        %v1270 = vld [vmem:[#allocation2 + $0x44] sm:$0x8]
        %v1271 = vsel %vm1068, %v1245, %v1270
        %1272 = vst [vmem:[#allocation2 + $0x44] sm:$0x8] %v1271
        %v1274 = vunpack.c.l.b16 %v915
        %v1275 = vunpack.c.h.b16 %v915
        %v1276 = vpack.c.b16 %v1274, %v1274
        %v1277 = vpack.c.b16 %v1275, %v1275
        %v1279 = vshrl.u32 %v1276, 16
        %v1281 = vrot.slane %v1279, 7
        %v1282 = vshll.u32 %v1276, 16
        %v1284 = vor.u32 %v1281, %v1282
        %v1285 = vrot.slane %v1281, 4
        %v1287 = vshrl.u32 %v1277, 16
        %v1289 = vrot.slane %v1287, 7
        %v1290 = vshll.u32 %v1277, 16
        %v1292 = vor.u32 %v1289, %v1290
        %v1293 = vsel %vm1095, %v1285, %v1292
        %v1294 = vrot.slane %v1289, 4
        %v1298 = vld [vmem:[#allocation2 + $0x48] sm:$0xf]
        %v1299 = vsel %vm1117, %v1284, %v1298
        %1300 = vst [vmem:[#allocation2 + $0x48] sm:$0xf] %v1299
        %1301 = vst [vmem:[#allocation2 + $0x4c] sm:$0xf] %v1293
        %v1302 = vld [vmem:[#allocation2 + $0x50] sm:$0x1]
        %v1303 = vsel %vm1123, %v1294, %v1302
        %1304 = vst [vmem:[#allocation2 + $0x50] sm:$0x1] %v1303
        %v1305 = vrot.slane %v1279, 4
        %v1306 = vrot.slane %v1305, 4
        %v1308 = vld [vmem:[#allocation2 + $0x48] sm:$0x1]
        %v1309 = vsel %vm1123, %v1306, %v1308
        %1310 = vst [vmem:[#allocation2 + $0x48] sm:$0x1] %v1309
        %v1311 = vrot.slane %v1290, 7
        %v1312 = vrot.slane %v1311, 4
        %v1314 = vld [vmem:[#allocation2 + $0x50] sm:$0x1]
        %v1315 = vsel %vm1136, %v1312, %v1314
        %1316 = vst [vmem:[#allocation2 + $0x50] sm:$0x1] %v1315
        %v1318 = vunpack.c.l.b16 %v916
        %v1319 = vunpack.c.h.b16 %v916
        %v1320 = vpack.c.b16 %v1318, %v1318
        %v1321 = vpack.c.b16 %v1319, %v1319
        %v1323 = vshrl.u32 %v1320, 16
        %v1325 = vrot.slane %v1323, 6
        %v1326 = vshll.u32 %v1320, 16
        %v1328 = vrot.slane %v1326, 7
        %v1329 = vor.u32 %v1325, %v1328
        %v1330 = vrot.slane %v1329, 4
        %v1332 = vshrl.u32 %v1321, 16
        %v1334 = vrot.slane %v1332, 6
        %v1335 = vshll.u32 %v1321, 16
        %v1337 = vrot.slane %v1335, 7
        %v1338 = vor.u32 %v1334, %v1337
        %v1339 = vsel %vm931, %v1330, %v1338
        %v1340 = vrot.slane %v1338, 4
        %v1344 = vld [vmem:[#allocation2 + $0x50] sm:$0xe]
        %v1345 = vsel %vm956, %v1329, %v1344
        %1346 = vst [vmem:[#allocation2 + $0x50] sm:$0xe] %v1345
        %1347 = vst [vmem:[#allocation2 + $0x54] sm:$0xf] %v1339
        %v1348 = vld [vmem:[#allocation2 + $0x58] sm:$0x3]
        %v1349 = vsel %vm962, %v1340, %v1348
        %1350 = vst [vmem:[#allocation2 + $0x58] sm:$0x3] %v1349
        %v1351 = vrot.slane %v1323, 7
        %v1353 = vld [vmem:[#allocation2 + $0x50] sm:$0x2]
        %v1354 = vsel %vm969, %v1351, %v1353
        %1355 = vst [vmem:[#allocation2 + $0x50] sm:$0x2] %v1354
        %v1356 = vrot.slane %v1335, 6
        %v1357 = vrot.slane %v1356, 4
        %v1359 = vld [vmem:[#allocation2 + $0x58] sm:$0x2]
        %v1360 = vsel %vm976, %v1357, %v1359
        %1361 = vst [vmem:[#allocation2 + $0x58] sm:$0x2] %v1360
        %v1363 = vunpack.c.l.b16 %v917
        %v1364 = vunpack.c.h.b16 %v917
        %v1365 = vpack.c.b16 %v1363, %v1363
        %v1366 = vpack.c.b16 %v1364, %v1364
        %v1368 = vshrl.u32 %v1365, 16
        %v1370 = vrot.slane %v1368, 5
        %v1371 = vshll.u32 %v1365, 16
        %v1373 = vrot.slane %v1371, 6
        %v1374 = vor.u32 %v1370, %v1373
        %v1375 = vrot.slane %v1374, 4
        %v1377 = vshrl.u32 %v1366, 16
        %v1379 = vrot.slane %v1377, 5
        %v1380 = vshll.u32 %v1366, 16
        %v1382 = vrot.slane %v1380, 6
        %v1383 = vor.u32 %v1379, %v1382
        %v1384 = vsel %vm987, %v1375, %v1383
        %v1385 = vrot.slane %v1383, 4
        %v1389 = vld [vmem:[#allocation2 + $0x58] sm:$0xc]
        %v1390 = vsel %vm1012, %v1374, %v1389
        %1391 = vst [vmem:[#allocation2 + $0x58] sm:$0xc] %v1390
        %1392 = vst [vmem:[#allocation2 + $0x5c] sm:$0xf] %v1384
        %v1393 = vld [vmem:[#allocation2 + $0x60] sm:$0x7]
        %v1394 = vsel %vm1018, %v1385, %v1393
        %1395 = vst [vmem:[#allocation2 + $0x60] sm:$0x7] %v1394
        %v1396 = vrot.slane %v1368, 6
        %v1398 = vld [vmem:[#allocation2 + $0x58] sm:$0x4]
        %v1399 = vsel %vm1025, %v1396, %v1398
        %1400 = vst [vmem:[#allocation2 + $0x58] sm:$0x4] %v1399
        %v1401 = vrot.slane %v1380, 5
        %v1402 = vrot.slane %v1401, 4
        %v1404 = vld [vmem:[#allocation2 + $0x60] sm:$0x4]
        %v1405 = vsel %vm1032, %v1402, %v1404
        %1406 = vst [vmem:[#allocation2 + $0x60] sm:$0x4] %v1405
        %v1408 = vunpack.c.l.b16 %v918
        %v1409 = vunpack.c.h.b16 %v918
        %v1410 = vpack.c.b16 %v1408, %v1408
        %v1411 = vpack.c.b16 %v1409, %v1409
        %v1413 = vshll.u32 %v1410, 16
        %v1415 = vrot.slane %v1413, 5
        %v1416 = vshrl.u32 %v1410, 16
        %v1418 = vrot.slane %v1416, 4
        %v1419 = vor.u32 %v1418, %v1415
        %v1420 = vrot.slane %v1419, 4
        %v1422 = vshll.u32 %v1411, 16
        %v1424 = vrot.slane %v1422, 5
        %v1425 = vsel %vm1043, %v1420, %v1424
        %v1426 = vshrl.u32 %v1411, 16
        %v1428 = vrot.slane %v1426, 4
        %v1429 = vor.u32 %v1428, %v1424
        %v1430 = vrot.slane %v1429, 4
        %v1434 = vld [vmem:[#allocation2 + $0x60] sm:$0x8]
        %v1435 = vsel %vm1068, %v1415, %v1434
        %1436 = vst [vmem:[#allocation2 + $0x60] sm:$0x8] %v1435
        %1437 = vst [vmem:[#allocation2 + $0x64] sm:$0xf] %v1425
        %v1438 = vld [vmem:[#allocation2 + $0x68] sm:$0xf]
        %v1439 = vsel %vm1074, %v1430, %v1438
        %1440 = vst [vmem:[#allocation2 + $0x68] sm:$0xf] %v1439
        %v1441 = vrot.slane %v1416, 5
        %v1443 = vld [vmem:[#allocation2 + $0x60] sm:$0x8]
        %v1444 = vsel %vm1080, %v1441, %v1443
        %1445 = vst [vmem:[#allocation2 + $0x60] sm:$0x8] %v1444
        %v1447 = vld [vmem:[#allocation2 + $0x68] sm:$0x8]
        %v1448 = vsel %vm1068, %v1422, %v1447
        %1449 = vst [vmem:[#allocation2 + $0x68] sm:$0x8] %v1448
        %v1451 = vunpack.c.l.b16 %v919
        %v1452 = vunpack.c.h.b16 %v919
        %v1453 = vpack.c.b16 %v1451, %v1451
        %v1454 = vpack.c.b16 %v1452, %v1452
        %v1456 = vshrl.u32 %v1453, 16
        %v1458 = vrot.slane %v1456, 7
        %v1459 = vshll.u32 %v1453, 16
        %v1461 = vor.u32 %v1458, %v1459
        %v1462 = vrot.slane %v1458, 4
        %v1464 = vshrl.u32 %v1454, 16
        %v1466 = vrot.slane %v1464, 7
        %v1467 = vshll.u32 %v1454, 16
        %v1469 = vor.u32 %v1466, %v1467
        %v1470 = vsel %vm1095, %v1462, %v1469
        %v1471 = vrot.slane %v1466, 4
        %v1475 = vld [vmem:[#allocation2 + $0x6c] sm:$0xf]
        %v1476 = vsel %vm1117, %v1461, %v1475
        %1477 = vst [vmem:[#allocation2 + $0x6c] sm:$0xf] %v1476
        %1478 = vst [vmem:[#allocation2 + $0x70] sm:$0xf] %v1470
        %v1479 = vld [vmem:[#allocation2 + $0x74] sm:$0x1]
        %v1480 = vsel %vm1123, %v1471, %v1479
        %1481 = vst [vmem:[#allocation2 + $0x74] sm:$0x1] %v1480
        %v1482 = vrot.slane %v1456, 4
        %v1483 = vrot.slane %v1482, 4
        %v1485 = vld [vmem:[#allocation2 + $0x6c] sm:$0x1]
        %v1486 = vsel %vm1123, %v1483, %v1485
        %1487 = vst [vmem:[#allocation2 + $0x6c] sm:$0x1] %v1486
        %v1488 = vrot.slane %v1467, 7
        %v1489 = vrot.slane %v1488, 4
        %v1491 = vld [vmem:[#allocation2 + $0x74] sm:$0x1]
        %v1492 = vsel %vm1136, %v1489, %v1491
        %1493 = vst [vmem:[#allocation2 + $0x74] sm:$0x1] %v1492
        %v1495 = vunpack.c.l.b16 %v920
        %v1496 = vunpack.c.h.b16 %v920
        %v1497 = vpack.c.b16 %v1495, %v1495
        %v1498 = vpack.c.b16 %v1496, %v1496
        %v1500 = vshrl.u32 %v1497, 16
        %v1502 = vrot.slane %v1500, 6
        %v1503 = vshll.u32 %v1497, 16
        %v1505 = vrot.slane %v1503, 7
        %v1506 = vor.u32 %v1502, %v1505
        %v1507 = vrot.slane %v1506, 4
        %v1509 = vshrl.u32 %v1498, 16
        %v1511 = vrot.slane %v1509, 6
        %v1512 = vshll.u32 %v1498, 16
        %v1514 = vrot.slane %v1512, 7
        %v1515 = vor.u32 %v1511, %v1514
        %v1516 = vsel %vm931, %v1507, %v1515
        %v1517 = vrot.slane %v1515, 4
        %v1521 = vld [vmem:[#allocation2 + $0x74] sm:$0xe]
        %v1522 = vsel %vm956, %v1506, %v1521
        %1523 = vst [vmem:[#allocation2 + $0x74] sm:$0xe] %v1522
        %1524 = vst [vmem:[#allocation2 + $0x78] sm:$0xf] %v1516
        %v1525 = vld [vmem:[#allocation2 + $0x7c] sm:$0x3]
        %v1526 = vsel %vm962, %v1517, %v1525
        %1527 = vst [vmem:[#allocation2 + $0x7c] sm:$0x3] %v1526
        %v1528 = vrot.slane %v1500, 7
        %v1530 = vld [vmem:[#allocation2 + $0x74] sm:$0x2]
        %v1531 = vsel %vm969, %v1528, %v1530
        %1532 = vst [vmem:[#allocation2 + $0x74] sm:$0x2] %v1531
        %v1533 = vrot.slane %v1512, 6
        %v1534 = vrot.slane %v1533, 4
        %v1536 = vld [vmem:[#allocation2 + $0x7c] sm:$0x2]
        %v1537 = vsel %vm976, %v1534, %v1536
        %1538 = vst [vmem:[#allocation2 + $0x7c] sm:$0x2] %v1537
        %v1540 = vunpack.c.l.b16 %v921
        %v1541 = vunpack.c.h.b16 %v921
        %v1542 = vpack.c.b16 %v1540, %v1540
        %v1543 = vpack.c.b16 %v1541, %v1541
        %v1545 = vshrl.u32 %v1542, 16
        %v1547 = vrot.slane %v1545, 5
        %v1548 = vshll.u32 %v1542, 16
        %v1550 = vrot.slane %v1548, 6
        %v1551 = vor.u32 %v1547, %v1550
        %v1552 = vrot.slane %v1551, 4
        %v1554 = vshrl.u32 %v1543, 16
        %v1556 = vrot.slane %v1554, 5
        %v1557 = vshll.u32 %v1543, 16
        %v1559 = vrot.slane %v1557, 6
        %v1560 = vor.u32 %v1556, %v1559
        %v1561 = vsel %vm987, %v1552, %v1560
        %v1562 = vrot.slane %v1560, 4
        %v1566 = vld [vmem:[#allocation2 + $0x7c] sm:$0xc]
        %v1567 = vsel %vm1012, %v1551, %v1566
        %1568 = vst [vmem:[#allocation2 + $0x7c] sm:$0xc] %v1567
        %1569 = vst [vmem:[#allocation2 + $0x80] sm:$0xf] %v1561
        %v1570 = vld [vmem:[#allocation2 + $0x84] sm:$0x7]
        %v1571 = vsel %vm1018, %v1562, %v1570
        %1572 = vst [vmem:[#allocation2 + $0x84] sm:$0x7] %v1571
        %v1573 = vrot.slane %v1545, 6
        %v1575 = vld [vmem:[#allocation2 + $0x7c] sm:$0x4]
        %v1576 = vsel %vm1025, %v1573, %v1575
        %1577 = vst [vmem:[#allocation2 + $0x7c] sm:$0x4] %v1576
        %v1578 = vrot.slane %v1557, 5
        %v1579 = vrot.slane %v1578, 4
        %v1581 = vld [vmem:[#allocation2 + $0x84] sm:$0x4]
        %v1582 = vsel %vm1032, %v1579, %v1581
        %1583 = vst [vmem:[#allocation2 + $0x84] sm:$0x4] %v1582
        %v1585 = vunpack.c.l.b16 %v922
        %v1586 = vunpack.c.h.b16 %v922
        %v1587 = vpack.c.b16 %v1585, %v1585
        %v1588 = vpack.c.b16 %v1586, %v1586
        %v1590 = vshll.u32 %v1587, 16
        %v1592 = vrot.slane %v1590, 5
        %v1593 = vshrl.u32 %v1587, 16
        %v1595 = vrot.slane %v1593, 4
        %v1596 = vor.u32 %v1595, %v1592
        %v1597 = vrot.slane %v1596, 4
        %v1599 = vshll.u32 %v1588, 16
        %v1601 = vrot.slane %v1599, 5
        %v1602 = vsel %vm1043, %v1597, %v1601
        %v1603 = vshrl.u32 %v1588, 16
        %v1605 = vrot.slane %v1603, 4
        %v1606 = vor.u32 %v1605, %v1601
        %v1607 = vrot.slane %v1606, 4
        %v1611 = vld [vmem:[#allocation2 + $0x84] sm:$0x8]
        %v1612 = vsel %vm1068, %v1592, %v1611
        %1613 = vst [vmem:[#allocation2 + $0x84] sm:$0x8] %v1612
        %1614 = vst [vmem:[#allocation2 + $0x88] sm:$0xf] %v1602
        %v1615 = vld [vmem:[#allocation2 + $0x8c] sm:$0xf]
        %v1616 = vsel %vm1074, %v1607, %v1615
        %1617 = vst [vmem:[#allocation2 + $0x8c] sm:$0xf] %v1616
        %v1618 = vrot.slane %v1593, 5
        %v1620 = vld [vmem:[#allocation2 + $0x84] sm:$0x8]
        %v1621 = vsel %vm1080, %v1618, %v1620
        %1622 = vst [vmem:[#allocation2 + $0x84] sm:$0x8] %v1621
        %v1624 = vld [vmem:[#allocation2 + $0x8c] sm:$0x8]
        %v1625 = vsel %vm1068, %v1599, %v1624
        %1626 = vst [vmem:[#allocation2 + $0x8c] sm:$0x8] %v1625
        %v1628 = vunpack.c.l.b16 %v923
        %v1629 = vunpack.c.h.b16 %v923
        %v1630 = vpack.c.b16 %v1628, %v1628
        %v1631 = vpack.c.b16 %v1629, %v1629
        %v1633 = vshrl.u32 %v1630, 16
        %v1635 = vrot.slane %v1633, 7
        %v1636 = vshll.u32 %v1630, 16
        %v1638 = vor.u32 %v1635, %v1636
        %v1639 = vrot.slane %v1635, 4
        %v1641 = vshrl.u32 %v1631, 16
        %v1643 = vrot.slane %v1641, 7
        %v1644 = vshll.u32 %v1631, 16
        %v1646 = vor.u32 %v1643, %v1644
        %v1647 = vsel %vm1095, %v1639, %v1646
        %v1648 = vrot.slane %v1643, 4
        %v1652 = vld [vmem:[#allocation2 + $0x90] sm:$0xf]
        %v1653 = vsel %vm1117, %v1638, %v1652
        %1654 = vst [vmem:[#allocation2 + $0x90] sm:$0xf] %v1653
        %1655 = vst [vmem:[#allocation2 + $0x94] sm:$0xf] %v1647
        %v1656 = vld [vmem:[#allocation2 + $0x98] sm:$0x1]
        %v1657 = vsel %vm1123, %v1648, %v1656
        %1658 = vst [vmem:[#allocation2 + $0x98] sm:$0x1] %v1657
        %v1659 = vrot.slane %v1633, 4
        %v1660 = vrot.slane %v1659, 4
        %v1662 = vld [vmem:[#allocation2 + $0x90] sm:$0x1]
        %v1663 = vsel %vm1123, %v1660, %v1662
        %1664 = vst [vmem:[#allocation2 + $0x90] sm:$0x1] %v1663
        %v1665 = vrot.slane %v1644, 7
        %v1666 = vrot.slane %v1665, 4
        %v1668 = vld [vmem:[#allocation2 + $0x98] sm:$0x1]
        %v1669 = vsel %vm1136, %v1666, %v1668
        %1670 = vst [vmem:[#allocation2 + $0x98] sm:$0x1] %v1669
        %v1671 = vrot.slane %v989, 7
        %v1672 = vor.u32 %v1671, %v992
        %v1673 = vrot.slane %v1671, 4
        %v1674 = vrot.slane %v998, 7
        %v1675 = vor.u32 %v1674, %v1001
        %v1676 = vsel %vm1095, %v1673, %v1675
        %v1677 = vrot.slane %v1674, 4
        %v1681 = vld [vmem:[#allocation2] sm:$0xf]
        %v1682 = vsel %vm1117, %v1672, %v1681
        %1683 = vst [vmem:[#allocation2] sm:$0xf] %v1682
        %1684 = vst [vmem:[#allocation2 + $0x4] sm:$0xf] %v1676
        %v1685 = vld [vmem:[#allocation2 + $0x8] sm:$0x1]
        %v1686 = vsel %vm1123, %v1677, %v1685
        %1687 = vst [vmem:[#allocation2 + $0x8] sm:$0x1] %v1686
        %v1688 = vrot.slane %v989, 4
        %v1689 = vrot.slane %v1688, 4
        %v1691 = vld [vmem:[#allocation2] sm:$0x1]
        %v1692 = vsel %vm1123, %v1689, %v1691
        %1693 = vst [vmem:[#allocation2] sm:$0x1] %v1692
        %v1694 = vrot.slane %v1001, 7
        %v1695 = vrot.slane %v1694, 4
        %v1697 = vld [vmem:[#allocation2 + $0x8] sm:$0x1]
        %v1698 = vsel %vm1136, %v1695, %v1697
        %1699 = vst [vmem:[#allocation2 + $0x8] sm:$0x1] %v1698
        %v1700 = vrot.slane %v1593, 6
        %v1701 = vrot.slane %v1590, 7
        %v1702 = vor.u32 %v1700, %v1701
        %v1703 = vrot.slane %v1702, 4
        %v1704 = vrot.slane %v1603, 6
        %v1705 = vrot.slane %v1599, 7
        %v1706 = vor.u32 %v1704, %v1705
        %v1707 = vsel %vm931, %v1703, %v1706
        %v1708 = vrot.slane %v1706, 4
        %v1712 = vld [vmem:[#allocation2 + $0x98] sm:$0xe]
        %v1713 = vsel %vm956, %v1702, %v1712
        %1714 = vst [vmem:[#allocation2 + $0x98] sm:$0xe] %v1713
        %1715 = vst [vmem:[#allocation2 + $0x9c] sm:$0xf] %v1707
        %v1716 = vld [vmem:[#allocation2 + $0xa0] sm:$0x3]
        %v1717 = vsel %vm962, %v1708, %v1716
        %1718 = vst [vmem:[#allocation2 + $0xa0] sm:$0x3] %v1717
        %v1719 = vrot.slane %v1593, 7
        %v1721 = vld [vmem:[#allocation2 + $0x98] sm:$0x2]
        %v1722 = vsel %vm969, %v1719, %v1721
        %1723 = vst [vmem:[#allocation2 + $0x98] sm:$0x2] %v1722
        %v1724 = vrot.slane %v1599, 6
        %v1725 = vrot.slane %v1724, 4
        %v1727 = vld [vmem:[#allocation2 + $0xa0] sm:$0x2]
        %v1728 = vsel %vm976, %v1725, %v1727
        %1729 = vst [vmem:[#allocation2 + $0xa0] sm:$0x2] %v1728
        %v1730 = vld [vmem:[#allocation2] sm:$0xf]
        %v1731 = vld [vmem:[#allocation2 + $0x4] sm:$0xf]
        %v1732 = vld [vmem:[#allocation2 + $0x8] sm:$0xf]
        %v1733 = vld [vmem:[#allocation2 + $0xc] sm:$0xf]
        %v1734 = vld [vmem:[#allocation2 + $0x10] sm:$0xf]
        %v1735 = vld [vmem:[#allocation2 + $0x14] sm:$0xf]
        %v1736 = vld [vmem:[#allocation2 + $0x18] sm:$0xf]
        %v1737 = vld [vmem:[#allocation2 + $0x1c] sm:$0xf]
        %v1738 = vld [vmem:[#allocation2 + $0x20] sm:$0xf]
        %v1739 = vld [vmem:[#allocation2 + $0x24] sm:$0xf]
        %v1740 = vld [vmem:[#allocation2 + $0x28] sm:$0xf]
        %v1741 = vld [vmem:[#allocation2 + $0x2c] sm:$0xf]
        %v1742 = vld [vmem:[#allocation2 + $0x30] sm:$0xf]
        %v1743 = vld [vmem:[#allocation2 + $0x34] sm:$0xf]
        %v1744 = vld [vmem:[#allocation2 + $0x38] sm:$0xf]
        %v1745 = vld [vmem:[#allocation2 + $0x3c] sm:$0xf]
        %v1746 = vld [vmem:[#allocation2 + $0x40] sm:$0xf]
        %v1747 = vld [vmem:[#allocation2 + $0x44] sm:$0xf]
        %v1748 = vld [vmem:[#allocation2 + $0x48] sm:$0xf]
        %v1749 = vld [vmem:[#allocation2 + $0x4c] sm:$0xf]
        %v1750 = vld [vmem:[#allocation2 + $0x50] sm:$0xf]
        %v1751 = vld [vmem:[#allocation2 + $0x54] sm:$0xf]
        %v1752 = vld [vmem:[#allocation2 + $0x58] sm:$0xf]
        %v1753 = vld [vmem:[#allocation2 + $0x5c] sm:$0xf]
        %v1754 = vld [vmem:[#allocation2 + $0x60] sm:$0xf]
        %v1755 = vld [vmem:[#allocation2 + $0x64] sm:$0xf]
        %v1756 = vld [vmem:[#allocation2 + $0x68] sm:$0xf]
        %v1757 = vld [vmem:[#allocation2 + $0x6c] sm:$0xf]
        %v1758 = vld [vmem:[#allocation2 + $0x70] sm:$0xf]
        %v1759 = vld [vmem:[#allocation2 + $0x74] sm:$0xf]
        %v1760 = vld [vmem:[#allocation2 + $0x78] sm:$0xf]
        %v1761 = vld [vmem:[#allocation2 + $0x7c] sm:$0xf]
        %v1762 = vld [vmem:[#allocation2 + $0x80] sm:$0xf]
        %v1763 = vld [vmem:[#allocation2 + $0x84] sm:$0xf]
        %v1764 = vld [vmem:[#allocation2 + $0x88] sm:$0xf]
        %v1765 = vld [vmem:[#allocation2 + $0x8c] sm:$0xf]
        %v1766 = vld [vmem:[%s1] sm:$0xf]
        %v1767 = vld [vmem:[%s1 + $0x4] sm:$0xf]
        %v1768 = vld [vmem:[%s1 + $0x8] sm:$0xf]
        %v1769 = vld [vmem:[%s1 + $0xc] sm:$0xf]
        %v1770 = vld [vmem:[%s1 + $0x10] sm:$0xf]
        %v1771 = vld [vmem:[%s1 + $0x14] sm:$0xf]
        %v1772 = vld [vmem:[%s1 + $0x18] sm:$0xf]
        %v1773 = vld [vmem:[%s1 + $0x1c] sm:$0xf]
        %v1774 = vld [vmem:[%s1 + $0x20] sm:$0xf]
        %v1775 = vld [vmem:[%s1 + $0x24] sm:$0xf]
        %v1776 = vld [vmem:[%s1 + $0x28] sm:$0xf]
        %v1777 = vld [vmem:[%s1 + $0x2c] sm:$0xf]
        %v1778 = vld [vmem:[%s1 + $0x30] sm:$0xf]
        %v1779 = vld [vmem:[%s1 + $0x34] sm:$0xf]
        %v1780 = vld [vmem:[%s1 + $0x38] sm:$0xf]
        %v1781 = vld [vmem:[%s1 + $0x3c] sm:$0xf]
        %v1782 = vld [vmem:[#allocation2 + $0x90] sm:$0x1]
        %s1783 = scalar_lea.vmem %s1, 64
        %v1784 = vld [vmem:[%s1783] sm:$0xf]
        %v1785 = vld [vmem:[%s1783 + $0x4] sm:$0xf]
        %v1786 = vld [vmem:[%s1783 + $0x8] sm:$0xf]
        %v1787 = vld [vmem:[%s1783 + $0xc] sm:$0xf]
        %v1788 = vld [vmem:[%s1783 + $0x10] sm:$0xf]
        %v1789 = vld [vmem:[%s1783 + $0x14] sm:$0xf]
        %v1790 = vld [vmem:[%s1783 + $0x18] sm:$0xf]
        %v1791 = vld [vmem:[%s1783 + $0x1c] sm:$0xf]
        %v1792 = vld [vmem:[%s1783 + $0x20] sm:$0xf]
        %v1793 = vld [vmem:[%s1783 + $0x24] sm:$0xf]
        %v1794 = vld [vmem:[%s1783 + $0x28] sm:$0xf]
        %v1795 = vld [vmem:[%s1783 + $0x2c] sm:$0xf]
        %v1796 = vld [vmem:[%s1783 + $0x30] sm:$0xf]
        %v1797 = vld [vmem:[%s1783 + $0x34] sm:$0xf]
        %v1798 = vld [vmem:[%s1783 + $0x38] sm:$0xf]
        %v1799 = vld [vmem:[%s1783 + $0x3c] sm:$0xf]
        %v1837 = vunpack.c.l.b16 %v1730
        %v1838 = vunpack.c.l.b16 %v1731
        %v1839 = vunpack.c.l.b16 %v1732
        %v1840 = vunpack.c.l.b16 %v1733
        %v1841 = vunpack.c.l.b16 %v1734
        %v1842 = vunpack.c.l.b16 %v1735
        %v1843 = vunpack.c.l.b16 %v1736
        %v1844 = vunpack.c.l.b16 %v1737
        %v1845 = vunpack.c.l.b16 %v1738
        %v1846 = vunpack.c.l.b16 %v1739
        %v1847 = vunpack.c.l.b16 %v1740
        %v1848 = vunpack.c.l.b16 %v1741
        %v1849 = vunpack.c.l.b16 %v1742
        %v1850 = vunpack.c.l.b16 %v1743
        %v1851 = vunpack.c.l.b16 %v1744
        %v1852 = vunpack.c.l.b16 %v1745
        %v1853 = vunpack.c.l.b16 %v1746
        %v1854 = vunpack.c.l.b16 %v1747
        %v1855 = vunpack.c.l.b16 %v1748
        %v1856 = vunpack.c.l.b16 %v1749
        %v1857 = vunpack.c.l.b16 %v1750
        %v1858 = vunpack.c.l.b16 %v1751
        %v1859 = vunpack.c.l.b16 %v1752
        %v1860 = vunpack.c.l.b16 %v1753
        %v1861 = vunpack.c.l.b16 %v1754
        %v1862 = vunpack.c.l.b16 %v1755
        %v1863 = vunpack.c.l.b16 %v1756
        %v1864 = vunpack.c.l.b16 %v1757
        %v1865 = vunpack.c.l.b16 %v1758
        %v1866 = vunpack.c.l.b16 %v1759
        %v1867 = vunpack.c.l.b16 %v1760
        %v1868 = vunpack.c.l.b16 %v1761
        %v1869 = vunpack.c.l.b16 %v1762
        %v1870 = vunpack.c.l.b16 %v1763
        %v1871 = vunpack.c.l.b16 %v1764
        %v1872 = vunpack.c.l.b16 %v1765
        %v1873 = vunpack.c.l.b16 %v1782
        %v1874 = vpack.c.b16 %v1838, %v1837
        %v1875 = vpack.c.b16 %v1840, %v1839
        %v1876 = vpack.c.b16 %v1842, %v1841
        %v1877 = vpack.c.b16 %v1844, %v1843
        %v1878 = vpack.c.b16 %v1846, %v1845
        %v1879 = vpack.c.b16 %v1848, %v1847
        %v1880 = vpack.c.b16 %v1850, %v1849
        %v1881 = vpack.c.b16 %v1852, %v1851
        %v1882 = vpack.c.b16 %v1854, %v1853
        %v1883 = vpack.c.b16 %v1856, %v1855
        %v1884 = vpack.c.b16 %v1858, %v1857
        %v1885 = vpack.c.b16 %v1860, %v1859
        %v1886 = vpack.c.b16 %v1862, %v1861
        %v1887 = vpack.c.b16 %v1864, %v1863
        %v1888 = vpack.c.b16 %v1866, %v1865
        %v1889 = vpack.c.b16 %v1868, %v1867
        %v1890 = vpack.c.b16 %v1870, %v1869
        %v1891 = vpack.c.b16 %v1872, %v1871
        %v1892 = vpack.c.b16 %v1873, %v1873
        %vm1893 = vsmask.f32 7424
        %v1895 = vshrl.u32 %v1874, 16
        %v1897 = vshll.u32 %v1874, 16
        %v1899 = vrot.slane %v1897, 1
        %v1900 = vor.u32 %v1895, %v1899
        %v1902 = vshll.u32 %v1875, 16
        %v1904 = vrot.slane %v1902, 1
        %v1905 = vsel %vm1893, %v1900, %v1904
        %v1906 = vshrl.u32 %v1875, 16
        %v1908 = vor.u32 %v1906, %v1904
        %v1910 = vshll.u32 %v1876, 16
        %v1912 = vrot.slane %v1910, 1
        %v1913 = vsel %vm1893, %v1908, %v1912
        %v1914 = vshrl.u32 %v1876, 16
        %v1916 = vor.u32 %v1914, %v1912
        %v1918 = vshll.u32 %v1877, 16
        %v1920 = vrot.slane %v1918, 1
        %v1921 = vsel %vm1893, %v1916, %v1920
        %v1922 = vshrl.u32 %v1877, 16
        %v1924 = vor.u32 %v1922, %v1920
        %v1926 = vshll.u32 %v1878, 16
        %v1928 = vrot.slane %v1926, 1
        %v1929 = vsel %vm1893, %v1924, %v1928
        %v1930 = vshrl.u32 %v1878, 16
        %v1932 = vor.u32 %v1930, %v1928
        %v1934 = vshll.u32 %v1879, 16
        %v1936 = vrot.slane %v1934, 1
        %v1937 = vsel %vm1893, %v1932, %v1936
        %v1938 = vshrl.u32 %v1879, 16
        %v1940 = vor.u32 %v1938, %v1936
        %v1942 = vshll.u32 %v1880, 16
        %v1944 = vrot.slane %v1942, 1
        %v1945 = vsel %vm1893, %v1940, %v1944
        %v1946 = vshrl.u32 %v1880, 16
        %v1948 = vor.u32 %v1946, %v1944
        %v1950 = vshll.u32 %v1881, 16
        %v1952 = vrot.slane %v1950, 1
        %v1953 = vsel %vm1893, %v1948, %v1952
        %v1954 = vshrl.u32 %v1881, 16
        %v1956 = vor.u32 %v1954, %v1952
        %v1958 = vshll.u32 %v1882, 16
        %v1960 = vrot.slane %v1958, 1
        %v1961 = vsel %vm1893, %v1956, %v1960
        %v1962 = vshrl.u32 %v1882, 16
        %v1964 = vor.u32 %v1962, %v1960
        %v1966 = vshll.u32 %v1883, 16
        %v1968 = vrot.slane %v1966, 1
        %v1969 = vsel %vm1893, %v1964, %v1968
        %v1970 = vshrl.u32 %v1883, 16
        %v1972 = vor.u32 %v1970, %v1968
        %v1974 = vshll.u32 %v1884, 16
        %v1976 = vrot.slane %v1974, 1
        %v1977 = vsel %vm1893, %v1972, %v1976
        %v1978 = vshrl.u32 %v1884, 16
        %v1980 = vor.u32 %v1978, %v1976
        %v1982 = vshll.u32 %v1885, 16
        %v1984 = vrot.slane %v1982, 1
        %v1985 = vsel %vm1893, %v1980, %v1984
        %v1986 = vshrl.u32 %v1885, 16
        %v1988 = vor.u32 %v1986, %v1984
        %v1990 = vshll.u32 %v1886, 16
        %v1992 = vrot.slane %v1990, 1
        %v1993 = vsel %vm1893, %v1988, %v1992
        %v1994 = vshrl.u32 %v1886, 16
        %v1996 = vor.u32 %v1994, %v1992
        %v1998 = vshll.u32 %v1887, 16
        %v2000 = vrot.slane %v1998, 1
        %v2001 = vsel %vm1893, %v1996, %v2000
        %v2002 = vshrl.u32 %v1887, 16
        %v2004 = vor.u32 %v2002, %v2000
        %v2006 = vshll.u32 %v1888, 16
        %v2008 = vrot.slane %v2006, 1
        %v2009 = vsel %vm1893, %v2004, %v2008
        %v2010 = vshrl.u32 %v1888, 16
        %v2012 = vor.u32 %v2010, %v2008
        %v2014 = vshll.u32 %v1889, 16
        %v2016 = vrot.slane %v2014, 1
        %v2017 = vsel %vm1893, %v2012, %v2016
        %v2018 = vshrl.u32 %v1889, 16
        %v2020 = vor.u32 %v2018, %v2016
        %v2022 = vshll.u32 %v1890, 16
        %v2024 = vrot.slane %v2022, 1
        %v2025 = vsel %vm1893, %v2020, %v2024
        %v2026 = vshrl.u32 %v1890, 16
        %v2028 = vor.u32 %v2026, %v2024
        %v2030 = vshll.u32 %v1891, 16
        %v2032 = vrot.slane %v2030, 1
        %v2033 = vsel %vm1893, %v2028, %v2032
        %v2034 = vshrl.u32 %v1891, 16
        %v2036 = vor.u32 %v2034, %v2032
        %v2038 = vshll.u32 %v1892, 16
        %v2040 = vrot.slane %v2038, 1
        %v2041 = vsel %vm1893, %v2036, %v2040
        %v2076 = vunpack.c.l.b16 %v1784
        %v2077 = vunpack.c.l.b16 %v1785
        %v2078 = vunpack.c.l.b16 %v1786
        %v2079 = vunpack.c.l.b16 %v1787
        %v2080 = vunpack.c.l.b16 %v1788
        %v2081 = vunpack.c.l.b16 %v1789
        %v2082 = vunpack.c.l.b16 %v1790
        %v2083 = vunpack.c.l.b16 %v1791
        %v2084 = vunpack.c.l.b16 %v1792
        %v2085 = vunpack.c.l.b16 %v1793
        %v2086 = vunpack.c.l.b16 %v1794
        %v2087 = vunpack.c.l.b16 %v1795
        %v2088 = vunpack.c.l.b16 %v1796
        %v2089 = vunpack.c.l.b16 %v1797
        %v2090 = vunpack.c.l.b16 %v1798
        %v2091 = vunpack.c.l.b16 %v1799
        %v2092 = vpack.c.b16 %v2077, %v2076
        %v2093 = vpack.c.b16 %v2079, %v2078
        %v2094 = vpack.c.b16 %v2081, %v2080
        %v2095 = vpack.c.b16 %v2083, %v2082
        %v2096 = vpack.c.b16 %v2085, %v2084
        %v2097 = vpack.c.b16 %v2087, %v2086
        %v2098 = vpack.c.b16 %v2089, %v2088
        %v2099 = vpack.c.b16 %v2091, %v2090
        %2108 = vmatprep.subr.bf16.mxu0 0
        %2109 = vmatpush1.bf16.msra.mxu0 %v2099
        %2110 = vmatprep.subr.bf16.mxu0 0
        %2111 = vmatpush1.bf16.msra.mxu0 %v2098
        %2112 = vmatprep.subr.bf16.mxu0 0
        %2113 = vmatpush1.bf16.msra.mxu0 %v2097
        %2114 = vmatprep.subr.bf16.mxu0 0
        %2115 = vmatpush1.bf16.msra.mxu0 %v2096
        %2116 = vmatprep.subr.bf16.mxu0 0
        %2117 = vmatpush1.bf16.msra.mxu0 %v2095
        %2118 = vmatprep.subr.bf16.mxu0 0
        %2119 = vmatpush1.bf16.msra.mxu0 %v2094
        %2120 = vmatprep.subr.bf16.mxu0 0
        %2121 = vmatpush1.bf16.msra.mxu0 %v2093
        %2122 = vmatprep.subr.bf16.mxu0 0
        %2123 = vmatpush1.bf16.msra.mxu0 %v2092
        %2124 = vmatprep.subr.bf16.mxu0 0
        %2125 = vmatpush2.bf16.msra.mxu0 0
        %2126 = vmatprep.subr.bf16.mxu0 0
        %2127 = vmatpush2.bf16.msra.mxu0 0
        %2128 = vmatprep.subr.bf16.mxu0 0
        %2129 = vmatpush2.bf16.msra.mxu0 0
        %2130 = vmatprep.subr.bf16.mxu0 0
        %2131 = vmatpush2.bf16.msra.mxu0 0
        %2132 = vmatprep.subr.bf16.mxu0 0
        %2133 = vmatpush2.bf16.msra.mxu0 0
        %2134 = vmatprep.subr.bf16.mxu0 0
        %2135 = vmatpush2.bf16.msra.mxu0 0
        %2136 = vmatprep.subr.bf16.mxu0 0
        %2137 = vmatpush2.bf16.msra.mxu0 0
        %2138 = vmatprep.subr.bf16.mxu0 0
        %2139 = vmatpush2.bf16.msra.mxu0 0
        %2140 = vmatprep.mubr.bf16.mxu0 0
        %2141 = vmatmul.mubr.bf16.gmra.mxu0 %v1905
        %v2142 = vpop.f32.mrf.mxu0
        %v2143 = vadd.f32 0.0, %v2142
        %v2144 = vpop.f32.mrf.mxu0
        %v2145 = vpop.f32.mrf.mxu0
        %v2146 = vadd.f32 0.0, %v2145
        %v2147 = vpop.f32.mrf.mxu0
        %2148 = vmatprep.mubr.bf16.mxu0 0
        %2149 = vmatmul.mubr.bf16.gmra.mxu0 %v1913
        %v2150 = vpop.f32.mrf.mxu0
        %v2151 = vadd.f32 0.0, %v2150
        %v2152 = vpop.f32.mrf.mxu0
        %v2153 = vpop.f32.mrf.mxu0
        %v2154 = vadd.f32 0.0, %v2153
        %v2155 = vpop.f32.mrf.mxu0
        %2156 = vmatprep.mubr.bf16.mxu0 0
        %2157 = vmatmul.mubr.bf16.gmra.mxu0 %v1921
        %v2158 = vpop.f32.mrf.mxu0
        %v2159 = vadd.f32 0.0, %v2158
        %v2160 = vpop.f32.mrf.mxu0
        %v2161 = vpop.f32.mrf.mxu0
        %v2162 = vadd.f32 0.0, %v2161
        %v2163 = vpop.f32.mrf.mxu0
        %2164 = vmatprep.mubr.bf16.mxu0 0
        %2165 = vmatmul.mubr.bf16.gmra.mxu0 %v1929
        %v2166 = vpop.f32.mrf.mxu0
        %v2167 = vadd.f32 0.0, %v2166
        %v2168 = vpop.f32.mrf.mxu0
        %v2169 = vpop.f32.mrf.mxu0
        %v2170 = vadd.f32 0.0, %v2169
        %v2171 = vpop.f32.mrf.mxu0
        %2172 = vmatprep.mubr.bf16.mxu0 0
        %2173 = vmatmul.mubr.bf16.gmra.mxu0 %v1937
        %v2174 = vpop.f32.mrf.mxu0
        %v2175 = vadd.f32 0.0, %v2174
        %v2176 = vpop.f32.mrf.mxu0
        %v2177 = vpop.f32.mrf.mxu0
        %v2178 = vadd.f32 0.0, %v2177
        %v2179 = vpop.f32.mrf.mxu0
        %2180 = vmatprep.mubr.bf16.mxu0 0
        %2181 = vmatmul.mubr.bf16.gmra.mxu0 %v1945
        %v2182 = vpop.f32.mrf.mxu0
        %v2183 = vadd.f32 0.0, %v2182
        %v2184 = vpop.f32.mrf.mxu0
        %v2185 = vpop.f32.mrf.mxu0
        %v2186 = vadd.f32 0.0, %v2185
        %v2187 = vpop.f32.mrf.mxu0
        %2188 = vmatprep.mubr.bf16.mxu0 0
        %2189 = vmatmul.mubr.bf16.gmra.mxu0 %v1953
        %v2190 = vpop.f32.mrf.mxu0
        %v2191 = vadd.f32 0.0, %v2190
        %v2192 = vpop.f32.mrf.mxu0
        %v2193 = vpop.f32.mrf.mxu0
        %v2194 = vadd.f32 0.0, %v2193
        %v2195 = vpop.f32.mrf.mxu0
        %2196 = vmatprep.mubr.bf16.mxu0 0
        %2197 = vmatmul.mubr.bf16.gmra.mxu0 %v1961
        %v2198 = vpop.f32.mrf.mxu0
        %v2199 = vadd.f32 0.0, %v2198
        %v2200 = vpop.f32.mrf.mxu0
        %v2201 = vpop.f32.mrf.mxu0
        %v2202 = vadd.f32 0.0, %v2201
        %v2203 = vpop.f32.mrf.mxu0
        %2204 = vmatprep.mubr.bf16.mxu0 0
        %2205 = vmatmul.mubr.bf16.gmra.mxu0 %v1969
        %v2206 = vpop.f32.mrf.mxu0
        %v2207 = vadd.f32 0.0, %v2206
        %v2208 = vpop.f32.mrf.mxu0
        %v2209 = vpop.f32.mrf.mxu0
        %v2210 = vadd.f32 0.0, %v2209
        %v2211 = vpop.f32.mrf.mxu0
        %2212 = vmatprep.mubr.bf16.mxu0 0
        %2213 = vmatmul.mubr.bf16.gmra.mxu0 %v1977
        %v2214 = vpop.f32.mrf.mxu0
        %v2215 = vadd.f32 0.0, %v2214
        %v2216 = vpop.f32.mrf.mxu0
        %v2217 = vpop.f32.mrf.mxu0
        %v2218 = vadd.f32 0.0, %v2217
        %v2219 = vpop.f32.mrf.mxu0
        %2220 = vmatprep.mubr.bf16.mxu0 0
        %2221 = vmatmul.mubr.bf16.gmra.mxu0 %v1985
        %v2222 = vpop.f32.mrf.mxu0
        %v2223 = vadd.f32 0.0, %v2222
        %v2224 = vpop.f32.mrf.mxu0
        %v2225 = vpop.f32.mrf.mxu0
        %v2226 = vadd.f32 0.0, %v2225
        %v2227 = vpop.f32.mrf.mxu0
        %2228 = vmatprep.mubr.bf16.mxu0 0
        %2229 = vmatmul.mubr.bf16.gmra.mxu0 %v1993
        %v2230 = vpop.f32.mrf.mxu0
        %v2231 = vadd.f32 0.0, %v2230
        %v2232 = vpop.f32.mrf.mxu0
        %v2233 = vpop.f32.mrf.mxu0
        %v2234 = vadd.f32 0.0, %v2233
        %v2235 = vpop.f32.mrf.mxu0
        %2236 = vmatprep.mubr.bf16.mxu0 0
        %2237 = vmatmul.mubr.bf16.gmra.mxu0 %v2001
        %v2238 = vpop.f32.mrf.mxu0
        %v2239 = vadd.f32 0.0, %v2238
        %v2240 = vpop.f32.mrf.mxu0
        %v2241 = vpop.f32.mrf.mxu0
        %v2242 = vadd.f32 0.0, %v2241
        %v2243 = vpop.f32.mrf.mxu0
        %2244 = vmatprep.mubr.bf16.mxu0 0
        %2245 = vmatmul.mubr.bf16.gmra.mxu0 %v2009
        %v2246 = vpop.f32.mrf.mxu0
        %v2247 = vadd.f32 0.0, %v2246
        %v2248 = vpop.f32.mrf.mxu0
        %v2249 = vpop.f32.mrf.mxu0
        %v2250 = vadd.f32 0.0, %v2249
        %v2251 = vpop.f32.mrf.mxu0
        %2252 = vmatprep.mubr.bf16.mxu0 0
        %2253 = vmatmul.mubr.bf16.gmra.mxu0 %v2017
        %v2254 = vpop.f32.mrf.mxu0
        %v2255 = vadd.f32 0.0, %v2254
        %v2256 = vpop.f32.mrf.mxu0
        %v2257 = vpop.f32.mrf.mxu0
        %v2258 = vadd.f32 0.0, %v2257
        %v2259 = vpop.f32.mrf.mxu0
        %2260 = vmatprep.mubr.bf16.mxu0 0
        %2261 = vmatmul.mubr.bf16.gmra.mxu0 %v2025
        %v2262 = vpop.f32.mrf.mxu0
        %v2263 = vadd.f32 0.0, %v2262
        %v2264 = vpop.f32.mrf.mxu0
        %v2265 = vpop.f32.mrf.mxu0
        %v2266 = vadd.f32 0.0, %v2265
        %v2267 = vpop.f32.mrf.mxu0
        %2268 = vmatprep.mubr.bf16.mxu0 0
        %2269 = vmatmul.mubr.bf16.gmra.mxu0 %v2033
        %v2270 = vpop.f32.mrf.mxu0
        %v2271 = vadd.f32 0.0, %v2270
        %v2272 = vpop.f32.mrf.mxu0
        %v2273 = vpop.f32.mrf.mxu0
        %v2274 = vadd.f32 0.0, %v2273
        %v2275 = vpop.f32.mrf.mxu0
        %2276 = vmatprep.mubr.bf16.mxu0 0
        %2277 = vmatmul.mubr.bf16.gmra.mxu0 %v2041
        %v2278 = vpop.f32.mrf.mxu0
        %v2279 = vadd.f32 0.0, %v2278
        %v2280 = vpop.f32.mrf.mxu0
        %v2281 = vpop.f32.mrf.mxu0
        %v2282 = vadd.f32 0.0, %v2281
        %v2283 = vpop.f32.mrf.mxu0
        %2284 = vdwg.mxu0
        %v2319 = vunpack.c.l.b16 %v1766
        %v2320 = vunpack.c.l.b16 %v1767
        %v2321 = vunpack.c.l.b16 %v1768
        %v2322 = vunpack.c.l.b16 %v1769
        %v2323 = vunpack.c.l.b16 %v1770
        %v2324 = vunpack.c.l.b16 %v1771
        %v2325 = vunpack.c.l.b16 %v1772
        %v2326 = vunpack.c.l.b16 %v1773
        %v2327 = vunpack.c.l.b16 %v1774
        %v2328 = vunpack.c.l.b16 %v1775
        %v2329 = vunpack.c.l.b16 %v1776
        %v2330 = vunpack.c.l.b16 %v1777
        %v2331 = vunpack.c.l.b16 %v1778
        %v2332 = vunpack.c.l.b16 %v1779
        %v2333 = vunpack.c.l.b16 %v1780
        %v2334 = vunpack.c.l.b16 %v1781
        %v2335 = vpack.c.b16 %v2320, %v2319
        %v2336 = vpack.c.b16 %v2322, %v2321
        %v2337 = vpack.c.b16 %v2324, %v2323
        %v2338 = vpack.c.b16 %v2326, %v2325
        %v2339 = vpack.c.b16 %v2328, %v2327
        %v2340 = vpack.c.b16 %v2330, %v2329
        %v2341 = vpack.c.b16 %v2332, %v2331
        %v2342 = vpack.c.b16 %v2334, %v2333
        %2351 = vmatprep.subr.bf16.mxu0 0
        %2352 = vmatpush1.bf16.msra.mxu0 %v2342
        %2353 = vmatprep.subr.bf16.mxu0 0
        %2354 = vmatpush1.bf16.msra.mxu0 %v2341
        %2355 = vmatprep.subr.bf16.mxu0 0
        %2356 = vmatpush1.bf16.msra.mxu0 %v2340
        %2357 = vmatprep.subr.bf16.mxu0 0
        %2358 = vmatpush1.bf16.msra.mxu0 %v2339
        %2359 = vmatprep.subr.bf16.mxu0 0
        %2360 = vmatpush1.bf16.msra.mxu0 %v2338
        %2361 = vmatprep.subr.bf16.mxu0 0
        %2362 = vmatpush1.bf16.msra.mxu0 %v2337
        %2363 = vmatprep.subr.bf16.mxu0 0
        %2364 = vmatpush1.bf16.msra.mxu0 %v2336
        %2365 = vmatprep.subr.bf16.mxu0 0
        %2366 = vmatpush1.bf16.msra.mxu0 %v2335
        %2367 = vmatprep.subr.bf16.mxu0 0
        %2368 = vmatpush2.bf16.msra.mxu0 0
        %2369 = vmatprep.subr.bf16.mxu0 0
        %2370 = vmatpush2.bf16.msra.mxu0 0
        %2371 = vmatprep.subr.bf16.mxu0 0
        %2372 = vmatpush2.bf16.msra.mxu0 0
        %2373 = vmatprep.subr.bf16.mxu0 0
        %2374 = vmatpush2.bf16.msra.mxu0 0
        %2375 = vmatprep.subr.bf16.mxu0 0
        %2376 = vmatpush2.bf16.msra.mxu0 0
        %2377 = vmatprep.subr.bf16.mxu0 0
        %2378 = vmatpush2.bf16.msra.mxu0 0
        %2379 = vmatprep.subr.bf16.mxu0 0
        %2380 = vmatpush2.bf16.msra.mxu0 0
        %2381 = vmatprep.subr.bf16.mxu0 0
        %2382 = vmatpush2.bf16.msra.mxu0 0
        %2383 = vmatprep.mubr.bf16.mxu0 0
        %2384 = vmatmul.mubr.bf16.gmra.mxu0 %v1874
        %v2385 = vpop.f32.mrf.mxu0
        %v2386 = vadd.f32 %v2143, %v2385
        %v2387 = vpop.f32.mrf.mxu0
        %v2388 = vpop.f32.mrf.mxu0
        %v2389 = vadd.f32 %v2146, %v2388
        %v2390 = vpop.f32.mrf.mxu0
        %2391 = vmatprep.mubr.bf16.mxu0 0
        %2392 = vmatmul.mubr.bf16.gmra.mxu0 %v1875
        %v2393 = vpop.f32.mrf.mxu0
        %v2394 = vadd.f32 %v2151, %v2393
        %v2395 = vpop.f32.mrf.mxu0
        %v2396 = vpop.f32.mrf.mxu0
        %v2397 = vadd.f32 %v2154, %v2396
        %v2398 = vpop.f32.mrf.mxu0
        %2399 = vmatprep.mubr.bf16.mxu0 0
        %2400 = vmatmul.mubr.bf16.gmra.mxu0 %v1876
        %v2401 = vpop.f32.mrf.mxu0
        %v2402 = vadd.f32 %v2159, %v2401
        %v2403 = vpop.f32.mrf.mxu0
        %v2404 = vpop.f32.mrf.mxu0
        %v2405 = vadd.f32 %v2162, %v2404
        %v2406 = vpop.f32.mrf.mxu0
        %2407 = vmatprep.mubr.bf16.mxu0 0
        %2408 = vmatmul.mubr.bf16.gmra.mxu0 %v1877
        %v2409 = vpop.f32.mrf.mxu0
        %v2410 = vadd.f32 %v2167, %v2409
        %v2411 = vpop.f32.mrf.mxu0
        %v2412 = vpop.f32.mrf.mxu0
        %v2413 = vadd.f32 %v2170, %v2412
        %v2414 = vpop.f32.mrf.mxu0
        %2415 = vmatprep.mubr.bf16.mxu0 0
        %2416 = vmatmul.mubr.bf16.gmra.mxu0 %v1878
        %v2417 = vpop.f32.mrf.mxu0
        %v2418 = vadd.f32 %v2175, %v2417
        %v2419 = vpop.f32.mrf.mxu0
        %v2420 = vpop.f32.mrf.mxu0
        %v2421 = vadd.f32 %v2178, %v2420
        %v2422 = vpop.f32.mrf.mxu0
        %2423 = vmatprep.mubr.bf16.mxu0 0
        %2424 = vmatmul.mubr.bf16.gmra.mxu0 %v1879
        %v2425 = vpop.f32.mrf.mxu0
        %v2426 = vadd.f32 %v2183, %v2425
        %v2427 = vpop.f32.mrf.mxu0
        %v2428 = vpop.f32.mrf.mxu0
        %v2429 = vadd.f32 %v2186, %v2428
        %v2430 = vpop.f32.mrf.mxu0
        %2431 = vmatprep.mubr.bf16.mxu0 0
        %2432 = vmatmul.mubr.bf16.gmra.mxu0 %v1880
        %v2433 = vpop.f32.mrf.mxu0
        %v2434 = vadd.f32 %v2191, %v2433
        %v2435 = vpop.f32.mrf.mxu0
        %v2436 = vpop.f32.mrf.mxu0
        %v2437 = vadd.f32 %v2194, %v2436
        %v2438 = vpop.f32.mrf.mxu0
        %2439 = vmatprep.mubr.bf16.mxu0 0
        %2440 = vmatmul.mubr.bf16.gmra.mxu0 %v1881
        %v2441 = vpop.f32.mrf.mxu0
        %v2442 = vadd.f32 %v2199, %v2441
        %v2443 = vpop.f32.mrf.mxu0
        %v2444 = vpop.f32.mrf.mxu0
        %v2445 = vadd.f32 %v2202, %v2444
        %v2446 = vpop.f32.mrf.mxu0
        %2447 = vmatprep.mubr.bf16.mxu0 0
        %2448 = vmatmul.mubr.bf16.gmra.mxu0 %v1882
        %v2449 = vpop.f32.mrf.mxu0
        %v2450 = vadd.f32 %v2207, %v2449
        %v2451 = vpop.f32.mrf.mxu0
        %v2452 = vpop.f32.mrf.mxu0
        %v2453 = vadd.f32 %v2210, %v2452
        %v2454 = vpop.f32.mrf.mxu0
        %2455 = vmatprep.mubr.bf16.mxu0 0
        %2456 = vmatmul.mubr.bf16.gmra.mxu0 %v1883
        %v2457 = vpop.f32.mrf.mxu0
        %v2458 = vadd.f32 %v2215, %v2457
        %v2459 = vpop.f32.mrf.mxu0
        %v2460 = vpop.f32.mrf.mxu0
        %v2461 = vadd.f32 %v2218, %v2460
        %v2462 = vpop.f32.mrf.mxu0
        %2463 = vmatprep.mubr.bf16.mxu0 0
        %2464 = vmatmul.mubr.bf16.gmra.mxu0 %v1884
        %v2465 = vpop.f32.mrf.mxu0
        %v2466 = vadd.f32 %v2223, %v2465
        %v2467 = vpop.f32.mrf.mxu0
        %v2468 = vpop.f32.mrf.mxu0
        %v2469 = vadd.f32 %v2226, %v2468
        %v2470 = vpop.f32.mrf.mxu0
        %2471 = vmatprep.mubr.bf16.mxu0 0
        %2472 = vmatmul.mubr.bf16.gmra.mxu0 %v1885
        %v2473 = vpop.f32.mrf.mxu0
        %v2474 = vadd.f32 %v2231, %v2473
        %v2475 = vpop.f32.mrf.mxu0
        %v2476 = vpop.f32.mrf.mxu0
        %v2477 = vadd.f32 %v2234, %v2476
        %v2478 = vpop.f32.mrf.mxu0
        %2479 = vmatprep.mubr.bf16.mxu0 0
        %2480 = vmatmul.mubr.bf16.gmra.mxu0 %v1886
        %v2481 = vpop.f32.mrf.mxu0
        %v2482 = vadd.f32 %v2239, %v2481
        %v2483 = vpop.f32.mrf.mxu0
        %v2484 = vpop.f32.mrf.mxu0
        %v2485 = vadd.f32 %v2242, %v2484
        %v2486 = vpop.f32.mrf.mxu0
        %2487 = vmatprep.mubr.bf16.mxu0 0
        %2488 = vmatmul.mubr.bf16.gmra.mxu0 %v1887
        %v2489 = vpop.f32.mrf.mxu0
        %v2490 = vadd.f32 %v2247, %v2489
        %v2491 = vpop.f32.mrf.mxu0
        %v2492 = vpop.f32.mrf.mxu0
        %v2493 = vadd.f32 %v2250, %v2492
        %v2494 = vpop.f32.mrf.mxu0
        %2495 = vmatprep.mubr.bf16.mxu0 0
        %2496 = vmatmul.mubr.bf16.gmra.mxu0 %v1888
        %v2497 = vpop.f32.mrf.mxu0
        %v2498 = vadd.f32 %v2255, %v2497
        %v2499 = vpop.f32.mrf.mxu0
        %v2500 = vpop.f32.mrf.mxu0
        %v2501 = vadd.f32 %v2258, %v2500
        %v2502 = vpop.f32.mrf.mxu0
        %2503 = vmatprep.mubr.bf16.mxu0 0
        %2504 = vmatmul.mubr.bf16.gmra.mxu0 %v1889
        %v2505 = vpop.f32.mrf.mxu0
        %v2506 = vadd.f32 %v2263, %v2505
        %v2507 = vpop.f32.mrf.mxu0
        %v2508 = vpop.f32.mrf.mxu0
        %v2509 = vadd.f32 %v2266, %v2508
        %v2510 = vpop.f32.mrf.mxu0
        %2511 = vmatprep.mubr.bf16.mxu0 0
        %2512 = vmatmul.mubr.bf16.gmra.mxu0 %v1890
        %v2513 = vpop.f32.mrf.mxu0
        %v2514 = vadd.f32 %v2271, %v2513
        %v2515 = vpop.f32.mrf.mxu0
        %v2516 = vpop.f32.mrf.mxu0
        %v2517 = vadd.f32 %v2274, %v2516
        %v2518 = vpop.f32.mrf.mxu0
        %2519 = vmatprep.mubr.bf16.mxu0 0
        %2520 = vmatmul.mubr.bf16.gmra.mxu0 %v1891
        %v2521 = vpop.f32.mrf.mxu0
        %v2522 = vadd.f32 %v2279, %v2521
        %v2523 = vpop.f32.mrf.mxu0
        %v2524 = vpop.f32.mrf.mxu0
        %v2525 = vadd.f32 %v2282, %v2524
        %v2526 = vpop.f32.mrf.mxu0
        %2527 = vdwg.mxu0
        %v2528 = vld [vmem:[#allocation2] sm:$0xe]
        %s2529 = scalar_lea.vmem %s1, 128
        %v2530 = vld [vmem:[%s2529] sm:$0xf]
        %v2531 = vld [vmem:[%s2529 + $0x4] sm:$0xf]
        %v2532 = vld [vmem:[%s2529 + $0x8] sm:$0xf]
        %v2533 = vld [vmem:[%s2529 + $0xc] sm:$0xf]
        %v2534 = vld [vmem:[%s2529 + $0x10] sm:$0xf]
        %v2535 = vld [vmem:[%s2529 + $0x14] sm:$0xf]
        %v2536 = vld [vmem:[%s2529 + $0x18] sm:$0xf]
        %v2537 = vld [vmem:[%s2529 + $0x1c] sm:$0xf]
        %v2538 = vld [vmem:[%s2529 + $0x20] sm:$0xf]
        %v2539 = vld [vmem:[%s2529 + $0x24] sm:$0xf]
        %v2540 = vld [vmem:[%s2529 + $0x28] sm:$0xf]
        %v2541 = vld [vmem:[%s2529 + $0x2c] sm:$0xf]
        %v2542 = vld [vmem:[%s2529 + $0x30] sm:$0xf]
        %v2543 = vld [vmem:[%s2529 + $0x34] sm:$0xf]
        %v2544 = vld [vmem:[%s2529 + $0x38] sm:$0xf]
        %v2545 = vld [vmem:[%s2529 + $0x3c] sm:$0xf]
        %v2547 = vunpack.c.l.b16 %v2528
        %v2548 = vpack.c.b16 %v1838, %v2547
        %vm2549 = vcmask 1046528
        %v2550 = vrot.slane %v2548, 1
        %v2551 = vrot.slane %v1875, 1
        %v2552 = vsel %vm2549, %v2550, %v2551
        %v2553 = vrot.slane %v1876, 1
        %v2554 = vsel %vm2549, %v2551, %v2553
        %v2555 = vrot.slane %v1877, 1
        %v2556 = vsel %vm2549, %v2553, %v2555
        %v2557 = vrot.slane %v1878, 1
        %v2558 = vsel %vm2549, %v2555, %v2557
        %v2559 = vrot.slane %v1879, 1
        %v2560 = vsel %vm2549, %v2557, %v2559
        %v2561 = vrot.slane %v1880, 1
        %v2562 = vsel %vm2549, %v2559, %v2561
        %v2563 = vrot.slane %v1881, 1
        %v2564 = vsel %vm2549, %v2561, %v2563
        %v2565 = vrot.slane %v1882, 1
        %v2566 = vsel %vm2549, %v2563, %v2565
        %v2567 = vrot.slane %v1883, 1
        %v2568 = vsel %vm2549, %v2565, %v2567
        %v2569 = vrot.slane %v1884, 1
        %v2570 = vsel %vm2549, %v2567, %v2569
        %v2571 = vrot.slane %v1885, 1
        %v2572 = vsel %vm2549, %v2569, %v2571
        %v2573 = vrot.slane %v1886, 1
        %v2574 = vsel %vm2549, %v2571, %v2573
        %v2575 = vrot.slane %v1887, 1
        %v2576 = vsel %vm2549, %v2573, %v2575
        %v2577 = vrot.slane %v1888, 1
        %v2578 = vsel %vm2549, %v2575, %v2577
        %v2579 = vrot.slane %v1889, 1
        %v2580 = vsel %vm2549, %v2577, %v2579
        %v2581 = vrot.slane %v1890, 1
        %v2582 = vsel %vm2549, %v2579, %v2581
        %v2583 = vrot.slane %v1891, 1
        %v2584 = vsel %vm2549, %v2581, %v2583
        %v2585 = vrot.slane %v1892, 1
        %v2586 = vsel %vm2549, %v2583, %v2585
        %v2621 = vunpack.c.l.b16 %v2530
        %v2622 = vunpack.c.l.b16 %v2531
        %v2623 = vunpack.c.l.b16 %v2532
        %v2624 = vunpack.c.l.b16 %v2533
        %v2625 = vunpack.c.l.b16 %v2534
        %v2626 = vunpack.c.l.b16 %v2535
        %v2627 = vunpack.c.l.b16 %v2536
        %v2628 = vunpack.c.l.b16 %v2537
        %v2629 = vunpack.c.l.b16 %v2538
        %v2630 = vunpack.c.l.b16 %v2539
        %v2631 = vunpack.c.l.b16 %v2540
        %v2632 = vunpack.c.l.b16 %v2541
        %v2633 = vunpack.c.l.b16 %v2542
        %v2634 = vunpack.c.l.b16 %v2543
        %v2635 = vunpack.c.l.b16 %v2544
        %v2636 = vunpack.c.l.b16 %v2545
        %v2637 = vpack.c.b16 %v2622, %v2621
        %v2638 = vpack.c.b16 %v2624, %v2623
        %v2639 = vpack.c.b16 %v2626, %v2625
        %v2640 = vpack.c.b16 %v2628, %v2627
        %v2641 = vpack.c.b16 %v2630, %v2629
        %v2642 = vpack.c.b16 %v2632, %v2631
        %v2643 = vpack.c.b16 %v2634, %v2633
        %v2644 = vpack.c.b16 %v2636, %v2635
        %2653 = vmatprep.subr.bf16.mxu0 0
        %2654 = vmatpush1.bf16.msra.mxu0 %v2644
        %2655 = vmatprep.subr.bf16.mxu0 0
        %2656 = vmatpush1.bf16.msra.mxu0 %v2643
        %2657 = vmatprep.subr.bf16.mxu0 0
        %2658 = vmatpush1.bf16.msra.mxu0 %v2642
        %2659 = vmatprep.subr.bf16.mxu0 0
        %2660 = vmatpush1.bf16.msra.mxu0 %v2641
        %2661 = vmatprep.subr.bf16.mxu0 0
        %2662 = vmatpush1.bf16.msra.mxu0 %v2640
        %2663 = vmatprep.subr.bf16.mxu0 0
        %2664 = vmatpush1.bf16.msra.mxu0 %v2639
        %2665 = vmatprep.subr.bf16.mxu0 0
        %2666 = vmatpush1.bf16.msra.mxu0 %v2638
        %2667 = vmatprep.subr.bf16.mxu0 0
        %2668 = vmatpush1.bf16.msra.mxu0 %v2637
        %2669 = vmatprep.subr.bf16.mxu0 0
        %2670 = vmatpush2.bf16.msra.mxu0 0
        %2671 = vmatprep.subr.bf16.mxu0 0
        %2672 = vmatpush2.bf16.msra.mxu0 0
        %2673 = vmatprep.subr.bf16.mxu0 0
        %2674 = vmatpush2.bf16.msra.mxu0 0
        %2675 = vmatprep.subr.bf16.mxu0 0
        %2676 = vmatpush2.bf16.msra.mxu0 0
        %2677 = vmatprep.subr.bf16.mxu0 0
        %2678 = vmatpush2.bf16.msra.mxu0 0
        %2679 = vmatprep.subr.bf16.mxu0 0
        %2680 = vmatpush2.bf16.msra.mxu0 0
        %2681 = vmatprep.subr.bf16.mxu0 0
        %2682 = vmatpush2.bf16.msra.mxu0 0
        %2683 = vmatprep.subr.bf16.mxu0 0
        %2684 = vmatpush2.bf16.msra.mxu0 0
        %2685 = vmatprep.mubr.bf16.mxu0 0
        %2686 = vmatmul.mubr.bf16.gmra.mxu0 %v2552
        %v2687 = vpop.f32.mrf.mxu0
        %v2688 = vadd.f32 0.0, %v2687
        %v2689 = vpop.f32.mrf.mxu0
        %v2690 = vpop.f32.mrf.mxu0
        %v2691 = vadd.f32 0.0, %v2690
        %v2692 = vpop.f32.mrf.mxu0
        %2693 = vmatprep.mubr.bf16.mxu0 0
        %2694 = vmatmul.mubr.bf16.gmra.mxu0 %v2554
        %v2695 = vpop.f32.mrf.mxu0
        %v2696 = vadd.f32 0.0, %v2695
        %v2697 = vpop.f32.mrf.mxu0
        %v2698 = vpop.f32.mrf.mxu0
        %v2699 = vadd.f32 0.0, %v2698
        %v2700 = vpop.f32.mrf.mxu0
        %2701 = vmatprep.mubr.bf16.mxu0 0
        %2702 = vmatmul.mubr.bf16.gmra.mxu0 %v2556
        %v2703 = vpop.f32.mrf.mxu0
        %v2704 = vadd.f32 0.0, %v2703
        %v2705 = vpop.f32.mrf.mxu0
        %v2706 = vpop.f32.mrf.mxu0
        %v2707 = vadd.f32 0.0, %v2706
        %v2708 = vpop.f32.mrf.mxu0
        %2709 = vmatprep.mubr.bf16.mxu0 0
        %2710 = vmatmul.mubr.bf16.gmra.mxu0 %v2558
        %v2711 = vpop.f32.mrf.mxu0
        %v2712 = vadd.f32 0.0, %v2711
        %v2713 = vpop.f32.mrf.mxu0
        %v2714 = vpop.f32.mrf.mxu0
        %v2715 = vadd.f32 0.0, %v2714
        %v2716 = vpop.f32.mrf.mxu0
        %2717 = vmatprep.mubr.bf16.mxu0 0
        %2718 = vmatmul.mubr.bf16.gmra.mxu0 %v2560
        %v2719 = vpop.f32.mrf.mxu0
        %v2720 = vadd.f32 0.0, %v2719
        %v2721 = vpop.f32.mrf.mxu0
        %v2722 = vpop.f32.mrf.mxu0
        %v2723 = vadd.f32 0.0, %v2722
        %v2724 = vpop.f32.mrf.mxu0
        %2725 = vmatprep.mubr.bf16.mxu0 0
        %2726 = vmatmul.mubr.bf16.gmra.mxu0 %v2562
        %v2727 = vpop.f32.mrf.mxu0
        %v2728 = vadd.f32 0.0, %v2727
        %v2729 = vpop.f32.mrf.mxu0
        %v2730 = vpop.f32.mrf.mxu0
        %v2731 = vadd.f32 0.0, %v2730
        %v2732 = vpop.f32.mrf.mxu0
        %2733 = vmatprep.mubr.bf16.mxu0 0
        %2734 = vmatmul.mubr.bf16.gmra.mxu0 %v2564
        %v2735 = vpop.f32.mrf.mxu0
        %v2736 = vadd.f32 0.0, %v2735
        %v2737 = vpop.f32.mrf.mxu0
        %v2738 = vpop.f32.mrf.mxu0
        %v2739 = vadd.f32 0.0, %v2738
        %v2740 = vpop.f32.mrf.mxu0
        %2741 = vmatprep.mubr.bf16.mxu0 0
        %2742 = vmatmul.mubr.bf16.gmra.mxu0 %v2566
        %v2743 = vpop.f32.mrf.mxu0
        %v2744 = vadd.f32 0.0, %v2743
        %v2745 = vpop.f32.mrf.mxu0
        %v2746 = vpop.f32.mrf.mxu0
        %v2747 = vadd.f32 0.0, %v2746
        %v2748 = vpop.f32.mrf.mxu0
        %2749 = vmatprep.mubr.bf16.mxu0 0
        %2750 = vmatmul.mubr.bf16.gmra.mxu0 %v2568
        %v2751 = vpop.f32.mrf.mxu0
        %v2752 = vadd.f32 0.0, %v2751
        %v2753 = vpop.f32.mrf.mxu0
        %v2754 = vpop.f32.mrf.mxu0
        %v2755 = vadd.f32 0.0, %v2754
        %v2756 = vpop.f32.mrf.mxu0
        %2757 = vmatprep.mubr.bf16.mxu0 0
        %2758 = vmatmul.mubr.bf16.gmra.mxu0 %v2570
        %v2759 = vpop.f32.mrf.mxu0
        %v2760 = vadd.f32 0.0, %v2759
        %v2761 = vpop.f32.mrf.mxu0
        %v2762 = vpop.f32.mrf.mxu0
        %v2763 = vadd.f32 0.0, %v2762
        %v2764 = vpop.f32.mrf.mxu0
        %2765 = vmatprep.mubr.bf16.mxu0 0
        %2766 = vmatmul.mubr.bf16.gmra.mxu0 %v2572
        %v2767 = vpop.f32.mrf.mxu0
        %v2768 = vadd.f32 0.0, %v2767
        %v2769 = vpop.f32.mrf.mxu0
        %v2770 = vpop.f32.mrf.mxu0
        %v2771 = vadd.f32 0.0, %v2770
        %v2772 = vpop.f32.mrf.mxu0
        %2773 = vmatprep.mubr.bf16.mxu0 0
        %2774 = vmatmul.mubr.bf16.gmra.mxu0 %v2574
        %v2775 = vpop.f32.mrf.mxu0
        %v2776 = vadd.f32 0.0, %v2775
        %v2777 = vpop.f32.mrf.mxu0
        %v2778 = vpop.f32.mrf.mxu0
        %v2779 = vadd.f32 0.0, %v2778
        %v2780 = vpop.f32.mrf.mxu0
        %2781 = vmatprep.mubr.bf16.mxu0 0
        %2782 = vmatmul.mubr.bf16.gmra.mxu0 %v2576
        %v2783 = vpop.f32.mrf.mxu0
        %v2784 = vadd.f32 0.0, %v2783
        %v2785 = vpop.f32.mrf.mxu0
        %v2786 = vpop.f32.mrf.mxu0
        %v2787 = vadd.f32 0.0, %v2786
        %v2788 = vpop.f32.mrf.mxu0
        %2789 = vmatprep.mubr.bf16.mxu0 0
        %2790 = vmatmul.mubr.bf16.gmra.mxu0 %v2578
        %v2791 = vpop.f32.mrf.mxu0
        %v2792 = vadd.f32 0.0, %v2791
        %v2793 = vpop.f32.mrf.mxu0
        %v2794 = vpop.f32.mrf.mxu0
        %v2795 = vadd.f32 0.0, %v2794
        %v2796 = vpop.f32.mrf.mxu0
        %2797 = vmatprep.mubr.bf16.mxu0 0
        %2798 = vmatmul.mubr.bf16.gmra.mxu0 %v2580
        %v2799 = vpop.f32.mrf.mxu0
        %v2800 = vadd.f32 0.0, %v2799
        %v2801 = vpop.f32.mrf.mxu0
        %v2802 = vpop.f32.mrf.mxu0
        %v2803 = vadd.f32 0.0, %v2802
        %v2804 = vpop.f32.mrf.mxu0
        %2805 = vmatprep.mubr.bf16.mxu0 0
        %2806 = vmatmul.mubr.bf16.gmra.mxu0 %v2582
        %v2807 = vpop.f32.mrf.mxu0
        %v2808 = vadd.f32 0.0, %v2807
        %v2809 = vpop.f32.mrf.mxu0
        %v2810 = vpop.f32.mrf.mxu0
        %v2811 = vadd.f32 0.0, %v2810
        %v2812 = vpop.f32.mrf.mxu0
        %2813 = vmatprep.mubr.bf16.mxu0 0
        %2814 = vmatmul.mubr.bf16.gmra.mxu0 %v2584
        %v2815 = vpop.f32.mrf.mxu0
        %v2816 = vadd.f32 0.0, %v2815
        %v2817 = vpop.f32.mrf.mxu0
        %v2818 = vpop.f32.mrf.mxu0
        %v2819 = vadd.f32 0.0, %v2818
        %v2820 = vpop.f32.mrf.mxu0
        %2821 = vmatprep.mubr.bf16.mxu0 0
        %2822 = vmatmul.mubr.bf16.gmra.mxu0 %v2586
        %v2823 = vpop.f32.mrf.mxu0
        %v2824 = vadd.f32 0.0, %v2823
        %v2825 = vpop.f32.mrf.mxu0
        %v2826 = vpop.f32.mrf.mxu0
        %v2827 = vadd.f32 0.0, %v2826
        %v2828 = vpop.f32.mrf.mxu0
        %2829 = vdwg.mxu0
        %v2830 = vadd.f32 %v2386, %v2688
        %v2831 = vadd.f32 %v2389, %v2691
        %v2832 = vadd.f32 %v2394, %v2696
        %v2833 = vadd.f32 %v2397, %v2699
        %v2834 = vadd.f32 %v2402, %v2704
        %v2835 = vadd.f32 %v2405, %v2707
        %v2836 = vadd.f32 %v2410, %v2712
        %v2837 = vadd.f32 %v2413, %v2715
        %v2838 = vadd.f32 %v2418, %v2720
        %v2839 = vadd.f32 %v2421, %v2723
        %v2840 = vadd.f32 %v2426, %v2728
        %v2841 = vadd.f32 %v2429, %v2731
        %v2842 = vadd.f32 %v2434, %v2736
        %v2843 = vadd.f32 %v2437, %v2739
        %v2844 = vadd.f32 %v2442, %v2744
        %v2845 = vadd.f32 %v2445, %v2747
        %v2846 = vadd.f32 %v2450, %v2752
        %v2847 = vadd.f32 %v2453, %v2755
        %v2848 = vadd.f32 %v2458, %v2760
        %v2849 = vadd.f32 %v2461, %v2763
        %v2850 = vadd.f32 %v2466, %v2768
        %v2851 = vadd.f32 %v2469, %v2771
        %v2852 = vadd.f32 %v2474, %v2776
        %v2853 = vadd.f32 %v2477, %v2779
        %v2854 = vadd.f32 %v2482, %v2784
        %v2855 = vadd.f32 %v2485, %v2787
        %v2856 = vadd.f32 %v2490, %v2792
        %v2857 = vadd.f32 %v2493, %v2795
        %v2858 = vadd.f32 %v2498, %v2800
        %v2859 = vadd.f32 %v2501, %v2803
        %v2860 = vadd.f32 %v2506, %v2808
        %v2861 = vadd.f32 %v2509, %v2811
        %v2862 = vadd.f32 %v2514, %v2816
        %v2863 = vadd.f32 %v2517, %v2819
        %v2864 = vadd.f32 %v2522, %v2824
        %v2865 = vadd.f32 %v2525, %v2827
        %v2866 = vld [vmem:[#allocation2 + $0x8] sm:$0xe]
        %v2867 = vld [vmem:[#allocation2 + $0xc] sm:$0xf]
        %v2868 = vld [vmem:[#allocation2 + $0x10] sm:$0xf]
        %v2869 = vld [vmem:[#allocation2 + $0x14] sm:$0xf]
        %v2870 = vld [vmem:[#allocation2 + $0x18] sm:$0xf]
        %v2871 = vld [vmem:[#allocation2 + $0x1c] sm:$0xf]
        %v2872 = vld [vmem:[#allocation2 + $0x20] sm:$0xf]
        %v2873 = vld [vmem:[#allocation2 + $0x24] sm:$0xf]
        %v2874 = vld [vmem:[#allocation2 + $0x28] sm:$0xf]
        %v2875 = vld [vmem:[#allocation2 + $0x2c] sm:$0xf]
        %v2876 = vld [vmem:[#allocation2 + $0x30] sm:$0xf]
        %v2877 = vld [vmem:[#allocation2 + $0x34] sm:$0xf]
        %v2878 = vld [vmem:[#allocation2 + $0x38] sm:$0xf]
        %v2879 = vld [vmem:[#allocation2 + $0x3c] sm:$0xf]
        %v2880 = vld [vmem:[#allocation2 + $0x40] sm:$0xf]
        %v2881 = vld [vmem:[#allocation2 + $0x44] sm:$0xf]
        %v2882 = vld [vmem:[#allocation2 + $0x48] sm:$0xf]
        %v2883 = vld [vmem:[#allocation2 + $0x4c] sm:$0xf]
        %v2884 = vld [vmem:[#allocation2 + $0x50] sm:$0xf]
        %v2885 = vld [vmem:[#allocation2 + $0x54] sm:$0xf]
        %v2886 = vld [vmem:[#allocation2 + $0x58] sm:$0xf]
        %v2887 = vld [vmem:[#allocation2 + $0x5c] sm:$0xf]
        %v2888 = vld [vmem:[#allocation2 + $0x60] sm:$0xf]
        %v2889 = vld [vmem:[#allocation2 + $0x64] sm:$0xf]
        %v2890 = vld [vmem:[#allocation2 + $0x68] sm:$0xf]
        %v2891 = vld [vmem:[#allocation2 + $0x6c] sm:$0xf]
        %v2892 = vld [vmem:[#allocation2 + $0x70] sm:$0xf]
        %v2893 = vld [vmem:[#allocation2 + $0x74] sm:$0xf]
        %v2894 = vld [vmem:[#allocation2 + $0x78] sm:$0xf]
        %v2895 = vld [vmem:[#allocation2 + $0x7c] sm:$0xf]
        %v2896 = vld [vmem:[#allocation2 + $0x80] sm:$0xf]
        %v2897 = vld [vmem:[#allocation2 + $0x84] sm:$0xf]
        %v2898 = vld [vmem:[#allocation2 + $0x88] sm:$0xf]
        %v2899 = vld [vmem:[#allocation2 + $0x8c] sm:$0xf]
        %v2900 = vld [vmem:[#allocation2 + $0x90] sm:$0xf]
        %v2901 = vld [vmem:[#allocation2 + $0x94] sm:$0xf]
        %v2902 = vld [vmem:[#allocation2 + $0x98] sm:$0x1]
        %s2903 = scalar_lea.vmem %s1, 192
        %v2904 = vld [vmem:[%s2903] sm:$0xf]
        %v2905 = vld [vmem:[%s2903 + $0x4] sm:$0xf]
        %v2906 = vld [vmem:[%s2903 + $0x8] sm:$0xf]
        %v2907 = vld [vmem:[%s2903 + $0xc] sm:$0xf]
        %v2908 = vld [vmem:[%s2903 + $0x10] sm:$0xf]
        %v2909 = vld [vmem:[%s2903 + $0x14] sm:$0xf]
        %v2910 = vld [vmem:[%s2903 + $0x18] sm:$0xf]
        %v2911 = vld [vmem:[%s2903 + $0x1c] sm:$0xf]
        %v2912 = vld [vmem:[%s2903 + $0x20] sm:$0xf]
        %v2913 = vld [vmem:[%s2903 + $0x24] sm:$0xf]
        %v2914 = vld [vmem:[%s2903 + $0x28] sm:$0xf]
        %v2915 = vld [vmem:[%s2903 + $0x2c] sm:$0xf]
        %v2916 = vld [vmem:[%s2903 + $0x30] sm:$0xf]
        %v2917 = vld [vmem:[%s2903 + $0x34] sm:$0xf]
        %v2918 = vld [vmem:[%s2903 + $0x38] sm:$0xf]
        %v2919 = vld [vmem:[%s2903 + $0x3c] sm:$0xf]
        %v2920 = vld [vmem:[#allocation2 + $0x98] sm:$0x3]
        %s2921 = scalar_lea.vmem %s1, 256
        %v2922 = vld [vmem:[%s2921] sm:$0xf]
        %v2923 = vld [vmem:[%s2921 + $0x4] sm:$0xf]
        %v2924 = vld [vmem:[%s2921 + $0x8] sm:$0xf]
        %v2925 = vld [vmem:[%s2921 + $0xc] sm:$0xf]
        %v2926 = vld [vmem:[%s2921 + $0x10] sm:$0xf]
        %v2927 = vld [vmem:[%s2921 + $0x14] sm:$0xf]
        %v2928 = vld [vmem:[%s2921 + $0x18] sm:$0xf]
        %v2929 = vld [vmem:[%s2921 + $0x1c] sm:$0xf]
        %v2930 = vld [vmem:[%s2921 + $0x20] sm:$0xf]
        %v2931 = vld [vmem:[%s2921 + $0x24] sm:$0xf]
        %v2932 = vld [vmem:[%s2921 + $0x28] sm:$0xf]
        %v2933 = vld [vmem:[%s2921 + $0x2c] sm:$0xf]
        %v2934 = vld [vmem:[%s2921 + $0x30] sm:$0xf]
        %v2935 = vld [vmem:[%s2921 + $0x34] sm:$0xf]
        %v2936 = vld [vmem:[%s2921 + $0x38] sm:$0xf]
        %v2937 = vld [vmem:[%s2921 + $0x3c] sm:$0xf]
        %v2975 = vunpack.c.l.b16 %v2866
        %v2976 = vunpack.c.l.b16 %v2867
        %v2977 = vunpack.c.l.b16 %v2868
        %v2978 = vunpack.c.l.b16 %v2869
        %v2979 = vunpack.c.l.b16 %v2870
        %v2980 = vunpack.c.l.b16 %v2871
        %v2981 = vunpack.c.l.b16 %v2872
        %v2982 = vunpack.c.l.b16 %v2873
        %v2983 = vunpack.c.l.b16 %v2874
        %v2984 = vunpack.c.l.b16 %v2875
        %v2985 = vunpack.c.l.b16 %v2876
        %v2986 = vunpack.c.l.b16 %v2877
        %v2987 = vunpack.c.l.b16 %v2878
        %v2988 = vunpack.c.l.b16 %v2879
        %v2989 = vunpack.c.l.b16 %v2880
        %v2990 = vunpack.c.l.b16 %v2881
        %v2991 = vunpack.c.l.b16 %v2882
        %v2992 = vunpack.c.l.b16 %v2883
        %v2993 = vunpack.c.l.b16 %v2884
        %v2994 = vunpack.c.l.b16 %v2885
        %v2995 = vunpack.c.l.b16 %v2886
        %v2996 = vunpack.c.l.b16 %v2887
        %v2997 = vunpack.c.l.b16 %v2888
        %v2998 = vunpack.c.l.b16 %v2889
        %v2999 = vunpack.c.l.b16 %v2890
        %v3000 = vunpack.c.l.b16 %v2891
        %v3001 = vunpack.c.l.b16 %v2892
        %v3002 = vunpack.c.l.b16 %v2893
        %v3003 = vunpack.c.l.b16 %v2894
        %v3004 = vunpack.c.l.b16 %v2895
        %v3005 = vunpack.c.l.b16 %v2896
        %v3006 = vunpack.c.l.b16 %v2897
        %v3007 = vunpack.c.l.b16 %v2898
        %v3008 = vunpack.c.l.b16 %v2899
        %v3009 = vunpack.c.l.b16 %v2900
        %v3010 = vunpack.c.l.b16 %v2901
        %v3011 = vunpack.c.l.b16 %v2920
        %v3012 = vpack.c.b16 %v2976, %v2975
        %v3013 = vpack.c.b16 %v2978, %v2977
        %v3014 = vpack.c.b16 %v2980, %v2979
        %v3015 = vpack.c.b16 %v2982, %v2981
        %v3016 = vpack.c.b16 %v2984, %v2983
        %v3017 = vpack.c.b16 %v2986, %v2985
        %v3018 = vpack.c.b16 %v2988, %v2987
        %v3019 = vpack.c.b16 %v2990, %v2989
        %v3020 = vpack.c.b16 %v2992, %v2991
        %v3021 = vpack.c.b16 %v2994, %v2993
        %v3022 = vpack.c.b16 %v2996, %v2995
        %v3023 = vpack.c.b16 %v2998, %v2997
        %v3024 = vpack.c.b16 %v3000, %v2999
        %v3025 = vpack.c.b16 %v3002, %v3001
        %v3026 = vpack.c.b16 %v3004, %v3003
        %v3027 = vpack.c.b16 %v3006, %v3005
        %v3028 = vpack.c.b16 %v3008, %v3007
        %v3029 = vpack.c.b16 %v3010, %v3009
        %v3030 = vpack.c.b16 %v3011, %v3011
        %vm3031 = vsmask.f32 6400
        %v3033 = vshrl.u32 %v3012, 16
        %v3035 = vrot.slane %v3033, 1
        %v3036 = vshll.u32 %v3012, 16
        %v3038 = vrot.slane %v3036, 2
        %v3039 = vor.u32 %v3035, %v3038
        %v3041 = vshrl.u32 %v3013, 16
        %v3043 = vrot.slane %v3041, 1
        %v3044 = vshll.u32 %v3013, 16
        %v3046 = vrot.slane %v3044, 2
        %v3047 = vor.u32 %v3043, %v3046
        %v3048 = vsel %vm3031, %v3039, %v3047
        %v3050 = vshrl.u32 %v3014, 16
        %v3052 = vrot.slane %v3050, 1
        %v3053 = vshll.u32 %v3014, 16
        %v3055 = vrot.slane %v3053, 2
        %v3056 = vor.u32 %v3052, %v3055
        %v3057 = vsel %vm3031, %v3047, %v3056
        %v3059 = vshrl.u32 %v3015, 16
        %v3061 = vrot.slane %v3059, 1
        %v3062 = vshll.u32 %v3015, 16
        %v3064 = vrot.slane %v3062, 2
        %v3065 = vor.u32 %v3061, %v3064
        %v3066 = vsel %vm3031, %v3056, %v3065
        %v3068 = vshrl.u32 %v3016, 16
        %v3070 = vrot.slane %v3068, 1
        %v3071 = vshll.u32 %v3016, 16
        %v3073 = vrot.slane %v3071, 2
        %v3074 = vor.u32 %v3070, %v3073
        %v3075 = vsel %vm3031, %v3065, %v3074
        %v3077 = vshrl.u32 %v3017, 16
        %v3079 = vrot.slane %v3077, 1
        %v3080 = vshll.u32 %v3017, 16
        %v3082 = vrot.slane %v3080, 2
        %v3083 = vor.u32 %v3079, %v3082
        %v3084 = vsel %vm3031, %v3074, %v3083
        %v3086 = vshrl.u32 %v3018, 16
        %v3088 = vrot.slane %v3086, 1
        %v3089 = vshll.u32 %v3018, 16
        %v3091 = vrot.slane %v3089, 2
        %v3092 = vor.u32 %v3088, %v3091
        %v3093 = vsel %vm3031, %v3083, %v3092
        %v3095 = vshrl.u32 %v3019, 16
        %v3097 = vrot.slane %v3095, 1
        %v3098 = vshll.u32 %v3019, 16
        %v3100 = vrot.slane %v3098, 2
        %v3101 = vor.u32 %v3097, %v3100
        %v3102 = vsel %vm3031, %v3092, %v3101
        %v3104 = vshrl.u32 %v3020, 16
        %v3106 = vrot.slane %v3104, 1
        %v3107 = vshll.u32 %v3020, 16
        %v3109 = vrot.slane %v3107, 2
        %v3110 = vor.u32 %v3106, %v3109
        %v3111 = vsel %vm3031, %v3101, %v3110
        %v3113 = vshrl.u32 %v3021, 16
        %v3115 = vrot.slane %v3113, 1
        %v3116 = vshll.u32 %v3021, 16
        %v3118 = vrot.slane %v3116, 2
        %v3119 = vor.u32 %v3115, %v3118
        %v3120 = vsel %vm3031, %v3110, %v3119
        %v3122 = vshrl.u32 %v3022, 16
        %v3124 = vrot.slane %v3122, 1
        %v3125 = vshll.u32 %v3022, 16
        %v3127 = vrot.slane %v3125, 2
        %v3128 = vor.u32 %v3124, %v3127
        %v3129 = vsel %vm3031, %v3119, %v3128
        %v3131 = vshrl.u32 %v3023, 16
        %v3133 = vrot.slane %v3131, 1
        %v3134 = vshll.u32 %v3023, 16
        %v3136 = vrot.slane %v3134, 2
        %v3137 = vor.u32 %v3133, %v3136
        %v3138 = vsel %vm3031, %v3128, %v3137
        %v3140 = vshrl.u32 %v3024, 16
        %v3142 = vrot.slane %v3140, 1
        %v3143 = vshll.u32 %v3024, 16
        %v3145 = vrot.slane %v3143, 2
        %v3146 = vor.u32 %v3142, %v3145
        %v3147 = vsel %vm3031, %v3137, %v3146
        %v3149 = vshrl.u32 %v3025, 16
        %v3151 = vrot.slane %v3149, 1
        %v3152 = vshll.u32 %v3025, 16
        %v3154 = vrot.slane %v3152, 2
        %v3155 = vor.u32 %v3151, %v3154
        %v3156 = vsel %vm3031, %v3146, %v3155
        %v3158 = vshrl.u32 %v3026, 16
        %v3160 = vrot.slane %v3158, 1
        %v3161 = vshll.u32 %v3026, 16
        %v3163 = vrot.slane %v3161, 2
        %v3164 = vor.u32 %v3160, %v3163
        %v3165 = vsel %vm3031, %v3155, %v3164
        %v3167 = vshrl.u32 %v3027, 16
        %v3169 = vrot.slane %v3167, 1
        %v3170 = vshll.u32 %v3027, 16
        %v3172 = vrot.slane %v3170, 2
        %v3173 = vor.u32 %v3169, %v3172
        %v3174 = vsel %vm3031, %v3164, %v3173
        %v3176 = vshrl.u32 %v3028, 16
        %v3178 = vrot.slane %v3176, 1
        %v3179 = vshll.u32 %v3028, 16
        %v3181 = vrot.slane %v3179, 2
        %v3182 = vor.u32 %v3178, %v3181
        %v3183 = vsel %vm3031, %v3173, %v3182
        %v3185 = vshrl.u32 %v3029, 16
        %v3187 = vrot.slane %v3185, 1
        %v3188 = vshll.u32 %v3029, 16
        %v3190 = vrot.slane %v3188, 2
        %v3191 = vor.u32 %v3187, %v3190
        %v3192 = vsel %vm3031, %v3182, %v3191
        %v3194 = vshrl.u32 %v3030, 16
        %v3196 = vrot.slane %v3194, 1
        %v3197 = vshll.u32 %v3030, 16
        %v3199 = vrot.slane %v3197, 2
        %v3200 = vor.u32 %v3196, %v3199
        %v3201 = vsel %vm3031, %v3191, %v3200
        %v3236 = vunpack.c.l.b16 %v2922
        %v3237 = vunpack.c.l.b16 %v2923
        %v3238 = vunpack.c.l.b16 %v2924
        %v3239 = vunpack.c.l.b16 %v2925
        %v3240 = vunpack.c.l.b16 %v2926
        %v3241 = vunpack.c.l.b16 %v2927
        %v3242 = vunpack.c.l.b16 %v2928
        %v3243 = vunpack.c.l.b16 %v2929
        %v3244 = vunpack.c.l.b16 %v2930
        %v3245 = vunpack.c.l.b16 %v2931
        %v3246 = vunpack.c.l.b16 %v2932
        %v3247 = vunpack.c.l.b16 %v2933
        %v3248 = vunpack.c.l.b16 %v2934
        %v3249 = vunpack.c.l.b16 %v2935
        %v3250 = vunpack.c.l.b16 %v2936
        %v3251 = vunpack.c.l.b16 %v2937
        %v3252 = vpack.c.b16 %v3237, %v3236
        %v3253 = vpack.c.b16 %v3239, %v3238
        %v3254 = vpack.c.b16 %v3241, %v3240
        %v3255 = vpack.c.b16 %v3243, %v3242
        %v3256 = vpack.c.b16 %v3245, %v3244
        %v3257 = vpack.c.b16 %v3247, %v3246
        %v3258 = vpack.c.b16 %v3249, %v3248
        %v3259 = vpack.c.b16 %v3251, %v3250
        %3268 = vmatprep.subr.bf16.mxu0 0
        %3269 = vmatpush1.bf16.msra.mxu0 %v3259
        %3270 = vmatprep.subr.bf16.mxu0 0
        %3271 = vmatpush1.bf16.msra.mxu0 %v3258
        %3272 = vmatprep.subr.bf16.mxu0 0
        %3273 = vmatpush1.bf16.msra.mxu0 %v3257
        %3274 = vmatprep.subr.bf16.mxu0 0
        %3275 = vmatpush1.bf16.msra.mxu0 %v3256
        %3276 = vmatprep.subr.bf16.mxu0 0
        %3277 = vmatpush1.bf16.msra.mxu0 %v3255
        %3278 = vmatprep.subr.bf16.mxu0 0
        %3279 = vmatpush1.bf16.msra.mxu0 %v3254
        %3280 = vmatprep.subr.bf16.mxu0 0
        %3281 = vmatpush1.bf16.msra.mxu0 %v3253
        %3282 = vmatprep.subr.bf16.mxu0 0
        %3283 = vmatpush1.bf16.msra.mxu0 %v3252
        %3284 = vmatprep.subr.bf16.mxu0 0
        %3285 = vmatpush2.bf16.msra.mxu0 0
        %3286 = vmatprep.subr.bf16.mxu0 0
        %3287 = vmatpush2.bf16.msra.mxu0 0
        %3288 = vmatprep.subr.bf16.mxu0 0
        %3289 = vmatpush2.bf16.msra.mxu0 0
        %3290 = vmatprep.subr.bf16.mxu0 0
        %3291 = vmatpush2.bf16.msra.mxu0 0
        %3292 = vmatprep.subr.bf16.mxu0 0
        %3293 = vmatpush2.bf16.msra.mxu0 0
        %3294 = vmatprep.subr.bf16.mxu0 0
        %3295 = vmatpush2.bf16.msra.mxu0 0
        %3296 = vmatprep.subr.bf16.mxu0 0
        %3297 = vmatpush2.bf16.msra.mxu0 0
        %3298 = vmatprep.subr.bf16.mxu0 0
        %3299 = vmatpush2.bf16.msra.mxu0 0
        %3300 = vmatprep.mubr.bf16.mxu0 0
        %3301 = vmatmul.mubr.bf16.gmra.mxu0 %v3048
        %v3302 = vpop.f32.mrf.mxu0
        %v3303 = vadd.f32 0.0, %v3302
        %v3304 = vpop.f32.mrf.mxu0
        %v3305 = vpop.f32.mrf.mxu0
        %v3306 = vadd.f32 0.0, %v3305
        %v3307 = vpop.f32.mrf.mxu0
        %3308 = vmatprep.mubr.bf16.mxu0 0
        %3309 = vmatmul.mubr.bf16.gmra.mxu0 %v3057
        %v3310 = vpop.f32.mrf.mxu0
        %v3311 = vadd.f32 0.0, %v3310
        %v3312 = vpop.f32.mrf.mxu0
        %v3313 = vpop.f32.mrf.mxu0
        %v3314 = vadd.f32 0.0, %v3313
        %v3315 = vpop.f32.mrf.mxu0
        %3316 = vmatprep.mubr.bf16.mxu0 0
        %3317 = vmatmul.mubr.bf16.gmra.mxu0 %v3066
        %v3318 = vpop.f32.mrf.mxu0
        %v3319 = vadd.f32 0.0, %v3318
        %v3320 = vpop.f32.mrf.mxu0
        %v3321 = vpop.f32.mrf.mxu0
        %v3322 = vadd.f32 0.0, %v3321
        %v3323 = vpop.f32.mrf.mxu0
        %3324 = vmatprep.mubr.bf16.mxu0 0
        %3325 = vmatmul.mubr.bf16.gmra.mxu0 %v3075
        %v3326 = vpop.f32.mrf.mxu0
        %v3327 = vadd.f32 0.0, %v3326
        %v3328 = vpop.f32.mrf.mxu0
        %v3329 = vpop.f32.mrf.mxu0
        %v3330 = vadd.f32 0.0, %v3329
        %v3331 = vpop.f32.mrf.mxu0
        %3332 = vmatprep.mubr.bf16.mxu0 0
        %3333 = vmatmul.mubr.bf16.gmra.mxu0 %v3084
        %v3334 = vpop.f32.mrf.mxu0
        %v3335 = vadd.f32 0.0, %v3334
        %v3336 = vpop.f32.mrf.mxu0
        %v3337 = vpop.f32.mrf.mxu0
        %v3338 = vadd.f32 0.0, %v3337
        %v3339 = vpop.f32.mrf.mxu0
        %3340 = vmatprep.mubr.bf16.mxu0 0
        %3341 = vmatmul.mubr.bf16.gmra.mxu0 %v3093
        %v3342 = vpop.f32.mrf.mxu0
        %v3343 = vadd.f32 0.0, %v3342
        %v3344 = vpop.f32.mrf.mxu0
        %v3345 = vpop.f32.mrf.mxu0
        %v3346 = vadd.f32 0.0, %v3345
        %v3347 = vpop.f32.mrf.mxu0
        %3348 = vmatprep.mubr.bf16.mxu0 0
        %3349 = vmatmul.mubr.bf16.gmra.mxu0 %v3102
        %v3350 = vpop.f32.mrf.mxu0
        %v3351 = vadd.f32 0.0, %v3350
        %v3352 = vpop.f32.mrf.mxu0
        %v3353 = vpop.f32.mrf.mxu0
        %v3354 = vadd.f32 0.0, %v3353
        %v3355 = vpop.f32.mrf.mxu0
        %3356 = vmatprep.mubr.bf16.mxu0 0
        %3357 = vmatmul.mubr.bf16.gmra.mxu0 %v3111
        %v3358 = vpop.f32.mrf.mxu0
        %v3359 = vadd.f32 0.0, %v3358
        %v3360 = vpop.f32.mrf.mxu0
        %v3361 = vpop.f32.mrf.mxu0
        %v3362 = vadd.f32 0.0, %v3361
        %v3363 = vpop.f32.mrf.mxu0
        %3364 = vmatprep.mubr.bf16.mxu0 0
        %3365 = vmatmul.mubr.bf16.gmra.mxu0 %v3120
        %v3366 = vpop.f32.mrf.mxu0
        %v3367 = vadd.f32 0.0, %v3366
        %v3368 = vpop.f32.mrf.mxu0
        %v3369 = vpop.f32.mrf.mxu0
        %v3370 = vadd.f32 0.0, %v3369
        %v3371 = vpop.f32.mrf.mxu0
        %3372 = vmatprep.mubr.bf16.mxu0 0
        %3373 = vmatmul.mubr.bf16.gmra.mxu0 %v3129
        %v3374 = vpop.f32.mrf.mxu0
        %v3375 = vadd.f32 0.0, %v3374
        %v3376 = vpop.f32.mrf.mxu0
        %v3377 = vpop.f32.mrf.mxu0
        %v3378 = vadd.f32 0.0, %v3377
        %v3379 = vpop.f32.mrf.mxu0
        %3380 = vmatprep.mubr.bf16.mxu0 0
        %3381 = vmatmul.mubr.bf16.gmra.mxu0 %v3138
        %v3382 = vpop.f32.mrf.mxu0
        %v3383 = vadd.f32 0.0, %v3382
        %v3384 = vpop.f32.mrf.mxu0
        %v3385 = vpop.f32.mrf.mxu0
        %v3386 = vadd.f32 0.0, %v3385
        %v3387 = vpop.f32.mrf.mxu0
        %3388 = vmatprep.mubr.bf16.mxu0 0
        %3389 = vmatmul.mubr.bf16.gmra.mxu0 %v3147
        %v3390 = vpop.f32.mrf.mxu0
        %v3391 = vadd.f32 0.0, %v3390
        %v3392 = vpop.f32.mrf.mxu0
        %v3393 = vpop.f32.mrf.mxu0
        %v3394 = vadd.f32 0.0, %v3393
        %v3395 = vpop.f32.mrf.mxu0
        %3396 = vmatprep.mubr.bf16.mxu0 0
        %3397 = vmatmul.mubr.bf16.gmra.mxu0 %v3156
        %v3398 = vpop.f32.mrf.mxu0
        %v3399 = vadd.f32 0.0, %v3398
        %v3400 = vpop.f32.mrf.mxu0
        %v3401 = vpop.f32.mrf.mxu0
        %v3402 = vadd.f32 0.0, %v3401
        %v3403 = vpop.f32.mrf.mxu0
        %3404 = vmatprep.mubr.bf16.mxu0 0
        %3405 = vmatmul.mubr.bf16.gmra.mxu0 %v3165
        %v3406 = vpop.f32.mrf.mxu0
        %v3407 = vadd.f32 0.0, %v3406
        %v3408 = vpop.f32.mrf.mxu0
        %v3409 = vpop.f32.mrf.mxu0
        %v3410 = vadd.f32 0.0, %v3409
        %v3411 = vpop.f32.mrf.mxu0
        %3412 = vmatprep.mubr.bf16.mxu0 0
        %3413 = vmatmul.mubr.bf16.gmra.mxu0 %v3174
        %v3414 = vpop.f32.mrf.mxu0
        %v3415 = vadd.f32 0.0, %v3414
        %v3416 = vpop.f32.mrf.mxu0
        %v3417 = vpop.f32.mrf.mxu0
        %v3418 = vadd.f32 0.0, %v3417
        %v3419 = vpop.f32.mrf.mxu0
        %3420 = vmatprep.mubr.bf16.mxu0 0
        %3421 = vmatmul.mubr.bf16.gmra.mxu0 %v3183
        %v3422 = vpop.f32.mrf.mxu0
        %v3423 = vadd.f32 0.0, %v3422
        %v3424 = vpop.f32.mrf.mxu0
        %v3425 = vpop.f32.mrf.mxu0
        %v3426 = vadd.f32 0.0, %v3425
        %v3427 = vpop.f32.mrf.mxu0
        %3428 = vmatprep.mubr.bf16.mxu0 0
        %3429 = vmatmul.mubr.bf16.gmra.mxu0 %v3192
        %v3430 = vpop.f32.mrf.mxu0
        %v3431 = vadd.f32 0.0, %v3430
        %v3432 = vpop.f32.mrf.mxu0
        %v3433 = vpop.f32.mrf.mxu0
        %v3434 = vadd.f32 0.0, %v3433
        %v3435 = vpop.f32.mrf.mxu0
        %3436 = vmatprep.mubr.bf16.mxu0 0
        %3437 = vmatmul.mubr.bf16.gmra.mxu0 %v3201
        %v3438 = vpop.f32.mrf.mxu0
        %v3439 = vadd.f32 0.0, %v3438
        %v3440 = vpop.f32.mrf.mxu0
        %v3441 = vpop.f32.mrf.mxu0
        %v3442 = vadd.f32 0.0, %v3441
        %v3443 = vpop.f32.mrf.mxu0
        %3444 = vdwg.mxu0
        %v3446 = vunpack.c.l.b16 %v2902
        %v3447 = vpack.c.b16 %v3446, %v3446
        %v3448 = vrot.slane %v3012, 1
        %v3449 = vrot.slane %v3013, 1
        %v3450 = vsel %vm2549, %v3448, %v3449
        %v3451 = vrot.slane %v3014, 1
        %v3452 = vsel %vm2549, %v3449, %v3451
        %v3453 = vrot.slane %v3015, 1
        %v3454 = vsel %vm2549, %v3451, %v3453
        %v3455 = vrot.slane %v3016, 1
        %v3456 = vsel %vm2549, %v3453, %v3455
        %v3457 = vrot.slane %v3017, 1
        %v3458 = vsel %vm2549, %v3455, %v3457
        %v3459 = vrot.slane %v3018, 1
        %v3460 = vsel %vm2549, %v3457, %v3459
        %v3461 = vrot.slane %v3019, 1
        %v3462 = vsel %vm2549, %v3459, %v3461
        %v3463 = vrot.slane %v3020, 1
        %v3464 = vsel %vm2549, %v3461, %v3463
        %v3465 = vrot.slane %v3021, 1
        %v3466 = vsel %vm2549, %v3463, %v3465
        %v3467 = vrot.slane %v3022, 1
        %v3468 = vsel %vm2549, %v3465, %v3467
        %v3469 = vrot.slane %v3023, 1
        %v3470 = vsel %vm2549, %v3467, %v3469
        %v3471 = vrot.slane %v3024, 1
        %v3472 = vsel %vm2549, %v3469, %v3471
        %v3473 = vrot.slane %v3025, 1
        %v3474 = vsel %vm2549, %v3471, %v3473
        %v3475 = vrot.slane %v3026, 1
        %v3476 = vsel %vm2549, %v3473, %v3475
        %v3477 = vrot.slane %v3027, 1
        %v3478 = vsel %vm2549, %v3475, %v3477
        %v3479 = vrot.slane %v3028, 1
        %v3480 = vsel %vm2549, %v3477, %v3479
        %v3481 = vrot.slane %v3029, 1
        %v3482 = vsel %vm2549, %v3479, %v3481
        %v3483 = vrot.slane %v3447, 1
        %v3484 = vsel %vm2549, %v3481, %v3483
        %v3519 = vunpack.c.l.b16 %v2904
        %v3520 = vunpack.c.l.b16 %v2905
        %v3521 = vunpack.c.l.b16 %v2906
        %v3522 = vunpack.c.l.b16 %v2907
        %v3523 = vunpack.c.l.b16 %v2908
        %v3524 = vunpack.c.l.b16 %v2909
        %v3525 = vunpack.c.l.b16 %v2910
        %v3526 = vunpack.c.l.b16 %v2911
        %v3527 = vunpack.c.l.b16 %v2912
        %v3528 = vunpack.c.l.b16 %v2913
        %v3529 = vunpack.c.l.b16 %v2914
        %v3530 = vunpack.c.l.b16 %v2915
        %v3531 = vunpack.c.l.b16 %v2916
        %v3532 = vunpack.c.l.b16 %v2917
        %v3533 = vunpack.c.l.b16 %v2918
        %v3534 = vunpack.c.l.b16 %v2919
        %v3535 = vpack.c.b16 %v3520, %v3519
        %v3536 = vpack.c.b16 %v3522, %v3521
        %v3537 = vpack.c.b16 %v3524, %v3523
        %v3538 = vpack.c.b16 %v3526, %v3525
        %v3539 = vpack.c.b16 %v3528, %v3527
        %v3540 = vpack.c.b16 %v3530, %v3529
        %v3541 = vpack.c.b16 %v3532, %v3531
        %v3542 = vpack.c.b16 %v3534, %v3533
        %3551 = vmatprep.subr.bf16.mxu0 0
        %3552 = vmatpush1.bf16.msra.mxu0 %v3542
        %3553 = vmatprep.subr.bf16.mxu0 0
        %3554 = vmatpush1.bf16.msra.mxu0 %v3541
        %3555 = vmatprep.subr.bf16.mxu0 0
        %3556 = vmatpush1.bf16.msra.mxu0 %v3540
        %3557 = vmatprep.subr.bf16.mxu0 0
        %3558 = vmatpush1.bf16.msra.mxu0 %v3539
        %3559 = vmatprep.subr.bf16.mxu0 0
        %3560 = vmatpush1.bf16.msra.mxu0 %v3538
        %3561 = vmatprep.subr.bf16.mxu0 0
        %3562 = vmatpush1.bf16.msra.mxu0 %v3537
        %3563 = vmatprep.subr.bf16.mxu0 0
        %3564 = vmatpush1.bf16.msra.mxu0 %v3536
        %3565 = vmatprep.subr.bf16.mxu0 0
        %3566 = vmatpush1.bf16.msra.mxu0 %v3535
        %3567 = vmatprep.subr.bf16.mxu0 0
        %3568 = vmatpush2.bf16.msra.mxu0 0
        %3569 = vmatprep.subr.bf16.mxu0 0
        %3570 = vmatpush2.bf16.msra.mxu0 0
        %3571 = vmatprep.subr.bf16.mxu0 0
        %3572 = vmatpush2.bf16.msra.mxu0 0
        %3573 = vmatprep.subr.bf16.mxu0 0
        %3574 = vmatpush2.bf16.msra.mxu0 0
        %3575 = vmatprep.subr.bf16.mxu0 0
        %3576 = vmatpush2.bf16.msra.mxu0 0
        %3577 = vmatprep.subr.bf16.mxu0 0
        %3578 = vmatpush2.bf16.msra.mxu0 0
        %3579 = vmatprep.subr.bf16.mxu0 0
        %3580 = vmatpush2.bf16.msra.mxu0 0
        %3581 = vmatprep.subr.bf16.mxu0 0
        %3582 = vmatpush2.bf16.msra.mxu0 0
        %3583 = vmatprep.mubr.bf16.mxu0 0
        %3584 = vmatmul.mubr.bf16.gmra.mxu0 %v3450
        %v3585 = vpop.f32.mrf.mxu0
        %v3586 = vadd.f32 %v3303, %v3585
        %v3587 = vpop.f32.mrf.mxu0
        %v3588 = vpop.f32.mrf.mxu0
        %v3589 = vadd.f32 %v3306, %v3588
        %v3590 = vpop.f32.mrf.mxu0
        %3591 = vmatprep.mubr.bf16.mxu0 0
        %3592 = vmatmul.mubr.bf16.gmra.mxu0 %v3452
        %v3593 = vpop.f32.mrf.mxu0
        %v3594 = vadd.f32 %v3311, %v3593
        %v3595 = vpop.f32.mrf.mxu0
        %v3596 = vpop.f32.mrf.mxu0
        %v3597 = vadd.f32 %v3314, %v3596
        %v3598 = vpop.f32.mrf.mxu0
        %3599 = vmatprep.mubr.bf16.mxu0 0
        %3600 = vmatmul.mubr.bf16.gmra.mxu0 %v3454
        %v3601 = vpop.f32.mrf.mxu0
        %v3602 = vadd.f32 %v3319, %v3601
        %v3603 = vpop.f32.mrf.mxu0
        %v3604 = vpop.f32.mrf.mxu0
        %v3605 = vadd.f32 %v3322, %v3604
        %v3606 = vpop.f32.mrf.mxu0
        %3607 = vmatprep.mubr.bf16.mxu0 0
        %3608 = vmatmul.mubr.bf16.gmra.mxu0 %v3456
        %v3609 = vpop.f32.mrf.mxu0
        %v3610 = vadd.f32 %v3327, %v3609
        %v3611 = vpop.f32.mrf.mxu0
        %v3612 = vpop.f32.mrf.mxu0
        %v3613 = vadd.f32 %v3330, %v3612
        %v3614 = vpop.f32.mrf.mxu0
        %3615 = vmatprep.mubr.bf16.mxu0 0
        %3616 = vmatmul.mubr.bf16.gmra.mxu0 %v3458
        %v3617 = vpop.f32.mrf.mxu0
        %v3618 = vadd.f32 %v3335, %v3617
        %v3619 = vpop.f32.mrf.mxu0
        %v3620 = vpop.f32.mrf.mxu0
        %v3621 = vadd.f32 %v3338, %v3620
        %v3622 = vpop.f32.mrf.mxu0
        %3623 = vmatprep.mubr.bf16.mxu0 0
        %3624 = vmatmul.mubr.bf16.gmra.mxu0 %v3460
        %v3625 = vpop.f32.mrf.mxu0
        %v3626 = vadd.f32 %v3343, %v3625
        %v3627 = vpop.f32.mrf.mxu0
        %v3628 = vpop.f32.mrf.mxu0
        %v3629 = vadd.f32 %v3346, %v3628
        %v3630 = vpop.f32.mrf.mxu0
        %3631 = vmatprep.mubr.bf16.mxu0 0
        %3632 = vmatmul.mubr.bf16.gmra.mxu0 %v3462
        %v3633 = vpop.f32.mrf.mxu0
        %v3634 = vadd.f32 %v3351, %v3633
        %v3635 = vpop.f32.mrf.mxu0
        %v3636 = vpop.f32.mrf.mxu0
        %v3637 = vadd.f32 %v3354, %v3636
        %v3638 = vpop.f32.mrf.mxu0
        %3639 = vmatprep.mubr.bf16.mxu0 0
        %3640 = vmatmul.mubr.bf16.gmra.mxu0 %v3464
        %v3641 = vpop.f32.mrf.mxu0
        %v3642 = vadd.f32 %v3359, %v3641
        %v3643 = vpop.f32.mrf.mxu0
        %v3644 = vpop.f32.mrf.mxu0
        %v3645 = vadd.f32 %v3362, %v3644
        %v3646 = vpop.f32.mrf.mxu0
        %3647 = vmatprep.mubr.bf16.mxu0 0
        %3648 = vmatmul.mubr.bf16.gmra.mxu0 %v3466
        %v3649 = vpop.f32.mrf.mxu0
        %v3650 = vadd.f32 %v3367, %v3649
        %v3651 = vpop.f32.mrf.mxu0
        %v3652 = vpop.f32.mrf.mxu0
        %v3653 = vadd.f32 %v3370, %v3652
        %v3654 = vpop.f32.mrf.mxu0
        %3655 = vmatprep.mubr.bf16.mxu0 0
        %3656 = vmatmul.mubr.bf16.gmra.mxu0 %v3468
        %v3657 = vpop.f32.mrf.mxu0
        %v3658 = vadd.f32 %v3375, %v3657
        %v3659 = vpop.f32.mrf.mxu0
        %v3660 = vpop.f32.mrf.mxu0
        %v3661 = vadd.f32 %v3378, %v3660
        %v3662 = vpop.f32.mrf.mxu0
        %3663 = vmatprep.mubr.bf16.mxu0 0
        %3664 = vmatmul.mubr.bf16.gmra.mxu0 %v3470
        %v3665 = vpop.f32.mrf.mxu0
        %v3666 = vadd.f32 %v3383, %v3665
        %v3667 = vpop.f32.mrf.mxu0
        %v3668 = vpop.f32.mrf.mxu0
        %v3669 = vadd.f32 %v3386, %v3668
        %v3670 = vpop.f32.mrf.mxu0
        %3671 = vmatprep.mubr.bf16.mxu0 0
        %3672 = vmatmul.mubr.bf16.gmra.mxu0 %v3472
        %v3673 = vpop.f32.mrf.mxu0
        %v3674 = vadd.f32 %v3391, %v3673
        %v3675 = vpop.f32.mrf.mxu0
        %v3676 = vpop.f32.mrf.mxu0
        %v3677 = vadd.f32 %v3394, %v3676
        %v3678 = vpop.f32.mrf.mxu0
        %3679 = vmatprep.mubr.bf16.mxu0 0
        %3680 = vmatmul.mubr.bf16.gmra.mxu0 %v3474
        %v3681 = vpop.f32.mrf.mxu0
        %v3682 = vadd.f32 %v3399, %v3681
        %v3683 = vpop.f32.mrf.mxu0
        %v3684 = vpop.f32.mrf.mxu0
        %v3685 = vadd.f32 %v3402, %v3684
        %v3686 = vpop.f32.mrf.mxu0
        %3687 = vmatprep.mubr.bf16.mxu0 0
        %3688 = vmatmul.mubr.bf16.gmra.mxu0 %v3476
        %v3689 = vpop.f32.mrf.mxu0
        %v3690 = vadd.f32 %v3407, %v3689
        %v3691 = vpop.f32.mrf.mxu0
        %v3692 = vpop.f32.mrf.mxu0
        %v3693 = vadd.f32 %v3410, %v3692
        %v3694 = vpop.f32.mrf.mxu0
        %3695 = vmatprep.mubr.bf16.mxu0 0
        %3696 = vmatmul.mubr.bf16.gmra.mxu0 %v3478
        %v3697 = vpop.f32.mrf.mxu0
        %v3698 = vadd.f32 %v3415, %v3697
        %v3699 = vpop.f32.mrf.mxu0
        %v3700 = vpop.f32.mrf.mxu0
        %v3701 = vadd.f32 %v3418, %v3700
        %v3702 = vpop.f32.mrf.mxu0
        %3703 = vmatprep.mubr.bf16.mxu0 0
        %3704 = vmatmul.mubr.bf16.gmra.mxu0 %v3480
        %v3705 = vpop.f32.mrf.mxu0
        %v3706 = vadd.f32 %v3423, %v3705
        %v3707 = vpop.f32.mrf.mxu0
        %v3708 = vpop.f32.mrf.mxu0
        %v3709 = vadd.f32 %v3426, %v3708
        %v3710 = vpop.f32.mrf.mxu0
        %3711 = vmatprep.mubr.bf16.mxu0 0
        %3712 = vmatmul.mubr.bf16.gmra.mxu0 %v3482
        %v3713 = vpop.f32.mrf.mxu0
        %v3714 = vadd.f32 %v3431, %v3713
        %v3715 = vpop.f32.mrf.mxu0
        %v3716 = vpop.f32.mrf.mxu0
        %v3717 = vadd.f32 %v3434, %v3716
        %v3718 = vpop.f32.mrf.mxu0
        %3719 = vmatprep.mubr.bf16.mxu0 0
        %3720 = vmatmul.mubr.bf16.gmra.mxu0 %v3484
        %v3721 = vpop.f32.mrf.mxu0
        %v3722 = vadd.f32 %v3439, %v3721
        %v3723 = vpop.f32.mrf.mxu0
        %v3724 = vpop.f32.mrf.mxu0
        %v3725 = vadd.f32 %v3442, %v3724
        %v3726 = vpop.f32.mrf.mxu0
        %3727 = vdwg.mxu0
        %v3728 = vld [vmem:[#allocation2 + $0x8] sm:$0xc]
        %s3729 = scalar_lea.vmem %s1, 320
        %v3730 = vld [vmem:[%s3729] sm:$0xf]
        %v3731 = vld [vmem:[%s3729 + $0x4] sm:$0xf]
        %v3732 = vld [vmem:[%s3729 + $0x8] sm:$0xf]
        %v3733 = vld [vmem:[%s3729 + $0xc] sm:$0xf]
        %v3734 = vld [vmem:[%s3729 + $0x10] sm:$0xf]
        %v3735 = vld [vmem:[%s3729 + $0x14] sm:$0xf]
        %v3736 = vld [vmem:[%s3729 + $0x18] sm:$0xf]
        %v3737 = vld [vmem:[%s3729 + $0x1c] sm:$0xf]
        %v3738 = vld [vmem:[%s3729 + $0x20] sm:$0xf]
        %v3739 = vld [vmem:[%s3729 + $0x24] sm:$0xf]
        %v3740 = vld [vmem:[%s3729 + $0x28] sm:$0xf]
        %v3741 = vld [vmem:[%s3729 + $0x2c] sm:$0xf]
        %v3742 = vld [vmem:[%s3729 + $0x30] sm:$0xf]
        %v3743 = vld [vmem:[%s3729 + $0x34] sm:$0xf]
        %v3744 = vld [vmem:[%s3729 + $0x38] sm:$0xf]
        %v3745 = vld [vmem:[%s3729 + $0x3c] sm:$0xf]
        %v3747 = vunpack.c.l.b16 %v3728
        %v3748 = vpack.c.b16 %v2976, %v3747
        %vm3749 = vcmask 1045504
        %v3750 = vrot.slane %v3748, 2
        %v3751 = vrot.slane %v3013, 2
        %v3752 = vsel %vm3749, %v3750, %v3751
        %v3753 = vrot.slane %v3014, 2
        %v3754 = vsel %vm3749, %v3751, %v3753
        %v3755 = vrot.slane %v3015, 2
        %v3756 = vsel %vm3749, %v3753, %v3755
        %v3757 = vrot.slane %v3016, 2
        %v3758 = vsel %vm3749, %v3755, %v3757
        %v3759 = vrot.slane %v3017, 2
        %v3760 = vsel %vm3749, %v3757, %v3759
        %v3761 = vrot.slane %v3018, 2
        %v3762 = vsel %vm3749, %v3759, %v3761
        %v3763 = vrot.slane %v3019, 2
        %v3764 = vsel %vm3749, %v3761, %v3763
        %v3765 = vrot.slane %v3020, 2
        %v3766 = vsel %vm3749, %v3763, %v3765
        %v3767 = vrot.slane %v3021, 2
        %v3768 = vsel %vm3749, %v3765, %v3767
        %v3769 = vrot.slane %v3022, 2
        %v3770 = vsel %vm3749, %v3767, %v3769
        %v3771 = vrot.slane %v3023, 2
        %v3772 = vsel %vm3749, %v3769, %v3771
        %v3773 = vrot.slane %v3024, 2
        %v3774 = vsel %vm3749, %v3771, %v3773
        %v3775 = vrot.slane %v3025, 2
        %v3776 = vsel %vm3749, %v3773, %v3775
        %v3777 = vrot.slane %v3026, 2
        %v3778 = vsel %vm3749, %v3775, %v3777
        %v3779 = vrot.slane %v3027, 2
        %v3780 = vsel %vm3749, %v3777, %v3779
        %v3781 = vrot.slane %v3028, 2
        %v3782 = vsel %vm3749, %v3779, %v3781
        %v3783 = vrot.slane %v3029, 2
        %v3784 = vsel %vm3749, %v3781, %v3783
        %v3785 = vrot.slane %v3030, 2
        %v3786 = vsel %vm3749, %v3783, %v3785
        %v3821 = vunpack.c.l.b16 %v3730
        %v3822 = vunpack.c.l.b16 %v3731
        %v3823 = vunpack.c.l.b16 %v3732
        %v3824 = vunpack.c.l.b16 %v3733
        %v3825 = vunpack.c.l.b16 %v3734
        %v3826 = vunpack.c.l.b16 %v3735
        %v3827 = vunpack.c.l.b16 %v3736
        %v3828 = vunpack.c.l.b16 %v3737
        %v3829 = vunpack.c.l.b16 %v3738
        %v3830 = vunpack.c.l.b16 %v3739
        %v3831 = vunpack.c.l.b16 %v3740
        %v3832 = vunpack.c.l.b16 %v3741
        %v3833 = vunpack.c.l.b16 %v3742
        %v3834 = vunpack.c.l.b16 %v3743
        %v3835 = vunpack.c.l.b16 %v3744
        %v3836 = vunpack.c.l.b16 %v3745
        %v3837 = vpack.c.b16 %v3822, %v3821
        %v3838 = vpack.c.b16 %v3824, %v3823
        %v3839 = vpack.c.b16 %v3826, %v3825
        %v3840 = vpack.c.b16 %v3828, %v3827
        %v3841 = vpack.c.b16 %v3830, %v3829
        %v3842 = vpack.c.b16 %v3832, %v3831
        %v3843 = vpack.c.b16 %v3834, %v3833
        %v3844 = vpack.c.b16 %v3836, %v3835
        %3853 = vmatprep.subr.bf16.mxu0 0
        %3854 = vmatpush1.bf16.msra.mxu0 %v3844
        %3855 = vmatprep.subr.bf16.mxu0 0
        %3856 = vmatpush1.bf16.msra.mxu0 %v3843
        %3857 = vmatprep.subr.bf16.mxu0 0
        %3858 = vmatpush1.bf16.msra.mxu0 %v3842
        %3859 = vmatprep.subr.bf16.mxu0 0
        %3860 = vmatpush1.bf16.msra.mxu0 %v3841
        %3861 = vmatprep.subr.bf16.mxu0 0
        %3862 = vmatpush1.bf16.msra.mxu0 %v3840
        %3863 = vmatprep.subr.bf16.mxu0 0
        %3864 = vmatpush1.bf16.msra.mxu0 %v3839
        %3865 = vmatprep.subr.bf16.mxu0 0
        %3866 = vmatpush1.bf16.msra.mxu0 %v3838
        %3867 = vmatprep.subr.bf16.mxu0 0
        %3868 = vmatpush1.bf16.msra.mxu0 %v3837
        %3869 = vmatprep.subr.bf16.mxu0 0
        %3870 = vmatpush2.bf16.msra.mxu0 0
        %3871 = vmatprep.subr.bf16.mxu0 0
        %3872 = vmatpush2.bf16.msra.mxu0 0
        %3873 = vmatprep.subr.bf16.mxu0 0
        %3874 = vmatpush2.bf16.msra.mxu0 0
        %3875 = vmatprep.subr.bf16.mxu0 0
        %3876 = vmatpush2.bf16.msra.mxu0 0
        %3877 = vmatprep.subr.bf16.mxu0 0
        %3878 = vmatpush2.bf16.msra.mxu0 0
        %3879 = vmatprep.subr.bf16.mxu0 0
        %3880 = vmatpush2.bf16.msra.mxu0 0
        %3881 = vmatprep.subr.bf16.mxu0 0
        %3882 = vmatpush2.bf16.msra.mxu0 0
        %3883 = vmatprep.subr.bf16.mxu0 0
        %3884 = vmatpush2.bf16.msra.mxu0 0
        %3885 = vmatprep.mubr.bf16.mxu0 0
        %3886 = vmatmul.mubr.bf16.gmra.mxu0 %v3752
        %v3887 = vpop.f32.mrf.mxu0
        %v3888 = vadd.f32 0.0, %v3887
        %v3889 = vpop.f32.mrf.mxu0
        %v3890 = vpop.f32.mrf.mxu0
        %v3891 = vadd.f32 0.0, %v3890
        %v3892 = vpop.f32.mrf.mxu0
        %3893 = vmatprep.mubr.bf16.mxu0 0
        %3894 = vmatmul.mubr.bf16.gmra.mxu0 %v3754
        %v3895 = vpop.f32.mrf.mxu0
        %v3896 = vadd.f32 0.0, %v3895
        %v3897 = vpop.f32.mrf.mxu0
        %v3898 = vpop.f32.mrf.mxu0
        %v3899 = vadd.f32 0.0, %v3898
        %v3900 = vpop.f32.mrf.mxu0
        %3901 = vmatprep.mubr.bf16.mxu0 0
        %3902 = vmatmul.mubr.bf16.gmra.mxu0 %v3756
        %v3903 = vpop.f32.mrf.mxu0
        %v3904 = vadd.f32 0.0, %v3903
        %v3905 = vpop.f32.mrf.mxu0
        %v3906 = vpop.f32.mrf.mxu0
        %v3907 = vadd.f32 0.0, %v3906
        %v3908 = vpop.f32.mrf.mxu0
        %3909 = vmatprep.mubr.bf16.mxu0 0
        %3910 = vmatmul.mubr.bf16.gmra.mxu0 %v3758
        %v3911 = vpop.f32.mrf.mxu0
        %v3912 = vadd.f32 0.0, %v3911
        %v3913 = vpop.f32.mrf.mxu0
        %v3914 = vpop.f32.mrf.mxu0
        %v3915 = vadd.f32 0.0, %v3914
        %v3916 = vpop.f32.mrf.mxu0
        %3917 = vmatprep.mubr.bf16.mxu0 0
        %3918 = vmatmul.mubr.bf16.gmra.mxu0 %v3760
        %v3919 = vpop.f32.mrf.mxu0
        %v3920 = vadd.f32 0.0, %v3919
        %v3921 = vpop.f32.mrf.mxu0
        %v3922 = vpop.f32.mrf.mxu0
        %v3923 = vadd.f32 0.0, %v3922
        %v3924 = vpop.f32.mrf.mxu0
        %3925 = vmatprep.mubr.bf16.mxu0 0
        %3926 = vmatmul.mubr.bf16.gmra.mxu0 %v3762
        %v3927 = vpop.f32.mrf.mxu0
        %v3928 = vadd.f32 0.0, %v3927
        %v3929 = vpop.f32.mrf.mxu0
        %v3930 = vpop.f32.mrf.mxu0
        %v3931 = vadd.f32 0.0, %v3930
        %v3932 = vpop.f32.mrf.mxu0
        %3933 = vmatprep.mubr.bf16.mxu0 0
        %3934 = vmatmul.mubr.bf16.gmra.mxu0 %v3764
        %v3935 = vpop.f32.mrf.mxu0
        %v3936 = vadd.f32 0.0, %v3935
        %v3937 = vpop.f32.mrf.mxu0
        %v3938 = vpop.f32.mrf.mxu0
        %v3939 = vadd.f32 0.0, %v3938
        %v3940 = vpop.f32.mrf.mxu0
        %3941 = vmatprep.mubr.bf16.mxu0 0
        %3942 = vmatmul.mubr.bf16.gmra.mxu0 %v3766
        %v3943 = vpop.f32.mrf.mxu0
        %v3944 = vadd.f32 0.0, %v3943
        %v3945 = vpop.f32.mrf.mxu0
        %v3946 = vpop.f32.mrf.mxu0
        %v3947 = vadd.f32 0.0, %v3946
        %v3948 = vpop.f32.mrf.mxu0
        %3949 = vmatprep.mubr.bf16.mxu0 0
        %3950 = vmatmul.mubr.bf16.gmra.mxu0 %v3768
        %v3951 = vpop.f32.mrf.mxu0
        %v3952 = vadd.f32 0.0, %v3951
        %v3953 = vpop.f32.mrf.mxu0
        %v3954 = vpop.f32.mrf.mxu0
        %v3955 = vadd.f32 0.0, %v3954
        %v3956 = vpop.f32.mrf.mxu0
        %3957 = vmatprep.mubr.bf16.mxu0 0
        %3958 = vmatmul.mubr.bf16.gmra.mxu0 %v3770
        %v3959 = vpop.f32.mrf.mxu0
        %v3960 = vadd.f32 0.0, %v3959
        %v3961 = vpop.f32.mrf.mxu0
        %v3962 = vpop.f32.mrf.mxu0
        %v3963 = vadd.f32 0.0, %v3962
        %v3964 = vpop.f32.mrf.mxu0
        %3965 = vmatprep.mubr.bf16.mxu0 0
        %3966 = vmatmul.mubr.bf16.gmra.mxu0 %v3772
        %v3967 = vpop.f32.mrf.mxu0
        %v3968 = vadd.f32 0.0, %v3967
        %v3969 = vpop.f32.mrf.mxu0
        %v3970 = vpop.f32.mrf.mxu0
        %v3971 = vadd.f32 0.0, %v3970
        %v3972 = vpop.f32.mrf.mxu0
        %3973 = vmatprep.mubr.bf16.mxu0 0
        %3974 = vmatmul.mubr.bf16.gmra.mxu0 %v3774
        %v3975 = vpop.f32.mrf.mxu0
        %v3976 = vadd.f32 0.0, %v3975
        %v3977 = vpop.f32.mrf.mxu0
        %v3978 = vpop.f32.mrf.mxu0
        %v3979 = vadd.f32 0.0, %v3978
        %v3980 = vpop.f32.mrf.mxu0
        %3981 = vmatprep.mubr.bf16.mxu0 0
        %3982 = vmatmul.mubr.bf16.gmra.mxu0 %v3776
        %v3983 = vpop.f32.mrf.mxu0
        %v3984 = vadd.f32 0.0, %v3983
        %v3985 = vpop.f32.mrf.mxu0
        %v3986 = vpop.f32.mrf.mxu0
        %v3987 = vadd.f32 0.0, %v3986
        %v3988 = vpop.f32.mrf.mxu0
        %3989 = vmatprep.mubr.bf16.mxu0 0
        %3990 = vmatmul.mubr.bf16.gmra.mxu0 %v3778
        %v3991 = vpop.f32.mrf.mxu0
        %v3992 = vadd.f32 0.0, %v3991
        %v3993 = vpop.f32.mrf.mxu0
        %v3994 = vpop.f32.mrf.mxu0
        %v3995 = vadd.f32 0.0, %v3994
        %v3996 = vpop.f32.mrf.mxu0
        %3997 = vmatprep.mubr.bf16.mxu0 0
        %3998 = vmatmul.mubr.bf16.gmra.mxu0 %v3780
        %v3999 = vpop.f32.mrf.mxu0
        %v4000 = vadd.f32 0.0, %v3999
        %v4001 = vpop.f32.mrf.mxu0
        %v4002 = vpop.f32.mrf.mxu0
        %v4003 = vadd.f32 0.0, %v4002
        %v4004 = vpop.f32.mrf.mxu0
        %4005 = vmatprep.mubr.bf16.mxu0 0
        %4006 = vmatmul.mubr.bf16.gmra.mxu0 %v3782
        %v4007 = vpop.f32.mrf.mxu0
        %v4008 = vadd.f32 0.0, %v4007
        %v4009 = vpop.f32.mrf.mxu0
        %v4010 = vpop.f32.mrf.mxu0
        %v4011 = vadd.f32 0.0, %v4010
        %v4012 = vpop.f32.mrf.mxu0
        %4013 = vmatprep.mubr.bf16.mxu0 0
        %4014 = vmatmul.mubr.bf16.gmra.mxu0 %v3784
        %v4015 = vpop.f32.mrf.mxu0
        %v4016 = vadd.f32 0.0, %v4015
        %v4017 = vpop.f32.mrf.mxu0
        %v4018 = vpop.f32.mrf.mxu0
        %v4019 = vadd.f32 0.0, %v4018
        %v4020 = vpop.f32.mrf.mxu0
        %4021 = vmatprep.mubr.bf16.mxu0 0
        %4022 = vmatmul.mubr.bf16.gmra.mxu0 %v3786
        %v4023 = vpop.f32.mrf.mxu0
        %v4024 = vadd.f32 0.0, %v4023
        %v4025 = vpop.f32.mrf.mxu0
        %v4026 = vpop.f32.mrf.mxu0
        %v4027 = vadd.f32 0.0, %v4026
        %v4028 = vpop.f32.mrf.mxu0
        %4029 = vdwg.mxu0
        %v4030 = vadd.f32 %v3586, %v3888
        %v4031 = vadd.f32 %v3589, %v3891
        %v4032 = vadd.f32 %v3594, %v3896
        %v4033 = vadd.f32 %v3597, %v3899
        %v4034 = vadd.f32 %v3602, %v3904
        %v4035 = vadd.f32 %v3605, %v3907
        %v4036 = vadd.f32 %v3610, %v3912
        %v4037 = vadd.f32 %v3613, %v3915
        %v4038 = vadd.f32 %v3618, %v3920
        %v4039 = vadd.f32 %v3621, %v3923
        %v4040 = vadd.f32 %v3626, %v3928
        %v4041 = vadd.f32 %v3629, %v3931
        %v4042 = vadd.f32 %v3634, %v3936
        %v4043 = vadd.f32 %v3637, %v3939
        %v4044 = vadd.f32 %v3642, %v3944
        %v4045 = vadd.f32 %v3645, %v3947
        %v4046 = vadd.f32 %v3650, %v3952
        %v4047 = vadd.f32 %v3653, %v3955
        %v4048 = vadd.f32 %v3658, %v3960
        %v4049 = vadd.f32 %v3661, %v3963
        %v4050 = vadd.f32 %v3666, %v3968
        %v4051 = vadd.f32 %v3669, %v3971
        %v4052 = vadd.f32 %v3674, %v3976
        %v4053 = vadd.f32 %v3677, %v3979
        %v4054 = vadd.f32 %v3682, %v3984
        %v4055 = vadd.f32 %v3685, %v3987
        %v4056 = vadd.f32 %v3690, %v3992
        %v4057 = vadd.f32 %v3693, %v3995
        %v4058 = vadd.f32 %v3698, %v4000
        %v4059 = vadd.f32 %v3701, %v4003
        %v4060 = vadd.f32 %v3706, %v4008
        %v4061 = vadd.f32 %v3709, %v4011
        %v4062 = vadd.f32 %v3714, %v4016
        %v4063 = vadd.f32 %v3717, %v4019
        %v4064 = vadd.f32 %v3722, %v4024
        %v4065 = vadd.f32 %v3725, %v4027
        %v4066 = vld [vmem:[#allocation2 + $0x10] sm:$0xc]
        %v4067 = vld [vmem:[#allocation2 + $0x14] sm:$0xf]
        %v4068 = vld [vmem:[#allocation2 + $0x18] sm:$0xf]
        %v4069 = vld [vmem:[#allocation2 + $0x1c] sm:$0xf]
        %v4070 = vld [vmem:[#allocation2 + $0x20] sm:$0xf]
        %v4071 = vld [vmem:[#allocation2 + $0x24] sm:$0xf]
        %v4072 = vld [vmem:[#allocation2 + $0x28] sm:$0xf]
        %v4073 = vld [vmem:[#allocation2 + $0x2c] sm:$0xf]
        %v4074 = vld [vmem:[#allocation2 + $0x30] sm:$0xf]
        %v4075 = vld [vmem:[#allocation2 + $0x34] sm:$0xf]
        %v4076 = vld [vmem:[#allocation2 + $0x38] sm:$0xf]
        %v4077 = vld [vmem:[#allocation2 + $0x3c] sm:$0xf]
        %v4078 = vld [vmem:[#allocation2 + $0x40] sm:$0xf]
        %v4079 = vld [vmem:[#allocation2 + $0x44] sm:$0xf]
        %v4080 = vld [vmem:[#allocation2 + $0x48] sm:$0xf]
        %v4081 = vld [vmem:[#allocation2 + $0x4c] sm:$0xf]
        %v4082 = vld [vmem:[#allocation2 + $0x50] sm:$0xf]
        %v4083 = vld [vmem:[#allocation2 + $0x54] sm:$0xf]
        %v4084 = vld [vmem:[#allocation2 + $0x58] sm:$0xf]
        %v4085 = vld [vmem:[#allocation2 + $0x5c] sm:$0xf]
        %v4086 = vld [vmem:[#allocation2 + $0x60] sm:$0xf]
        %v4087 = vld [vmem:[#allocation2 + $0x64] sm:$0xf]
        %v4088 = vld [vmem:[#allocation2 + $0x68] sm:$0xf]
        %v4089 = vld [vmem:[#allocation2 + $0x6c] sm:$0xf]
        %v4090 = vld [vmem:[#allocation2 + $0x70] sm:$0xf]
        %v4091 = vld [vmem:[#allocation2 + $0x74] sm:$0xf]
        %v4092 = vld [vmem:[#allocation2 + $0x78] sm:$0xf]
        %v4093 = vld [vmem:[#allocation2 + $0x7c] sm:$0xf]
        %v4094 = vld [vmem:[#allocation2 + $0x80] sm:$0xf]
        %v4095 = vld [vmem:[#allocation2 + $0x84] sm:$0xf]
        %v4096 = vld [vmem:[#allocation2 + $0x88] sm:$0xf]
        %v4097 = vld [vmem:[#allocation2 + $0x8c] sm:$0xf]
        %v4098 = vld [vmem:[#allocation2 + $0x90] sm:$0xf]
        %v4099 = vld [vmem:[#allocation2 + $0x94] sm:$0xf]
        %v4100 = vld [vmem:[#allocation2 + $0x98] sm:$0xf]
        %v4101 = vld [vmem:[#allocation2 + $0x9c] sm:$0xf]
        %v4102 = vld [vmem:[#allocation2 + $0xa0] sm:$0x3]
        %s4103 = scalar_lea.vmem %s1, 384
        %v4104 = vld [vmem:[%s4103] sm:$0xf]
        %v4105 = vld [vmem:[%s4103 + $0x4] sm:$0xf]
        %v4106 = vld [vmem:[%s4103 + $0x8] sm:$0xf]
        %v4107 = vld [vmem:[%s4103 + $0xc] sm:$0xf]
        %v4108 = vld [vmem:[%s4103 + $0x10] sm:$0xf]
        %v4109 = vld [vmem:[%s4103 + $0x14] sm:$0xf]
        %v4110 = vld [vmem:[%s4103 + $0x18] sm:$0xf]
        %v4111 = vld [vmem:[%s4103 + $0x1c] sm:$0xf]
        %v4112 = vld [vmem:[%s4103 + $0x20] sm:$0xf]
        %v4113 = vld [vmem:[%s4103 + $0x24] sm:$0xf]
        %v4114 = vld [vmem:[%s4103 + $0x28] sm:$0xf]
        %v4115 = vld [vmem:[%s4103 + $0x2c] sm:$0xf]
        %v4116 = vld [vmem:[%s4103 + $0x30] sm:$0xf]
        %v4117 = vld [vmem:[%s4103 + $0x34] sm:$0xf]
        %v4118 = vld [vmem:[%s4103 + $0x38] sm:$0xf]
        %v4119 = vld [vmem:[%s4103 + $0x3c] sm:$0xf]
        %v4120 = vld [vmem:[#allocation2 + $0xa0] sm:$0x7]
        %s4121 = scalar_lea.vmem %s1, 448
        %v4122 = vld [vmem:[%s4121] sm:$0xf]
        %v4123 = vld [vmem:[%s4121 + $0x4] sm:$0xf]
        %v4124 = vld [vmem:[%s4121 + $0x8] sm:$0xf]
        %v4125 = vld [vmem:[%s4121 + $0xc] sm:$0xf]
        %v4126 = vld [vmem:[%s4121 + $0x10] sm:$0xf]
        %v4127 = vld [vmem:[%s4121 + $0x14] sm:$0xf]
        %v4128 = vld [vmem:[%s4121 + $0x18] sm:$0xf]
        %v4129 = vld [vmem:[%s4121 + $0x1c] sm:$0xf]
        %v4130 = vld [vmem:[%s4121 + $0x20] sm:$0xf]
        %v4131 = vld [vmem:[%s4121 + $0x24] sm:$0xf]
        %v4132 = vld [vmem:[%s4121 + $0x28] sm:$0xf]
        %v4133 = vld [vmem:[%s4121 + $0x2c] sm:$0xf]
        %v4134 = vld [vmem:[%s4121 + $0x30] sm:$0xf]
        %v4135 = vld [vmem:[%s4121 + $0x34] sm:$0xf]
        %v4136 = vld [vmem:[%s4121 + $0x38] sm:$0xf]
        %v4137 = vld [vmem:[%s4121 + $0x3c] sm:$0xf]
        %v4175 = vunpack.c.l.b16 %v4066
        %v4176 = vunpack.c.l.b16 %v4067
        %v4177 = vunpack.c.l.b16 %v4068
        %v4178 = vunpack.c.l.b16 %v4069
        %v4179 = vunpack.c.l.b16 %v4070
        %v4180 = vunpack.c.l.b16 %v4071
        %v4181 = vunpack.c.l.b16 %v4072
        %v4182 = vunpack.c.l.b16 %v4073
        %v4183 = vunpack.c.l.b16 %v4074
        %v4184 = vunpack.c.l.b16 %v4075
        %v4185 = vunpack.c.l.b16 %v4076
        %v4186 = vunpack.c.l.b16 %v4077
        %v4187 = vunpack.c.l.b16 %v4078
        %v4188 = vunpack.c.l.b16 %v4079
        %v4189 = vunpack.c.l.b16 %v4080
        %v4190 = vunpack.c.l.b16 %v4081
        %v4191 = vunpack.c.l.b16 %v4082
        %v4192 = vunpack.c.l.b16 %v4083
        %v4193 = vunpack.c.l.b16 %v4084
        %v4194 = vunpack.c.l.b16 %v4085
        %v4195 = vunpack.c.l.b16 %v4086
        %v4196 = vunpack.c.l.b16 %v4087
        %v4197 = vunpack.c.l.b16 %v4088
        %v4198 = vunpack.c.l.b16 %v4089
        %v4199 = vunpack.c.l.b16 %v4090
        %v4200 = vunpack.c.l.b16 %v4091
        %v4201 = vunpack.c.l.b16 %v4092
        %v4202 = vunpack.c.l.b16 %v4093
        %v4203 = vunpack.c.l.b16 %v4094
        %v4204 = vunpack.c.l.b16 %v4095
        %v4205 = vunpack.c.l.b16 %v4096
        %v4206 = vunpack.c.l.b16 %v4097
        %v4207 = vunpack.c.l.b16 %v4098
        %v4208 = vunpack.c.l.b16 %v4099
        %v4209 = vunpack.c.l.b16 %v4100
        %v4210 = vunpack.c.l.b16 %v4101
        %v4211 = vunpack.c.l.b16 %v4120
        %v4212 = vpack.c.b16 %v4176, %v4175
        %v4213 = vpack.c.b16 %v4178, %v4177
        %v4214 = vpack.c.b16 %v4180, %v4179
        %v4215 = vpack.c.b16 %v4182, %v4181
        %v4216 = vpack.c.b16 %v4184, %v4183
        %v4217 = vpack.c.b16 %v4186, %v4185
        %v4218 = vpack.c.b16 %v4188, %v4187
        %v4219 = vpack.c.b16 %v4190, %v4189
        %v4220 = vpack.c.b16 %v4192, %v4191
        %v4221 = vpack.c.b16 %v4194, %v4193
        %v4222 = vpack.c.b16 %v4196, %v4195
        %v4223 = vpack.c.b16 %v4198, %v4197
        %v4224 = vpack.c.b16 %v4200, %v4199
        %v4225 = vpack.c.b16 %v4202, %v4201
        %v4226 = vpack.c.b16 %v4204, %v4203
        %v4227 = vpack.c.b16 %v4206, %v4205
        %v4228 = vpack.c.b16 %v4208, %v4207
        %v4229 = vpack.c.b16 %v4210, %v4209
        %v4230 = vpack.c.b16 %v4211, %v4211
        %vm4231 = vsmask.f32 5376
        %v4233 = vshrl.u32 %v4212, 16
        %v4235 = vrot.slane %v4233, 2
        %v4236 = vshll.u32 %v4212, 16
        %v4238 = vrot.slane %v4236, 3
        %v4239 = vor.u32 %v4235, %v4238
        %v4241 = vshrl.u32 %v4213, 16
        %v4243 = vrot.slane %v4241, 2
        %v4244 = vshll.u32 %v4213, 16
        %v4246 = vrot.slane %v4244, 3
        %v4247 = vor.u32 %v4243, %v4246
        %v4248 = vsel %vm4231, %v4239, %v4247
        %v4250 = vshrl.u32 %v4214, 16
        %v4252 = vrot.slane %v4250, 2
        %v4253 = vshll.u32 %v4214, 16
        %v4255 = vrot.slane %v4253, 3
        %v4256 = vor.u32 %v4252, %v4255
        %v4257 = vsel %vm4231, %v4247, %v4256
        %v4259 = vshrl.u32 %v4215, 16
        %v4261 = vrot.slane %v4259, 2
        %v4262 = vshll.u32 %v4215, 16
        %v4264 = vrot.slane %v4262, 3
        %v4265 = vor.u32 %v4261, %v4264
        %v4266 = vsel %vm4231, %v4256, %v4265
        %v4268 = vshrl.u32 %v4216, 16
        %v4270 = vrot.slane %v4268, 2
        %v4271 = vshll.u32 %v4216, 16
        %v4273 = vrot.slane %v4271, 3
        %v4274 = vor.u32 %v4270, %v4273
        %v4275 = vsel %vm4231, %v4265, %v4274
        %v4277 = vshrl.u32 %v4217, 16
        %v4279 = vrot.slane %v4277, 2
        %v4280 = vshll.u32 %v4217, 16
        %v4282 = vrot.slane %v4280, 3
        %v4283 = vor.u32 %v4279, %v4282
        %v4284 = vsel %vm4231, %v4274, %v4283
        %v4286 = vshrl.u32 %v4218, 16
        %v4288 = vrot.slane %v4286, 2
        %v4289 = vshll.u32 %v4218, 16
        %v4291 = vrot.slane %v4289, 3
        %v4292 = vor.u32 %v4288, %v4291
        %v4293 = vsel %vm4231, %v4283, %v4292
        %v4295 = vshrl.u32 %v4219, 16
        %v4297 = vrot.slane %v4295, 2
        %v4298 = vshll.u32 %v4219, 16
        %v4300 = vrot.slane %v4298, 3
        %v4301 = vor.u32 %v4297, %v4300
        %v4302 = vsel %vm4231, %v4292, %v4301
        %v4304 = vshrl.u32 %v4220, 16
        %v4306 = vrot.slane %v4304, 2
        %v4307 = vshll.u32 %v4220, 16
        %v4309 = vrot.slane %v4307, 3
        %v4310 = vor.u32 %v4306, %v4309
        %v4311 = vsel %vm4231, %v4301, %v4310
        %v4313 = vshrl.u32 %v4221, 16
        %v4315 = vrot.slane %v4313, 2
        %v4316 = vshll.u32 %v4221, 16
        %v4318 = vrot.slane %v4316, 3
        %v4319 = vor.u32 %v4315, %v4318
        %v4320 = vsel %vm4231, %v4310, %v4319
        %v4322 = vshrl.u32 %v4222, 16
        %v4324 = vrot.slane %v4322, 2
        %v4325 = vshll.u32 %v4222, 16
        %v4327 = vrot.slane %v4325, 3
        %v4328 = vor.u32 %v4324, %v4327
        %v4329 = vsel %vm4231, %v4319, %v4328
        %v4331 = vshrl.u32 %v4223, 16
        %v4333 = vrot.slane %v4331, 2
        %v4334 = vshll.u32 %v4223, 16
        %v4336 = vrot.slane %v4334, 3
        %v4337 = vor.u32 %v4333, %v4336
        %v4338 = vsel %vm4231, %v4328, %v4337
        %v4340 = vshrl.u32 %v4224, 16
        %v4342 = vrot.slane %v4340, 2
        %v4343 = vshll.u32 %v4224, 16
        %v4345 = vrot.slane %v4343, 3
        %v4346 = vor.u32 %v4342, %v4345
        %v4347 = vsel %vm4231, %v4337, %v4346
        %v4349 = vshrl.u32 %v4225, 16
        %v4351 = vrot.slane %v4349, 2
        %v4352 = vshll.u32 %v4225, 16
        %v4354 = vrot.slane %v4352, 3
        %v4355 = vor.u32 %v4351, %v4354
        %v4356 = vsel %vm4231, %v4346, %v4355
        %v4358 = vshrl.u32 %v4226, 16
        %v4360 = vrot.slane %v4358, 2
        %v4361 = vshll.u32 %v4226, 16
        %v4363 = vrot.slane %v4361, 3
        %v4364 = vor.u32 %v4360, %v4363
        %v4365 = vsel %vm4231, %v4355, %v4364
        %v4367 = vshrl.u32 %v4227, 16
        %v4369 = vrot.slane %v4367, 2
        %v4370 = vshll.u32 %v4227, 16
        %v4372 = vrot.slane %v4370, 3
        %v4373 = vor.u32 %v4369, %v4372
        %v4374 = vsel %vm4231, %v4364, %v4373
        %v4376 = vshrl.u32 %v4228, 16
        %v4378 = vrot.slane %v4376, 2
        %v4379 = vshll.u32 %v4228, 16
        %v4381 = vrot.slane %v4379, 3
        %v4382 = vor.u32 %v4378, %v4381
        %v4383 = vsel %vm4231, %v4373, %v4382
        %v4385 = vshrl.u32 %v4229, 16
        %v4387 = vrot.slane %v4385, 2
        %v4388 = vshll.u32 %v4229, 16
        %v4390 = vrot.slane %v4388, 3
        %v4391 = vor.u32 %v4387, %v4390
        %v4392 = vsel %vm4231, %v4382, %v4391
        %v4394 = vshrl.u32 %v4230, 16
        %v4396 = vrot.slane %v4394, 2
        %v4397 = vshll.u32 %v4230, 16
        %v4399 = vrot.slane %v4397, 3
        %v4400 = vor.u32 %v4396, %v4399
        %v4401 = vsel %vm4231, %v4391, %v4400
        %v4436 = vunpack.c.l.b16 %v4122
        %v4437 = vunpack.c.l.b16 %v4123
        %v4438 = vunpack.c.l.b16 %v4124
        %v4439 = vunpack.c.l.b16 %v4125
        %v4440 = vunpack.c.l.b16 %v4126
        %v4441 = vunpack.c.l.b16 %v4127
        %v4442 = vunpack.c.l.b16 %v4128
        %v4443 = vunpack.c.l.b16 %v4129
        %v4444 = vunpack.c.l.b16 %v4130
        %v4445 = vunpack.c.l.b16 %v4131
        %v4446 = vunpack.c.l.b16 %v4132
        %v4447 = vunpack.c.l.b16 %v4133
        %v4448 = vunpack.c.l.b16 %v4134
        %v4449 = vunpack.c.l.b16 %v4135
        %v4450 = vunpack.c.l.b16 %v4136
        %v4451 = vunpack.c.l.b16 %v4137
        %v4452 = vpack.c.b16 %v4437, %v4436
        %v4453 = vpack.c.b16 %v4439, %v4438
        %v4454 = vpack.c.b16 %v4441, %v4440
        %v4455 = vpack.c.b16 %v4443, %v4442
        %v4456 = vpack.c.b16 %v4445, %v4444
        %v4457 = vpack.c.b16 %v4447, %v4446
        %v4458 = vpack.c.b16 %v4449, %v4448
        %v4459 = vpack.c.b16 %v4451, %v4450
        %4468 = vmatprep.subr.bf16.mxu0 0
        %4469 = vmatpush1.bf16.msra.mxu0 %v4459
        %4470 = vmatprep.subr.bf16.mxu0 0
        %4471 = vmatpush1.bf16.msra.mxu0 %v4458
        %4472 = vmatprep.subr.bf16.mxu0 0
        %4473 = vmatpush1.bf16.msra.mxu0 %v4457
        %4474 = vmatprep.subr.bf16.mxu0 0
        %4475 = vmatpush1.bf16.msra.mxu0 %v4456
        %4476 = vmatprep.subr.bf16.mxu0 0
        %4477 = vmatpush1.bf16.msra.mxu0 %v4455
        %4478 = vmatprep.subr.bf16.mxu0 0
        %4479 = vmatpush1.bf16.msra.mxu0 %v4454
        %4480 = vmatprep.subr.bf16.mxu0 0
        %4481 = vmatpush1.bf16.msra.mxu0 %v4453
        %4482 = vmatprep.subr.bf16.mxu0 0
        %4483 = vmatpush1.bf16.msra.mxu0 %v4452
        %4484 = vmatprep.subr.bf16.mxu0 0
        %4485 = vmatpush2.bf16.msra.mxu0 0
        %4486 = vmatprep.subr.bf16.mxu0 0
        %4487 = vmatpush2.bf16.msra.mxu0 0
        %4488 = vmatprep.subr.bf16.mxu0 0
        %4489 = vmatpush2.bf16.msra.mxu0 0
        %4490 = vmatprep.subr.bf16.mxu0 0
        %4491 = vmatpush2.bf16.msra.mxu0 0
        %4492 = vmatprep.subr.bf16.mxu0 0
        %4493 = vmatpush2.bf16.msra.mxu0 0
        %4494 = vmatprep.subr.bf16.mxu0 0
        %4495 = vmatpush2.bf16.msra.mxu0 0
        %4496 = vmatprep.subr.bf16.mxu0 0
        %4497 = vmatpush2.bf16.msra.mxu0 0
        %4498 = vmatprep.subr.bf16.mxu0 0
        %4499 = vmatpush2.bf16.msra.mxu0 0
        %4500 = vmatprep.mubr.bf16.mxu0 0
        %4501 = vmatmul.mubr.bf16.gmra.mxu0 %v4248
        %v4502 = vpop.f32.mrf.mxu0
        %v4503 = vadd.f32 0.0, %v4502
        %v4504 = vpop.f32.mrf.mxu0
        %v4505 = vpop.f32.mrf.mxu0
        %v4506 = vadd.f32 0.0, %v4505
        %v4507 = vpop.f32.mrf.mxu0
        %4508 = vmatprep.mubr.bf16.mxu0 0
        %4509 = vmatmul.mubr.bf16.gmra.mxu0 %v4257
        %v4510 = vpop.f32.mrf.mxu0
        %v4511 = vadd.f32 0.0, %v4510
        %v4512 = vpop.f32.mrf.mxu0
        %v4513 = vpop.f32.mrf.mxu0
        %v4514 = vadd.f32 0.0, %v4513
        %v4515 = vpop.f32.mrf.mxu0
        %4516 = vmatprep.mubr.bf16.mxu0 0
        %4517 = vmatmul.mubr.bf16.gmra.mxu0 %v4266
        %v4518 = vpop.f32.mrf.mxu0
        %v4519 = vadd.f32 0.0, %v4518
        %v4520 = vpop.f32.mrf.mxu0
        %v4521 = vpop.f32.mrf.mxu0
        %v4522 = vadd.f32 0.0, %v4521
        %v4523 = vpop.f32.mrf.mxu0
        %4524 = vmatprep.mubr.bf16.mxu0 0
        %4525 = vmatmul.mubr.bf16.gmra.mxu0 %v4275
        %v4526 = vpop.f32.mrf.mxu0
        %v4527 = vadd.f32 0.0, %v4526
        %v4528 = vpop.f32.mrf.mxu0
        %v4529 = vpop.f32.mrf.mxu0
        %v4530 = vadd.f32 0.0, %v4529
        %v4531 = vpop.f32.mrf.mxu0
        %4532 = vmatprep.mubr.bf16.mxu0 0
        %4533 = vmatmul.mubr.bf16.gmra.mxu0 %v4284
        %v4534 = vpop.f32.mrf.mxu0
        %v4535 = vadd.f32 0.0, %v4534
        %v4536 = vpop.f32.mrf.mxu0
        %v4537 = vpop.f32.mrf.mxu0
        %v4538 = vadd.f32 0.0, %v4537
        %v4539 = vpop.f32.mrf.mxu0
        %4540 = vmatprep.mubr.bf16.mxu0 0
        %4541 = vmatmul.mubr.bf16.gmra.mxu0 %v4293
        %v4542 = vpop.f32.mrf.mxu0
        %v4543 = vadd.f32 0.0, %v4542
        %v4544 = vpop.f32.mrf.mxu0
        %v4545 = vpop.f32.mrf.mxu0
        %v4546 = vadd.f32 0.0, %v4545
        %v4547 = vpop.f32.mrf.mxu0
        %4548 = vmatprep.mubr.bf16.mxu0 0
        %4549 = vmatmul.mubr.bf16.gmra.mxu0 %v4302
        %v4550 = vpop.f32.mrf.mxu0
        %v4551 = vadd.f32 0.0, %v4550
        %v4552 = vpop.f32.mrf.mxu0
        %v4553 = vpop.f32.mrf.mxu0
        %v4554 = vadd.f32 0.0, %v4553
        %v4555 = vpop.f32.mrf.mxu0
        %4556 = vmatprep.mubr.bf16.mxu0 0
        %4557 = vmatmul.mubr.bf16.gmra.mxu0 %v4311
        %v4558 = vpop.f32.mrf.mxu0
        %v4559 = vadd.f32 0.0, %v4558
        %v4560 = vpop.f32.mrf.mxu0
        %v4561 = vpop.f32.mrf.mxu0
        %v4562 = vadd.f32 0.0, %v4561
        %v4563 = vpop.f32.mrf.mxu0
        %4564 = vmatprep.mubr.bf16.mxu0 0
        %4565 = vmatmul.mubr.bf16.gmra.mxu0 %v4320
        %v4566 = vpop.f32.mrf.mxu0
        %v4567 = vadd.f32 0.0, %v4566
        %v4568 = vpop.f32.mrf.mxu0
        %v4569 = vpop.f32.mrf.mxu0
        %v4570 = vadd.f32 0.0, %v4569
        %v4571 = vpop.f32.mrf.mxu0
        %4572 = vmatprep.mubr.bf16.mxu0 0
        %4573 = vmatmul.mubr.bf16.gmra.mxu0 %v4329
        %v4574 = vpop.f32.mrf.mxu0
        %v4575 = vadd.f32 0.0, %v4574
        %v4576 = vpop.f32.mrf.mxu0
        %v4577 = vpop.f32.mrf.mxu0
        %v4578 = vadd.f32 0.0, %v4577
        %v4579 = vpop.f32.mrf.mxu0
        %4580 = vmatprep.mubr.bf16.mxu0 0
        %4581 = vmatmul.mubr.bf16.gmra.mxu0 %v4338
        %v4582 = vpop.f32.mrf.mxu0
        %v4583 = vadd.f32 0.0, %v4582
        %v4584 = vpop.f32.mrf.mxu0
        %v4585 = vpop.f32.mrf.mxu0
        %v4586 = vadd.f32 0.0, %v4585
        %v4587 = vpop.f32.mrf.mxu0
        %4588 = vmatprep.mubr.bf16.mxu0 0
        %4589 = vmatmul.mubr.bf16.gmra.mxu0 %v4347
        %v4590 = vpop.f32.mrf.mxu0
        %v4591 = vadd.f32 0.0, %v4590
        %v4592 = vpop.f32.mrf.mxu0
        %v4593 = vpop.f32.mrf.mxu0
        %v4594 = vadd.f32 0.0, %v4593
        %v4595 = vpop.f32.mrf.mxu0
        %4596 = vmatprep.mubr.bf16.mxu0 0
        %4597 = vmatmul.mubr.bf16.gmra.mxu0 %v4356
        %v4598 = vpop.f32.mrf.mxu0
        %v4599 = vadd.f32 0.0, %v4598
        %v4600 = vpop.f32.mrf.mxu0
        %v4601 = vpop.f32.mrf.mxu0
        %v4602 = vadd.f32 0.0, %v4601
        %v4603 = vpop.f32.mrf.mxu0
        %4604 = vmatprep.mubr.bf16.mxu0 0
        %4605 = vmatmul.mubr.bf16.gmra.mxu0 %v4365
        %v4606 = vpop.f32.mrf.mxu0
        %v4607 = vadd.f32 0.0, %v4606
        %v4608 = vpop.f32.mrf.mxu0
        %v4609 = vpop.f32.mrf.mxu0
        %v4610 = vadd.f32 0.0, %v4609
        %v4611 = vpop.f32.mrf.mxu0
        %4612 = vmatprep.mubr.bf16.mxu0 0
        %4613 = vmatmul.mubr.bf16.gmra.mxu0 %v4374
        %v4614 = vpop.f32.mrf.mxu0
        %v4615 = vadd.f32 0.0, %v4614
        %v4616 = vpop.f32.mrf.mxu0
        %v4617 = vpop.f32.mrf.mxu0
        %v4618 = vadd.f32 0.0, %v4617
        %v4619 = vpop.f32.mrf.mxu0
        %4620 = vmatprep.mubr.bf16.mxu0 0
        %4621 = vmatmul.mubr.bf16.gmra.mxu0 %v4383
        %v4622 = vpop.f32.mrf.mxu0
        %v4623 = vadd.f32 0.0, %v4622
        %v4624 = vpop.f32.mrf.mxu0
        %v4625 = vpop.f32.mrf.mxu0
        %v4626 = vadd.f32 0.0, %v4625
        %v4627 = vpop.f32.mrf.mxu0
        %4628 = vmatprep.mubr.bf16.mxu0 0
        %4629 = vmatmul.mubr.bf16.gmra.mxu0 %v4392
        %v4630 = vpop.f32.mrf.mxu0
        %v4631 = vadd.f32 0.0, %v4630
        %v4632 = vpop.f32.mrf.mxu0
        %v4633 = vpop.f32.mrf.mxu0
        %v4634 = vadd.f32 0.0, %v4633
        %v4635 = vpop.f32.mrf.mxu0
        %4636 = vmatprep.mubr.bf16.mxu0 0
        %4637 = vmatmul.mubr.bf16.gmra.mxu0 %v4401
        %v4638 = vpop.f32.mrf.mxu0
        %v4639 = vadd.f32 0.0, %v4638
        %v4640 = vpop.f32.mrf.mxu0
        %v4641 = vpop.f32.mrf.mxu0
        %v4642 = vadd.f32 0.0, %v4641
        %v4643 = vpop.f32.mrf.mxu0
        %4644 = vdwg.mxu0
        %v4646 = vunpack.c.l.b16 %v4102
        %v4647 = vpack.c.b16 %v4646, %v4646
        %v4648 = vrot.slane %v4212, 2
        %v4649 = vrot.slane %v4213, 2
        %v4650 = vsel %vm3749, %v4648, %v4649
        %v4651 = vrot.slane %v4214, 2
        %v4652 = vsel %vm3749, %v4649, %v4651
        %v4653 = vrot.slane %v4215, 2
        %v4654 = vsel %vm3749, %v4651, %v4653
        %v4655 = vrot.slane %v4216, 2
        %v4656 = vsel %vm3749, %v4653, %v4655
        %v4657 = vrot.slane %v4217, 2
        %v4658 = vsel %vm3749, %v4655, %v4657
        %v4659 = vrot.slane %v4218, 2
        %v4660 = vsel %vm3749, %v4657, %v4659
        %v4661 = vrot.slane %v4219, 2
        %v4662 = vsel %vm3749, %v4659, %v4661
        %v4663 = vrot.slane %v4220, 2
        %v4664 = vsel %vm3749, %v4661, %v4663
        %v4665 = vrot.slane %v4221, 2
        %v4666 = vsel %vm3749, %v4663, %v4665
        %v4667 = vrot.slane %v4222, 2
        %v4668 = vsel %vm3749, %v4665, %v4667
        %v4669 = vrot.slane %v4223, 2
        %v4670 = vsel %vm3749, %v4667, %v4669
        %v4671 = vrot.slane %v4224, 2
        %v4672 = vsel %vm3749, %v4669, %v4671
        %v4673 = vrot.slane %v4225, 2
        %v4674 = vsel %vm3749, %v4671, %v4673
        %v4675 = vrot.slane %v4226, 2
        %v4676 = vsel %vm3749, %v4673, %v4675
        %v4677 = vrot.slane %v4227, 2
        %v4678 = vsel %vm3749, %v4675, %v4677
        %v4679 = vrot.slane %v4228, 2
        %v4680 = vsel %vm3749, %v4677, %v4679
        %v4681 = vrot.slane %v4229, 2
        %v4682 = vsel %vm3749, %v4679, %v4681
        %v4683 = vrot.slane %v4647, 2
        %v4684 = vsel %vm3749, %v4681, %v4683
        %v4719 = vunpack.c.l.b16 %v4104
        %v4720 = vunpack.c.l.b16 %v4105
        %v4721 = vunpack.c.l.b16 %v4106
        %v4722 = vunpack.c.l.b16 %v4107
        %v4723 = vunpack.c.l.b16 %v4108
        %v4724 = vunpack.c.l.b16 %v4109
        %v4725 = vunpack.c.l.b16 %v4110
        %v4726 = vunpack.c.l.b16 %v4111
        %v4727 = vunpack.c.l.b16 %v4112
        %v4728 = vunpack.c.l.b16 %v4113
        %v4729 = vunpack.c.l.b16 %v4114
        %v4730 = vunpack.c.l.b16 %v4115
        %v4731 = vunpack.c.l.b16 %v4116
        %v4732 = vunpack.c.l.b16 %v4117
        %v4733 = vunpack.c.l.b16 %v4118
        %v4734 = vunpack.c.l.b16 %v4119
        %v4735 = vpack.c.b16 %v4720, %v4719
        %v4736 = vpack.c.b16 %v4722, %v4721
        %v4737 = vpack.c.b16 %v4724, %v4723
        %v4738 = vpack.c.b16 %v4726, %v4725
        %v4739 = vpack.c.b16 %v4728, %v4727
        %v4740 = vpack.c.b16 %v4730, %v4729
        %v4741 = vpack.c.b16 %v4732, %v4731
        %v4742 = vpack.c.b16 %v4734, %v4733
        %4751 = vmatprep.subr.bf16.mxu0 0
        %4752 = vmatpush1.bf16.msra.mxu0 %v4742
        %4753 = vmatprep.subr.bf16.mxu0 0
        %4754 = vmatpush1.bf16.msra.mxu0 %v4741
        %4755 = vmatprep.subr.bf16.mxu0 0
        %4756 = vmatpush1.bf16.msra.mxu0 %v4740
        %4757 = vmatprep.subr.bf16.mxu0 0
        %4758 = vmatpush1.bf16.msra.mxu0 %v4739
        %4759 = vmatprep.subr.bf16.mxu0 0
        %4760 = vmatpush1.bf16.msra.mxu0 %v4738
        %4761 = vmatprep.subr.bf16.mxu0 0
        %4762 = vmatpush1.bf16.msra.mxu0 %v4737
        %4763 = vmatprep.subr.bf16.mxu0 0
        %4764 = vmatpush1.bf16.msra.mxu0 %v4736
        %4765 = vmatprep.subr.bf16.mxu0 0
        %4766 = vmatpush1.bf16.msra.mxu0 %v4735
        %4767 = vmatprep.subr.bf16.mxu0 0
        %4768 = vmatpush2.bf16.msra.mxu0 0
        %4769 = vmatprep.subr.bf16.mxu0 0
        %4770 = vmatpush2.bf16.msra.mxu0 0
        %4771 = vmatprep.subr.bf16.mxu0 0
        %4772 = vmatpush2.bf16.msra.mxu0 0
        %4773 = vmatprep.subr.bf16.mxu0 0
        %4774 = vmatpush2.bf16.msra.mxu0 0
        %4775 = vmatprep.subr.bf16.mxu0 0
        %4776 = vmatpush2.bf16.msra.mxu0 0
        %4777 = vmatprep.subr.bf16.mxu0 0
        %4778 = vmatpush2.bf16.msra.mxu0 0
        %4779 = vmatprep.subr.bf16.mxu0 0
        %4780 = vmatpush2.bf16.msra.mxu0 0
        %4781 = vmatprep.subr.bf16.mxu0 0
        %4782 = vmatpush2.bf16.msra.mxu0 0
        %4783 = vmatprep.mubr.bf16.mxu0 0
        %4784 = vmatmul.mubr.bf16.gmra.mxu0 %v4650
        %v4785 = vpop.f32.mrf.mxu0
        %v4786 = vadd.f32 %v4503, %v4785
        %v4787 = vpop.f32.mrf.mxu0
        %v4788 = vpop.f32.mrf.mxu0
        %v4789 = vadd.f32 %v4506, %v4788
        %v4790 = vpop.f32.mrf.mxu0
        %4791 = vmatprep.mubr.bf16.mxu0 0
        %4792 = vmatmul.mubr.bf16.gmra.mxu0 %v4652
        %v4793 = vpop.f32.mrf.mxu0
        %v4794 = vadd.f32 %v4511, %v4793
        %v4795 = vpop.f32.mrf.mxu0
        %v4796 = vpop.f32.mrf.mxu0
        %v4797 = vadd.f32 %v4514, %v4796
        %v4798 = vpop.f32.mrf.mxu0
        %4799 = vmatprep.mubr.bf16.mxu0 0
        %4800 = vmatmul.mubr.bf16.gmra.mxu0 %v4654
        %v4801 = vpop.f32.mrf.mxu0
        %v4802 = vadd.f32 %v4519, %v4801
        %v4803 = vpop.f32.mrf.mxu0
        %v4804 = vpop.f32.mrf.mxu0
        %v4805 = vadd.f32 %v4522, %v4804
        %v4806 = vpop.f32.mrf.mxu0
        %4807 = vmatprep.mubr.bf16.mxu0 0
        %4808 = vmatmul.mubr.bf16.gmra.mxu0 %v4656
        %v4809 = vpop.f32.mrf.mxu0
        %v4810 = vadd.f32 %v4527, %v4809
        %v4811 = vpop.f32.mrf.mxu0
        %v4812 = vpop.f32.mrf.mxu0
        %v4813 = vadd.f32 %v4530, %v4812
        %v4814 = vpop.f32.mrf.mxu0
        %4815 = vmatprep.mubr.bf16.mxu0 0
        %4816 = vmatmul.mubr.bf16.gmra.mxu0 %v4658
        %v4817 = vpop.f32.mrf.mxu0
        %v4818 = vadd.f32 %v4535, %v4817
        %v4819 = vpop.f32.mrf.mxu0
        %v4820 = vpop.f32.mrf.mxu0
        %v4821 = vadd.f32 %v4538, %v4820
        %v4822 = vpop.f32.mrf.mxu0
        %4823 = vmatprep.mubr.bf16.mxu0 0
        %4824 = vmatmul.mubr.bf16.gmra.mxu0 %v4660
        %v4825 = vpop.f32.mrf.mxu0
        %v4826 = vadd.f32 %v4543, %v4825
        %v4827 = vpop.f32.mrf.mxu0
        %v4828 = vpop.f32.mrf.mxu0
        %v4829 = vadd.f32 %v4546, %v4828
        %v4830 = vpop.f32.mrf.mxu0
        %4831 = vmatprep.mubr.bf16.mxu0 0
        %4832 = vmatmul.mubr.bf16.gmra.mxu0 %v4662
        %v4833 = vpop.f32.mrf.mxu0
        %v4834 = vadd.f32 %v4551, %v4833
        %v4835 = vpop.f32.mrf.mxu0
        %v4836 = vpop.f32.mrf.mxu0
        %v4837 = vadd.f32 %v4554, %v4836
        %v4838 = vpop.f32.mrf.mxu0
        %4839 = vmatprep.mubr.bf16.mxu0 0
        %4840 = vmatmul.mubr.bf16.gmra.mxu0 %v4664
        %v4841 = vpop.f32.mrf.mxu0
        %v4842 = vadd.f32 %v4559, %v4841
        %v4843 = vpop.f32.mrf.mxu0
        %v4844 = vpop.f32.mrf.mxu0
        %v4845 = vadd.f32 %v4562, %v4844
        %v4846 = vpop.f32.mrf.mxu0
        %4847 = vmatprep.mubr.bf16.mxu0 0
        %4848 = vmatmul.mubr.bf16.gmra.mxu0 %v4666
        %v4849 = vpop.f32.mrf.mxu0
        %v4850 = vadd.f32 %v4567, %v4849
        %v4851 = vpop.f32.mrf.mxu0
        %v4852 = vpop.f32.mrf.mxu0
        %v4853 = vadd.f32 %v4570, %v4852
        %v4854 = vpop.f32.mrf.mxu0
        %4855 = vmatprep.mubr.bf16.mxu0 0
        %4856 = vmatmul.mubr.bf16.gmra.mxu0 %v4668
        %v4857 = vpop.f32.mrf.mxu0
        %v4858 = vadd.f32 %v4575, %v4857
        %v4859 = vpop.f32.mrf.mxu0
        %v4860 = vpop.f32.mrf.mxu0
        %v4861 = vadd.f32 %v4578, %v4860
        %v4862 = vpop.f32.mrf.mxu0
        %4863 = vmatprep.mubr.bf16.mxu0 0
        %4864 = vmatmul.mubr.bf16.gmra.mxu0 %v4670
        %v4865 = vpop.f32.mrf.mxu0
        %v4866 = vadd.f32 %v4583, %v4865
        %v4867 = vpop.f32.mrf.mxu0
        %v4868 = vpop.f32.mrf.mxu0
        %v4869 = vadd.f32 %v4586, %v4868
        %v4870 = vpop.f32.mrf.mxu0
        %4871 = vmatprep.mubr.bf16.mxu0 0
        %4872 = vmatmul.mubr.bf16.gmra.mxu0 %v4672
        %v4873 = vpop.f32.mrf.mxu0
        %v4874 = vadd.f32 %v4591, %v4873
        %v4875 = vpop.f32.mrf.mxu0
        %v4876 = vpop.f32.mrf.mxu0
        %v4877 = vadd.f32 %v4594, %v4876
        %v4878 = vpop.f32.mrf.mxu0
        %4879 = vmatprep.mubr.bf16.mxu0 0
        %4880 = vmatmul.mubr.bf16.gmra.mxu0 %v4674
        %v4881 = vpop.f32.mrf.mxu0
        %v4882 = vadd.f32 %v4599, %v4881
        %v4883 = vpop.f32.mrf.mxu0
        %v4884 = vpop.f32.mrf.mxu0
        %v4885 = vadd.f32 %v4602, %v4884
        %v4886 = vpop.f32.mrf.mxu0
        %4887 = vmatprep.mubr.bf16.mxu0 0
        %4888 = vmatmul.mubr.bf16.gmra.mxu0 %v4676
        %v4889 = vpop.f32.mrf.mxu0
        %v4890 = vadd.f32 %v4607, %v4889
        %v4891 = vpop.f32.mrf.mxu0
        %v4892 = vpop.f32.mrf.mxu0
        %v4893 = vadd.f32 %v4610, %v4892
        %v4894 = vpop.f32.mrf.mxu0
        %4895 = vmatprep.mubr.bf16.mxu0 0
        %4896 = vmatmul.mubr.bf16.gmra.mxu0 %v4678
        %v4897 = vpop.f32.mrf.mxu0
        %v4898 = vadd.f32 %v4615, %v4897
        %v4899 = vpop.f32.mrf.mxu0
        %v4900 = vpop.f32.mrf.mxu0
        %v4901 = vadd.f32 %v4618, %v4900
        %v4902 = vpop.f32.mrf.mxu0
        %4903 = vmatprep.mubr.bf16.mxu0 0
        %4904 = vmatmul.mubr.bf16.gmra.mxu0 %v4680
        %v4905 = vpop.f32.mrf.mxu0
        %v4906 = vadd.f32 %v4623, %v4905
        %v4907 = vpop.f32.mrf.mxu0
        %v4908 = vpop.f32.mrf.mxu0
        %v4909 = vadd.f32 %v4626, %v4908
        %v4910 = vpop.f32.mrf.mxu0
        %4911 = vmatprep.mubr.bf16.mxu0 0
        %4912 = vmatmul.mubr.bf16.gmra.mxu0 %v4682
        %v4913 = vpop.f32.mrf.mxu0
        %v4914 = vadd.f32 %v4631, %v4913
        %v4915 = vpop.f32.mrf.mxu0
        %v4916 = vpop.f32.mrf.mxu0
        %v4917 = vadd.f32 %v4634, %v4916
        %v4918 = vpop.f32.mrf.mxu0
        %4919 = vmatprep.mubr.bf16.mxu0 0
        %4920 = vmatmul.mubr.bf16.gmra.mxu0 %v4684
        %v4921 = vpop.f32.mrf.mxu0
        %v4922 = vadd.f32 %v4639, %v4921
        %v4923 = vpop.f32.mrf.mxu0
        %v4924 = vpop.f32.mrf.mxu0
        %v4925 = vadd.f32 %v4642, %v4924
        %v4926 = vpop.f32.mrf.mxu0
        %4927 = vdwg.mxu0
        %v4928 = vld [vmem:[#allocation2 + $0x10] sm:$0x8]
        %s4929 = scalar_lea.vmem %s1, 512
        %v4930 = vld [vmem:[%s4929] sm:$0xf]
        %v4931 = vld [vmem:[%s4929 + $0x4] sm:$0xf]
        %v4932 = vld [vmem:[%s4929 + $0x8] sm:$0xf]
        %v4933 = vld [vmem:[%s4929 + $0xc] sm:$0xf]
        %v4934 = vld [vmem:[%s4929 + $0x10] sm:$0xf]
        %v4935 = vld [vmem:[%s4929 + $0x14] sm:$0xf]
        %v4936 = vld [vmem:[%s4929 + $0x18] sm:$0xf]
        %v4937 = vld [vmem:[%s4929 + $0x1c] sm:$0xf]
        %v4938 = vld [vmem:[%s4929 + $0x20] sm:$0xf]
        %v4939 = vld [vmem:[%s4929 + $0x24] sm:$0xf]
        %v4940 = vld [vmem:[%s4929 + $0x28] sm:$0xf]
        %v4941 = vld [vmem:[%s4929 + $0x2c] sm:$0xf]
        %v4942 = vld [vmem:[%s4929 + $0x30] sm:$0xf]
        %v4943 = vld [vmem:[%s4929 + $0x34] sm:$0xf]
        %v4944 = vld [vmem:[%s4929 + $0x38] sm:$0xf]
        %v4945 = vld [vmem:[%s4929 + $0x3c] sm:$0xf]
        %v4947 = vunpack.c.l.b16 %v4928
        %v4948 = vpack.c.b16 %v4176, %v4947
        %vm4949 = vcmask 1044480
        %v4950 = vrot.slane %v4948, 3
        %v4951 = vrot.slane %v4213, 3
        %v4952 = vsel %vm4949, %v4950, %v4951
        %v4953 = vrot.slane %v4214, 3
        %v4954 = vsel %vm4949, %v4951, %v4953
        %v4955 = vrot.slane %v4215, 3
        %v4956 = vsel %vm4949, %v4953, %v4955
        %v4957 = vrot.slane %v4216, 3
        %v4958 = vsel %vm4949, %v4955, %v4957
        %v4959 = vrot.slane %v4217, 3
        %v4960 = vsel %vm4949, %v4957, %v4959
        %v4961 = vrot.slane %v4218, 3
        %v4962 = vsel %vm4949, %v4959, %v4961
        %v4963 = vrot.slane %v4219, 3
        %v4964 = vsel %vm4949, %v4961, %v4963
        %v4965 = vrot.slane %v4220, 3
        %v4966 = vsel %vm4949, %v4963, %v4965
        %v4967 = vrot.slane %v4221, 3
        %v4968 = vsel %vm4949, %v4965, %v4967
        %v4969 = vrot.slane %v4222, 3
        %v4970 = vsel %vm4949, %v4967, %v4969
        %v4971 = vrot.slane %v4223, 3
        %v4972 = vsel %vm4949, %v4969, %v4971
        %v4973 = vrot.slane %v4224, 3
        %v4974 = vsel %vm4949, %v4971, %v4973
        %v4975 = vrot.slane %v4225, 3
        %v4976 = vsel %vm4949, %v4973, %v4975
        %v4977 = vrot.slane %v4226, 3
        %v4978 = vsel %vm4949, %v4975, %v4977
        %v4979 = vrot.slane %v4227, 3
        %v4980 = vsel %vm4949, %v4977, %v4979
        %v4981 = vrot.slane %v4228, 3
        %v4982 = vsel %vm4949, %v4979, %v4981
        %v4983 = vrot.slane %v4229, 3
        %v4984 = vsel %vm4949, %v4981, %v4983
        %v4985 = vrot.slane %v4230, 3
        %v4986 = vsel %vm4949, %v4983, %v4985
        %v5021 = vunpack.c.l.b16 %v4930
        %v5022 = vunpack.c.l.b16 %v4931
        %v5023 = vunpack.c.l.b16 %v4932
        %v5024 = vunpack.c.l.b16 %v4933
        %v5025 = vunpack.c.l.b16 %v4934
        %v5026 = vunpack.c.l.b16 %v4935
        %v5027 = vunpack.c.l.b16 %v4936
        %v5028 = vunpack.c.l.b16 %v4937
        %v5029 = vunpack.c.l.b16 %v4938
        %v5030 = vunpack.c.l.b16 %v4939
        %v5031 = vunpack.c.l.b16 %v4940
        %v5032 = vunpack.c.l.b16 %v4941
        %v5033 = vunpack.c.l.b16 %v4942
        %v5034 = vunpack.c.l.b16 %v4943
        %v5035 = vunpack.c.l.b16 %v4944
        %v5036 = vunpack.c.l.b16 %v4945
        %v5037 = vpack.c.b16 %v5022, %v5021
        %v5038 = vpack.c.b16 %v5024, %v5023
        %v5039 = vpack.c.b16 %v5026, %v5025
        %v5040 = vpack.c.b16 %v5028, %v5027
        %v5041 = vpack.c.b16 %v5030, %v5029
        %v5042 = vpack.c.b16 %v5032, %v5031
        %v5043 = vpack.c.b16 %v5034, %v5033
        %v5044 = vpack.c.b16 %v5036, %v5035
        %5053 = vmatprep.subr.bf16.mxu0 0
        %5054 = vmatpush1.bf16.msra.mxu0 %v5044
        %5055 = vmatprep.subr.bf16.mxu0 0
        %5056 = vmatpush1.bf16.msra.mxu0 %v5043
        %5057 = vmatprep.subr.bf16.mxu0 0
        %5058 = vmatpush1.bf16.msra.mxu0 %v5042
        %5059 = vmatprep.subr.bf16.mxu0 0
        %5060 = vmatpush1.bf16.msra.mxu0 %v5041
        %5061 = vmatprep.subr.bf16.mxu0 0
        %5062 = vmatpush1.bf16.msra.mxu0 %v5040
        %5063 = vmatprep.subr.bf16.mxu0 0
        %5064 = vmatpush1.bf16.msra.mxu0 %v5039
        %5065 = vmatprep.subr.bf16.mxu0 0
        %5066 = vmatpush1.bf16.msra.mxu0 %v5038
        %5067 = vmatprep.subr.bf16.mxu0 0
        %5068 = vmatpush1.bf16.msra.mxu0 %v5037
        %5069 = vmatprep.subr.bf16.mxu0 0
        %5070 = vmatpush2.bf16.msra.mxu0 0
        %5071 = vmatprep.subr.bf16.mxu0 0
        %5072 = vmatpush2.bf16.msra.mxu0 0
        %5073 = vmatprep.subr.bf16.mxu0 0
        %5074 = vmatpush2.bf16.msra.mxu0 0
        %5075 = vmatprep.subr.bf16.mxu0 0
        %5076 = vmatpush2.bf16.msra.mxu0 0
        %5077 = vmatprep.subr.bf16.mxu0 0
        %5078 = vmatpush2.bf16.msra.mxu0 0
        %5079 = vmatprep.subr.bf16.mxu0 0
        %5080 = vmatpush2.bf16.msra.mxu0 0
        %5081 = vmatprep.subr.bf16.mxu0 0
        %5082 = vmatpush2.bf16.msra.mxu0 0
        %5083 = vmatprep.subr.bf16.mxu0 0
        %5084 = vmatpush2.bf16.msra.mxu0 0
        %5085 = vmatprep.mubr.bf16.mxu0 0
        %5086 = vmatmul.mubr.bf16.gmra.mxu0 %v4952
        %v5087 = vpop.f32.mrf.mxu0
        %v5088 = vadd.f32 0.0, %v5087
        %v5089 = vpop.f32.mrf.mxu0
        %v5090 = vpop.f32.mrf.mxu0
        %v5091 = vadd.f32 0.0, %v5090
        %v5092 = vpop.f32.mrf.mxu0
        %5093 = vmatprep.mubr.bf16.mxu0 0
        %5094 = vmatmul.mubr.bf16.gmra.mxu0 %v4954
        %v5095 = vpop.f32.mrf.mxu0
        %v5096 = vadd.f32 0.0, %v5095
        %v5097 = vpop.f32.mrf.mxu0
        %v5098 = vpop.f32.mrf.mxu0
        %v5099 = vadd.f32 0.0, %v5098
        %v5100 = vpop.f32.mrf.mxu0
        %5101 = vmatprep.mubr.bf16.mxu0 0
        %5102 = vmatmul.mubr.bf16.gmra.mxu0 %v4956
        %v5103 = vpop.f32.mrf.mxu0
        %v5104 = vadd.f32 0.0, %v5103
        %v5105 = vpop.f32.mrf.mxu0
        %v5106 = vpop.f32.mrf.mxu0
        %v5107 = vadd.f32 0.0, %v5106
        %v5108 = vpop.f32.mrf.mxu0
        %5109 = vmatprep.mubr.bf16.mxu0 0
        %5110 = vmatmul.mubr.bf16.gmra.mxu0 %v4958
        %v5111 = vpop.f32.mrf.mxu0
        %v5112 = vadd.f32 0.0, %v5111
        %v5113 = vpop.f32.mrf.mxu0
        %v5114 = vpop.f32.mrf.mxu0
        %v5115 = vadd.f32 0.0, %v5114
        %v5116 = vpop.f32.mrf.mxu0
        %5117 = vmatprep.mubr.bf16.mxu0 0
        %5118 = vmatmul.mubr.bf16.gmra.mxu0 %v4960
        %v5119 = vpop.f32.mrf.mxu0
        %v5120 = vadd.f32 0.0, %v5119
        %v5121 = vpop.f32.mrf.mxu0
        %v5122 = vpop.f32.mrf.mxu0
        %v5123 = vadd.f32 0.0, %v5122
        %v5124 = vpop.f32.mrf.mxu0
        %5125 = vmatprep.mubr.bf16.mxu0 0
        %5126 = vmatmul.mubr.bf16.gmra.mxu0 %v4962
        %v5127 = vpop.f32.mrf.mxu0
        %v5128 = vadd.f32 0.0, %v5127
        %v5129 = vpop.f32.mrf.mxu0
        %v5130 = vpop.f32.mrf.mxu0
        %v5131 = vadd.f32 0.0, %v5130
        %v5132 = vpop.f32.mrf.mxu0
        %5133 = vmatprep.mubr.bf16.mxu0 0
        %5134 = vmatmul.mubr.bf16.gmra.mxu0 %v4964
        %v5135 = vpop.f32.mrf.mxu0
        %v5136 = vadd.f32 0.0, %v5135
        %v5137 = vpop.f32.mrf.mxu0
        %v5138 = vpop.f32.mrf.mxu0
        %v5139 = vadd.f32 0.0, %v5138
        %v5140 = vpop.f32.mrf.mxu0
        %5141 = vmatprep.mubr.bf16.mxu0 0
        %5142 = vmatmul.mubr.bf16.gmra.mxu0 %v4966
        %v5143 = vpop.f32.mrf.mxu0
        %v5144 = vadd.f32 0.0, %v5143
        %v5145 = vpop.f32.mrf.mxu0
        %v5146 = vpop.f32.mrf.mxu0
        %v5147 = vadd.f32 0.0, %v5146
        %v5148 = vpop.f32.mrf.mxu0
        %5149 = vmatprep.mubr.bf16.mxu0 0
        %5150 = vmatmul.mubr.bf16.gmra.mxu0 %v4968
        %v5151 = vpop.f32.mrf.mxu0
        %v5152 = vadd.f32 0.0, %v5151
        %v5153 = vpop.f32.mrf.mxu0
        %v5154 = vpop.f32.mrf.mxu0
        %v5155 = vadd.f32 0.0, %v5154
        %v5156 = vpop.f32.mrf.mxu0
        %5157 = vmatprep.mubr.bf16.mxu0 0
        %5158 = vmatmul.mubr.bf16.gmra.mxu0 %v4970
        %v5159 = vpop.f32.mrf.mxu0
        %v5160 = vadd.f32 0.0, %v5159
        %v5161 = vpop.f32.mrf.mxu0
        %v5162 = vpop.f32.mrf.mxu0
        %v5163 = vadd.f32 0.0, %v5162
        %v5164 = vpop.f32.mrf.mxu0
        %5165 = vmatprep.mubr.bf16.mxu0 0
        %5166 = vmatmul.mubr.bf16.gmra.mxu0 %v4972
        %v5167 = vpop.f32.mrf.mxu0
        %v5168 = vadd.f32 0.0, %v5167
        %v5169 = vpop.f32.mrf.mxu0
        %v5170 = vpop.f32.mrf.mxu0
        %v5171 = vadd.f32 0.0, %v5170
        %v5172 = vpop.f32.mrf.mxu0
        %5173 = vmatprep.mubr.bf16.mxu0 0
        %5174 = vmatmul.mubr.bf16.gmra.mxu0 %v4974
        %v5175 = vpop.f32.mrf.mxu0
        %v5176 = vadd.f32 0.0, %v5175
        %v5177 = vpop.f32.mrf.mxu0
        %v5178 = vpop.f32.mrf.mxu0
        %v5179 = vadd.f32 0.0, %v5178
        %v5180 = vpop.f32.mrf.mxu0
        %5181 = vmatprep.mubr.bf16.mxu0 0
        %5182 = vmatmul.mubr.bf16.gmra.mxu0 %v4976
        %v5183 = vpop.f32.mrf.mxu0
        %v5184 = vadd.f32 0.0, %v5183
        %v5185 = vpop.f32.mrf.mxu0
        %v5186 = vpop.f32.mrf.mxu0
        %v5187 = vadd.f32 0.0, %v5186
        %v5188 = vpop.f32.mrf.mxu0
        %5189 = vmatprep.mubr.bf16.mxu0 0
        %5190 = vmatmul.mubr.bf16.gmra.mxu0 %v4978
        %v5191 = vpop.f32.mrf.mxu0
        %v5192 = vadd.f32 0.0, %v5191
        %v5193 = vpop.f32.mrf.mxu0
        %v5194 = vpop.f32.mrf.mxu0
        %v5195 = vadd.f32 0.0, %v5194
        %v5196 = vpop.f32.mrf.mxu0
        %5197 = vmatprep.mubr.bf16.mxu0 0
        %5198 = vmatmul.mubr.bf16.gmra.mxu0 %v4980
        %v5199 = vpop.f32.mrf.mxu0
        %v5200 = vadd.f32 0.0, %v5199
        %v5201 = vpop.f32.mrf.mxu0
        %v5202 = vpop.f32.mrf.mxu0
        %v5203 = vadd.f32 0.0, %v5202
        %v5204 = vpop.f32.mrf.mxu0
        %5205 = vmatprep.mubr.bf16.mxu0 0
        %5206 = vmatmul.mubr.bf16.gmra.mxu0 %v4982
        %v5207 = vpop.f32.mrf.mxu0
        %v5208 = vadd.f32 0.0, %v5207
        %v5209 = vpop.f32.mrf.mxu0
        %v5210 = vpop.f32.mrf.mxu0
        %v5211 = vadd.f32 0.0, %v5210
        %v5212 = vpop.f32.mrf.mxu0
        %5213 = vmatprep.mubr.bf16.mxu0 0
        %5214 = vmatmul.mubr.bf16.gmra.mxu0 %v4984
        %v5215 = vpop.f32.mrf.mxu0
        %v5216 = vadd.f32 0.0, %v5215
        %v5217 = vpop.f32.mrf.mxu0
        %v5218 = vpop.f32.mrf.mxu0
        %v5219 = vadd.f32 0.0, %v5218
        %v5220 = vpop.f32.mrf.mxu0
        %5221 = vmatprep.mubr.bf16.mxu0 0
        %5222 = vmatmul.mubr.bf16.gmra.mxu0 %v4986
        %v5223 = vpop.f32.mrf.mxu0
        %v5224 = vadd.f32 0.0, %v5223
        %v5225 = vpop.f32.mrf.mxu0
        %v5226 = vpop.f32.mrf.mxu0
        %v5227 = vadd.f32 0.0, %v5226
        %v5228 = vpop.f32.mrf.mxu0
        %5229 = vdwg.mxu0
        %v5230 = vadd.f32 %v4786, %v5088
        %v5231 = vadd.f32 %v4789, %v5091
        %v5232 = vadd.f32 %v4794, %v5096
        %v5233 = vadd.f32 %v4797, %v5099
        %v5234 = vadd.f32 %v4802, %v5104
        %v5235 = vadd.f32 %v4805, %v5107
        %v5236 = vadd.f32 %v4810, %v5112
        %v5237 = vadd.f32 %v4813, %v5115
        %v5238 = vadd.f32 %v4818, %v5120
        %v5239 = vadd.f32 %v4821, %v5123
        %v5240 = vadd.f32 %v4826, %v5128
        %v5241 = vadd.f32 %v4829, %v5131
        %v5242 = vadd.f32 %v4834, %v5136
        %v5243 = vadd.f32 %v4837, %v5139
        %v5244 = vadd.f32 %v4842, %v5144
        %v5245 = vadd.f32 %v4845, %v5147
        %v5246 = vadd.f32 %v4850, %v5152
        %v5247 = vadd.f32 %v4853, %v5155
        %v5248 = vadd.f32 %v4858, %v5160
        %v5249 = vadd.f32 %v4861, %v5163
        %v5250 = vadd.f32 %v4866, %v5168
        %v5251 = vadd.f32 %v4869, %v5171
        %v5252 = vadd.f32 %v4874, %v5176
        %v5253 = vadd.f32 %v4877, %v5179
        %v5254 = vadd.f32 %v4882, %v5184
        %v5255 = vadd.f32 %v4885, %v5187
        %v5256 = vadd.f32 %v4890, %v5192
        %v5257 = vadd.f32 %v4893, %v5195
        %v5258 = vadd.f32 %v4898, %v5200
        %v5259 = vadd.f32 %v4901, %v5203
        %v5260 = vadd.f32 %v4906, %v5208
        %v5261 = vadd.f32 %v4909, %v5211
        %v5262 = vadd.f32 %v4914, %v5216
        %v5263 = vadd.f32 %v4917, %v5219
        %v5264 = vadd.f32 %v4922, %v5224
        %v5265 = vadd.f32 %v4925, %v5227
        %v5266 = vadd.f32 %v2830, %v4030
        %v5267 = vadd.f32 %v2831, %v4031
        %v5268 = vadd.f32 %v2832, %v4032
        %v5269 = vadd.f32 %v2833, %v4033
        %v5270 = vadd.f32 %v2834, %v4034
        %v5271 = vadd.f32 %v2835, %v4035
        %v5272 = vadd.f32 %v2836, %v4036
        %v5273 = vadd.f32 %v2837, %v4037
        %v5274 = vadd.f32 %v2838, %v4038
        %v5275 = vadd.f32 %v2839, %v4039
        %v5276 = vadd.f32 %v2840, %v4040
        %v5277 = vadd.f32 %v2841, %v4041
        %v5278 = vadd.f32 %v2842, %v4042
        %v5279 = vadd.f32 %v2843, %v4043
        %v5280 = vadd.f32 %v2844, %v4044
        %v5281 = vadd.f32 %v2845, %v4045
        %v5282 = vadd.f32 %v2846, %v4046
        %v5283 = vadd.f32 %v2847, %v4047
        %v5284 = vadd.f32 %v2848, %v4048
        %v5285 = vadd.f32 %v2849, %v4049
        %v5286 = vadd.f32 %v2850, %v4050
        %v5287 = vadd.f32 %v2851, %v4051
        %v5288 = vadd.f32 %v2852, %v4052
        %v5289 = vadd.f32 %v2853, %v4053
        %v5290 = vadd.f32 %v2854, %v4054
        %v5291 = vadd.f32 %v2855, %v4055
        %v5292 = vadd.f32 %v2856, %v4056
        %v5293 = vadd.f32 %v2857, %v4057
        %v5294 = vadd.f32 %v2858, %v4058
        %v5295 = vadd.f32 %v2859, %v4059
        %v5296 = vadd.f32 %v2860, %v4060
        %v5297 = vadd.f32 %v2861, %v4061
        %v5298 = vadd.f32 %v2862, %v4062
        %v5299 = vadd.f32 %v2863, %v4063
        %v5300 = vadd.f32 %v2864, %v4064
        %v5301 = vadd.f32 %v2865, %v4065
        %v5302 = vadd.f32 %v5266, %v5230
        %v5303 = vadd.f32 %v5267, %v5231
        %v5304 = vadd.f32 %v5268, %v5232
        %v5305 = vadd.f32 %v5269, %v5233
        %v5306 = vadd.f32 %v5270, %v5234
        %v5307 = vadd.f32 %v5271, %v5235
        %v5308 = vadd.f32 %v5272, %v5236
        %v5309 = vadd.f32 %v5273, %v5237
        %v5310 = vadd.f32 %v5274, %v5238
        %v5311 = vadd.f32 %v5275, %v5239
        %v5312 = vadd.f32 %v5276, %v5240
        %v5313 = vadd.f32 %v5277, %v5241
        %v5314 = vadd.f32 %v5278, %v5242
        %v5315 = vadd.f32 %v5279, %v5243
        %v5316 = vadd.f32 %v5280, %v5244
        %v5317 = vadd.f32 %v5281, %v5245
        %v5318 = vadd.f32 %v5282, %v5246
        %v5319 = vadd.f32 %v5283, %v5247
        %v5320 = vadd.f32 %v5284, %v5248
        %v5321 = vadd.f32 %v5285, %v5249
        %v5322 = vadd.f32 %v5286, %v5250
        %v5323 = vadd.f32 %v5287, %v5251
        %v5324 = vadd.f32 %v5288, %v5252
        %v5325 = vadd.f32 %v5289, %v5253
        %v5326 = vadd.f32 %v5290, %v5254
        %v5327 = vadd.f32 %v5291, %v5255
        %v5328 = vadd.f32 %v5292, %v5256
        %v5329 = vadd.f32 %v5293, %v5257
        %v5330 = vadd.f32 %v5294, %v5258
        %v5331 = vadd.f32 %v5295, %v5259
        %v5332 = vadd.f32 %v5296, %v5260
        %v5333 = vadd.f32 %v5297, %v5261
        %v5334 = vadd.f32 %v5298, %v5262
        %v5335 = vadd.f32 %v5299, %v5263
        %v5336 = vadd.f32 %v5300, %v5264
        %v5337 = vadd.f32 %v5301, %v5265
        %v5338 = vld [vmem:[%s2] sm:$0x1]
        %v5340 = vlaneseq
        %v5341 = vshrl.u32 %v5340, 7
        %v5342 = vsub.s32 0, %v5341
        %v5343 = vrot.slane %v5338, %v5342
        %v5345 = vadd.f32 %v5302, %v5343
        %v5346 = vadd.f32 %v5303, %v5343
        %v5347 = vadd.f32 %v5304, %v5343
        %v5348 = vadd.f32 %v5305, %v5343
        %v5349 = vadd.f32 %v5306, %v5343
        %v5350 = vadd.f32 %v5307, %v5343
        %v5351 = vadd.f32 %v5308, %v5343
        %v5352 = vadd.f32 %v5309, %v5343
        %v5353 = vadd.f32 %v5310, %v5343
        %v5354 = vadd.f32 %v5311, %v5343
        %v5355 = vadd.f32 %v5312, %v5343
        %v5356 = vadd.f32 %v5313, %v5343
        %v5357 = vadd.f32 %v5314, %v5343
        %v5358 = vadd.f32 %v5315, %v5343
        %v5359 = vadd.f32 %v5316, %v5343
        %v5360 = vadd.f32 %v5317, %v5343
        %v5361 = vadd.f32 %v5318, %v5343
        %v5362 = vadd.f32 %v5319, %v5343
        %v5363 = vadd.f32 %v5320, %v5343
        %v5364 = vadd.f32 %v5321, %v5343
        %v5365 = vadd.f32 %v5322, %v5343
        %v5366 = vadd.f32 %v5323, %v5343
        %v5367 = vadd.f32 %v5324, %v5343
        %v5368 = vadd.f32 %v5325, %v5343
        %v5369 = vadd.f32 %v5326, %v5343
        %v5370 = vadd.f32 %v5327, %v5343
        %v5371 = vadd.f32 %v5328, %v5343
        %v5372 = vadd.f32 %v5329, %v5343
        %v5373 = vadd.f32 %v5330, %v5343
        %v5374 = vadd.f32 %v5331, %v5343
        %v5375 = vadd.f32 %v5332, %v5343
        %v5376 = vadd.f32 %v5333, %v5343
        %v5377 = vadd.f32 %v5334, %v5343
        %v5378 = vadd.f32 %v5335, %v5343
        %v5379 = vadd.f32 %v5336, %v5343
        %v5380 = vadd.f32 %v5337, %v5343
        %v5381 = vsel %vm837, 1, 0
        %v5382 = vsel %vm838, 1, 0
        %v5383 = vsel %vm839, 1, 0
        %v5384 = vsel %vm840, 1, 0
        %v5385 = vsel %vm841, 1, 0
        %v5386 = vsel %vm842, 1, 0
        %v5387 = vsel %vm843, 1, 0
        %v5388 = vsel %vm844, 1, 0
        %v5389 = vsel %vm845, 1, 0
        %v5390 = vsel %vm846, 1, 0
        %v5391 = vsel %vm847, 1, 0
        %v5392 = vsel %vm848, 1, 0
        %v5393 = vsel %vm849, 1, 0
        %v5394 = vsel %vm850, 1, 0
        %v5395 = vsel %vm851, 1, 0
        %v5396 = vsel %vm852, 1, 0
        %v5397 = vsel %vm853, 1, 0
        %v5398 = vsel %vm854, 1, 0
        %v5399 = vsel %vm855, 1, 0
        %v5400 = vsel %vm856, 1, 0
        %v5401 = vsel %vm857, 1, 0
        %v5402 = vsel %vm858, 1, 0
        %v5403 = vsel %vm859, 1, 0
        %v5404 = vsel %vm860, 1, 0
        %v5405 = vsel %vm861, 1, 0
        %v5406 = vsel %vm862, 1, 0
        %v5407 = vsel %vm863, 1, 0
        %v5408 = vsel %vm864, 1, 0
        %v5409 = vsel %vm865, 1, 0
        %v5410 = vsel %vm866, 1, 0
        %v5411 = vsel %vm867, 1, 0
        %v5412 = vsel %vm868, 1, 0
        %v5413 = vsel %vm869, 1, 0
        %v5414 = vsel %vm870, 1, 0
        %v5415 = vsel %vm871, 1, 0
        %v5416 = vsel %vm872, 1, 0
        %vm5417 = vcmp.eq.s32.totalorder %v5381, 1
        %vm5418 = vcmp.eq.s32.totalorder %v5382, 1
        %vm5419 = vcmp.eq.s32.totalorder %v5383, 1
        %vm5420 = vcmp.eq.s32.totalorder %v5384, 1
        %vm5421 = vcmp.eq.s32.totalorder %v5385, 1
        %vm5422 = vcmp.eq.s32.totalorder %v5386, 1
        %vm5423 = vcmp.eq.s32.totalorder %v5387, 1
        %vm5424 = vcmp.eq.s32.totalorder %v5388, 1
        %vm5425 = vcmp.eq.s32.totalorder %v5389, 1
        %vm5426 = vcmp.eq.s32.totalorder %v5390, 1
        %vm5427 = vcmp.eq.s32.totalorder %v5391, 1
        %vm5428 = vcmp.eq.s32.totalorder %v5392, 1
        %vm5429 = vcmp.eq.s32.totalorder %v5393, 1
        %vm5430 = vcmp.eq.s32.totalorder %v5394, 1
        %vm5431 = vcmp.eq.s32.totalorder %v5395, 1
        %vm5432 = vcmp.eq.s32.totalorder %v5396, 1
        %vm5433 = vcmp.eq.s32.totalorder %v5397, 1
        %vm5434 = vcmp.eq.s32.totalorder %v5398, 1
        %vm5435 = vcmp.eq.s32.totalorder %v5399, 1
        %vm5436 = vcmp.eq.s32.totalorder %v5400, 1
        %vm5437 = vcmp.eq.s32.totalorder %v5401, 1
        %vm5438 = vcmp.eq.s32.totalorder %v5402, 1
        %vm5439 = vcmp.eq.s32.totalorder %v5403, 1
        %vm5440 = vcmp.eq.s32.totalorder %v5404, 1
        %vm5441 = vcmp.eq.s32.totalorder %v5405, 1
        %vm5442 = vcmp.eq.s32.totalorder %v5406, 1
        %vm5443 = vcmp.eq.s32.totalorder %v5407, 1
        %vm5444 = vcmp.eq.s32.totalorder %v5408, 1
        %vm5445 = vcmp.eq.s32.totalorder %v5409, 1
        %vm5446 = vcmp.eq.s32.totalorder %v5410, 1
        %vm5447 = vcmp.eq.s32.totalorder %v5411, 1
        %vm5448 = vcmp.eq.s32.totalorder %v5412, 1
        %vm5449 = vcmp.eq.s32.totalorder %v5413, 1
        %vm5450 = vcmp.eq.s32.totalorder %v5414, 1
        %vm5451 = vcmp.eq.s32.totalorder %v5415, 1
        %vm5452 = vcmp.eq.s32.totalorder %v5416, 1
        %v5453 = vsel %vm5417, %v5345, 0.0
        %v5454 = vsel %vm5418, %v5346, 0.0
        %v5455 = vsel %vm5419, %v5347, 0.0
        %v5456 = vsel %vm5420, %v5348, 0.0
        %v5457 = vsel %vm5421, %v5349, 0.0
        %v5458 = vsel %vm5422, %v5350, 0.0
        %v5459 = vsel %vm5423, %v5351, 0.0
        %v5460 = vsel %vm5424, %v5352, 0.0
        %v5461 = vsel %vm5425, %v5353, 0.0
        %v5462 = vsel %vm5426, %v5354, 0.0
        %v5463 = vsel %vm5427, %v5355, 0.0
        %v5464 = vsel %vm5428, %v5356, 0.0
        %v5465 = vsel %vm5429, %v5357, 0.0
        %v5466 = vsel %vm5430, %v5358, 0.0
        %v5467 = vsel %vm5431, %v5359, 0.0
        %v5468 = vsel %vm5432, %v5360, 0.0
        %v5469 = vsel %vm5433, %v5361, 0.0
        %v5470 = vsel %vm5434, %v5362, 0.0
        %v5471 = vsel %vm5435, %v5363, 0.0
        %v5472 = vsel %vm5436, %v5364, 0.0
        %v5473 = vsel %vm5437, %v5365, 0.0
        %v5474 = vsel %vm5438, %v5366, 0.0
        %v5475 = vsel %vm5439, %v5367, 0.0
        %v5476 = vsel %vm5440, %v5368, 0.0
        %v5477 = vsel %vm5441, %v5369, 0.0
        %v5478 = vsel %vm5442, %v5370, 0.0
        %v5479 = vsel %vm5443, %v5371, 0.0
        %v5480 = vsel %vm5444, %v5372, 0.0
        %v5481 = vsel %vm5445, %v5373, 0.0
        %v5482 = vsel %vm5446, %v5374, 0.0
        %v5483 = vsel %vm5447, %v5375, 0.0
        %v5484 = vsel %vm5448, %v5376, 0.0
        %v5485 = vsel %vm5449, %v5377, 0.0
        %v5486 = vsel %vm5450, %v5378, 0.0
        %v5487 = vsel %vm5451, %v5379, 0.0
        %v5488 = vsel %vm5452, %v5380, 0.0
        %v5489 = vadd.f32 %v5453, %v5454
        %v5490 = vadd.f32 %v5489, %v5455
        %v5491 = vadd.f32 %v5490, %v5456
        %v5492 = vadd.f32 %v5491, %v5457
        %v5493 = vadd.f32 %v5492, %v5458
        %v5494 = vadd.f32 %v5493, %v5459
        %v5495 = vadd.f32 %v5494, %v5460
        %v5496 = vadd.f32 %v5495, %v5461
        %v5497 = vadd.f32 %v5496, %v5462
        %v5498 = vadd.f32 %v5497, %v5463
        %v5499 = vadd.f32 %v5498, %v5464
        %v5500 = vadd.f32 %v5499, %v5465
        %v5501 = vadd.f32 %v5500, %v5466
        %v5502 = vadd.f32 %v5501, %v5467
        %v5503 = vadd.f32 %v5502, %v5468
        %v5504 = vadd.f32 %v5503, %v5469
        %v5505 = vadd.f32 %v5504, %v5470
        %v5506 = vadd.f32 %v5505, %v5471
        %v5507 = vadd.f32 %v5506, %v5472
        %v5508 = vadd.f32 %v5507, %v5473
        %v5509 = vadd.f32 %v5508, %v5474
        %v5510 = vadd.f32 %v5509, %v5475
        %v5511 = vadd.f32 %v5510, %v5476
        %v5512 = vadd.f32 %v5511, %v5477
        %v5513 = vadd.f32 %v5512, %v5478
        %v5514 = vadd.f32 %v5513, %v5479
        %v5515 = vadd.f32 %v5514, %v5480
        %v5516 = vadd.f32 %v5515, %v5481
        %v5517 = vadd.f32 %v5516, %v5482
        %v5518 = vadd.f32 %v5517, %v5483
        %v5519 = vadd.f32 %v5518, %v5484
        %v5520 = vadd.f32 %v5519, %v5485
        %v5521 = vadd.f32 %v5520, %v5486
        %v5522 = vadd.f32 %v5521, %v5487
        %v5523 = vadd.f32 %v5522, %v5488
        %v5524 = vrot.slane %v5523, 4
        %v5525 = vadd.f32 %v5523, %v5524
        %v5526 = vrot.slane %v5525, 2
        %v5527 = vadd.f32 %v5525, %v5526
        %v5528 = vrot.slane %v5527, 1
        %v5529 = vadd.f32 %v5527, %v5528
        %v5530 = vmul.f32 %v5529, 0.00390625
        %v5531 = vmul.f32 %v5345, %v5345
        %v5532 = vmul.f32 %v5346, %v5346
        %v5533 = vmul.f32 %v5347, %v5347
        %v5534 = vmul.f32 %v5348, %v5348
        %v5535 = vmul.f32 %v5349, %v5349
        %v5536 = vmul.f32 %v5350, %v5350
        %v5537 = vmul.f32 %v5351, %v5351
        %v5538 = vmul.f32 %v5352, %v5352
        %v5539 = vmul.f32 %v5353, %v5353
        %v5540 = vmul.f32 %v5354, %v5354
        %v5541 = vmul.f32 %v5355, %v5355
        %v5542 = vmul.f32 %v5356, %v5356
        %v5543 = vmul.f32 %v5357, %v5357
        %v5544 = vmul.f32 %v5358, %v5358
        %v5545 = vmul.f32 %v5359, %v5359
        %v5546 = vmul.f32 %v5360, %v5360
        %v5547 = vmul.f32 %v5361, %v5361
        %v5548 = vmul.f32 %v5362, %v5362
        %v5549 = vmul.f32 %v5363, %v5363
        %v5550 = vmul.f32 %v5364, %v5364
        %v5551 = vmul.f32 %v5365, %v5365
        %v5552 = vmul.f32 %v5366, %v5366
        %v5553 = vmul.f32 %v5367, %v5367
        %v5554 = vmul.f32 %v5368, %v5368
        %v5555 = vmul.f32 %v5369, %v5369
        %v5556 = vmul.f32 %v5370, %v5370
        %v5557 = vmul.f32 %v5371, %v5371
        %v5558 = vmul.f32 %v5372, %v5372
        %v5559 = vmul.f32 %v5373, %v5373
        %v5560 = vmul.f32 %v5374, %v5374
        %v5561 = vmul.f32 %v5375, %v5375
        %v5562 = vmul.f32 %v5376, %v5376
        %v5563 = vmul.f32 %v5377, %v5377
        %v5564 = vmul.f32 %v5378, %v5378
        %v5565 = vmul.f32 %v5379, %v5379
        %v5566 = vmul.f32 %v5380, %v5380
        %v5567 = vsel %vm5417, %v5531, 0.0
        %v5568 = vsel %vm5418, %v5532, 0.0
        %v5569 = vsel %vm5419, %v5533, 0.0
        %v5570 = vsel %vm5420, %v5534, 0.0
        %v5571 = vsel %vm5421, %v5535, 0.0
        %v5572 = vsel %vm5422, %v5536, 0.0
        %v5573 = vsel %vm5423, %v5537, 0.0
        %v5574 = vsel %vm5424, %v5538, 0.0
        %v5575 = vsel %vm5425, %v5539, 0.0
        %v5576 = vsel %vm5426, %v5540, 0.0
        %v5577 = vsel %vm5427, %v5541, 0.0
        %v5578 = vsel %vm5428, %v5542, 0.0
        %v5579 = vsel %vm5429, %v5543, 0.0
        %v5580 = vsel %vm5430, %v5544, 0.0
        %v5581 = vsel %vm5431, %v5545, 0.0
        %v5582 = vsel %vm5432, %v5546, 0.0
        %v5583 = vsel %vm5433, %v5547, 0.0
        %v5584 = vsel %vm5434, %v5548, 0.0
        %v5585 = vsel %vm5435, %v5549, 0.0
        %v5586 = vsel %vm5436, %v5550, 0.0
        %v5587 = vsel %vm5437, %v5551, 0.0
        %v5588 = vsel %vm5438, %v5552, 0.0
        %v5589 = vsel %vm5439, %v5553, 0.0
        %v5590 = vsel %vm5440, %v5554, 0.0
        %v5591 = vsel %vm5441, %v5555, 0.0
        %v5592 = vsel %vm5442, %v5556, 0.0
        %v5593 = vsel %vm5443, %v5557, 0.0
        %v5594 = vsel %vm5444, %v5558, 0.0
        %v5595 = vsel %vm5445, %v5559, 0.0
        %v5596 = vsel %vm5446, %v5560, 0.0
        %v5597 = vsel %vm5447, %v5561, 0.0
        %v5598 = vsel %vm5448, %v5562, 0.0
        %v5599 = vsel %vm5449, %v5563, 0.0
        %v5600 = vsel %vm5450, %v5564, 0.0
        %v5601 = vsel %vm5451, %v5565, 0.0
        %v5602 = vsel %vm5452, %v5566, 0.0
        %v5603 = vadd.f32 %v5567, %v5568
        %v5604 = vadd.f32 %v5603, %v5569
        %v5605 = vadd.f32 %v5604, %v5570
        %v5606 = vadd.f32 %v5605, %v5571
        %v5607 = vadd.f32 %v5606, %v5572
        %v5608 = vadd.f32 %v5607, %v5573
        %v5609 = vadd.f32 %v5608, %v5574
        %v5610 = vadd.f32 %v5609, %v5575
        %v5611 = vadd.f32 %v5610, %v5576
        %v5612 = vadd.f32 %v5611, %v5577
        %v5613 = vadd.f32 %v5612, %v5578
        %v5614 = vadd.f32 %v5613, %v5579
        %v5615 = vadd.f32 %v5614, %v5580
        %v5616 = vadd.f32 %v5615, %v5581
        %v5617 = vadd.f32 %v5616, %v5582
        %v5618 = vadd.f32 %v5617, %v5583
        %v5619 = vadd.f32 %v5618, %v5584
        %v5620 = vadd.f32 %v5619, %v5585
        %v5621 = vadd.f32 %v5620, %v5586
        %v5622 = vadd.f32 %v5621, %v5587
        %v5623 = vadd.f32 %v5622, %v5588
        %v5624 = vadd.f32 %v5623, %v5589
        %v5625 = vadd.f32 %v5624, %v5590
        %v5626 = vadd.f32 %v5625, %v5591
        %v5627 = vadd.f32 %v5626, %v5592
        %v5628 = vadd.f32 %v5627, %v5593
        %v5629 = vadd.f32 %v5628, %v5594
        %v5630 = vadd.f32 %v5629, %v5595
        %v5631 = vadd.f32 %v5630, %v5596
        %v5632 = vadd.f32 %v5631, %v5597
        %v5633 = vadd.f32 %v5632, %v5598
        %v5634 = vadd.f32 %v5633, %v5599
        %v5635 = vadd.f32 %v5634, %v5600
        %v5636 = vadd.f32 %v5635, %v5601
        %v5637 = vadd.f32 %v5636, %v5602
        %v5638 = vrot.slane %v5637, 4
        %v5639 = vadd.f32 %v5637, %v5638
        %v5640 = vrot.slane %v5639, 2
        %v5641 = vadd.f32 %v5639, %v5640
        %v5642 = vrot.slane %v5641, 1
        %v5643 = vadd.f32 %v5641, %v5642
        %v5644 = vmul.f32 %v5643, 0.00390625
        %v5645 = vmul.f32 %v5530, %v5530
        %v5646 = vsub.f32 %v5644, %v5645
        %v5647 = vsub.f32 %v5345, %v5530
        %v5648 = vsub.f32 %v5346, %v5530
        %v5649 = vsub.f32 %v5347, %v5530
        %v5650 = vsub.f32 %v5348, %v5530
        %v5651 = vsub.f32 %v5349, %v5530
        %v5652 = vsub.f32 %v5350, %v5530
        %v5653 = vsub.f32 %v5351, %v5530
        %v5654 = vsub.f32 %v5352, %v5530
        %v5655 = vsub.f32 %v5353, %v5530
        %v5656 = vsub.f32 %v5354, %v5530
        %v5657 = vsub.f32 %v5355, %v5530
        %v5658 = vsub.f32 %v5356, %v5530
        %v5659 = vsub.f32 %v5357, %v5530
        %v5660 = vsub.f32 %v5358, %v5530
        %v5661 = vsub.f32 %v5359, %v5530
        %v5662 = vsub.f32 %v5360, %v5530
        %v5663 = vsub.f32 %v5361, %v5530
        %v5664 = vsub.f32 %v5362, %v5530
        %v5665 = vsub.f32 %v5363, %v5530
        %v5666 = vsub.f32 %v5364, %v5530
        %v5667 = vsub.f32 %v5365, %v5530
        %v5668 = vsub.f32 %v5366, %v5530
        %v5669 = vsub.f32 %v5367, %v5530
        %v5670 = vsub.f32 %v5368, %v5530
        %v5671 = vsub.f32 %v5369, %v5530
        %v5672 = vsub.f32 %v5370, %v5530
        %v5673 = vsub.f32 %v5371, %v5530
        %v5674 = vsub.f32 %v5372, %v5530
        %v5675 = vsub.f32 %v5373, %v5530
        %v5676 = vsub.f32 %v5374, %v5530
        %v5677 = vsub.f32 %v5375, %v5530
        %v5678 = vsub.f32 %v5376, %v5530
        %v5679 = vsub.f32 %v5377, %v5530
        %v5680 = vsub.f32 %v5378, %v5530
        %v5681 = vsub.f32 %v5379, %v5530
        %v5682 = vsub.f32 %v5380, %v5530
        %v5683 = vadd.f32 %v5646, 1e-05
        %v5684 = vrsqrt.pop %v5683
        %v5685 = vmul.f32 %v5647, %v5684
        %v5686 = vmul.f32 %v5648, %v5684
        %v5687 = vmul.f32 %v5649, %v5684
        %v5688 = vmul.f32 %v5650, %v5684
        %v5689 = vmul.f32 %v5651, %v5684
        %v5690 = vmul.f32 %v5652, %v5684
        %v5691 = vmul.f32 %v5653, %v5684
        %v5692 = vmul.f32 %v5654, %v5684
        %v5693 = vmul.f32 %v5655, %v5684
        %v5694 = vmul.f32 %v5656, %v5684
        %v5695 = vmul.f32 %v5657, %v5684
        %v5696 = vmul.f32 %v5658, %v5684
        %v5697 = vmul.f32 %v5659, %v5684
        %v5698 = vmul.f32 %v5660, %v5684
        %v5699 = vmul.f32 %v5661, %v5684
        %v5700 = vmul.f32 %v5662, %v5684
        %v5701 = vmul.f32 %v5663, %v5684
        %v5702 = vmul.f32 %v5664, %v5684
        %v5703 = vmul.f32 %v5665, %v5684
        %v5704 = vmul.f32 %v5666, %v5684
        %v5705 = vmul.f32 %v5667, %v5684
        %v5706 = vmul.f32 %v5668, %v5684
        %v5707 = vmul.f32 %v5669, %v5684
        %v5708 = vmul.f32 %v5670, %v5684
        %v5709 = vmul.f32 %v5671, %v5684
        %v5710 = vmul.f32 %v5672, %v5684
        %v5711 = vmul.f32 %v5673, %v5684
        %v5712 = vmul.f32 %v5674, %v5684
        %v5713 = vmul.f32 %v5675, %v5684
        %v5714 = vmul.f32 %v5676, %v5684
        %v5715 = vmul.f32 %v5677, %v5684
        %v5716 = vmul.f32 %v5678, %v5684
        %v5717 = vmul.f32 %v5679, %v5684
        %v5718 = vmul.f32 %v5680, %v5684
        %v5719 = vmul.f32 %v5681, %v5684
        %v5720 = vmul.f32 %v5682, %v5684
        %v5721 = vmax.f32 %v5685, 0.0
        %v5722 = vmax.f32 %v5686, 0.0
        %v5723 = vmax.f32 %v5687, 0.0
        %v5724 = vmax.f32 %v5688, 0.0
        %v5725 = vmax.f32 %v5689, 0.0
        %v5726 = vmax.f32 %v5690, 0.0
        %v5727 = vmax.f32 %v5691, 0.0
        %v5728 = vmax.f32 %v5692, 0.0
        %v5729 = vmax.f32 %v5693, 0.0
        %v5730 = vmax.f32 %v5694, 0.0
        %v5731 = vmax.f32 %v5695, 0.0
        %v5732 = vmax.f32 %v5696, 0.0
        %v5733 = vmax.f32 %v5697, 0.0
        %v5734 = vmax.f32 %v5698, 0.0
        %v5735 = vmax.f32 %v5699, 0.0
        %v5736 = vmax.f32 %v5700, 0.0
        %v5737 = vmax.f32 %v5701, 0.0
        %v5738 = vmax.f32 %v5702, 0.0
        %v5739 = vmax.f32 %v5703, 0.0
        %v5740 = vmax.f32 %v5704, 0.0
        %v5741 = vmax.f32 %v5705, 0.0
        %v5742 = vmax.f32 %v5706, 0.0
        %v5743 = vmax.f32 %v5707, 0.0
        %v5744 = vmax.f32 %v5708, 0.0
        %v5745 = vmax.f32 %v5709, 0.0
        %v5746 = vmax.f32 %v5710, 0.0
        %v5747 = vmax.f32 %v5711, 0.0
        %v5748 = vmax.f32 %v5712, 0.0
        %v5749 = vmax.f32 %v5713, 0.0
        %v5750 = vmax.f32 %v5714, 0.0
        %v5751 = vmax.f32 %v5715, 0.0
        %v5752 = vmax.f32 %v5716, 0.0
        %v5753 = vmax.f32 %v5717, 0.0
        %v5754 = vmax.f32 %v5718, 0.0
        %v5755 = vmax.f32 %v5719, 0.0
        %v5756 = vmax.f32 %v5720, 0.0
        %v5757 = vpack.c.bf16 %v5722, %v5721
        %v5758 = vpack.c.bf16 %v5724, %v5723
        %v5759 = vpack.c.bf16 %v5726, %v5725
        %v5760 = vpack.c.bf16 %v5728, %v5727
        %v5761 = vpack.c.bf16 %v5730, %v5729
        %v5762 = vpack.c.bf16 %v5732, %v5731
        %v5763 = vpack.c.bf16 %v5734, %v5733
        %v5764 = vpack.c.bf16 %v5736, %v5735
        %v5765 = vpack.c.bf16 %v5738, %v5737
        %v5766 = vpack.c.bf16 %v5740, %v5739
        %v5767 = vpack.c.bf16 %v5742, %v5741
        %v5768 = vpack.c.bf16 %v5744, %v5743
        %v5769 = vpack.c.bf16 %v5746, %v5745
        %v5770 = vpack.c.bf16 %v5748, %v5747
        %v5771 = vpack.c.bf16 %v5750, %v5749
        %v5772 = vpack.c.bf16 %v5752, %v5751
        %v5773 = vpack.c.bf16 %v5754, %v5753
        %v5774 = vpack.c.bf16 %v5756, %v5755
        %v5793 = vunpack.c.l.b16 %v5757
        %v5794 = vunpack.c.h.b16 %v5757
        %v5795 = vunpack.c.l.b16 %v5758
        %v5796 = vunpack.c.h.b16 %v5758
        %v5797 = vunpack.c.l.b16 %v5759
        %v5798 = vunpack.c.h.b16 %v5759
        %v5799 = vunpack.c.l.b16 %v5760
        %v5800 = vunpack.c.h.b16 %v5760
        %v5801 = vunpack.c.l.b16 %v5761
        %v5802 = vunpack.c.h.b16 %v5761
        %v5803 = vunpack.c.l.b16 %v5762
        %v5804 = vunpack.c.h.b16 %v5762
        %v5805 = vunpack.c.l.b16 %v5763
        %v5806 = vunpack.c.h.b16 %v5763
        %v5807 = vunpack.c.l.b16 %v5764
        %v5808 = vunpack.c.h.b16 %v5764
        %v5809 = vunpack.c.l.b16 %v5765
        %v5810 = vunpack.c.h.b16 %v5765
        %v5811 = vunpack.c.l.b16 %v5766
        %v5812 = vunpack.c.h.b16 %v5766
        %v5813 = vunpack.c.l.b16 %v5767
        %v5814 = vunpack.c.h.b16 %v5767
        %v5815 = vunpack.c.l.b16 %v5768
        %v5816 = vunpack.c.h.b16 %v5768
        %v5817 = vunpack.c.l.b16 %v5769
        %v5818 = vunpack.c.h.b16 %v5769
        %v5819 = vunpack.c.l.b16 %v5770
        %v5820 = vunpack.c.h.b16 %v5770
        %v5821 = vunpack.c.l.b16 %v5771
        %v5822 = vunpack.c.h.b16 %v5771
        %v5823 = vunpack.c.l.b16 %v5772
        %v5824 = vunpack.c.h.b16 %v5772
        %v5825 = vunpack.c.l.b16 %v5773
        %v5826 = vunpack.c.h.b16 %v5773
        %v5827 = vunpack.c.l.b16 %v5774
        %v5828 = vunpack.c.h.b16 %v5774
        %v5829 = vpack.c.b16 %v5793, %v5793
        %v5830 = vpack.c.b16 %v5794, %v5794
        %v5831 = vpack.c.b16 %v5795, %v5795
        %v5832 = vpack.c.b16 %v5796, %v5796
        %v5833 = vpack.c.b16 %v5797, %v5797
        %v5834 = vpack.c.b16 %v5798, %v5798
        %v5835 = vpack.c.b16 %v5799, %v5799
        %v5836 = vpack.c.b16 %v5800, %v5800
        %v5837 = vpack.c.b16 %v5801, %v5801
        %v5838 = vpack.c.b16 %v5802, %v5802
        %v5839 = vpack.c.b16 %v5803, %v5803
        %v5840 = vpack.c.b16 %v5804, %v5804
        %v5841 = vpack.c.b16 %v5805, %v5805
        %v5842 = vpack.c.b16 %v5806, %v5806
        %v5843 = vpack.c.b16 %v5807, %v5807
        %v5844 = vpack.c.b16 %v5808, %v5808
        %v5845 = vpack.c.b16 %v5809, %v5809
        %v5846 = vpack.c.b16 %v5810, %v5810
        %v5847 = vpack.c.b16 %v5811, %v5811
        %v5848 = vpack.c.b16 %v5812, %v5812
        %v5849 = vpack.c.b16 %v5813, %v5813
        %v5850 = vpack.c.b16 %v5814, %v5814
        %v5851 = vpack.c.b16 %v5815, %v5815
        %v5852 = vpack.c.b16 %v5816, %v5816
        %v5853 = vpack.c.b16 %v5817, %v5817
        %v5854 = vpack.c.b16 %v5818, %v5818
        %v5855 = vpack.c.b16 %v5819, %v5819
        %v5856 = vpack.c.b16 %v5820, %v5820
        %v5857 = vpack.c.b16 %v5821, %v5821
        %v5858 = vpack.c.b16 %v5822, %v5822
        %v5859 = vpack.c.b16 %v5823, %v5823
        %v5860 = vpack.c.b16 %v5824, %v5824
        %v5861 = vpack.c.b16 %v5825, %v5825
        %v5862 = vpack.c.b16 %v5826, %v5826
        %v5863 = vpack.c.b16 %v5827, %v5827
        %v5864 = vpack.c.b16 %v5828, %v5828
        %v5866 = vshrl.u32 %v5829, 16
        %v5868 = vrot.slane %v5866, 6
        %v5869 = vshll.u32 %v5829, 16
        %v5871 = vrot.slane %v5869, 7
        %v5872 = vor.u32 %v5868, %v5871
        %v5873 = vrot.slane %v5872, 4
        %v5875 = vshrl.u32 %v5830, 16
        %v5877 = vrot.slane %v5875, 6
        %v5878 = vshll.u32 %v5830, 16
        %v5880 = vrot.slane %v5878, 7
        %v5881 = vor.u32 %v5877, %v5880
        %v5882 = vsel %vm931, %v5873, %v5881
        %v5883 = vrot.slane %v5881, 4
        %v5885 = vshrl.u32 %v5831, 16
        %v5887 = vrot.slane %v5885, 6
        %v5888 = vshll.u32 %v5831, 16
        %v5890 = vrot.slane %v5888, 7
        %v5891 = vor.u32 %v5887, %v5890
        %v5892 = vsel %vm931, %v5883, %v5891
        %v5893 = vrot.slane %v5891, 4
        %v5895 = vshrl.u32 %v5832, 16
        %v5897 = vrot.slane %v5895, 6
        %v5898 = vshll.u32 %v5832, 16
        %v5900 = vrot.slane %v5898, 7
        %v5901 = vor.u32 %v5897, %v5900
        %v5902 = vsel %vm931, %v5893, %v5901
        %v5903 = vrot.slane %v5901, 4
        %v5905 = vshrl.u32 %v5833, 16
        %v5907 = vrot.slane %v5905, 6
        %v5908 = vshll.u32 %v5833, 16
        %v5910 = vrot.slane %v5908, 7
        %v5911 = vor.u32 %v5907, %v5910
        %v5912 = vsel %vm931, %v5903, %v5911
        %v5913 = vrot.slane %v5911, 4
        %v5915 = vshrl.u32 %v5834, 16
        %v5917 = vrot.slane %v5915, 6
        %v5918 = vshll.u32 %v5834, 16
        %v5920 = vrot.slane %v5918, 7
        %v5921 = vor.u32 %v5917, %v5920
        %v5922 = vsel %vm931, %v5913, %v5921
        %v5923 = vrot.slane %v5921, 4
        %v5925 = vshrl.u32 %v5835, 16
        %v5927 = vrot.slane %v5925, 6
        %v5928 = vshll.u32 %v5835, 16
        %v5930 = vrot.slane %v5928, 7
        %v5931 = vor.u32 %v5927, %v5930
        %v5932 = vsel %vm931, %v5923, %v5931
        %v5933 = vrot.slane %v5931, 4
        %v5935 = vshrl.u32 %v5836, 16
        %v5937 = vrot.slane %v5935, 6
        %v5938 = vshll.u32 %v5836, 16
        %v5940 = vrot.slane %v5938, 7
        %v5941 = vor.u32 %v5937, %v5940
        %v5942 = vsel %vm931, %v5933, %v5941
        %v5943 = vrot.slane %v5941, 4
        %v5945 = vshrl.u32 %v5837, 16
        %v5947 = vrot.slane %v5945, 6
        %v5948 = vshll.u32 %v5837, 16
        %v5950 = vrot.slane %v5948, 7
        %v5951 = vor.u32 %v5947, %v5950
        %v5952 = vsel %vm931, %v5943, %v5951
        %v5953 = vrot.slane %v5951, 4
        %v5955 = vshrl.u32 %v5838, 16
        %v5957 = vrot.slane %v5955, 6
        %v5958 = vshll.u32 %v5838, 16
        %v5960 = vrot.slane %v5958, 7
        %v5961 = vor.u32 %v5957, %v5960
        %v5962 = vsel %vm931, %v5953, %v5961
        %v5963 = vrot.slane %v5961, 4
        %v5965 = vshrl.u32 %v5839, 16
        %v5967 = vrot.slane %v5965, 6
        %v5968 = vshll.u32 %v5839, 16
        %v5970 = vrot.slane %v5968, 7
        %v5971 = vor.u32 %v5967, %v5970
        %v5972 = vsel %vm931, %v5963, %v5971
        %v5973 = vrot.slane %v5971, 4
        %v5975 = vshrl.u32 %v5840, 16
        %v5977 = vrot.slane %v5975, 6
        %v5978 = vshll.u32 %v5840, 16
        %v5980 = vrot.slane %v5978, 7
        %v5981 = vor.u32 %v5977, %v5980
        %v5982 = vsel %vm931, %v5973, %v5981
        %v5983 = vrot.slane %v5981, 4
        %v5985 = vshrl.u32 %v5841, 16
        %v5987 = vrot.slane %v5985, 6
        %v5988 = vshll.u32 %v5841, 16
        %v5990 = vrot.slane %v5988, 7
        %v5991 = vor.u32 %v5987, %v5990
        %v5992 = vsel %vm931, %v5983, %v5991
        %v5993 = vrot.slane %v5991, 4
        %v5995 = vshrl.u32 %v5842, 16
        %v5997 = vrot.slane %v5995, 6
        %v5998 = vshll.u32 %v5842, 16
        %v6000 = vrot.slane %v5998, 7
        %v6001 = vor.u32 %v5997, %v6000
        %v6002 = vsel %vm931, %v5993, %v6001
        %v6003 = vrot.slane %v6001, 4
        %v6005 = vshrl.u32 %v5843, 16
        %v6007 = vrot.slane %v6005, 6
        %v6008 = vshll.u32 %v5843, 16
        %v6010 = vrot.slane %v6008, 7
        %v6011 = vor.u32 %v6007, %v6010
        %v6012 = vsel %vm931, %v6003, %v6011
        %v6013 = vrot.slane %v6011, 4
        %v6015 = vshrl.u32 %v5844, 16
        %v6017 = vrot.slane %v6015, 6
        %v6018 = vshll.u32 %v5844, 16
        %v6020 = vrot.slane %v6018, 7
        %v6021 = vor.u32 %v6017, %v6020
        %v6022 = vsel %vm931, %v6013, %v6021
        %v6023 = vrot.slane %v6021, 4
        %v6025 = vshrl.u32 %v5845, 16
        %v6027 = vrot.slane %v6025, 6
        %v6028 = vshll.u32 %v5845, 16
        %v6030 = vrot.slane %v6028, 7
        %v6031 = vor.u32 %v6027, %v6030
        %v6032 = vsel %vm931, %v6023, %v6031
        %v6033 = vrot.slane %v6031, 4
        %v6035 = vshrl.u32 %v5846, 16
        %v6037 = vrot.slane %v6035, 6
        %v6038 = vshll.u32 %v5846, 16
        %v6040 = vrot.slane %v6038, 7
        %v6041 = vor.u32 %v6037, %v6040
        %v6042 = vsel %vm931, %v6033, %v6041
        %v6043 = vrot.slane %v6041, 4
        %v6045 = vshrl.u32 %v5847, 16
        %v6047 = vrot.slane %v6045, 6
        %v6048 = vshll.u32 %v5847, 16
        %v6050 = vrot.slane %v6048, 7
        %v6051 = vor.u32 %v6047, %v6050
        %v6052 = vsel %vm931, %v6043, %v6051
        %v6053 = vrot.slane %v6051, 4
        %v6055 = vshrl.u32 %v5848, 16
        %v6057 = vrot.slane %v6055, 6
        %v6058 = vshll.u32 %v5848, 16
        %v6060 = vrot.slane %v6058, 7
        %v6061 = vor.u32 %v6057, %v6060
        %v6062 = vsel %vm931, %v6053, %v6061
        %v6063 = vrot.slane %v6061, 4
        %v6065 = vshrl.u32 %v5849, 16
        %v6067 = vrot.slane %v6065, 6
        %v6068 = vshll.u32 %v5849, 16
        %v6070 = vrot.slane %v6068, 7
        %v6071 = vor.u32 %v6067, %v6070
        %v6072 = vsel %vm931, %v6063, %v6071
        %v6073 = vrot.slane %v6071, 4
        %v6075 = vshrl.u32 %v5850, 16
        %v6077 = vrot.slane %v6075, 6
        %v6078 = vshll.u32 %v5850, 16
        %v6080 = vrot.slane %v6078, 7
        %v6081 = vor.u32 %v6077, %v6080
        %v6082 = vsel %vm931, %v6073, %v6081
        %v6083 = vrot.slane %v6081, 4
        %v6085 = vshrl.u32 %v5851, 16
        %v6087 = vrot.slane %v6085, 6
        %v6088 = vshll.u32 %v5851, 16
        %v6090 = vrot.slane %v6088, 7
        %v6091 = vor.u32 %v6087, %v6090
        %v6092 = vsel %vm931, %v6083, %v6091
        %v6093 = vrot.slane %v6091, 4
        %v6095 = vshrl.u32 %v5852, 16
        %v6097 = vrot.slane %v6095, 6
        %v6098 = vshll.u32 %v5852, 16
        %v6100 = vrot.slane %v6098, 7
        %v6101 = vor.u32 %v6097, %v6100
        %v6102 = vsel %vm931, %v6093, %v6101
        %v6103 = vrot.slane %v6101, 4
        %v6105 = vshrl.u32 %v5853, 16
        %v6107 = vrot.slane %v6105, 6
        %v6108 = vshll.u32 %v5853, 16
        %v6110 = vrot.slane %v6108, 7
        %v6111 = vor.u32 %v6107, %v6110
        %v6112 = vsel %vm931, %v6103, %v6111
        %v6113 = vrot.slane %v6111, 4
        %v6115 = vshrl.u32 %v5854, 16
        %v6117 = vrot.slane %v6115, 6
        %v6118 = vshll.u32 %v5854, 16
        %v6120 = vrot.slane %v6118, 7
        %v6121 = vor.u32 %v6117, %v6120
        %v6122 = vsel %vm931, %v6113, %v6121
        %v6123 = vrot.slane %v6121, 4
        %v6125 = vshrl.u32 %v5855, 16
        %v6127 = vrot.slane %v6125, 6
        %v6128 = vshll.u32 %v5855, 16
        %v6130 = vrot.slane %v6128, 7
        %v6131 = vor.u32 %v6127, %v6130
        %v6132 = vsel %vm931, %v6123, %v6131
        %v6133 = vrot.slane %v6131, 4
        %v6135 = vshrl.u32 %v5856, 16
        %v6137 = vrot.slane %v6135, 6
        %v6138 = vshll.u32 %v5856, 16
        %v6140 = vrot.slane %v6138, 7
        %v6141 = vor.u32 %v6137, %v6140
        %v6142 = vsel %vm931, %v6133, %v6141
        %v6143 = vrot.slane %v6141, 4
        %v6145 = vshrl.u32 %v5857, 16
        %v6147 = vrot.slane %v6145, 6
        %v6148 = vshll.u32 %v5857, 16
        %v6150 = vrot.slane %v6148, 7
        %v6151 = vor.u32 %v6147, %v6150
        %v6152 = vsel %vm931, %v6143, %v6151
        %v6153 = vrot.slane %v6151, 4
        %v6155 = vshrl.u32 %v5858, 16
        %v6157 = vrot.slane %v6155, 6
        %v6158 = vshll.u32 %v5858, 16
        %v6160 = vrot.slane %v6158, 7
        %v6161 = vor.u32 %v6157, %v6160
        %v6162 = vsel %vm931, %v6153, %v6161
        %v6163 = vrot.slane %v6161, 4
        %v6165 = vshrl.u32 %v5859, 16
        %v6167 = vrot.slane %v6165, 6
        %v6168 = vshll.u32 %v5859, 16
        %v6170 = vrot.slane %v6168, 7
        %v6171 = vor.u32 %v6167, %v6170
        %v6172 = vsel %vm931, %v6163, %v6171
        %v6173 = vrot.slane %v6171, 4
        %v6175 = vshrl.u32 %v5860, 16
        %v6177 = vrot.slane %v6175, 6
        %v6178 = vshll.u32 %v5860, 16
        %v6180 = vrot.slane %v6178, 7
        %v6181 = vor.u32 %v6177, %v6180
        %v6182 = vsel %vm931, %v6173, %v6181
        %v6183 = vrot.slane %v6181, 4
        %v6185 = vshrl.u32 %v5861, 16
        %v6187 = vrot.slane %v6185, 6
        %v6188 = vshll.u32 %v5861, 16
        %v6190 = vrot.slane %v6188, 7
        %v6191 = vor.u32 %v6187, %v6190
        %v6192 = vsel %vm931, %v6183, %v6191
        %v6193 = vrot.slane %v6191, 4
        %v6195 = vshrl.u32 %v5862, 16
        %v6197 = vrot.slane %v6195, 6
        %v6198 = vshll.u32 %v5862, 16
        %v6200 = vrot.slane %v6198, 7
        %v6201 = vor.u32 %v6197, %v6200
        %v6202 = vsel %vm931, %v6193, %v6201
        %v6203 = vrot.slane %v6201, 4
        %v6205 = vshrl.u32 %v5863, 16
        %v6207 = vrot.slane %v6205, 6
        %v6208 = vshll.u32 %v5863, 16
        %v6210 = vrot.slane %v6208, 7
        %v6211 = vor.u32 %v6207, %v6210
        %v6212 = vsel %vm931, %v6203, %v6211
        %v6213 = vrot.slane %v6211, 4
        %v6215 = vshrl.u32 %v5864, 16
        %v6217 = vrot.slane %v6215, 6
        %v6218 = vshll.u32 %v5864, 16
        %v6220 = vrot.slane %v6218, 7
        %v6221 = vor.u32 %v6217, %v6220
        %v6222 = vsel %vm931, %v6213, %v6221
        %v6223 = vrot.slane %v6221, 4
        %v6261 = vsel %vm956, %v5872, %v2866
        %6262 = vst [vmem:[#allocation2 + $0x8] sm:$0xe] %v6261
        %6263 = vst [vmem:[#allocation2 + $0xc] sm:$0xf] %v5882
        %6264 = vst [vmem:[#allocation2 + $0x10] sm:$0xf] %v5892
        %6265 = vst [vmem:[#allocation2 + $0x14] sm:$0xf] %v5902
        %6266 = vst [vmem:[#allocation2 + $0x18] sm:$0xf] %v5912
        %6267 = vst [vmem:[#allocation2 + $0x1c] sm:$0xf] %v5922
        %6268 = vst [vmem:[#allocation2 + $0x20] sm:$0xf] %v5932
        %6269 = vst [vmem:[#allocation2 + $0x24] sm:$0xf] %v5942
        %6270 = vst [vmem:[#allocation2 + $0x28] sm:$0xf] %v5952
        %6271 = vst [vmem:[#allocation2 + $0x2c] sm:$0xf] %v5962
        %6272 = vst [vmem:[#allocation2 + $0x30] sm:$0xf] %v5972
        %6273 = vst [vmem:[#allocation2 + $0x34] sm:$0xf] %v5982
        %6274 = vst [vmem:[#allocation2 + $0x38] sm:$0xf] %v5992
        %6275 = vst [vmem:[#allocation2 + $0x3c] sm:$0xf] %v6002
        %6276 = vst [vmem:[#allocation2 + $0x40] sm:$0xf] %v6012
        %6277 = vst [vmem:[#allocation2 + $0x44] sm:$0xf] %v6022
        %6278 = vst [vmem:[#allocation2 + $0x48] sm:$0xf] %v6032
        %6279 = vst [vmem:[#allocation2 + $0x4c] sm:$0xf] %v6042
        %6280 = vst [vmem:[#allocation2 + $0x50] sm:$0xf] %v6052
        %6281 = vst [vmem:[#allocation2 + $0x54] sm:$0xf] %v6062
        %6282 = vst [vmem:[#allocation2 + $0x58] sm:$0xf] %v6072
        %6283 = vst [vmem:[#allocation2 + $0x5c] sm:$0xf] %v6082
        %6284 = vst [vmem:[#allocation2 + $0x60] sm:$0xf] %v6092
        %6285 = vst [vmem:[#allocation2 + $0x64] sm:$0xf] %v6102
        %6286 = vst [vmem:[#allocation2 + $0x68] sm:$0xf] %v6112
        %6287 = vst [vmem:[#allocation2 + $0x6c] sm:$0xf] %v6122
        %6288 = vst [vmem:[#allocation2 + $0x70] sm:$0xf] %v6132
        %6289 = vst [vmem:[#allocation2 + $0x74] sm:$0xf] %v6142
        %6290 = vst [vmem:[#allocation2 + $0x78] sm:$0xf] %v6152
        %6291 = vst [vmem:[#allocation2 + $0x7c] sm:$0xf] %v6162
        %6292 = vst [vmem:[#allocation2 + $0x80] sm:$0xf] %v6172
        %6293 = vst [vmem:[#allocation2 + $0x84] sm:$0xf] %v6182
        %6294 = vst [vmem:[#allocation2 + $0x88] sm:$0xf] %v6192
        %6295 = vst [vmem:[#allocation2 + $0x8c] sm:$0xf] %v6202
        %6296 = vst [vmem:[#allocation2 + $0x90] sm:$0xf] %v6212
        %6297 = vst [vmem:[#allocation2 + $0x94] sm:$0xf] %v6222
        %v6298 = vld [vmem:[#allocation2 + $0x98] sm:$0x3]
        %v6299 = vsel %vm962, %v6223, %v6298
        %6300 = vst [vmem:[#allocation2 + $0x98] sm:$0x3] %v6299
        %v6301 = vrot.slane %v5866, 7
        %v6303 = vld [vmem:[#allocation2 + $0x8] sm:$0x2]
        %v6304 = vsel %vm969, %v6301, %v6303
        %6305 = vst [vmem:[#allocation2 + $0x8] sm:$0x2] %v6304
        %v6306 = vrot.slane %v5878, 6
        %v6307 = vrot.slane %v6306, 4
        %v6309 = vld [vmem:[#allocation2 + $0x10] sm:$0x2]
        %v6310 = vsel %vm976, %v6307, %v6309
        %6311 = vst [vmem:[#allocation2 + $0x10] sm:$0x2] %v6310
        %v6312 = vrot.slane %v5885, 7
        %v6314 = vld [vmem:[#allocation2 + $0x10] sm:$0x4]
        %v6315 = vsel %vm1025, %v6312, %v6314
        %6316 = vst [vmem:[#allocation2 + $0x10] sm:$0x4] %v6315
        %v6317 = vrot.slane %v5908, 6
        %v6319 = vld [vmem:[#allocation2 + $0x18] sm:$0x4]
        %v6320 = vsel %vm1032, %v6317, %v6319
        %6321 = vst [vmem:[#allocation2 + $0x18] sm:$0x4] %v6320
        %v6322 = vrot.slane %v5905, 7
        %v6324 = vld [vmem:[#allocation2 + $0x18] sm:$0x8]
        %v6325 = vsel %vm1080, %v6322, %v6324
        %6326 = vst [vmem:[#allocation2 + $0x18] sm:$0x8] %v6325
        %v6327 = vrot.slane %v5928, 6
        %v6329 = vld [vmem:[#allocation2 + $0x20] sm:$0x8]
        %v6330 = vsel %vm1068, %v6327, %v6329
        %6331 = vst [vmem:[#allocation2 + $0x20] sm:$0x8] %v6330
        %v6332 = vrot.slane %v5925, 7
        %v6333 = vrot.slane %v6332, 4
        %v6335 = vld [vmem:[#allocation2 + $0x24] sm:$0x1]
        %v6336 = vsel %vm1123, %v6333, %v6335
        %6337 = vst [vmem:[#allocation2 + $0x24] sm:$0x1] %v6336
        %v6338 = vrot.slane %v5948, 6
        %v6339 = vrot.slane %v6338, 4
        %v6341 = vld [vmem:[#allocation2 + $0x2c] sm:$0x1]
        %v6342 = vsel %vm1136, %v6339, %v6341
        %6343 = vst [vmem:[#allocation2 + $0x2c] sm:$0x1] %v6342
        %v6344 = vrot.slane %v5955, 7
        %v6346 = vld [vmem:[#allocation2 + $0x2c] sm:$0x2]
        %v6347 = vsel %vm969, %v6344, %v6346
        %6348 = vst [vmem:[#allocation2 + $0x2c] sm:$0x2] %v6347
        %v6349 = vrot.slane %v5968, 6
        %v6350 = vrot.slane %v6349, 4
        %v6352 = vld [vmem:[#allocation2 + $0x34] sm:$0x2]
        %v6353 = vsel %vm976, %v6350, %v6352
        %6354 = vst [vmem:[#allocation2 + $0x34] sm:$0x2] %v6353
        %v6355 = vrot.slane %v5975, 7
        %v6357 = vld [vmem:[#allocation2 + $0x34] sm:$0x4]
        %v6358 = vsel %vm1025, %v6355, %v6357
        %6359 = vst [vmem:[#allocation2 + $0x34] sm:$0x4] %v6358
        %v6360 = vrot.slane %v5998, 6
        %v6362 = vld [vmem:[#allocation2 + $0x3c] sm:$0x4]
        %v6363 = vsel %vm1032, %v6360, %v6362
        %6364 = vst [vmem:[#allocation2 + $0x3c] sm:$0x4] %v6363
        %v6365 = vrot.slane %v5995, 7
        %v6367 = vld [vmem:[#allocation2 + $0x3c] sm:$0x8]
        %v6368 = vsel %vm1080, %v6365, %v6367
        %6369 = vst [vmem:[#allocation2 + $0x3c] sm:$0x8] %v6368
        %v6370 = vrot.slane %v6018, 6
        %v6372 = vld [vmem:[#allocation2 + $0x44] sm:$0x8]
        %v6373 = vsel %vm1068, %v6370, %v6372
        %6374 = vst [vmem:[#allocation2 + $0x44] sm:$0x8] %v6373
        %v6375 = vrot.slane %v6015, 7
        %v6376 = vrot.slane %v6375, 4
        %v6378 = vld [vmem:[#allocation2 + $0x48] sm:$0x1]
        %v6379 = vsel %vm1123, %v6376, %v6378
        %6380 = vst [vmem:[#allocation2 + $0x48] sm:$0x1] %v6379
        %v6381 = vrot.slane %v6038, 6
        %v6382 = vrot.slane %v6381, 4
        %v6384 = vld [vmem:[#allocation2 + $0x50] sm:$0x1]
        %v6385 = vsel %vm1136, %v6382, %v6384
        %6386 = vst [vmem:[#allocation2 + $0x50] sm:$0x1] %v6385
        %v6387 = vrot.slane %v6045, 7
        %v6389 = vld [vmem:[#allocation2 + $0x50] sm:$0x2]
        %v6390 = vsel %vm969, %v6387, %v6389
        %6391 = vst [vmem:[#allocation2 + $0x50] sm:$0x2] %v6390
        %v6392 = vrot.slane %v6058, 6
        %v6393 = vrot.slane %v6392, 4
        %v6395 = vld [vmem:[#allocation2 + $0x58] sm:$0x2]
        %v6396 = vsel %vm976, %v6393, %v6395
        %6397 = vst [vmem:[#allocation2 + $0x58] sm:$0x2] %v6396
        %v6398 = vrot.slane %v6065, 7
        %v6400 = vld [vmem:[#allocation2 + $0x58] sm:$0x4]
        %v6401 = vsel %vm1025, %v6398, %v6400
        %6402 = vst [vmem:[#allocation2 + $0x58] sm:$0x4] %v6401
        %v6403 = vrot.slane %v6088, 6
        %v6405 = vld [vmem:[#allocation2 + $0x60] sm:$0x4]
        %v6406 = vsel %vm1032, %v6403, %v6405
        %6407 = vst [vmem:[#allocation2 + $0x60] sm:$0x4] %v6406
        %v6408 = vrot.slane %v6085, 7
        %v6410 = vld [vmem:[#allocation2 + $0x60] sm:$0x8]
        %v6411 = vsel %vm1080, %v6408, %v6410
        %6412 = vst [vmem:[#allocation2 + $0x60] sm:$0x8] %v6411
        %v6413 = vrot.slane %v6108, 6
        %v6415 = vld [vmem:[#allocation2 + $0x68] sm:$0x8]
        %v6416 = vsel %vm1068, %v6413, %v6415
        %6417 = vst [vmem:[#allocation2 + $0x68] sm:$0x8] %v6416
        %v6418 = vrot.slane %v6105, 7
        %v6419 = vrot.slane %v6418, 4
        %v6421 = vld [vmem:[#allocation2 + $0x6c] sm:$0x1]
        %v6422 = vsel %vm1123, %v6419, %v6421
        %6423 = vst [vmem:[#allocation2 + $0x6c] sm:$0x1] %v6422
        %v6424 = vrot.slane %v6128, 6
        %v6425 = vrot.slane %v6424, 4
        %v6427 = vld [vmem:[#allocation2 + $0x74] sm:$0x1]
        %v6428 = vsel %vm1136, %v6425, %v6427
        %6429 = vst [vmem:[#allocation2 + $0x74] sm:$0x1] %v6428
        %v6430 = vrot.slane %v6135, 7
        %v6432 = vld [vmem:[#allocation2 + $0x74] sm:$0x2]
        %v6433 = vsel %vm969, %v6430, %v6432
        %6434 = vst [vmem:[#allocation2 + $0x74] sm:$0x2] %v6433
        %v6435 = vrot.slane %v6148, 6
        %v6436 = vrot.slane %v6435, 4
        %v6438 = vld [vmem:[#allocation2 + $0x7c] sm:$0x2]
        %v6439 = vsel %vm976, %v6436, %v6438
        %6440 = vst [vmem:[#allocation2 + $0x7c] sm:$0x2] %v6439
        %v6441 = vrot.slane %v6155, 7
        %v6443 = vld [vmem:[#allocation2 + $0x7c] sm:$0x4]
        %v6444 = vsel %vm1025, %v6441, %v6443
        %6445 = vst [vmem:[#allocation2 + $0x7c] sm:$0x4] %v6444
        %v6446 = vrot.slane %v6178, 6
        %v6448 = vld [vmem:[#allocation2 + $0x84] sm:$0x4]
        %v6449 = vsel %vm1032, %v6446, %v6448
        %6450 = vst [vmem:[#allocation2 + $0x84] sm:$0x4] %v6449
        %v6451 = vrot.slane %v6175, 7
        %v6453 = vld [vmem:[#allocation2 + $0x84] sm:$0x8]
        %v6454 = vsel %vm1080, %v6451, %v6453
        %6455 = vst [vmem:[#allocation2 + $0x84] sm:$0x8] %v6454
        %v6456 = vrot.slane %v6198, 6
        %v6458 = vld [vmem:[#allocation2 + $0x8c] sm:$0x8]
        %v6459 = vsel %vm1068, %v6456, %v6458
        %6460 = vst [vmem:[#allocation2 + $0x8c] sm:$0x8] %v6459
        %v6461 = vrot.slane %v6195, 7
        %v6462 = vrot.slane %v6461, 4
        %v6464 = vld [vmem:[#allocation2 + $0x90] sm:$0x1]
        %v6465 = vsel %vm1123, %v6462, %v6464
        %6466 = vst [vmem:[#allocation2 + $0x90] sm:$0x1] %v6465
        %v6467 = vrot.slane %v6218, 6
        %v6468 = vrot.slane %v6467, 4
        %v6470 = vld [vmem:[#allocation2 + $0x98] sm:$0x1]
        %v6471 = vsel %vm1136, %v6468, %v6470
        %6472 = vst [vmem:[#allocation2 + $0x98] sm:$0x1] %v6471
        %v6473 = vrot.slane %v5885, 4
        %v6474 = vrot.slane %v5888, 5
        %v6475 = vor.u32 %v6473, %v6474
        %v6476 = vrot.slane %v6475, 4
        %v6477 = vrot.slane %v5898, 5
        %v6478 = vsel %vm1043, %v6476, %v6477
        %v6479 = vrot.slane %v5895, 4
        %v6480 = vor.u32 %v6479, %v6477
        %v6481 = vrot.slane %v6480, 4
        %v6482 = vrot.slane %v5908, 5
        %v6483 = vsel %vm1043, %v6481, %v6482
        %v6484 = vrot.slane %v5905, 4
        %v6485 = vrot.slane %v6484, 4
        %v6489 = vld [vmem:[#allocation2] sm:$0xf]
        %v6490 = vsel %vm1117, %v6478, %v6489
        %6491 = vst [vmem:[#allocation2] sm:$0xf] %v6490
        %6492 = vst [vmem:[#allocation2 + $0x4] sm:$0xf] %v6483
        %v6493 = vld [vmem:[#allocation2 + $0x8] sm:$0x1]
        %v6494 = vsel %vm1123, %v6485, %v6493
        %6495 = vst [vmem:[#allocation2 + $0x8] sm:$0x1] %v6494
        %v6496 = vrot.slane %v5885, 5
        %v6497 = vrot.slane %v6496, 4
        %v6499 = vld [vmem:[#allocation2] sm:$0x1]
        %v6500 = vsel %vm1123, %v6497, %v6499
        %6501 = vst [vmem:[#allocation2] sm:$0x1] %v6500
        %v6503 = vld [vmem:[#allocation2 + $0x8] sm:$0x1]
        %v6504 = vsel %vm1136, %v5908, %v6503
        %6505 = vst [vmem:[#allocation2 + $0x8] sm:$0x1] %v6504
        %v6506 = vrot.slane %v6175, 4
        %v6507 = vrot.slane %v6178, 5
        %v6508 = vor.u32 %v6506, %v6507
        %v6509 = vrot.slane %v6508, 4
        %v6510 = vrot.slane %v6188, 5
        %v6511 = vsel %vm1043, %v6509, %v6510
        %v6512 = vrot.slane %v6185, 4
        %v6513 = vor.u32 %v6512, %v6510
        %v6514 = vrot.slane %v6513, 4
        %v6515 = vrot.slane %v6198, 5
        %v6516 = vsel %vm1043, %v6514, %v6515
        %v6517 = vrot.slane %v6195, 4
        %v6518 = vor.u32 %v6517, %v6515
        %v6519 = vrot.slane %v6518, 4
        %v6523 = vld [vmem:[#allocation2 + $0x98] sm:$0xe]
        %v6524 = vsel %vm956, %v6511, %v6523
        %6525 = vst [vmem:[#allocation2 + $0x98] sm:$0xe] %v6524
        %6526 = vst [vmem:[#allocation2 + $0x9c] sm:$0xf] %v6516
        %v6527 = vld [vmem:[#allocation2 + $0xa0] sm:$0x3]
        %v6528 = vsel %vm962, %v6519, %v6527
        %6529 = vst [vmem:[#allocation2 + $0xa0] sm:$0x3] %v6528
        %v6530 = vrot.slane %v6175, 5
        %v6531 = vrot.slane %v6530, 4
        %v6533 = vld [vmem:[#allocation2 + $0x98] sm:$0x2]
        %v6534 = vsel %vm969, %v6531, %v6533
        %6535 = vst [vmem:[#allocation2 + $0x98] sm:$0x2] %v6534
        %v6537 = vld [vmem:[#allocation2 + $0xa0] sm:$0x2]
        %v6538 = vsel %vm976, %v6198, %v6537
        %6539 = vst [vmem:[#allocation2 + $0xa0] sm:$0x2] %v6538
        %v6540 = vld [vmem:[#allocation2] sm:$0xf]
        %v6541 = vld [vmem:[#allocation2 + $0x4] sm:$0xf]
        %v6542 = vld [vmem:[#allocation2 + $0x8] sm:$0xf]
        %v6543 = vld [vmem:[#allocation2 + $0xc] sm:$0xf]
        %v6544 = vld [vmem:[#allocation2 + $0x10] sm:$0xf]
        %v6545 = vld [vmem:[#allocation2 + $0x14] sm:$0xf]
        %v6546 = vld [vmem:[#allocation2 + $0x18] sm:$0xf]
        %v6547 = vld [vmem:[#allocation2 + $0x1c] sm:$0xf]
        %v6548 = vld [vmem:[#allocation2 + $0x20] sm:$0xf]
        %v6549 = vld [vmem:[#allocation2 + $0x24] sm:$0xf]
        %v6550 = vld [vmem:[#allocation2 + $0x28] sm:$0xf]
        %v6551 = vld [vmem:[#allocation2 + $0x2c] sm:$0xf]
        %v6552 = vld [vmem:[#allocation2 + $0x30] sm:$0xf]
        %v6553 = vld [vmem:[#allocation2 + $0x34] sm:$0xf]
        %v6554 = vld [vmem:[#allocation2 + $0x38] sm:$0xf]
        %v6555 = vld [vmem:[#allocation2 + $0x3c] sm:$0xf]
        %v6556 = vld [vmem:[#allocation2 + $0x40] sm:$0xf]
        %v6557 = vld [vmem:[#allocation2 + $0x44] sm:$0xf]
        %v6558 = vld [vmem:[#allocation2 + $0x48] sm:$0xf]
        %v6559 = vld [vmem:[#allocation2 + $0x4c] sm:$0xf]
        %v6560 = vld [vmem:[#allocation2 + $0x50] sm:$0xf]
        %v6561 = vld [vmem:[#allocation2 + $0x54] sm:$0xf]
        %v6562 = vld [vmem:[#allocation2 + $0x58] sm:$0xf]
        %v6563 = vld [vmem:[#allocation2 + $0x5c] sm:$0xf]
        %v6564 = vld [vmem:[#allocation2 + $0x60] sm:$0xf]
        %v6565 = vld [vmem:[#allocation2 + $0x64] sm:$0xf]
        %v6566 = vld [vmem:[#allocation2 + $0x68] sm:$0xf]
        %v6567 = vld [vmem:[#allocation2 + $0x6c] sm:$0xf]
        %v6568 = vld [vmem:[#allocation2 + $0x70] sm:$0xf]
        %v6569 = vld [vmem:[#allocation2 + $0x74] sm:$0xf]
        %v6570 = vld [vmem:[#allocation2 + $0x78] sm:$0xf]
        %v6571 = vld [vmem:[#allocation2 + $0x7c] sm:$0xf]
        %v6572 = vld [vmem:[#allocation2 + $0x80] sm:$0xf]
        %v6573 = vld [vmem:[#allocation2 + $0x84] sm:$0xf]
        %v6574 = vld [vmem:[#allocation2 + $0x88] sm:$0xf]
        %v6575 = vld [vmem:[#allocation2 + $0x8c] sm:$0xf]
        %v6576 = vld [vmem:[%s3] sm:$0xf]
        %v6577 = vld [vmem:[%s3 + $0x4] sm:$0xf]
        %v6578 = vld [vmem:[%s3 + $0x8] sm:$0xf]
        %v6579 = vld [vmem:[%s3 + $0xc] sm:$0xf]
        %v6580 = vld [vmem:[%s3 + $0x10] sm:$0xf]
        %v6581 = vld [vmem:[%s3 + $0x14] sm:$0xf]
        %v6582 = vld [vmem:[%s3 + $0x18] sm:$0xf]
        %v6583 = vld [vmem:[%s3 + $0x1c] sm:$0xf]
        %v6584 = vld [vmem:[%s3 + $0x20] sm:$0xf]
        %v6585 = vld [vmem:[%s3 + $0x24] sm:$0xf]
        %v6586 = vld [vmem:[%s3 + $0x28] sm:$0xf]
        %v6587 = vld [vmem:[%s3 + $0x2c] sm:$0xf]
        %v6588 = vld [vmem:[%s3 + $0x30] sm:$0xf]
        %v6589 = vld [vmem:[%s3 + $0x34] sm:$0xf]
        %v6590 = vld [vmem:[%s3 + $0x38] sm:$0xf]
        %v6591 = vld [vmem:[%s3 + $0x3c] sm:$0xf]
        %v6592 = vld [vmem:[#allocation2 + $0x90] sm:$0x1]
        %s6593 = scalar_lea.vmem %s3, 64
        %v6594 = vld [vmem:[%s6593] sm:$0xf]
        %v6595 = vld [vmem:[%s6593 + $0x4] sm:$0xf]
        %v6596 = vld [vmem:[%s6593 + $0x8] sm:$0xf]
        %v6597 = vld [vmem:[%s6593 + $0xc] sm:$0xf]
        %v6598 = vld [vmem:[%s6593 + $0x10] sm:$0xf]
        %v6599 = vld [vmem:[%s6593 + $0x14] sm:$0xf]
        %v6600 = vld [vmem:[%s6593 + $0x18] sm:$0xf]
        %v6601 = vld [vmem:[%s6593 + $0x1c] sm:$0xf]
        %v6602 = vld [vmem:[%s6593 + $0x20] sm:$0xf]
        %v6603 = vld [vmem:[%s6593 + $0x24] sm:$0xf]
        %v6604 = vld [vmem:[%s6593 + $0x28] sm:$0xf]
        %v6605 = vld [vmem:[%s6593 + $0x2c] sm:$0xf]
        %v6606 = vld [vmem:[%s6593 + $0x30] sm:$0xf]
        %v6607 = vld [vmem:[%s6593 + $0x34] sm:$0xf]
        %v6608 = vld [vmem:[%s6593 + $0x38] sm:$0xf]
        %v6609 = vld [vmem:[%s6593 + $0x3c] sm:$0xf]
        %v6647 = vunpack.c.l.b16 %v6540
        %v6648 = vunpack.c.l.b16 %v6541
        %v6649 = vunpack.c.l.b16 %v6542
        %v6650 = vunpack.c.l.b16 %v6543
        %v6651 = vunpack.c.l.b16 %v6544
        %v6652 = vunpack.c.l.b16 %v6545
        %v6653 = vunpack.c.l.b16 %v6546
        %v6654 = vunpack.c.l.b16 %v6547
        %v6655 = vunpack.c.l.b16 %v6548
        %v6656 = vunpack.c.l.b16 %v6549
        %v6657 = vunpack.c.l.b16 %v6550
        %v6658 = vunpack.c.l.b16 %v6551
        %v6659 = vunpack.c.l.b16 %v6552
        %v6660 = vunpack.c.l.b16 %v6553
        %v6661 = vunpack.c.l.b16 %v6554
        %v6662 = vunpack.c.l.b16 %v6555
        %v6663 = vunpack.c.l.b16 %v6556
        %v6664 = vunpack.c.l.b16 %v6557
        %v6665 = vunpack.c.l.b16 %v6558
        %v6666 = vunpack.c.l.b16 %v6559
        %v6667 = vunpack.c.l.b16 %v6560
        %v6668 = vunpack.c.l.b16 %v6561
        %v6669 = vunpack.c.l.b16 %v6562
        %v6670 = vunpack.c.l.b16 %v6563
        %v6671 = vunpack.c.l.b16 %v6564
        %v6672 = vunpack.c.l.b16 %v6565
        %v6673 = vunpack.c.l.b16 %v6566
        %v6674 = vunpack.c.l.b16 %v6567
        %v6675 = vunpack.c.l.b16 %v6568
        %v6676 = vunpack.c.l.b16 %v6569
        %v6677 = vunpack.c.l.b16 %v6570
        %v6678 = vunpack.c.l.b16 %v6571
        %v6679 = vunpack.c.l.b16 %v6572
        %v6680 = vunpack.c.l.b16 %v6573
        %v6681 = vunpack.c.l.b16 %v6574
        %v6682 = vunpack.c.l.b16 %v6575
        %v6683 = vunpack.c.l.b16 %v6592
        %v6684 = vpack.c.b16 %v6648, %v6647
        %v6685 = vpack.c.b16 %v6650, %v6649
        %v6686 = vpack.c.b16 %v6652, %v6651
        %v6687 = vpack.c.b16 %v6654, %v6653
        %v6688 = vpack.c.b16 %v6656, %v6655
        %v6689 = vpack.c.b16 %v6658, %v6657
        %v6690 = vpack.c.b16 %v6660, %v6659
        %v6691 = vpack.c.b16 %v6662, %v6661
        %v6692 = vpack.c.b16 %v6664, %v6663
        %v6693 = vpack.c.b16 %v6666, %v6665
        %v6694 = vpack.c.b16 %v6668, %v6667
        %v6695 = vpack.c.b16 %v6670, %v6669
        %v6696 = vpack.c.b16 %v6672, %v6671
        %v6697 = vpack.c.b16 %v6674, %v6673
        %v6698 = vpack.c.b16 %v6676, %v6675
        %v6699 = vpack.c.b16 %v6678, %v6677
        %v6700 = vpack.c.b16 %v6680, %v6679
        %v6701 = vpack.c.b16 %v6682, %v6681
        %v6702 = vpack.c.b16 %v6683, %v6683
        %v6704 = vshrl.u32 %v6684, 16
        %v6706 = vshll.u32 %v6684, 16
        %v6708 = vrot.slane %v6706, 1
        %v6709 = vor.u32 %v6704, %v6708
        %v6711 = vshll.u32 %v6685, 16
        %v6713 = vrot.slane %v6711, 1
        %v6714 = vsel %vm1893, %v6709, %v6713
        %v6715 = vshrl.u32 %v6685, 16
        %v6717 = vor.u32 %v6715, %v6713
        %v6719 = vshll.u32 %v6686, 16
        %v6721 = vrot.slane %v6719, 1
        %v6722 = vsel %vm1893, %v6717, %v6721
        %v6723 = vshrl.u32 %v6686, 16
        %v6725 = vor.u32 %v6723, %v6721
        %v6727 = vshll.u32 %v6687, 16
        %v6729 = vrot.slane %v6727, 1
        %v6730 = vsel %vm1893, %v6725, %v6729
        %v6731 = vshrl.u32 %v6687, 16
        %v6733 = vor.u32 %v6731, %v6729
        %v6735 = vshll.u32 %v6688, 16
        %v6737 = vrot.slane %v6735, 1
        %v6738 = vsel %vm1893, %v6733, %v6737
        %v6739 = vshrl.u32 %v6688, 16
        %v6741 = vor.u32 %v6739, %v6737
        %v6743 = vshll.u32 %v6689, 16
        %v6745 = vrot.slane %v6743, 1
        %v6746 = vsel %vm1893, %v6741, %v6745
        %v6747 = vshrl.u32 %v6689, 16
        %v6749 = vor.u32 %v6747, %v6745
        %v6751 = vshll.u32 %v6690, 16
        %v6753 = vrot.slane %v6751, 1
        %v6754 = vsel %vm1893, %v6749, %v6753
        %v6755 = vshrl.u32 %v6690, 16
        %v6757 = vor.u32 %v6755, %v6753
        %v6759 = vshll.u32 %v6691, 16
        %v6761 = vrot.slane %v6759, 1
        %v6762 = vsel %vm1893, %v6757, %v6761
        %v6763 = vshrl.u32 %v6691, 16
        %v6765 = vor.u32 %v6763, %v6761
        %v6767 = vshll.u32 %v6692, 16
        %v6769 = vrot.slane %v6767, 1
        %v6770 = vsel %vm1893, %v6765, %v6769
        %v6771 = vshrl.u32 %v6692, 16
        %v6773 = vor.u32 %v6771, %v6769
        %v6775 = vshll.u32 %v6693, 16
        %v6777 = vrot.slane %v6775, 1
        %v6778 = vsel %vm1893, %v6773, %v6777
        %v6779 = vshrl.u32 %v6693, 16
        %v6781 = vor.u32 %v6779, %v6777
        %v6783 = vshll.u32 %v6694, 16
        %v6785 = vrot.slane %v6783, 1
        %v6786 = vsel %vm1893, %v6781, %v6785
        %v6787 = vshrl.u32 %v6694, 16
        %v6789 = vor.u32 %v6787, %v6785
        %v6791 = vshll.u32 %v6695, 16
        %v6793 = vrot.slane %v6791, 1
        %v6794 = vsel %vm1893, %v6789, %v6793
        %v6795 = vshrl.u32 %v6695, 16
        %v6797 = vor.u32 %v6795, %v6793
        %v6799 = vshll.u32 %v6696, 16
        %v6801 = vrot.slane %v6799, 1
        %v6802 = vsel %vm1893, %v6797, %v6801
        %v6803 = vshrl.u32 %v6696, 16
        %v6805 = vor.u32 %v6803, %v6801
        %v6807 = vshll.u32 %v6697, 16
        %v6809 = vrot.slane %v6807, 1
        %v6810 = vsel %vm1893, %v6805, %v6809
        %v6811 = vshrl.u32 %v6697, 16
        %v6813 = vor.u32 %v6811, %v6809
        %v6815 = vshll.u32 %v6698, 16
        %v6817 = vrot.slane %v6815, 1
        %v6818 = vsel %vm1893, %v6813, %v6817
        %v6819 = vshrl.u32 %v6698, 16
        %v6821 = vor.u32 %v6819, %v6817
        %v6823 = vshll.u32 %v6699, 16
        %v6825 = vrot.slane %v6823, 1
        %v6826 = vsel %vm1893, %v6821, %v6825
        %v6827 = vshrl.u32 %v6699, 16
        %v6829 = vor.u32 %v6827, %v6825
        %v6831 = vshll.u32 %v6700, 16
        %v6833 = vrot.slane %v6831, 1
        %v6834 = vsel %vm1893, %v6829, %v6833
        %v6835 = vshrl.u32 %v6700, 16
        %v6837 = vor.u32 %v6835, %v6833
        %v6839 = vshll.u32 %v6701, 16
        %v6841 = vrot.slane %v6839, 1
        %v6842 = vsel %vm1893, %v6837, %v6841
        %v6843 = vshrl.u32 %v6701, 16
        %v6845 = vor.u32 %v6843, %v6841
        %v6847 = vshll.u32 %v6702, 16
        %v6849 = vrot.slane %v6847, 1
        %v6850 = vsel %vm1893, %v6845, %v6849
        %v6885 = vunpack.c.l.b16 %v6594
        %v6886 = vunpack.c.l.b16 %v6595
        %v6887 = vunpack.c.l.b16 %v6596
        %v6888 = vunpack.c.l.b16 %v6597
        %v6889 = vunpack.c.l.b16 %v6598
        %v6890 = vunpack.c.l.b16 %v6599
        %v6891 = vunpack.c.l.b16 %v6600
        %v6892 = vunpack.c.l.b16 %v6601
        %v6893 = vunpack.c.l.b16 %v6602
        %v6894 = vunpack.c.l.b16 %v6603
        %v6895 = vunpack.c.l.b16 %v6604
        %v6896 = vunpack.c.l.b16 %v6605
        %v6897 = vunpack.c.l.b16 %v6606
        %v6898 = vunpack.c.l.b16 %v6607
        %v6899 = vunpack.c.l.b16 %v6608
        %v6900 = vunpack.c.l.b16 %v6609
        %v6901 = vpack.c.b16 %v6886, %v6885
        %v6902 = vpack.c.b16 %v6888, %v6887
        %v6903 = vpack.c.b16 %v6890, %v6889
        %v6904 = vpack.c.b16 %v6892, %v6891
        %v6905 = vpack.c.b16 %v6894, %v6893
        %v6906 = vpack.c.b16 %v6896, %v6895
        %v6907 = vpack.c.b16 %v6898, %v6897
        %v6908 = vpack.c.b16 %v6900, %v6899
        %6917 = vmatprep.subr.bf16.mxu0 0
        %6918 = vmatpush1.bf16.msra.mxu0 %v6908
        %6919 = vmatprep.subr.bf16.mxu0 0
        %6920 = vmatpush1.bf16.msra.mxu0 %v6907
        %6921 = vmatprep.subr.bf16.mxu0 0
        %6922 = vmatpush1.bf16.msra.mxu0 %v6906
        %6923 = vmatprep.subr.bf16.mxu0 0
        %6924 = vmatpush1.bf16.msra.mxu0 %v6905
        %6925 = vmatprep.subr.bf16.mxu0 0
        %6926 = vmatpush1.bf16.msra.mxu0 %v6904
        %6927 = vmatprep.subr.bf16.mxu0 0
        %6928 = vmatpush1.bf16.msra.mxu0 %v6903
        %6929 = vmatprep.subr.bf16.mxu0 0
        %6930 = vmatpush1.bf16.msra.mxu0 %v6902
        %6931 = vmatprep.subr.bf16.mxu0 0
        %6932 = vmatpush1.bf16.msra.mxu0 %v6901
        %6933 = vmatprep.subr.bf16.mxu0 0
        %6934 = vmatpush2.bf16.msra.mxu0 0
        %6935 = vmatprep.subr.bf16.mxu0 0
        %6936 = vmatpush2.bf16.msra.mxu0 0
        %6937 = vmatprep.subr.bf16.mxu0 0
        %6938 = vmatpush2.bf16.msra.mxu0 0
        %6939 = vmatprep.subr.bf16.mxu0 0
        %6940 = vmatpush2.bf16.msra.mxu0 0
        %6941 = vmatprep.subr.bf16.mxu0 0
        %6942 = vmatpush2.bf16.msra.mxu0 0
        %6943 = vmatprep.subr.bf16.mxu0 0
        %6944 = vmatpush2.bf16.msra.mxu0 0
        %6945 = vmatprep.subr.bf16.mxu0 0
        %6946 = vmatpush2.bf16.msra.mxu0 0
        %6947 = vmatprep.subr.bf16.mxu0 0
        %6948 = vmatpush2.bf16.msra.mxu0 0
        %6949 = vmatprep.mubr.bf16.mxu0 0
        %6950 = vmatmul.mubr.bf16.gmra.mxu0 %v6714
        %v6951 = vpop.f32.mrf.mxu0
        %v6952 = vadd.f32 0.0, %v6951
        %v6953 = vpop.f32.mrf.mxu0
        %v6954 = vpop.f32.mrf.mxu0
        %v6955 = vadd.f32 0.0, %v6954
        %v6956 = vpop.f32.mrf.mxu0
        %6957 = vmatprep.mubr.bf16.mxu0 0
        %6958 = vmatmul.mubr.bf16.gmra.mxu0 %v6722
        %v6959 = vpop.f32.mrf.mxu0
        %v6960 = vadd.f32 0.0, %v6959
        %v6961 = vpop.f32.mrf.mxu0
        %v6962 = vpop.f32.mrf.mxu0
        %v6963 = vadd.f32 0.0, %v6962
        %v6964 = vpop.f32.mrf.mxu0
        %6965 = vmatprep.mubr.bf16.mxu0 0
        %6966 = vmatmul.mubr.bf16.gmra.mxu0 %v6730
        %v6967 = vpop.f32.mrf.mxu0
        %v6968 = vadd.f32 0.0, %v6967
        %v6969 = vpop.f32.mrf.mxu0
        %v6970 = vpop.f32.mrf.mxu0
        %v6971 = vadd.f32 0.0, %v6970
        %v6972 = vpop.f32.mrf.mxu0
        %6973 = vmatprep.mubr.bf16.mxu0 0
        %6974 = vmatmul.mubr.bf16.gmra.mxu0 %v6738
        %v6975 = vpop.f32.mrf.mxu0
        %v6976 = vadd.f32 0.0, %v6975
        %v6977 = vpop.f32.mrf.mxu0
        %v6978 = vpop.f32.mrf.mxu0
        %v6979 = vadd.f32 0.0, %v6978
        %v6980 = vpop.f32.mrf.mxu0
        %6981 = vmatprep.mubr.bf16.mxu0 0
        %6982 = vmatmul.mubr.bf16.gmra.mxu0 %v6746
        %v6983 = vpop.f32.mrf.mxu0
        %v6984 = vadd.f32 0.0, %v6983
        %v6985 = vpop.f32.mrf.mxu0
        %v6986 = vpop.f32.mrf.mxu0
        %v6987 = vadd.f32 0.0, %v6986
        %v6988 = vpop.f32.mrf.mxu0
        %6989 = vmatprep.mubr.bf16.mxu0 0
        %6990 = vmatmul.mubr.bf16.gmra.mxu0 %v6754
        %v6991 = vpop.f32.mrf.mxu0
        %v6992 = vadd.f32 0.0, %v6991
        %v6993 = vpop.f32.mrf.mxu0
        %v6994 = vpop.f32.mrf.mxu0
        %v6995 = vadd.f32 0.0, %v6994
        %v6996 = vpop.f32.mrf.mxu0
        %6997 = vmatprep.mubr.bf16.mxu0 0
        %6998 = vmatmul.mubr.bf16.gmra.mxu0 %v6762
        %v6999 = vpop.f32.mrf.mxu0
        %v7000 = vadd.f32 0.0, %v6999
        %v7001 = vpop.f32.mrf.mxu0
        %v7002 = vpop.f32.mrf.mxu0
        %v7003 = vadd.f32 0.0, %v7002
        %v7004 = vpop.f32.mrf.mxu0
        %7005 = vmatprep.mubr.bf16.mxu0 0
        %7006 = vmatmul.mubr.bf16.gmra.mxu0 %v6770
        %v7007 = vpop.f32.mrf.mxu0
        %v7008 = vadd.f32 0.0, %v7007
        %v7009 = vpop.f32.mrf.mxu0
        %v7010 = vpop.f32.mrf.mxu0
        %v7011 = vadd.f32 0.0, %v7010
        %v7012 = vpop.f32.mrf.mxu0
        %7013 = vmatprep.mubr.bf16.mxu0 0
        %7014 = vmatmul.mubr.bf16.gmra.mxu0 %v6778
        %v7015 = vpop.f32.mrf.mxu0
        %v7016 = vadd.f32 0.0, %v7015
        %v7017 = vpop.f32.mrf.mxu0
        %v7018 = vpop.f32.mrf.mxu0
        %v7019 = vadd.f32 0.0, %v7018
        %v7020 = vpop.f32.mrf.mxu0
        %7021 = vmatprep.mubr.bf16.mxu0 0
        %7022 = vmatmul.mubr.bf16.gmra.mxu0 %v6786
        %v7023 = vpop.f32.mrf.mxu0
        %v7024 = vadd.f32 0.0, %v7023
        %v7025 = vpop.f32.mrf.mxu0
        %v7026 = vpop.f32.mrf.mxu0
        %v7027 = vadd.f32 0.0, %v7026
        %v7028 = vpop.f32.mrf.mxu0
        %7029 = vmatprep.mubr.bf16.mxu0 0
        %7030 = vmatmul.mubr.bf16.gmra.mxu0 %v6794
        %v7031 = vpop.f32.mrf.mxu0
        %v7032 = vadd.f32 0.0, %v7031
        %v7033 = vpop.f32.mrf.mxu0
        %v7034 = vpop.f32.mrf.mxu0
        %v7035 = vadd.f32 0.0, %v7034
        %v7036 = vpop.f32.mrf.mxu0
        %7037 = vmatprep.mubr.bf16.mxu0 0
        %7038 = vmatmul.mubr.bf16.gmra.mxu0 %v6802
        %v7039 = vpop.f32.mrf.mxu0
        %v7040 = vadd.f32 0.0, %v7039
        %v7041 = vpop.f32.mrf.mxu0
        %v7042 = vpop.f32.mrf.mxu0
        %v7043 = vadd.f32 0.0, %v7042
        %v7044 = vpop.f32.mrf.mxu0
        %7045 = vmatprep.mubr.bf16.mxu0 0
        %7046 = vmatmul.mubr.bf16.gmra.mxu0 %v6810
        %v7047 = vpop.f32.mrf.mxu0
        %v7048 = vadd.f32 0.0, %v7047
        %v7049 = vpop.f32.mrf.mxu0
        %v7050 = vpop.f32.mrf.mxu0
        %v7051 = vadd.f32 0.0, %v7050
        %v7052 = vpop.f32.mrf.mxu0
        %7053 = vmatprep.mubr.bf16.mxu0 0
        %7054 = vmatmul.mubr.bf16.gmra.mxu0 %v6818
        %v7055 = vpop.f32.mrf.mxu0
        %v7056 = vadd.f32 0.0, %v7055
        %v7057 = vpop.f32.mrf.mxu0
        %v7058 = vpop.f32.mrf.mxu0
        %v7059 = vadd.f32 0.0, %v7058
        %v7060 = vpop.f32.mrf.mxu0
        %7061 = vmatprep.mubr.bf16.mxu0 0
        %7062 = vmatmul.mubr.bf16.gmra.mxu0 %v6826
        %v7063 = vpop.f32.mrf.mxu0
        %v7064 = vadd.f32 0.0, %v7063
        %v7065 = vpop.f32.mrf.mxu0
        %v7066 = vpop.f32.mrf.mxu0
        %v7067 = vadd.f32 0.0, %v7066
        %v7068 = vpop.f32.mrf.mxu0
        %7069 = vmatprep.mubr.bf16.mxu0 0
        %7070 = vmatmul.mubr.bf16.gmra.mxu0 %v6834
        %v7071 = vpop.f32.mrf.mxu0
        %v7072 = vadd.f32 0.0, %v7071
        %v7073 = vpop.f32.mrf.mxu0
        %v7074 = vpop.f32.mrf.mxu0
        %v7075 = vadd.f32 0.0, %v7074
        %v7076 = vpop.f32.mrf.mxu0
        %7077 = vmatprep.mubr.bf16.mxu0 0
        %7078 = vmatmul.mubr.bf16.gmra.mxu0 %v6842
        %v7079 = vpop.f32.mrf.mxu0
        %v7080 = vadd.f32 0.0, %v7079
        %v7081 = vpop.f32.mrf.mxu0
        %v7082 = vpop.f32.mrf.mxu0
        %v7083 = vadd.f32 0.0, %v7082
        %v7084 = vpop.f32.mrf.mxu0
        %7085 = vmatprep.mubr.bf16.mxu0 0
        %7086 = vmatmul.mubr.bf16.gmra.mxu0 %v6850
        %v7087 = vpop.f32.mrf.mxu0
        %v7088 = vadd.f32 0.0, %v7087
        %v7089 = vpop.f32.mrf.mxu0
        %v7090 = vpop.f32.mrf.mxu0
        %v7091 = vadd.f32 0.0, %v7090
        %v7092 = vpop.f32.mrf.mxu0
        %7093 = vdwg.mxu0
        %v7128 = vunpack.c.l.b16 %v6576
        %v7129 = vunpack.c.l.b16 %v6577
        %v7130 = vunpack.c.l.b16 %v6578
        %v7131 = vunpack.c.l.b16 %v6579
        %v7132 = vunpack.c.l.b16 %v6580
        %v7133 = vunpack.c.l.b16 %v6581
        %v7134 = vunpack.c.l.b16 %v6582
        %v7135 = vunpack.c.l.b16 %v6583
        %v7136 = vunpack.c.l.b16 %v6584
        %v7137 = vunpack.c.l.b16 %v6585
        %v7138 = vunpack.c.l.b16 %v6586
        %v7139 = vunpack.c.l.b16 %v6587
        %v7140 = vunpack.c.l.b16 %v6588
        %v7141 = vunpack.c.l.b16 %v6589
        %v7142 = vunpack.c.l.b16 %v6590
        %v7143 = vunpack.c.l.b16 %v6591
        %v7144 = vpack.c.b16 %v7129, %v7128
        %v7145 = vpack.c.b16 %v7131, %v7130
        %v7146 = vpack.c.b16 %v7133, %v7132
        %v7147 = vpack.c.b16 %v7135, %v7134
        %v7148 = vpack.c.b16 %v7137, %v7136
        %v7149 = vpack.c.b16 %v7139, %v7138
        %v7150 = vpack.c.b16 %v7141, %v7140
        %v7151 = vpack.c.b16 %v7143, %v7142
        %7160 = vmatprep.subr.bf16.mxu0 0
        %7161 = vmatpush1.bf16.msra.mxu0 %v7151
        %7162 = vmatprep.subr.bf16.mxu0 0
        %7163 = vmatpush1.bf16.msra.mxu0 %v7150
        %7164 = vmatprep.subr.bf16.mxu0 0
        %7165 = vmatpush1.bf16.msra.mxu0 %v7149
        %7166 = vmatprep.subr.bf16.mxu0 0
        %7167 = vmatpush1.bf16.msra.mxu0 %v7148
        %7168 = vmatprep.subr.bf16.mxu0 0
        %7169 = vmatpush1.bf16.msra.mxu0 %v7147
        %7170 = vmatprep.subr.bf16.mxu0 0
        %7171 = vmatpush1.bf16.msra.mxu0 %v7146
        %7172 = vmatprep.subr.bf16.mxu0 0
        %7173 = vmatpush1.bf16.msra.mxu0 %v7145
        %7174 = vmatprep.subr.bf16.mxu0 0
        %7175 = vmatpush1.bf16.msra.mxu0 %v7144
        %7176 = vmatprep.subr.bf16.mxu0 0
        %7177 = vmatpush2.bf16.msra.mxu0 0
        %7178 = vmatprep.subr.bf16.mxu0 0
        %7179 = vmatpush2.bf16.msra.mxu0 0
        %7180 = vmatprep.subr.bf16.mxu0 0
        %7181 = vmatpush2.bf16.msra.mxu0 0
        %7182 = vmatprep.subr.bf16.mxu0 0
        %7183 = vmatpush2.bf16.msra.mxu0 0
        %7184 = vmatprep.subr.bf16.mxu0 0
        %7185 = vmatpush2.bf16.msra.mxu0 0
        %7186 = vmatprep.subr.bf16.mxu0 0
        %7187 = vmatpush2.bf16.msra.mxu0 0
        %7188 = vmatprep.subr.bf16.mxu0 0
        %7189 = vmatpush2.bf16.msra.mxu0 0
        %7190 = vmatprep.subr.bf16.mxu0 0
        %7191 = vmatpush2.bf16.msra.mxu0 0
        %7192 = vmatprep.mubr.bf16.mxu0 0
        %7193 = vmatmul.mubr.bf16.gmra.mxu0 %v6684
        %v7194 = vpop.f32.mrf.mxu0
        %v7195 = vadd.f32 %v6952, %v7194
        %v7196 = vpop.f32.mrf.mxu0
        %v7197 = vpop.f32.mrf.mxu0
        %v7198 = vadd.f32 %v6955, %v7197
        %v7199 = vpop.f32.mrf.mxu0
        %7200 = vmatprep.mubr.bf16.mxu0 0
        %7201 = vmatmul.mubr.bf16.gmra.mxu0 %v6685
        %v7202 = vpop.f32.mrf.mxu0
        %v7203 = vadd.f32 %v6960, %v7202
        %v7204 = vpop.f32.mrf.mxu0
        %v7205 = vpop.f32.mrf.mxu0
        %v7206 = vadd.f32 %v6963, %v7205
        %v7207 = vpop.f32.mrf.mxu0
        %7208 = vmatprep.mubr.bf16.mxu0 0
        %7209 = vmatmul.mubr.bf16.gmra.mxu0 %v6686
        %v7210 = vpop.f32.mrf.mxu0
        %v7211 = vadd.f32 %v6968, %v7210
        %v7212 = vpop.f32.mrf.mxu0
        %v7213 = vpop.f32.mrf.mxu0
        %v7214 = vadd.f32 %v6971, %v7213
        %v7215 = vpop.f32.mrf.mxu0
        %7216 = vmatprep.mubr.bf16.mxu0 0
        %7217 = vmatmul.mubr.bf16.gmra.mxu0 %v6687
        %v7218 = vpop.f32.mrf.mxu0
        %v7219 = vadd.f32 %v6976, %v7218
        %v7220 = vpop.f32.mrf.mxu0
        %v7221 = vpop.f32.mrf.mxu0
        %v7222 = vadd.f32 %v6979, %v7221
        %v7223 = vpop.f32.mrf.mxu0
        %7224 = vmatprep.mubr.bf16.mxu0 0
        %7225 = vmatmul.mubr.bf16.gmra.mxu0 %v6688
        %v7226 = vpop.f32.mrf.mxu0
        %v7227 = vadd.f32 %v6984, %v7226
        %v7228 = vpop.f32.mrf.mxu0
        %v7229 = vpop.f32.mrf.mxu0
        %v7230 = vadd.f32 %v6987, %v7229
        %v7231 = vpop.f32.mrf.mxu0
        %7232 = vmatprep.mubr.bf16.mxu0 0
        %7233 = vmatmul.mubr.bf16.gmra.mxu0 %v6689
        %v7234 = vpop.f32.mrf.mxu0
        %v7235 = vadd.f32 %v6992, %v7234
        %v7236 = vpop.f32.mrf.mxu0
        %v7237 = vpop.f32.mrf.mxu0
        %v7238 = vadd.f32 %v6995, %v7237
        %v7239 = vpop.f32.mrf.mxu0
        %7240 = vmatprep.mubr.bf16.mxu0 0
        %7241 = vmatmul.mubr.bf16.gmra.mxu0 %v6690
        %v7242 = vpop.f32.mrf.mxu0
        %v7243 = vadd.f32 %v7000, %v7242
        %v7244 = vpop.f32.mrf.mxu0
        %v7245 = vpop.f32.mrf.mxu0
        %v7246 = vadd.f32 %v7003, %v7245
        %v7247 = vpop.f32.mrf.mxu0
        %7248 = vmatprep.mubr.bf16.mxu0 0
        %7249 = vmatmul.mubr.bf16.gmra.mxu0 %v6691
        %v7250 = vpop.f32.mrf.mxu0
        %v7251 = vadd.f32 %v7008, %v7250
        %v7252 = vpop.f32.mrf.mxu0
        %v7253 = vpop.f32.mrf.mxu0
        %v7254 = vadd.f32 %v7011, %v7253
        %v7255 = vpop.f32.mrf.mxu0
        %7256 = vmatprep.mubr.bf16.mxu0 0
        %7257 = vmatmul.mubr.bf16.gmra.mxu0 %v6692
        %v7258 = vpop.f32.mrf.mxu0
        %v7259 = vadd.f32 %v7016, %v7258
        %v7260 = vpop.f32.mrf.mxu0
        %v7261 = vpop.f32.mrf.mxu0
        %v7262 = vadd.f32 %v7019, %v7261
        %v7263 = vpop.f32.mrf.mxu0
        %7264 = vmatprep.mubr.bf16.mxu0 0
        %7265 = vmatmul.mubr.bf16.gmra.mxu0 %v6693
        %v7266 = vpop.f32.mrf.mxu0
        %v7267 = vadd.f32 %v7024, %v7266
        %v7268 = vpop.f32.mrf.mxu0
        %v7269 = vpop.f32.mrf.mxu0
        %v7270 = vadd.f32 %v7027, %v7269
        %v7271 = vpop.f32.mrf.mxu0
        %7272 = vmatprep.mubr.bf16.mxu0 0
        %7273 = vmatmul.mubr.bf16.gmra.mxu0 %v6694
        %v7274 = vpop.f32.mrf.mxu0
        %v7275 = vadd.f32 %v7032, %v7274
        %v7276 = vpop.f32.mrf.mxu0
        %v7277 = vpop.f32.mrf.mxu0
        %v7278 = vadd.f32 %v7035, %v7277
        %v7279 = vpop.f32.mrf.mxu0
        %7280 = vmatprep.mubr.bf16.mxu0 0
        %7281 = vmatmul.mubr.bf16.gmra.mxu0 %v6695
        %v7282 = vpop.f32.mrf.mxu0
        %v7283 = vadd.f32 %v7040, %v7282
        %v7284 = vpop.f32.mrf.mxu0
        %v7285 = vpop.f32.mrf.mxu0
        %v7286 = vadd.f32 %v7043, %v7285
        %v7287 = vpop.f32.mrf.mxu0
        %7288 = vmatprep.mubr.bf16.mxu0 0
        %7289 = vmatmul.mubr.bf16.gmra.mxu0 %v6696
        %v7290 = vpop.f32.mrf.mxu0
        %v7291 = vadd.f32 %v7048, %v7290
        %v7292 = vpop.f32.mrf.mxu0
        %v7293 = vpop.f32.mrf.mxu0
        %v7294 = vadd.f32 %v7051, %v7293
        %v7295 = vpop.f32.mrf.mxu0
        %7296 = vmatprep.mubr.bf16.mxu0 0
        %7297 = vmatmul.mubr.bf16.gmra.mxu0 %v6697
        %v7298 = vpop.f32.mrf.mxu0
        %v7299 = vadd.f32 %v7056, %v7298
        %v7300 = vpop.f32.mrf.mxu0
        %v7301 = vpop.f32.mrf.mxu0
        %v7302 = vadd.f32 %v7059, %v7301
        %v7303 = vpop.f32.mrf.mxu0
        %7304 = vmatprep.mubr.bf16.mxu0 0
        %7305 = vmatmul.mubr.bf16.gmra.mxu0 %v6698
        %v7306 = vpop.f32.mrf.mxu0
        %v7307 = vadd.f32 %v7064, %v7306
        %v7308 = vpop.f32.mrf.mxu0
        %v7309 = vpop.f32.mrf.mxu0
        %v7310 = vadd.f32 %v7067, %v7309
        %v7311 = vpop.f32.mrf.mxu0
        %7312 = vmatprep.mubr.bf16.mxu0 0
        %7313 = vmatmul.mubr.bf16.gmra.mxu0 %v6699
        %v7314 = vpop.f32.mrf.mxu0
        %v7315 = vadd.f32 %v7072, %v7314
        %v7316 = vpop.f32.mrf.mxu0
        %v7317 = vpop.f32.mrf.mxu0
        %v7318 = vadd.f32 %v7075, %v7317
        %v7319 = vpop.f32.mrf.mxu0
        %7320 = vmatprep.mubr.bf16.mxu0 0
        %7321 = vmatmul.mubr.bf16.gmra.mxu0 %v6700
        %v7322 = vpop.f32.mrf.mxu0
        %v7323 = vadd.f32 %v7080, %v7322
        %v7324 = vpop.f32.mrf.mxu0
        %v7325 = vpop.f32.mrf.mxu0
        %v7326 = vadd.f32 %v7083, %v7325
        %v7327 = vpop.f32.mrf.mxu0
        %7328 = vmatprep.mubr.bf16.mxu0 0
        %7329 = vmatmul.mubr.bf16.gmra.mxu0 %v6701
        %v7330 = vpop.f32.mrf.mxu0
        %v7331 = vadd.f32 %v7088, %v7330
        %v7332 = vpop.f32.mrf.mxu0
        %v7333 = vpop.f32.mrf.mxu0
        %v7334 = vadd.f32 %v7091, %v7333
        %v7335 = vpop.f32.mrf.mxu0
        %7336 = vdwg.mxu0
        %v7337 = vld [vmem:[#allocation2] sm:$0xe]
        %s7338 = scalar_lea.vmem %s3, 128
        %v7339 = vld [vmem:[%s7338] sm:$0xf]
        %v7340 = vld [vmem:[%s7338 + $0x4] sm:$0xf]
        %v7341 = vld [vmem:[%s7338 + $0x8] sm:$0xf]
        %v7342 = vld [vmem:[%s7338 + $0xc] sm:$0xf]
        %v7343 = vld [vmem:[%s7338 + $0x10] sm:$0xf]
        %v7344 = vld [vmem:[%s7338 + $0x14] sm:$0xf]
        %v7345 = vld [vmem:[%s7338 + $0x18] sm:$0xf]
        %v7346 = vld [vmem:[%s7338 + $0x1c] sm:$0xf]
        %v7347 = vld [vmem:[%s7338 + $0x20] sm:$0xf]
        %v7348 = vld [vmem:[%s7338 + $0x24] sm:$0xf]
        %v7349 = vld [vmem:[%s7338 + $0x28] sm:$0xf]
        %v7350 = vld [vmem:[%s7338 + $0x2c] sm:$0xf]
        %v7351 = vld [vmem:[%s7338 + $0x30] sm:$0xf]
        %v7352 = vld [vmem:[%s7338 + $0x34] sm:$0xf]
        %v7353 = vld [vmem:[%s7338 + $0x38] sm:$0xf]
        %v7354 = vld [vmem:[%s7338 + $0x3c] sm:$0xf]
        %v7356 = vunpack.c.l.b16 %v7337
        %v7357 = vpack.c.b16 %v6648, %v7356
        %v7358 = vrot.slane %v7357, 1
        %v7359 = vrot.slane %v6685, 1
        %v7360 = vsel %vm2549, %v7358, %v7359
        %v7361 = vrot.slane %v6686, 1
        %v7362 = vsel %vm2549, %v7359, %v7361
        %v7363 = vrot.slane %v6687, 1
        %v7364 = vsel %vm2549, %v7361, %v7363
        %v7365 = vrot.slane %v6688, 1
        %v7366 = vsel %vm2549, %v7363, %v7365
        %v7367 = vrot.slane %v6689, 1
        %v7368 = vsel %vm2549, %v7365, %v7367
        %v7369 = vrot.slane %v6690, 1
        %v7370 = vsel %vm2549, %v7367, %v7369
        %v7371 = vrot.slane %v6691, 1
        %v7372 = vsel %vm2549, %v7369, %v7371
        %v7373 = vrot.slane %v6692, 1
        %v7374 = vsel %vm2549, %v7371, %v7373
        %v7375 = vrot.slane %v6693, 1
        %v7376 = vsel %vm2549, %v7373, %v7375
        %v7377 = vrot.slane %v6694, 1
        %v7378 = vsel %vm2549, %v7375, %v7377
        %v7379 = vrot.slane %v6695, 1
        %v7380 = vsel %vm2549, %v7377, %v7379
        %v7381 = vrot.slane %v6696, 1
        %v7382 = vsel %vm2549, %v7379, %v7381
        %v7383 = vrot.slane %v6697, 1
        %v7384 = vsel %vm2549, %v7381, %v7383
        %v7385 = vrot.slane %v6698, 1
        %v7386 = vsel %vm2549, %v7383, %v7385
        %v7387 = vrot.slane %v6699, 1
        %v7388 = vsel %vm2549, %v7385, %v7387
        %v7389 = vrot.slane %v6700, 1
        %v7390 = vsel %vm2549, %v7387, %v7389
        %v7391 = vrot.slane %v6701, 1
        %v7392 = vsel %vm2549, %v7389, %v7391
        %v7393 = vrot.slane %v6702, 1
        %v7394 = vsel %vm2549, %v7391, %v7393
        %v7429 = vunpack.c.l.b16 %v7339
        %v7430 = vunpack.c.l.b16 %v7340
        %v7431 = vunpack.c.l.b16 %v7341
        %v7432 = vunpack.c.l.b16 %v7342
        %v7433 = vunpack.c.l.b16 %v7343
        %v7434 = vunpack.c.l.b16 %v7344
        %v7435 = vunpack.c.l.b16 %v7345
        %v7436 = vunpack.c.l.b16 %v7346
        %v7437 = vunpack.c.l.b16 %v7347
        %v7438 = vunpack.c.l.b16 %v7348
        %v7439 = vunpack.c.l.b16 %v7349
        %v7440 = vunpack.c.l.b16 %v7350
        %v7441 = vunpack.c.l.b16 %v7351
        %v7442 = vunpack.c.l.b16 %v7352
        %v7443 = vunpack.c.l.b16 %v7353
        %v7444 = vunpack.c.l.b16 %v7354
        %v7445 = vpack.c.b16 %v7430, %v7429
        %v7446 = vpack.c.b16 %v7432, %v7431
        %v7447 = vpack.c.b16 %v7434, %v7433
        %v7448 = vpack.c.b16 %v7436, %v7435
        %v7449 = vpack.c.b16 %v7438, %v7437
        %v7450 = vpack.c.b16 %v7440, %v7439
        %v7451 = vpack.c.b16 %v7442, %v7441
        %v7452 = vpack.c.b16 %v7444, %v7443
        %7461 = vmatprep.subr.bf16.mxu0 0
        %7462 = vmatpush1.bf16.msra.mxu0 %v7452
        %7463 = vmatprep.subr.bf16.mxu0 0
        %7464 = vmatpush1.bf16.msra.mxu0 %v7451
        %7465 = vmatprep.subr.bf16.mxu0 0
        %7466 = vmatpush1.bf16.msra.mxu0 %v7450
        %7467 = vmatprep.subr.bf16.mxu0 0
        %7468 = vmatpush1.bf16.msra.mxu0 %v7449
        %7469 = vmatprep.subr.bf16.mxu0 0
        %7470 = vmatpush1.bf16.msra.mxu0 %v7448
        %7471 = vmatprep.subr.bf16.mxu0 0
        %7472 = vmatpush1.bf16.msra.mxu0 %v7447
        %7473 = vmatprep.subr.bf16.mxu0 0
        %7474 = vmatpush1.bf16.msra.mxu0 %v7446
        %7475 = vmatprep.subr.bf16.mxu0 0
        %7476 = vmatpush1.bf16.msra.mxu0 %v7445
        %7477 = vmatprep.subr.bf16.mxu0 0
        %7478 = vmatpush2.bf16.msra.mxu0 0
        %7479 = vmatprep.subr.bf16.mxu0 0
        %7480 = vmatpush2.bf16.msra.mxu0 0
        %7481 = vmatprep.subr.bf16.mxu0 0
        %7482 = vmatpush2.bf16.msra.mxu0 0
        %7483 = vmatprep.subr.bf16.mxu0 0
        %7484 = vmatpush2.bf16.msra.mxu0 0
        %7485 = vmatprep.subr.bf16.mxu0 0
        %7486 = vmatpush2.bf16.msra.mxu0 0
        %7487 = vmatprep.subr.bf16.mxu0 0
        %7488 = vmatpush2.bf16.msra.mxu0 0
        %7489 = vmatprep.subr.bf16.mxu0 0
        %7490 = vmatpush2.bf16.msra.mxu0 0
        %7491 = vmatprep.subr.bf16.mxu0 0
        %7492 = vmatpush2.bf16.msra.mxu0 0
        %7493 = vmatprep.mubr.bf16.mxu0 0
        %7494 = vmatmul.mubr.bf16.gmra.mxu0 %v7360
        %v7495 = vpop.f32.mrf.mxu0
        %v7496 = vadd.f32 0.0, %v7495
        %v7497 = vpop.f32.mrf.mxu0
        %v7498 = vpop.f32.mrf.mxu0
        %v7499 = vadd.f32 0.0, %v7498
        %v7500 = vpop.f32.mrf.mxu0
        %7501 = vmatprep.mubr.bf16.mxu0 0
        %7502 = vmatmul.mubr.bf16.gmra.mxu0 %v7362
        %v7503 = vpop.f32.mrf.mxu0
        %v7504 = vadd.f32 0.0, %v7503
        %v7505 = vpop.f32.mrf.mxu0
        %v7506 = vpop.f32.mrf.mxu0
        %v7507 = vadd.f32 0.0, %v7506
        %v7508 = vpop.f32.mrf.mxu0
        %7509 = vmatprep.mubr.bf16.mxu0 0
        %7510 = vmatmul.mubr.bf16.gmra.mxu0 %v7364
        %v7511 = vpop.f32.mrf.mxu0
        %v7512 = vadd.f32 0.0, %v7511
        %v7513 = vpop.f32.mrf.mxu0
        %v7514 = vpop.f32.mrf.mxu0
        %v7515 = vadd.f32 0.0, %v7514
        %v7516 = vpop.f32.mrf.mxu0
        %7517 = vmatprep.mubr.bf16.mxu0 0
        %7518 = vmatmul.mubr.bf16.gmra.mxu0 %v7366
        %v7519 = vpop.f32.mrf.mxu0
        %v7520 = vadd.f32 0.0, %v7519
        %v7521 = vpop.f32.mrf.mxu0
        %v7522 = vpop.f32.mrf.mxu0
        %v7523 = vadd.f32 0.0, %v7522
        %v7524 = vpop.f32.mrf.mxu0
        %7525 = vmatprep.mubr.bf16.mxu0 0
        %7526 = vmatmul.mubr.bf16.gmra.mxu0 %v7368
        %v7527 = vpop.f32.mrf.mxu0
        %v7528 = vadd.f32 0.0, %v7527
        %v7529 = vpop.f32.mrf.mxu0
        %v7530 = vpop.f32.mrf.mxu0
        %v7531 = vadd.f32 0.0, %v7530
        %v7532 = vpop.f32.mrf.mxu0
        %7533 = vmatprep.mubr.bf16.mxu0 0
        %7534 = vmatmul.mubr.bf16.gmra.mxu0 %v7370
        %v7535 = vpop.f32.mrf.mxu0
        %v7536 = vadd.f32 0.0, %v7535
        %v7537 = vpop.f32.mrf.mxu0
        %v7538 = vpop.f32.mrf.mxu0
        %v7539 = vadd.f32 0.0, %v7538
        %v7540 = vpop.f32.mrf.mxu0
        %7541 = vmatprep.mubr.bf16.mxu0 0
        %7542 = vmatmul.mubr.bf16.gmra.mxu0 %v7372
        %v7543 = vpop.f32.mrf.mxu0
        %v7544 = vadd.f32 0.0, %v7543
        %v7545 = vpop.f32.mrf.mxu0
        %v7546 = vpop.f32.mrf.mxu0
        %v7547 = vadd.f32 0.0, %v7546
        %v7548 = vpop.f32.mrf.mxu0
        %7549 = vmatprep.mubr.bf16.mxu0 0
        %7550 = vmatmul.mubr.bf16.gmra.mxu0 %v7374
        %v7551 = vpop.f32.mrf.mxu0
        %v7552 = vadd.f32 0.0, %v7551
        %v7553 = vpop.f32.mrf.mxu0
        %v7554 = vpop.f32.mrf.mxu0
        %v7555 = vadd.f32 0.0, %v7554
        %v7556 = vpop.f32.mrf.mxu0
        %7557 = vmatprep.mubr.bf16.mxu0 0
        %7558 = vmatmul.mubr.bf16.gmra.mxu0 %v7376
        %v7559 = vpop.f32.mrf.mxu0
        %v7560 = vadd.f32 0.0, %v7559
        %v7561 = vpop.f32.mrf.mxu0
        %v7562 = vpop.f32.mrf.mxu0
        %v7563 = vadd.f32 0.0, %v7562
        %v7564 = vpop.f32.mrf.mxu0
        %7565 = vmatprep.mubr.bf16.mxu0 0
        %7566 = vmatmul.mubr.bf16.gmra.mxu0 %v7378
        %v7567 = vpop.f32.mrf.mxu0
        %v7568 = vadd.f32 0.0, %v7567
        %v7569 = vpop.f32.mrf.mxu0
        %v7570 = vpop.f32.mrf.mxu0
        %v7571 = vadd.f32 0.0, %v7570
        %v7572 = vpop.f32.mrf.mxu0
        %7573 = vmatprep.mubr.bf16.mxu0 0
        %7574 = vmatmul.mubr.bf16.gmra.mxu0 %v7380
        %v7575 = vpop.f32.mrf.mxu0
        %v7576 = vadd.f32 0.0, %v7575
        %v7577 = vpop.f32.mrf.mxu0
        %v7578 = vpop.f32.mrf.mxu0
        %v7579 = vadd.f32 0.0, %v7578
        %v7580 = vpop.f32.mrf.mxu0
        %7581 = vmatprep.mubr.bf16.mxu0 0
        %7582 = vmatmul.mubr.bf16.gmra.mxu0 %v7382
        %v7583 = vpop.f32.mrf.mxu0
        %v7584 = vadd.f32 0.0, %v7583
        %v7585 = vpop.f32.mrf.mxu0
        %v7586 = vpop.f32.mrf.mxu0
        %v7587 = vadd.f32 0.0, %v7586
        %v7588 = vpop.f32.mrf.mxu0
        %7589 = vmatprep.mubr.bf16.mxu0 0
        %7590 = vmatmul.mubr.bf16.gmra.mxu0 %v7384
        %v7591 = vpop.f32.mrf.mxu0
        %v7592 = vadd.f32 0.0, %v7591
        %v7593 = vpop.f32.mrf.mxu0
        %v7594 = vpop.f32.mrf.mxu0
        %v7595 = vadd.f32 0.0, %v7594
        %v7596 = vpop.f32.mrf.mxu0
        %7597 = vmatprep.mubr.bf16.mxu0 0
        %7598 = vmatmul.mubr.bf16.gmra.mxu0 %v7386
        %v7599 = vpop.f32.mrf.mxu0
        %v7600 = vadd.f32 0.0, %v7599
        %v7601 = vpop.f32.mrf.mxu0
        %v7602 = vpop.f32.mrf.mxu0
        %v7603 = vadd.f32 0.0, %v7602
        %v7604 = vpop.f32.mrf.mxu0
        %7605 = vmatprep.mubr.bf16.mxu0 0
        %7606 = vmatmul.mubr.bf16.gmra.mxu0 %v7388
        %v7607 = vpop.f32.mrf.mxu0
        %v7608 = vadd.f32 0.0, %v7607
        %v7609 = vpop.f32.mrf.mxu0
        %v7610 = vpop.f32.mrf.mxu0
        %v7611 = vadd.f32 0.0, %v7610
        %v7612 = vpop.f32.mrf.mxu0
        %7613 = vmatprep.mubr.bf16.mxu0 0
        %7614 = vmatmul.mubr.bf16.gmra.mxu0 %v7390
        %v7615 = vpop.f32.mrf.mxu0
        %v7616 = vadd.f32 0.0, %v7615
        %v7617 = vpop.f32.mrf.mxu0
        %v7618 = vpop.f32.mrf.mxu0
        %v7619 = vadd.f32 0.0, %v7618
        %v7620 = vpop.f32.mrf.mxu0
        %7621 = vmatprep.mubr.bf16.mxu0 0
        %7622 = vmatmul.mubr.bf16.gmra.mxu0 %v7392
        %v7623 = vpop.f32.mrf.mxu0
        %v7624 = vadd.f32 0.0, %v7623
        %v7625 = vpop.f32.mrf.mxu0
        %v7626 = vpop.f32.mrf.mxu0
        %v7627 = vadd.f32 0.0, %v7626
        %v7628 = vpop.f32.mrf.mxu0
        %7629 = vmatprep.mubr.bf16.mxu0 0
        %7630 = vmatmul.mubr.bf16.gmra.mxu0 %v7394
        %v7631 = vpop.f32.mrf.mxu0
        %v7632 = vadd.f32 0.0, %v7631
        %v7633 = vpop.f32.mrf.mxu0
        %v7634 = vpop.f32.mrf.mxu0
        %v7635 = vadd.f32 0.0, %v7634
        %v7636 = vpop.f32.mrf.mxu0
        %7637 = vdwg.mxu0
        %v7638 = vadd.f32 %v7195, %v7496
        %v7639 = vadd.f32 %v7198, %v7499
        %v7640 = vadd.f32 %v7203, %v7504
        %v7641 = vadd.f32 %v7206, %v7507
        %v7642 = vadd.f32 %v7211, %v7512
        %v7643 = vadd.f32 %v7214, %v7515
        %v7644 = vadd.f32 %v7219, %v7520
        %v7645 = vadd.f32 %v7222, %v7523
        %v7646 = vadd.f32 %v7227, %v7528
        %v7647 = vadd.f32 %v7230, %v7531
        %v7648 = vadd.f32 %v7235, %v7536
        %v7649 = vadd.f32 %v7238, %v7539
        %v7650 = vadd.f32 %v7243, %v7544
        %v7651 = vadd.f32 %v7246, %v7547
        %v7652 = vadd.f32 %v7251, %v7552
        %v7653 = vadd.f32 %v7254, %v7555
        %v7654 = vadd.f32 %v7259, %v7560
        %v7655 = vadd.f32 %v7262, %v7563
        %v7656 = vadd.f32 %v7267, %v7568
        %v7657 = vadd.f32 %v7270, %v7571
        %v7658 = vadd.f32 %v7275, %v7576
        %v7659 = vadd.f32 %v7278, %v7579
        %v7660 = vadd.f32 %v7283, %v7584
        %v7661 = vadd.f32 %v7286, %v7587
        %v7662 = vadd.f32 %v7291, %v7592
        %v7663 = vadd.f32 %v7294, %v7595
        %v7664 = vadd.f32 %v7299, %v7600
        %v7665 = vadd.f32 %v7302, %v7603
        %v7666 = vadd.f32 %v7307, %v7608
        %v7667 = vadd.f32 %v7310, %v7611
        %v7668 = vadd.f32 %v7315, %v7616
        %v7669 = vadd.f32 %v7318, %v7619
        %v7670 = vadd.f32 %v7323, %v7624
        %v7671 = vadd.f32 %v7326, %v7627
        %v7672 = vadd.f32 %v7331, %v7632
        %v7673 = vadd.f32 %v7334, %v7635
        %v7674 = vld [vmem:[#allocation2 + $0x8] sm:$0xe]
        %v7675 = vld [vmem:[#allocation2 + $0xc] sm:$0xf]
        %v7676 = vld [vmem:[#allocation2 + $0x10] sm:$0xf]
        %v7677 = vld [vmem:[#allocation2 + $0x14] sm:$0xf]
        %v7678 = vld [vmem:[#allocation2 + $0x18] sm:$0xf]
        %v7679 = vld [vmem:[#allocation2 + $0x1c] sm:$0xf]
        %v7680 = vld [vmem:[#allocation2 + $0x20] sm:$0xf]
        %v7681 = vld [vmem:[#allocation2 + $0x24] sm:$0xf]
        %v7682 = vld [vmem:[#allocation2 + $0x28] sm:$0xf]
        %v7683 = vld [vmem:[#allocation2 + $0x2c] sm:$0xf]
        %v7684 = vld [vmem:[#allocation2 + $0x30] sm:$0xf]
        %v7685 = vld [vmem:[#allocation2 + $0x34] sm:$0xf]
        %v7686 = vld [vmem:[#allocation2 + $0x38] sm:$0xf]
        %v7687 = vld [vmem:[#allocation2 + $0x3c] sm:$0xf]
        %v7688 = vld [vmem:[#allocation2 + $0x40] sm:$0xf]
        %v7689 = vld [vmem:[#allocation2 + $0x44] sm:$0xf]
        %v7690 = vld [vmem:[#allocation2 + $0x48] sm:$0xf]
        %v7691 = vld [vmem:[#allocation2 + $0x4c] sm:$0xf]
        %v7692 = vld [vmem:[#allocation2 + $0x50] sm:$0xf]
        %v7693 = vld [vmem:[#allocation2 + $0x54] sm:$0xf]
        %v7694 = vld [vmem:[#allocation2 + $0x58] sm:$0xf]
        %v7695 = vld [vmem:[#allocation2 + $0x5c] sm:$0xf]
        %v7696 = vld [vmem:[#allocation2 + $0x60] sm:$0xf]
        %v7697 = vld [vmem:[#allocation2 + $0x64] sm:$0xf]
        %v7698 = vld [vmem:[#allocation2 + $0x68] sm:$0xf]
        %v7699 = vld [vmem:[#allocation2 + $0x6c] sm:$0xf]
        %v7700 = vld [vmem:[#allocation2 + $0x70] sm:$0xf]
        %v7701 = vld [vmem:[#allocation2 + $0x74] sm:$0xf]
        %v7702 = vld [vmem:[#allocation2 + $0x78] sm:$0xf]
        %v7703 = vld [vmem:[#allocation2 + $0x7c] sm:$0xf]
        %v7704 = vld [vmem:[#allocation2 + $0x80] sm:$0xf]
        %v7705 = vld [vmem:[#allocation2 + $0x84] sm:$0xf]
        %v7706 = vld [vmem:[#allocation2 + $0x88] sm:$0xf]
        %v7707 = vld [vmem:[#allocation2 + $0x8c] sm:$0xf]
        %v7708 = vld [vmem:[#allocation2 + $0x90] sm:$0xf]
        %v7709 = vld [vmem:[#allocation2 + $0x94] sm:$0xf]
        %v7710 = vld [vmem:[#allocation2 + $0x98] sm:$0x1]
        %s7711 = scalar_lea.vmem %s3, 192
        %v7712 = vld [vmem:[%s7711] sm:$0xf]
        %v7713 = vld [vmem:[%s7711 + $0x4] sm:$0xf]
        %v7714 = vld [vmem:[%s7711 + $0x8] sm:$0xf]
        %v7715 = vld [vmem:[%s7711 + $0xc] sm:$0xf]
        %v7716 = vld [vmem:[%s7711 + $0x10] sm:$0xf]
        %v7717 = vld [vmem:[%s7711 + $0x14] sm:$0xf]
        %v7718 = vld [vmem:[%s7711 + $0x18] sm:$0xf]
        %v7719 = vld [vmem:[%s7711 + $0x1c] sm:$0xf]
        %v7720 = vld [vmem:[%s7711 + $0x20] sm:$0xf]
        %v7721 = vld [vmem:[%s7711 + $0x24] sm:$0xf]
        %v7722 = vld [vmem:[%s7711 + $0x28] sm:$0xf]
        %v7723 = vld [vmem:[%s7711 + $0x2c] sm:$0xf]
        %v7724 = vld [vmem:[%s7711 + $0x30] sm:$0xf]
        %v7725 = vld [vmem:[%s7711 + $0x34] sm:$0xf]
        %v7726 = vld [vmem:[%s7711 + $0x38] sm:$0xf]
        %v7727 = vld [vmem:[%s7711 + $0x3c] sm:$0xf]
        %v7728 = vld [vmem:[#allocation2 + $0x98] sm:$0x3]
        %s7729 = scalar_lea.vmem %s3, 256
        %v7730 = vld [vmem:[%s7729] sm:$0xf]
        %v7731 = vld [vmem:[%s7729 + $0x4] sm:$0xf]
        %v7732 = vld [vmem:[%s7729 + $0x8] sm:$0xf]
        %v7733 = vld [vmem:[%s7729 + $0xc] sm:$0xf]
        %v7734 = vld [vmem:[%s7729 + $0x10] sm:$0xf]
        %v7735 = vld [vmem:[%s7729 + $0x14] sm:$0xf]
        %v7736 = vld [vmem:[%s7729 + $0x18] sm:$0xf]
        %v7737 = vld [vmem:[%s7729 + $0x1c] sm:$0xf]
        %v7738 = vld [vmem:[%s7729 + $0x20] sm:$0xf]
        %v7739 = vld [vmem:[%s7729 + $0x24] sm:$0xf]
        %v7740 = vld [vmem:[%s7729 + $0x28] sm:$0xf]
        %v7741 = vld [vmem:[%s7729 + $0x2c] sm:$0xf]
        %v7742 = vld [vmem:[%s7729 + $0x30] sm:$0xf]
        %v7743 = vld [vmem:[%s7729 + $0x34] sm:$0xf]
        %v7744 = vld [vmem:[%s7729 + $0x38] sm:$0xf]
        %v7745 = vld [vmem:[%s7729 + $0x3c] sm:$0xf]
        %v7783 = vunpack.c.l.b16 %v7674
        %v7784 = vunpack.c.l.b16 %v7675
        %v7785 = vunpack.c.l.b16 %v7676
        %v7786 = vunpack.c.l.b16 %v7677
        %v7787 = vunpack.c.l.b16 %v7678
        %v7788 = vunpack.c.l.b16 %v7679
        %v7789 = vunpack.c.l.b16 %v7680
        %v7790 = vunpack.c.l.b16 %v7681
        %v7791 = vunpack.c.l.b16 %v7682
        %v7792 = vunpack.c.l.b16 %v7683
        %v7793 = vunpack.c.l.b16 %v7684
        %v7794 = vunpack.c.l.b16 %v7685
        %v7795 = vunpack.c.l.b16 %v7686
        %v7796 = vunpack.c.l.b16 %v7687
        %v7797 = vunpack.c.l.b16 %v7688
        %v7798 = vunpack.c.l.b16 %v7689
        %v7799 = vunpack.c.l.b16 %v7690
        %v7800 = vunpack.c.l.b16 %v7691
        %v7801 = vunpack.c.l.b16 %v7692
        %v7802 = vunpack.c.l.b16 %v7693
        %v7803 = vunpack.c.l.b16 %v7694
        %v7804 = vunpack.c.l.b16 %v7695
        %v7805 = vunpack.c.l.b16 %v7696
        %v7806 = vunpack.c.l.b16 %v7697
        %v7807 = vunpack.c.l.b16 %v7698
        %v7808 = vunpack.c.l.b16 %v7699
        %v7809 = vunpack.c.l.b16 %v7700
        %v7810 = vunpack.c.l.b16 %v7701
        %v7811 = vunpack.c.l.b16 %v7702
        %v7812 = vunpack.c.l.b16 %v7703
        %v7813 = vunpack.c.l.b16 %v7704
        %v7814 = vunpack.c.l.b16 %v7705
        %v7815 = vunpack.c.l.b16 %v7706
        %v7816 = vunpack.c.l.b16 %v7707
        %v7817 = vunpack.c.l.b16 %v7708
        %v7818 = vunpack.c.l.b16 %v7709
        %v7819 = vunpack.c.l.b16 %v7728
        %v7820 = vpack.c.b16 %v7784, %v7783
        %v7821 = vpack.c.b16 %v7786, %v7785
        %v7822 = vpack.c.b16 %v7788, %v7787
        %v7823 = vpack.c.b16 %v7790, %v7789
        %v7824 = vpack.c.b16 %v7792, %v7791
        %v7825 = vpack.c.b16 %v7794, %v7793
        %v7826 = vpack.c.b16 %v7796, %v7795
        %v7827 = vpack.c.b16 %v7798, %v7797
        %v7828 = vpack.c.b16 %v7800, %v7799
        %v7829 = vpack.c.b16 %v7802, %v7801
        %v7830 = vpack.c.b16 %v7804, %v7803
        %v7831 = vpack.c.b16 %v7806, %v7805
        %v7832 = vpack.c.b16 %v7808, %v7807
        %v7833 = vpack.c.b16 %v7810, %v7809
        %v7834 = vpack.c.b16 %v7812, %v7811
        %v7835 = vpack.c.b16 %v7814, %v7813
        %v7836 = vpack.c.b16 %v7816, %v7815
        %v7837 = vpack.c.b16 %v7818, %v7817
        %v7838 = vpack.c.b16 %v7819, %v7819
        %v7840 = vshrl.u32 %v7820, 16
        %v7842 = vrot.slane %v7840, 1
        %v7843 = vshll.u32 %v7820, 16
        %v7845 = vrot.slane %v7843, 2
        %v7846 = vor.u32 %v7842, %v7845
        %v7848 = vshrl.u32 %v7821, 16
        %v7850 = vrot.slane %v7848, 1
        %v7851 = vshll.u32 %v7821, 16
        %v7853 = vrot.slane %v7851, 2
        %v7854 = vor.u32 %v7850, %v7853
        %v7855 = vsel %vm3031, %v7846, %v7854
        %v7857 = vshrl.u32 %v7822, 16
        %v7859 = vrot.slane %v7857, 1
        %v7860 = vshll.u32 %v7822, 16
        %v7862 = vrot.slane %v7860, 2
        %v7863 = vor.u32 %v7859, %v7862
        %v7864 = vsel %vm3031, %v7854, %v7863
        %v7866 = vshrl.u32 %v7823, 16
        %v7868 = vrot.slane %v7866, 1
        %v7869 = vshll.u32 %v7823, 16
        %v7871 = vrot.slane %v7869, 2
        %v7872 = vor.u32 %v7868, %v7871
        %v7873 = vsel %vm3031, %v7863, %v7872
        %v7875 = vshrl.u32 %v7824, 16
        %v7877 = vrot.slane %v7875, 1
        %v7878 = vshll.u32 %v7824, 16
        %v7880 = vrot.slane %v7878, 2
        %v7881 = vor.u32 %v7877, %v7880
        %v7882 = vsel %vm3031, %v7872, %v7881
        %v7884 = vshrl.u32 %v7825, 16
        %v7886 = vrot.slane %v7884, 1
        %v7887 = vshll.u32 %v7825, 16
        %v7889 = vrot.slane %v7887, 2
        %v7890 = vor.u32 %v7886, %v7889
        %v7891 = vsel %vm3031, %v7881, %v7890
        %v7893 = vshrl.u32 %v7826, 16
        %v7895 = vrot.slane %v7893, 1
        %v7896 = vshll.u32 %v7826, 16
        %v7898 = vrot.slane %v7896, 2
        %v7899 = vor.u32 %v7895, %v7898
        %v7900 = vsel %vm3031, %v7890, %v7899
        %v7902 = vshrl.u32 %v7827, 16
        %v7904 = vrot.slane %v7902, 1
        %v7905 = vshll.u32 %v7827, 16
        %v7907 = vrot.slane %v7905, 2
        %v7908 = vor.u32 %v7904, %v7907
        %v7909 = vsel %vm3031, %v7899, %v7908
        %v7911 = vshrl.u32 %v7828, 16
        %v7913 = vrot.slane %v7911, 1
        %v7914 = vshll.u32 %v7828, 16
        %v7916 = vrot.slane %v7914, 2
        %v7917 = vor.u32 %v7913, %v7916
        %v7918 = vsel %vm3031, %v7908, %v7917
        %v7920 = vshrl.u32 %v7829, 16
        %v7922 = vrot.slane %v7920, 1
        %v7923 = vshll.u32 %v7829, 16
        %v7925 = vrot.slane %v7923, 2
        %v7926 = vor.u32 %v7922, %v7925
        %v7927 = vsel %vm3031, %v7917, %v7926
        %v7929 = vshrl.u32 %v7830, 16
        %v7931 = vrot.slane %v7929, 1
        %v7932 = vshll.u32 %v7830, 16
        %v7934 = vrot.slane %v7932, 2
        %v7935 = vor.u32 %v7931, %v7934
        %v7936 = vsel %vm3031, %v7926, %v7935
        %v7938 = vshrl.u32 %v7831, 16
        %v7940 = vrot.slane %v7938, 1
        %v7941 = vshll.u32 %v7831, 16
        %v7943 = vrot.slane %v7941, 2
        %v7944 = vor.u32 %v7940, %v7943
        %v7945 = vsel %vm3031, %v7935, %v7944
        %v7947 = vshrl.u32 %v7832, 16
        %v7949 = vrot.slane %v7947, 1
        %v7950 = vshll.u32 %v7832, 16
        %v7952 = vrot.slane %v7950, 2
        %v7953 = vor.u32 %v7949, %v7952
        %v7954 = vsel %vm3031, %v7944, %v7953
        %v7956 = vshrl.u32 %v7833, 16
        %v7958 = vrot.slane %v7956, 1
        %v7959 = vshll.u32 %v7833, 16
        %v7961 = vrot.slane %v7959, 2
        %v7962 = vor.u32 %v7958, %v7961
        %v7963 = vsel %vm3031, %v7953, %v7962
        %v7965 = vshrl.u32 %v7834, 16
        %v7967 = vrot.slane %v7965, 1
        %v7968 = vshll.u32 %v7834, 16
        %v7970 = vrot.slane %v7968, 2
        %v7971 = vor.u32 %v7967, %v7970
        %v7972 = vsel %vm3031, %v7962, %v7971
        %v7974 = vshrl.u32 %v7835, 16
        %v7976 = vrot.slane %v7974, 1
        %v7977 = vshll.u32 %v7835, 16
        %v7979 = vrot.slane %v7977, 2
        %v7980 = vor.u32 %v7976, %v7979
        %v7981 = vsel %vm3031, %v7971, %v7980
        %v7983 = vshrl.u32 %v7836, 16
        %v7985 = vrot.slane %v7983, 1
        %v7986 = vshll.u32 %v7836, 16
        %v7988 = vrot.slane %v7986, 2
        %v7989 = vor.u32 %v7985, %v7988
        %v7990 = vsel %vm3031, %v7980, %v7989
        %v7992 = vshrl.u32 %v7837, 16
        %v7994 = vrot.slane %v7992, 1
        %v7995 = vshll.u32 %v7837, 16
        %v7997 = vrot.slane %v7995, 2
        %v7998 = vor.u32 %v7994, %v7997
        %v7999 = vsel %vm3031, %v7989, %v7998
        %v8001 = vshrl.u32 %v7838, 16
        %v8003 = vrot.slane %v8001, 1
        %v8004 = vshll.u32 %v7838, 16
        %v8006 = vrot.slane %v8004, 2
        %v8007 = vor.u32 %v8003, %v8006
        %v8008 = vsel %vm3031, %v7998, %v8007
        %v8043 = vunpack.c.l.b16 %v7730
        %v8044 = vunpack.c.l.b16 %v7731
        %v8045 = vunpack.c.l.b16 %v7732
        %v8046 = vunpack.c.l.b16 %v7733
        %v8047 = vunpack.c.l.b16 %v7734
        %v8048 = vunpack.c.l.b16 %v7735
        %v8049 = vunpack.c.l.b16 %v7736
        %v8050 = vunpack.c.l.b16 %v7737
        %v8051 = vunpack.c.l.b16 %v7738
        %v8052 = vunpack.c.l.b16 %v7739
        %v8053 = vunpack.c.l.b16 %v7740
        %v8054 = vunpack.c.l.b16 %v7741
        %v8055 = vunpack.c.l.b16 %v7742
        %v8056 = vunpack.c.l.b16 %v7743
        %v8057 = vunpack.c.l.b16 %v7744
        %v8058 = vunpack.c.l.b16 %v7745
        %v8059 = vpack.c.b16 %v8044, %v8043
        %v8060 = vpack.c.b16 %v8046, %v8045
        %v8061 = vpack.c.b16 %v8048, %v8047
        %v8062 = vpack.c.b16 %v8050, %v8049
        %v8063 = vpack.c.b16 %v8052, %v8051
        %v8064 = vpack.c.b16 %v8054, %v8053
        %v8065 = vpack.c.b16 %v8056, %v8055
        %v8066 = vpack.c.b16 %v8058, %v8057
        %8075 = vmatprep.subr.bf16.mxu0 0
        %8076 = vmatpush1.bf16.msra.mxu0 %v8066
        %8077 = vmatprep.subr.bf16.mxu0 0
        %8078 = vmatpush1.bf16.msra.mxu0 %v8065
        %8079 = vmatprep.subr.bf16.mxu0 0
        %8080 = vmatpush1.bf16.msra.mxu0 %v8064
        %8081 = vmatprep.subr.bf16.mxu0 0
        %8082 = vmatpush1.bf16.msra.mxu0 %v8063
        %8083 = vmatprep.subr.bf16.mxu0 0
        %8084 = vmatpush1.bf16.msra.mxu0 %v8062
        %8085 = vmatprep.subr.bf16.mxu0 0
        %8086 = vmatpush1.bf16.msra.mxu0 %v8061
        %8087 = vmatprep.subr.bf16.mxu0 0
        %8088 = vmatpush1.bf16.msra.mxu0 %v8060
        %8089 = vmatprep.subr.bf16.mxu0 0
        %8090 = vmatpush1.bf16.msra.mxu0 %v8059
        %8091 = vmatprep.subr.bf16.mxu0 0
        %8092 = vmatpush2.bf16.msra.mxu0 0
        %8093 = vmatprep.subr.bf16.mxu0 0
        %8094 = vmatpush2.bf16.msra.mxu0 0
        %8095 = vmatprep.subr.bf16.mxu0 0
        %8096 = vmatpush2.bf16.msra.mxu0 0
        %8097 = vmatprep.subr.bf16.mxu0 0
        %8098 = vmatpush2.bf16.msra.mxu0 0
        %8099 = vmatprep.subr.bf16.mxu0 0
        %8100 = vmatpush2.bf16.msra.mxu0 0
        %8101 = vmatprep.subr.bf16.mxu0 0
        %8102 = vmatpush2.bf16.msra.mxu0 0
        %8103 = vmatprep.subr.bf16.mxu0 0
        %8104 = vmatpush2.bf16.msra.mxu0 0
        %8105 = vmatprep.subr.bf16.mxu0 0
        %8106 = vmatpush2.bf16.msra.mxu0 0
        %8107 = vmatprep.mubr.bf16.mxu0 0
        %8108 = vmatmul.mubr.bf16.gmra.mxu0 %v7855
        %v8109 = vpop.f32.mrf.mxu0
        %v8110 = vadd.f32 0.0, %v8109
        %v8111 = vpop.f32.mrf.mxu0
        %v8112 = vpop.f32.mrf.mxu0
        %v8113 = vadd.f32 0.0, %v8112
        %v8114 = vpop.f32.mrf.mxu0
        %8115 = vmatprep.mubr.bf16.mxu0 0
        %8116 = vmatmul.mubr.bf16.gmra.mxu0 %v7864
        %v8117 = vpop.f32.mrf.mxu0
        %v8118 = vadd.f32 0.0, %v8117
        %v8119 = vpop.f32.mrf.mxu0
        %v8120 = vpop.f32.mrf.mxu0
        %v8121 = vadd.f32 0.0, %v8120
        %v8122 = vpop.f32.mrf.mxu0
        %8123 = vmatprep.mubr.bf16.mxu0 0
        %8124 = vmatmul.mubr.bf16.gmra.mxu0 %v7873
        %v8125 = vpop.f32.mrf.mxu0
        %v8126 = vadd.f32 0.0, %v8125
        %v8127 = vpop.f32.mrf.mxu0
        %v8128 = vpop.f32.mrf.mxu0
        %v8129 = vadd.f32 0.0, %v8128
        %v8130 = vpop.f32.mrf.mxu0
        %8131 = vmatprep.mubr.bf16.mxu0 0
        %8132 = vmatmul.mubr.bf16.gmra.mxu0 %v7882
        %v8133 = vpop.f32.mrf.mxu0
        %v8134 = vadd.f32 0.0, %v8133
        %v8135 = vpop.f32.mrf.mxu0
        %v8136 = vpop.f32.mrf.mxu0
        %v8137 = vadd.f32 0.0, %v8136
        %v8138 = vpop.f32.mrf.mxu0
        %8139 = vmatprep.mubr.bf16.mxu0 0
        %8140 = vmatmul.mubr.bf16.gmra.mxu0 %v7891
        %v8141 = vpop.f32.mrf.mxu0
        %v8142 = vadd.f32 0.0, %v8141
        %v8143 = vpop.f32.mrf.mxu0
        %v8144 = vpop.f32.mrf.mxu0
        %v8145 = vadd.f32 0.0, %v8144
        %v8146 = vpop.f32.mrf.mxu0
        %8147 = vmatprep.mubr.bf16.mxu0 0
        %8148 = vmatmul.mubr.bf16.gmra.mxu0 %v7900
        %v8149 = vpop.f32.mrf.mxu0
        %v8150 = vadd.f32 0.0, %v8149
        %v8151 = vpop.f32.mrf.mxu0
        %v8152 = vpop.f32.mrf.mxu0
        %v8153 = vadd.f32 0.0, %v8152
        %v8154 = vpop.f32.mrf.mxu0
        %8155 = vmatprep.mubr.bf16.mxu0 0
        %8156 = vmatmul.mubr.bf16.gmra.mxu0 %v7909
        %v8157 = vpop.f32.mrf.mxu0
        %v8158 = vadd.f32 0.0, %v8157
        %v8159 = vpop.f32.mrf.mxu0
        %v8160 = vpop.f32.mrf.mxu0
        %v8161 = vadd.f32 0.0, %v8160
        %v8162 = vpop.f32.mrf.mxu0
        %8163 = vmatprep.mubr.bf16.mxu0 0
        %8164 = vmatmul.mubr.bf16.gmra.mxu0 %v7918
        %v8165 = vpop.f32.mrf.mxu0
        %v8166 = vadd.f32 0.0, %v8165
        %v8167 = vpop.f32.mrf.mxu0
        %v8168 = vpop.f32.mrf.mxu0
        %v8169 = vadd.f32 0.0, %v8168
        %v8170 = vpop.f32.mrf.mxu0
        %8171 = vmatprep.mubr.bf16.mxu0 0
        %8172 = vmatmul.mubr.bf16.gmra.mxu0 %v7927
        %v8173 = vpop.f32.mrf.mxu0
        %v8174 = vadd.f32 0.0, %v8173
        %v8175 = vpop.f32.mrf.mxu0
        %v8176 = vpop.f32.mrf.mxu0
        %v8177 = vadd.f32 0.0, %v8176
        %v8178 = vpop.f32.mrf.mxu0
        %8179 = vmatprep.mubr.bf16.mxu0 0
        %8180 = vmatmul.mubr.bf16.gmra.mxu0 %v7936
        %v8181 = vpop.f32.mrf.mxu0
        %v8182 = vadd.f32 0.0, %v8181
        %v8183 = vpop.f32.mrf.mxu0
        %v8184 = vpop.f32.mrf.mxu0
        %v8185 = vadd.f32 0.0, %v8184
        %v8186 = vpop.f32.mrf.mxu0
        %8187 = vmatprep.mubr.bf16.mxu0 0
        %8188 = vmatmul.mubr.bf16.gmra.mxu0 %v7945
        %v8189 = vpop.f32.mrf.mxu0
        %v8190 = vadd.f32 0.0, %v8189
        %v8191 = vpop.f32.mrf.mxu0
        %v8192 = vpop.f32.mrf.mxu0
        %v8193 = vadd.f32 0.0, %v8192
        %v8194 = vpop.f32.mrf.mxu0
        %8195 = vmatprep.mubr.bf16.mxu0 0
        %8196 = vmatmul.mubr.bf16.gmra.mxu0 %v7954
        %v8197 = vpop.f32.mrf.mxu0
        %v8198 = vadd.f32 0.0, %v8197
        %v8199 = vpop.f32.mrf.mxu0
        %v8200 = vpop.f32.mrf.mxu0
        %v8201 = vadd.f32 0.0, %v8200
        %v8202 = vpop.f32.mrf.mxu0
        %8203 = vmatprep.mubr.bf16.mxu0 0
        %8204 = vmatmul.mubr.bf16.gmra.mxu0 %v7963
        %v8205 = vpop.f32.mrf.mxu0
        %v8206 = vadd.f32 0.0, %v8205
        %v8207 = vpop.f32.mrf.mxu0
        %v8208 = vpop.f32.mrf.mxu0
        %v8209 = vadd.f32 0.0, %v8208
        %v8210 = vpop.f32.mrf.mxu0
        %8211 = vmatprep.mubr.bf16.mxu0 0
        %8212 = vmatmul.mubr.bf16.gmra.mxu0 %v7972
        %v8213 = vpop.f32.mrf.mxu0
        %v8214 = vadd.f32 0.0, %v8213
        %v8215 = vpop.f32.mrf.mxu0
        %v8216 = vpop.f32.mrf.mxu0
        %v8217 = vadd.f32 0.0, %v8216
        %v8218 = vpop.f32.mrf.mxu0
        %8219 = vmatprep.mubr.bf16.mxu0 0
        %8220 = vmatmul.mubr.bf16.gmra.mxu0 %v7981
        %v8221 = vpop.f32.mrf.mxu0
        %v8222 = vadd.f32 0.0, %v8221
        %v8223 = vpop.f32.mrf.mxu0
        %v8224 = vpop.f32.mrf.mxu0
        %v8225 = vadd.f32 0.0, %v8224
        %v8226 = vpop.f32.mrf.mxu0
        %8227 = vmatprep.mubr.bf16.mxu0 0
        %8228 = vmatmul.mubr.bf16.gmra.mxu0 %v7990
        %v8229 = vpop.f32.mrf.mxu0
        %v8230 = vadd.f32 0.0, %v8229
        %v8231 = vpop.f32.mrf.mxu0
        %v8232 = vpop.f32.mrf.mxu0
        %v8233 = vadd.f32 0.0, %v8232
        %v8234 = vpop.f32.mrf.mxu0
        %8235 = vmatprep.mubr.bf16.mxu0 0
        %8236 = vmatmul.mubr.bf16.gmra.mxu0 %v7999
        %v8237 = vpop.f32.mrf.mxu0
        %v8238 = vadd.f32 0.0, %v8237
        %v8239 = vpop.f32.mrf.mxu0
        %v8240 = vpop.f32.mrf.mxu0
        %v8241 = vadd.f32 0.0, %v8240
        %v8242 = vpop.f32.mrf.mxu0
        %8243 = vmatprep.mubr.bf16.mxu0 0
        %8244 = vmatmul.mubr.bf16.gmra.mxu0 %v8008
        %v8245 = vpop.f32.mrf.mxu0
        %v8246 = vadd.f32 0.0, %v8245
        %v8247 = vpop.f32.mrf.mxu0
        %v8248 = vpop.f32.mrf.mxu0
        %v8249 = vadd.f32 0.0, %v8248
        %v8250 = vpop.f32.mrf.mxu0
        %8251 = vdwg.mxu0
        %v8253 = vunpack.c.l.b16 %v7710
        %v8254 = vpack.c.b16 %v8253, %v8253
        %v8255 = vrot.slane %v7820, 1
        %v8256 = vrot.slane %v7821, 1
        %v8257 = vsel %vm2549, %v8255, %v8256
        %v8258 = vrot.slane %v7822, 1
        %v8259 = vsel %vm2549, %v8256, %v8258
        %v8260 = vrot.slane %v7823, 1
        %v8261 = vsel %vm2549, %v8258, %v8260
        %v8262 = vrot.slane %v7824, 1
        %v8263 = vsel %vm2549, %v8260, %v8262
        %v8264 = vrot.slane %v7825, 1
        %v8265 = vsel %vm2549, %v8262, %v8264
        %v8266 = vrot.slane %v7826, 1
        %v8267 = vsel %vm2549, %v8264, %v8266
        %v8268 = vrot.slane %v7827, 1
        %v8269 = vsel %vm2549, %v8266, %v8268
        %v8270 = vrot.slane %v7828, 1
        %v8271 = vsel %vm2549, %v8268, %v8270
        %v8272 = vrot.slane %v7829, 1
        %v8273 = vsel %vm2549, %v8270, %v8272
        %v8274 = vrot.slane %v7830, 1
        %v8275 = vsel %vm2549, %v8272, %v8274
        %v8276 = vrot.slane %v7831, 1
        %v8277 = vsel %vm2549, %v8274, %v8276
        %v8278 = vrot.slane %v7832, 1
        %v8279 = vsel %vm2549, %v8276, %v8278
        %v8280 = vrot.slane %v7833, 1
        %v8281 = vsel %vm2549, %v8278, %v8280
        %v8282 = vrot.slane %v7834, 1
        %v8283 = vsel %vm2549, %v8280, %v8282
        %v8284 = vrot.slane %v7835, 1
        %v8285 = vsel %vm2549, %v8282, %v8284
        %v8286 = vrot.slane %v7836, 1
        %v8287 = vsel %vm2549, %v8284, %v8286
        %v8288 = vrot.slane %v7837, 1
        %v8289 = vsel %vm2549, %v8286, %v8288
        %v8290 = vrot.slane %v8254, 1
        %v8291 = vsel %vm2549, %v8288, %v8290
        %v8326 = vunpack.c.l.b16 %v7712
        %v8327 = vunpack.c.l.b16 %v7713
        %v8328 = vunpack.c.l.b16 %v7714
        %v8329 = vunpack.c.l.b16 %v7715
        %v8330 = vunpack.c.l.b16 %v7716
        %v8331 = vunpack.c.l.b16 %v7717
        %v8332 = vunpack.c.l.b16 %v7718
        %v8333 = vunpack.c.l.b16 %v7719
        %v8334 = vunpack.c.l.b16 %v7720
        %v8335 = vunpack.c.l.b16 %v7721
        %v8336 = vunpack.c.l.b16 %v7722
        %v8337 = vunpack.c.l.b16 %v7723
        %v8338 = vunpack.c.l.b16 %v7724
        %v8339 = vunpack.c.l.b16 %v7725
        %v8340 = vunpack.c.l.b16 %v7726
        %v8341 = vunpack.c.l.b16 %v7727
        %v8342 = vpack.c.b16 %v8327, %v8326
        %v8343 = vpack.c.b16 %v8329, %v8328
        %v8344 = vpack.c.b16 %v8331, %v8330
        %v8345 = vpack.c.b16 %v8333, %v8332
        %v8346 = vpack.c.b16 %v8335, %v8334
        %v8347 = vpack.c.b16 %v8337, %v8336
        %v8348 = vpack.c.b16 %v8339, %v8338
        %v8349 = vpack.c.b16 %v8341, %v8340
        %8358 = vmatprep.subr.bf16.mxu0 0
        %8359 = vmatpush1.bf16.msra.mxu0 %v8349
        %8360 = vmatprep.subr.bf16.mxu0 0
        %8361 = vmatpush1.bf16.msra.mxu0 %v8348
        %8362 = vmatprep.subr.bf16.mxu0 0
        %8363 = vmatpush1.bf16.msra.mxu0 %v8347
        %8364 = vmatprep.subr.bf16.mxu0 0
        %8365 = vmatpush1.bf16.msra.mxu0 %v8346
        %8366 = vmatprep.subr.bf16.mxu0 0
        %8367 = vmatpush1.bf16.msra.mxu0 %v8345
        %8368 = vmatprep.subr.bf16.mxu0 0
        %8369 = vmatpush1.bf16.msra.mxu0 %v8344
        %8370 = vmatprep.subr.bf16.mxu0 0
        %8371 = vmatpush1.bf16.msra.mxu0 %v8343
        %8372 = vmatprep.subr.bf16.mxu0 0
        %8373 = vmatpush1.bf16.msra.mxu0 %v8342
        %8374 = vmatprep.subr.bf16.mxu0 0
        %8375 = vmatpush2.bf16.msra.mxu0 0
        %8376 = vmatprep.subr.bf16.mxu0 0
        %8377 = vmatpush2.bf16.msra.mxu0 0
        %8378 = vmatprep.subr.bf16.mxu0 0
        %8379 = vmatpush2.bf16.msra.mxu0 0
        %8380 = vmatprep.subr.bf16.mxu0 0
        %8381 = vmatpush2.bf16.msra.mxu0 0
        %8382 = vmatprep.subr.bf16.mxu0 0
        %8383 = vmatpush2.bf16.msra.mxu0 0
        %8384 = vmatprep.subr.bf16.mxu0 0
        %8385 = vmatpush2.bf16.msra.mxu0 0
        %8386 = vmatprep.subr.bf16.mxu0 0
        %8387 = vmatpush2.bf16.msra.mxu0 0
        %8388 = vmatprep.subr.bf16.mxu0 0
        %8389 = vmatpush2.bf16.msra.mxu0 0
        %8390 = vmatprep.mubr.bf16.mxu0 0
        %8391 = vmatmul.mubr.bf16.gmra.mxu0 %v8257
        %v8392 = vpop.f32.mrf.mxu0
        %v8393 = vadd.f32 %v8110, %v8392
        %v8394 = vpop.f32.mrf.mxu0
        %v8395 = vpop.f32.mrf.mxu0
        %v8396 = vadd.f32 %v8113, %v8395
        %v8397 = vpop.f32.mrf.mxu0
        %8398 = vmatprep.mubr.bf16.mxu0 0
        %8399 = vmatmul.mubr.bf16.gmra.mxu0 %v8259
        %v8400 = vpop.f32.mrf.mxu0
        %v8401 = vadd.f32 %v8118, %v8400
        %v8402 = vpop.f32.mrf.mxu0
        %v8403 = vpop.f32.mrf.mxu0
        %v8404 = vadd.f32 %v8121, %v8403
        %v8405 = vpop.f32.mrf.mxu0
        %8406 = vmatprep.mubr.bf16.mxu0 0
        %8407 = vmatmul.mubr.bf16.gmra.mxu0 %v8261
        %v8408 = vpop.f32.mrf.mxu0
        %v8409 = vadd.f32 %v8126, %v8408
        %v8410 = vpop.f32.mrf.mxu0
        %v8411 = vpop.f32.mrf.mxu0
        %v8412 = vadd.f32 %v8129, %v8411
        %v8413 = vpop.f32.mrf.mxu0
        %8414 = vmatprep.mubr.bf16.mxu0 0
        %8415 = vmatmul.mubr.bf16.gmra.mxu0 %v8263
        %v8416 = vpop.f32.mrf.mxu0
        %v8417 = vadd.f32 %v8134, %v8416
        %v8418 = vpop.f32.mrf.mxu0
        %v8419 = vpop.f32.mrf.mxu0
        %v8420 = vadd.f32 %v8137, %v8419
        %v8421 = vpop.f32.mrf.mxu0
        %8422 = vmatprep.mubr.bf16.mxu0 0
        %8423 = vmatmul.mubr.bf16.gmra.mxu0 %v8265
        %v8424 = vpop.f32.mrf.mxu0
        %v8425 = vadd.f32 %v8142, %v8424
        %v8426 = vpop.f32.mrf.mxu0
        %v8427 = vpop.f32.mrf.mxu0
        %v8428 = vadd.f32 %v8145, %v8427
        %v8429 = vpop.f32.mrf.mxu0
        %8430 = vmatprep.mubr.bf16.mxu0 0
        %8431 = vmatmul.mubr.bf16.gmra.mxu0 %v8267
        %v8432 = vpop.f32.mrf.mxu0
        %v8433 = vadd.f32 %v8150, %v8432
        %v8434 = vpop.f32.mrf.mxu0
        %v8435 = vpop.f32.mrf.mxu0
        %v8436 = vadd.f32 %v8153, %v8435
        %v8437 = vpop.f32.mrf.mxu0
        %8438 = vmatprep.mubr.bf16.mxu0 0
        %8439 = vmatmul.mubr.bf16.gmra.mxu0 %v8269
        %v8440 = vpop.f32.mrf.mxu0
        %v8441 = vadd.f32 %v8158, %v8440
        %v8442 = vpop.f32.mrf.mxu0
        %v8443 = vpop.f32.mrf.mxu0
        %v8444 = vadd.f32 %v8161, %v8443
        %v8445 = vpop.f32.mrf.mxu0
        %8446 = vmatprep.mubr.bf16.mxu0 0
        %8447 = vmatmul.mubr.bf16.gmra.mxu0 %v8271
        %v8448 = vpop.f32.mrf.mxu0
        %v8449 = vadd.f32 %v8166, %v8448
        %v8450 = vpop.f32.mrf.mxu0
        %v8451 = vpop.f32.mrf.mxu0
        %v8452 = vadd.f32 %v8169, %v8451
        %v8453 = vpop.f32.mrf.mxu0
        %8454 = vmatprep.mubr.bf16.mxu0 0
        %8455 = vmatmul.mubr.bf16.gmra.mxu0 %v8273
        %v8456 = vpop.f32.mrf.mxu0
        %v8457 = vadd.f32 %v8174, %v8456
        %v8458 = vpop.f32.mrf.mxu0
        %v8459 = vpop.f32.mrf.mxu0
        %v8460 = vadd.f32 %v8177, %v8459
        %v8461 = vpop.f32.mrf.mxu0
        %8462 = vmatprep.mubr.bf16.mxu0 0
        %8463 = vmatmul.mubr.bf16.gmra.mxu0 %v8275
        %v8464 = vpop.f32.mrf.mxu0
        %v8465 = vadd.f32 %v8182, %v8464
        %v8466 = vpop.f32.mrf.mxu0
        %v8467 = vpop.f32.mrf.mxu0
        %v8468 = vadd.f32 %v8185, %v8467
        %v8469 = vpop.f32.mrf.mxu0
        %8470 = vmatprep.mubr.bf16.mxu0 0
        %8471 = vmatmul.mubr.bf16.gmra.mxu0 %v8277
        %v8472 = vpop.f32.mrf.mxu0
        %v8473 = vadd.f32 %v8190, %v8472
        %v8474 = vpop.f32.mrf.mxu0
        %v8475 = vpop.f32.mrf.mxu0
        %v8476 = vadd.f32 %v8193, %v8475
        %v8477 = vpop.f32.mrf.mxu0
        %8478 = vmatprep.mubr.bf16.mxu0 0
        %8479 = vmatmul.mubr.bf16.gmra.mxu0 %v8279
        %v8480 = vpop.f32.mrf.mxu0
        %v8481 = vadd.f32 %v8198, %v8480
        %v8482 = vpop.f32.mrf.mxu0
        %v8483 = vpop.f32.mrf.mxu0
        %v8484 = vadd.f32 %v8201, %v8483
        %v8485 = vpop.f32.mrf.mxu0
        %8486 = vmatprep.mubr.bf16.mxu0 0
        %8487 = vmatmul.mubr.bf16.gmra.mxu0 %v8281
        %v8488 = vpop.f32.mrf.mxu0
        %v8489 = vadd.f32 %v8206, %v8488
        %v8490 = vpop.f32.mrf.mxu0
        %v8491 = vpop.f32.mrf.mxu0
        %v8492 = vadd.f32 %v8209, %v8491
        %v8493 = vpop.f32.mrf.mxu0
        %8494 = vmatprep.mubr.bf16.mxu0 0
        %8495 = vmatmul.mubr.bf16.gmra.mxu0 %v8283
        %v8496 = vpop.f32.mrf.mxu0
        %v8497 = vadd.f32 %v8214, %v8496
        %v8498 = vpop.f32.mrf.mxu0
        %v8499 = vpop.f32.mrf.mxu0
        %v8500 = vadd.f32 %v8217, %v8499
        %v8501 = vpop.f32.mrf.mxu0
        %8502 = vmatprep.mubr.bf16.mxu0 0
        %8503 = vmatmul.mubr.bf16.gmra.mxu0 %v8285
        %v8504 = vpop.f32.mrf.mxu0
        %v8505 = vadd.f32 %v8222, %v8504
        %v8506 = vpop.f32.mrf.mxu0
        %v8507 = vpop.f32.mrf.mxu0
        %v8508 = vadd.f32 %v8225, %v8507
        %v8509 = vpop.f32.mrf.mxu0
        %8510 = vmatprep.mubr.bf16.mxu0 0
        %8511 = vmatmul.mubr.bf16.gmra.mxu0 %v8287
        %v8512 = vpop.f32.mrf.mxu0
        %v8513 = vadd.f32 %v8230, %v8512
        %v8514 = vpop.f32.mrf.mxu0
        %v8515 = vpop.f32.mrf.mxu0
        %v8516 = vadd.f32 %v8233, %v8515
        %v8517 = vpop.f32.mrf.mxu0
        %8518 = vmatprep.mubr.bf16.mxu0 0
        %8519 = vmatmul.mubr.bf16.gmra.mxu0 %v8289
        %v8520 = vpop.f32.mrf.mxu0
        %v8521 = vadd.f32 %v8238, %v8520
        %v8522 = vpop.f32.mrf.mxu0
        %v8523 = vpop.f32.mrf.mxu0
        %v8524 = vadd.f32 %v8241, %v8523
        %v8525 = vpop.f32.mrf.mxu0
        %8526 = vmatprep.mubr.bf16.mxu0 0
        %8527 = vmatmul.mubr.bf16.gmra.mxu0 %v8291
        %v8528 = vpop.f32.mrf.mxu0
        %v8529 = vadd.f32 %v8246, %v8528
        %v8530 = vpop.f32.mrf.mxu0
        %v8531 = vpop.f32.mrf.mxu0
        %v8532 = vadd.f32 %v8249, %v8531
        %v8533 = vpop.f32.mrf.mxu0
        %8534 = vdwg.mxu0
        %v8535 = vld [vmem:[#allocation2 + $0x8] sm:$0xc]
        %s8536 = scalar_lea.vmem %s3, 320
        %v8537 = vld [vmem:[%s8536] sm:$0xf]
        %v8538 = vld [vmem:[%s8536 + $0x4] sm:$0xf]
        %v8539 = vld [vmem:[%s8536 + $0x8] sm:$0xf]
        %v8540 = vld [vmem:[%s8536 + $0xc] sm:$0xf]
        %v8541 = vld [vmem:[%s8536 + $0x10] sm:$0xf]
        %v8542 = vld [vmem:[%s8536 + $0x14] sm:$0xf]
        %v8543 = vld [vmem:[%s8536 + $0x18] sm:$0xf]
        %v8544 = vld [vmem:[%s8536 + $0x1c] sm:$0xf]
        %v8545 = vld [vmem:[%s8536 + $0x20] sm:$0xf]
        %v8546 = vld [vmem:[%s8536 + $0x24] sm:$0xf]
        %v8547 = vld [vmem:[%s8536 + $0x28] sm:$0xf]
        %v8548 = vld [vmem:[%s8536 + $0x2c] sm:$0xf]
        %v8549 = vld [vmem:[%s8536 + $0x30] sm:$0xf]
        %v8550 = vld [vmem:[%s8536 + $0x34] sm:$0xf]
        %v8551 = vld [vmem:[%s8536 + $0x38] sm:$0xf]
        %v8552 = vld [vmem:[%s8536 + $0x3c] sm:$0xf]
        %v8554 = vunpack.c.l.b16 %v8535
        %v8555 = vpack.c.b16 %v7784, %v8554
        %v8556 = vrot.slane %v8555, 2
        %v8557 = vrot.slane %v7821, 2
        %v8558 = vsel %vm3749, %v8556, %v8557
        %v8559 = vrot.slane %v7822, 2
        %v8560 = vsel %vm3749, %v8557, %v8559
        %v8561 = vrot.slane %v7823, 2
        %v8562 = vsel %vm3749, %v8559, %v8561
        %v8563 = vrot.slane %v7824, 2
        %v8564 = vsel %vm3749, %v8561, %v8563
        %v8565 = vrot.slane %v7825, 2
        %v8566 = vsel %vm3749, %v8563, %v8565
        %v8567 = vrot.slane %v7826, 2
        %v8568 = vsel %vm3749, %v8565, %v8567
        %v8569 = vrot.slane %v7827, 2
        %v8570 = vsel %vm3749, %v8567, %v8569
        %v8571 = vrot.slane %v7828, 2
        %v8572 = vsel %vm3749, %v8569, %v8571
        %v8573 = vrot.slane %v7829, 2
        %v8574 = vsel %vm3749, %v8571, %v8573
        %v8575 = vrot.slane %v7830, 2
        %v8576 = vsel %vm3749, %v8573, %v8575
        %v8577 = vrot.slane %v7831, 2
        %v8578 = vsel %vm3749, %v8575, %v8577
        %v8579 = vrot.slane %v7832, 2
        %v8580 = vsel %vm3749, %v8577, %v8579
        %v8581 = vrot.slane %v7833, 2
        %v8582 = vsel %vm3749, %v8579, %v8581
        %v8583 = vrot.slane %v7834, 2
        %v8584 = vsel %vm3749, %v8581, %v8583
        %v8585 = vrot.slane %v7835, 2
        %v8586 = vsel %vm3749, %v8583, %v8585
        %v8587 = vrot.slane %v7836, 2
        %v8588 = vsel %vm3749, %v8585, %v8587
        %v8589 = vrot.slane %v7837, 2
        %v8590 = vsel %vm3749, %v8587, %v8589
        %v8591 = vrot.slane %v7838, 2
        %v8592 = vsel %vm3749, %v8589, %v8591
        %v8627 = vunpack.c.l.b16 %v8537
        %v8628 = vunpack.c.l.b16 %v8538
        %v8629 = vunpack.c.l.b16 %v8539
        %v8630 = vunpack.c.l.b16 %v8540
        %v8631 = vunpack.c.l.b16 %v8541
        %v8632 = vunpack.c.l.b16 %v8542
        %v8633 = vunpack.c.l.b16 %v8543
        %v8634 = vunpack.c.l.b16 %v8544
        %v8635 = vunpack.c.l.b16 %v8545
        %v8636 = vunpack.c.l.b16 %v8546
        %v8637 = vunpack.c.l.b16 %v8547
        %v8638 = vunpack.c.l.b16 %v8548
        %v8639 = vunpack.c.l.b16 %v8549
        %v8640 = vunpack.c.l.b16 %v8550
        %v8641 = vunpack.c.l.b16 %v8551
        %v8642 = vunpack.c.l.b16 %v8552
        %v8643 = vpack.c.b16 %v8628, %v8627
        %v8644 = vpack.c.b16 %v8630, %v8629
        %v8645 = vpack.c.b16 %v8632, %v8631
        %v8646 = vpack.c.b16 %v8634, %v8633
        %v8647 = vpack.c.b16 %v8636, %v8635
        %v8648 = vpack.c.b16 %v8638, %v8637
        %v8649 = vpack.c.b16 %v8640, %v8639
        %v8650 = vpack.c.b16 %v8642, %v8641
        %8659 = vmatprep.subr.bf16.mxu0 0
        %8660 = vmatpush1.bf16.msra.mxu0 %v8650
        %8661 = vmatprep.subr.bf16.mxu0 0
        %8662 = vmatpush1.bf16.msra.mxu0 %v8649
        %8663 = vmatprep.subr.bf16.mxu0 0
        %8664 = vmatpush1.bf16.msra.mxu0 %v8648
        %8665 = vmatprep.subr.bf16.mxu0 0
        %8666 = vmatpush1.bf16.msra.mxu0 %v8647
        %8667 = vmatprep.subr.bf16.mxu0 0
        %8668 = vmatpush1.bf16.msra.mxu0 %v8646
        %8669 = vmatprep.subr.bf16.mxu0 0
        %8670 = vmatpush1.bf16.msra.mxu0 %v8645
        %8671 = vmatprep.subr.bf16.mxu0 0
        %8672 = vmatpush1.bf16.msra.mxu0 %v8644
        %8673 = vmatprep.subr.bf16.mxu0 0
        %8674 = vmatpush1.bf16.msra.mxu0 %v8643
        %8675 = vmatprep.subr.bf16.mxu0 0
        %8676 = vmatpush2.bf16.msra.mxu0 0
        %8677 = vmatprep.subr.bf16.mxu0 0
        %8678 = vmatpush2.bf16.msra.mxu0 0
        %8679 = vmatprep.subr.bf16.mxu0 0
        %8680 = vmatpush2.bf16.msra.mxu0 0
        %8681 = vmatprep.subr.bf16.mxu0 0
        %8682 = vmatpush2.bf16.msra.mxu0 0
        %8683 = vmatprep.subr.bf16.mxu0 0
        %8684 = vmatpush2.bf16.msra.mxu0 0
        %8685 = vmatprep.subr.bf16.mxu0 0
        %8686 = vmatpush2.bf16.msra.mxu0 0
        %8687 = vmatprep.subr.bf16.mxu0 0
        %8688 = vmatpush2.bf16.msra.mxu0 0
        %8689 = vmatprep.subr.bf16.mxu0 0
        %8690 = vmatpush2.bf16.msra.mxu0 0
        %8691 = vmatprep.mubr.bf16.mxu0 0
        %8692 = vmatmul.mubr.bf16.gmra.mxu0 %v8558
        %v8693 = vpop.f32.mrf.mxu0
        %v8694 = vadd.f32 0.0, %v8693
        %v8695 = vpop.f32.mrf.mxu0
        %v8696 = vpop.f32.mrf.mxu0
        %v8697 = vadd.f32 0.0, %v8696
        %v8698 = vpop.f32.mrf.mxu0
        %8699 = vmatprep.mubr.bf16.mxu0 0
        %8700 = vmatmul.mubr.bf16.gmra.mxu0 %v8560
        %v8701 = vpop.f32.mrf.mxu0
        %v8702 = vadd.f32 0.0, %v8701
        %v8703 = vpop.f32.mrf.mxu0
        %v8704 = vpop.f32.mrf.mxu0
        %v8705 = vadd.f32 0.0, %v8704
        %v8706 = vpop.f32.mrf.mxu0
        %8707 = vmatprep.mubr.bf16.mxu0 0
        %8708 = vmatmul.mubr.bf16.gmra.mxu0 %v8562
        %v8709 = vpop.f32.mrf.mxu0
        %v8710 = vadd.f32 0.0, %v8709
        %v8711 = vpop.f32.mrf.mxu0
        %v8712 = vpop.f32.mrf.mxu0
        %v8713 = vadd.f32 0.0, %v8712
        %v8714 = vpop.f32.mrf.mxu0
        %8715 = vmatprep.mubr.bf16.mxu0 0
        %8716 = vmatmul.mubr.bf16.gmra.mxu0 %v8564
        %v8717 = vpop.f32.mrf.mxu0
        %v8718 = vadd.f32 0.0, %v8717
        %v8719 = vpop.f32.mrf.mxu0
        %v8720 = vpop.f32.mrf.mxu0
        %v8721 = vadd.f32 0.0, %v8720
        %v8722 = vpop.f32.mrf.mxu0
        %8723 = vmatprep.mubr.bf16.mxu0 0
        %8724 = vmatmul.mubr.bf16.gmra.mxu0 %v8566
        %v8725 = vpop.f32.mrf.mxu0
        %v8726 = vadd.f32 0.0, %v8725
        %v8727 = vpop.f32.mrf.mxu0
        %v8728 = vpop.f32.mrf.mxu0
        %v8729 = vadd.f32 0.0, %v8728
        %v8730 = vpop.f32.mrf.mxu0
        %8731 = vmatprep.mubr.bf16.mxu0 0
        %8732 = vmatmul.mubr.bf16.gmra.mxu0 %v8568
        %v8733 = vpop.f32.mrf.mxu0
        %v8734 = vadd.f32 0.0, %v8733
        %v8735 = vpop.f32.mrf.mxu0
        %v8736 = vpop.f32.mrf.mxu0
        %v8737 = vadd.f32 0.0, %v8736
        %v8738 = vpop.f32.mrf.mxu0
        %8739 = vmatprep.mubr.bf16.mxu0 0
        %8740 = vmatmul.mubr.bf16.gmra.mxu0 %v8570
        %v8741 = vpop.f32.mrf.mxu0
        %v8742 = vadd.f32 0.0, %v8741
        %v8743 = vpop.f32.mrf.mxu0
        %v8744 = vpop.f32.mrf.mxu0
        %v8745 = vadd.f32 0.0, %v8744
        %v8746 = vpop.f32.mrf.mxu0
        %8747 = vmatprep.mubr.bf16.mxu0 0
        %8748 = vmatmul.mubr.bf16.gmra.mxu0 %v8572
        %v8749 = vpop.f32.mrf.mxu0
        %v8750 = vadd.f32 0.0, %v8749
        %v8751 = vpop.f32.mrf.mxu0
        %v8752 = vpop.f32.mrf.mxu0
        %v8753 = vadd.f32 0.0, %v8752
        %v8754 = vpop.f32.mrf.mxu0
        %8755 = vmatprep.mubr.bf16.mxu0 0
        %8756 = vmatmul.mubr.bf16.gmra.mxu0 %v8574
        %v8757 = vpop.f32.mrf.mxu0
        %v8758 = vadd.f32 0.0, %v8757
        %v8759 = vpop.f32.mrf.mxu0
        %v8760 = vpop.f32.mrf.mxu0
        %v8761 = vadd.f32 0.0, %v8760
        %v8762 = vpop.f32.mrf.mxu0
        %8763 = vmatprep.mubr.bf16.mxu0 0
        %8764 = vmatmul.mubr.bf16.gmra.mxu0 %v8576
        %v8765 = vpop.f32.mrf.mxu0
        %v8766 = vadd.f32 0.0, %v8765
        %v8767 = vpop.f32.mrf.mxu0
        %v8768 = vpop.f32.mrf.mxu0
        %v8769 = vadd.f32 0.0, %v8768
        %v8770 = vpop.f32.mrf.mxu0
        %8771 = vmatprep.mubr.bf16.mxu0 0
        %8772 = vmatmul.mubr.bf16.gmra.mxu0 %v8578
        %v8773 = vpop.f32.mrf.mxu0
        %v8774 = vadd.f32 0.0, %v8773
        %v8775 = vpop.f32.mrf.mxu0
        %v8776 = vpop.f32.mrf.mxu0
        %v8777 = vadd.f32 0.0, %v8776
        %v8778 = vpop.f32.mrf.mxu0
        %8779 = vmatprep.mubr.bf16.mxu0 0
        %8780 = vmatmul.mubr.bf16.gmra.mxu0 %v8580
        %v8781 = vpop.f32.mrf.mxu0
        %v8782 = vadd.f32 0.0, %v8781
        %v8783 = vpop.f32.mrf.mxu0
        %v8784 = vpop.f32.mrf.mxu0
        %v8785 = vadd.f32 0.0, %v8784
        %v8786 = vpop.f32.mrf.mxu0
        %8787 = vmatprep.mubr.bf16.mxu0 0
        %8788 = vmatmul.mubr.bf16.gmra.mxu0 %v8582
        %v8789 = vpop.f32.mrf.mxu0
        %v8790 = vadd.f32 0.0, %v8789
        %v8791 = vpop.f32.mrf.mxu0
        %v8792 = vpop.f32.mrf.mxu0
        %v8793 = vadd.f32 0.0, %v8792
        %v8794 = vpop.f32.mrf.mxu0
        %8795 = vmatprep.mubr.bf16.mxu0 0
        %8796 = vmatmul.mubr.bf16.gmra.mxu0 %v8584
        %v8797 = vpop.f32.mrf.mxu0
        %v8798 = vadd.f32 0.0, %v8797
        %v8799 = vpop.f32.mrf.mxu0
        %v8800 = vpop.f32.mrf.mxu0
        %v8801 = vadd.f32 0.0, %v8800
        %v8802 = vpop.f32.mrf.mxu0
        %8803 = vmatprep.mubr.bf16.mxu0 0
        %8804 = vmatmul.mubr.bf16.gmra.mxu0 %v8586
        %v8805 = vpop.f32.mrf.mxu0
        %v8806 = vadd.f32 0.0, %v8805
        %v8807 = vpop.f32.mrf.mxu0
        %v8808 = vpop.f32.mrf.mxu0
        %v8809 = vadd.f32 0.0, %v8808
        %v8810 = vpop.f32.mrf.mxu0
        %8811 = vmatprep.mubr.bf16.mxu0 0
        %8812 = vmatmul.mubr.bf16.gmra.mxu0 %v8588
        %v8813 = vpop.f32.mrf.mxu0
        %v8814 = vadd.f32 0.0, %v8813
        %v8815 = vpop.f32.mrf.mxu0
        %v8816 = vpop.f32.mrf.mxu0
        %v8817 = vadd.f32 0.0, %v8816
        %v8818 = vpop.f32.mrf.mxu0
        %8819 = vmatprep.mubr.bf16.mxu0 0
        %8820 = vmatmul.mubr.bf16.gmra.mxu0 %v8590
        %v8821 = vpop.f32.mrf.mxu0
        %v8822 = vadd.f32 0.0, %v8821
        %v8823 = vpop.f32.mrf.mxu0
        %v8824 = vpop.f32.mrf.mxu0
        %v8825 = vadd.f32 0.0, %v8824
        %v8826 = vpop.f32.mrf.mxu0
        %8827 = vmatprep.mubr.bf16.mxu0 0
        %8828 = vmatmul.mubr.bf16.gmra.mxu0 %v8592
        %v8829 = vpop.f32.mrf.mxu0
        %v8830 = vadd.f32 0.0, %v8829
        %v8831 = vpop.f32.mrf.mxu0
        %v8832 = vpop.f32.mrf.mxu0
        %v8833 = vadd.f32 0.0, %v8832
        %v8834 = vpop.f32.mrf.mxu0
        %8835 = vdwg.mxu0
        %v8836 = vadd.f32 %v8393, %v8694
        %v8837 = vadd.f32 %v8396, %v8697
        %v8838 = vadd.f32 %v8401, %v8702
        %v8839 = vadd.f32 %v8404, %v8705
        %v8840 = vadd.f32 %v8409, %v8710
        %v8841 = vadd.f32 %v8412, %v8713
        %v8842 = vadd.f32 %v8417, %v8718
        %v8843 = vadd.f32 %v8420, %v8721
        %v8844 = vadd.f32 %v8425, %v8726
        %v8845 = vadd.f32 %v8428, %v8729
        %v8846 = vadd.f32 %v8433, %v8734
        %v8847 = vadd.f32 %v8436, %v8737
        %v8848 = vadd.f32 %v8441, %v8742
        %v8849 = vadd.f32 %v8444, %v8745
        %v8850 = vadd.f32 %v8449, %v8750
        %v8851 = vadd.f32 %v8452, %v8753
        %v8852 = vadd.f32 %v8457, %v8758
        %v8853 = vadd.f32 %v8460, %v8761
        %v8854 = vadd.f32 %v8465, %v8766
        %v8855 = vadd.f32 %v8468, %v8769
        %v8856 = vadd.f32 %v8473, %v8774
        %v8857 = vadd.f32 %v8476, %v8777
        %v8858 = vadd.f32 %v8481, %v8782
        %v8859 = vadd.f32 %v8484, %v8785
        %v8860 = vadd.f32 %v8489, %v8790
        %v8861 = vadd.f32 %v8492, %v8793
        %v8862 = vadd.f32 %v8497, %v8798
        %v8863 = vadd.f32 %v8500, %v8801
        %v8864 = vadd.f32 %v8505, %v8806
        %v8865 = vadd.f32 %v8508, %v8809
        %v8866 = vadd.f32 %v8513, %v8814
        %v8867 = vadd.f32 %v8516, %v8817
        %v8868 = vadd.f32 %v8521, %v8822
        %v8869 = vadd.f32 %v8524, %v8825
        %v8870 = vadd.f32 %v8529, %v8830
        %v8871 = vadd.f32 %v8532, %v8833
        %v8872 = vld [vmem:[#allocation2 + $0x10] sm:$0xc]
        %v8873 = vld [vmem:[#allocation2 + $0x14] sm:$0xf]
        %v8874 = vld [vmem:[#allocation2 + $0x18] sm:$0xf]
        %v8875 = vld [vmem:[#allocation2 + $0x1c] sm:$0xf]
        %v8876 = vld [vmem:[#allocation2 + $0x20] sm:$0xf]
        %v8877 = vld [vmem:[#allocation2 + $0x24] sm:$0xf]
        %v8878 = vld [vmem:[#allocation2 + $0x28] sm:$0xf]
        %v8879 = vld [vmem:[#allocation2 + $0x2c] sm:$0xf]
        %v8880 = vld [vmem:[#allocation2 + $0x30] sm:$0xf]
        %v8881 = vld [vmem:[#allocation2 + $0x34] sm:$0xf]
        %v8882 = vld [vmem:[#allocation2 + $0x38] sm:$0xf]
        %v8883 = vld [vmem:[#allocation2 + $0x3c] sm:$0xf]
        %v8884 = vld [vmem:[#allocation2 + $0x40] sm:$0xf]
        %v8885 = vld [vmem:[#allocation2 + $0x44] sm:$0xf]
        %v8886 = vld [vmem:[#allocation2 + $0x48] sm:$0xf]
        %v8887 = vld [vmem:[#allocation2 + $0x4c] sm:$0xf]
        %v8888 = vld [vmem:[#allocation2 + $0x50] sm:$0xf]
        %v8889 = vld [vmem:[#allocation2 + $0x54] sm:$0xf]
        %v8890 = vld [vmem:[#allocation2 + $0x58] sm:$0xf]
        %v8891 = vld [vmem:[#allocation2 + $0x5c] sm:$0xf]
        %v8892 = vld [vmem:[#allocation2 + $0x60] sm:$0xf]
        %v8893 = vld [vmem:[#allocation2 + $0x64] sm:$0xf]
        %v8894 = vld [vmem:[#allocation2 + $0x68] sm:$0xf]
        %v8895 = vld [vmem:[#allocation2 + $0x6c] sm:$0xf]
        %v8896 = vld [vmem:[#allocation2 + $0x70] sm:$0xf]
        %v8897 = vld [vmem:[#allocation2 + $0x74] sm:$0xf]
        %v8898 = vld [vmem:[#allocation2 + $0x78] sm:$0xf]
        %v8899 = vld [vmem:[#allocation2 + $0x7c] sm:$0xf]
        %v8900 = vld [vmem:[#allocation2 + $0x80] sm:$0xf]
        %v8901 = vld [vmem:[#allocation2 + $0x84] sm:$0xf]
        %v8902 = vld [vmem:[#allocation2 + $0x88] sm:$0xf]
        %v8903 = vld [vmem:[#allocation2 + $0x8c] sm:$0xf]
        %v8904 = vld [vmem:[#allocation2 + $0x90] sm:$0xf]
        %v8905 = vld [vmem:[#allocation2 + $0x94] sm:$0xf]
        %v8906 = vld [vmem:[#allocation2 + $0x98] sm:$0xf]
        %v8907 = vld [vmem:[#allocation2 + $0x9c] sm:$0xf]
        %v8908 = vld [vmem:[#allocation2 + $0xa0] sm:$0x3]
        %s8909 = scalar_lea.vmem %s3, 384
        %v8910 = vld [vmem:[%s8909] sm:$0xf]
        %v8911 = vld [vmem:[%s8909 + $0x4] sm:$0xf]
        %v8912 = vld [vmem:[%s8909 + $0x8] sm:$0xf]
        %v8913 = vld [vmem:[%s8909 + $0xc] sm:$0xf]
        %v8914 = vld [vmem:[%s8909 + $0x10] sm:$0xf]
        %v8915 = vld [vmem:[%s8909 + $0x14] sm:$0xf]
        %v8916 = vld [vmem:[%s8909 + $0x18] sm:$0xf]
        %v8917 = vld [vmem:[%s8909 + $0x1c] sm:$0xf]
        %v8918 = vld [vmem:[%s8909 + $0x20] sm:$0xf]
        %v8919 = vld [vmem:[%s8909 + $0x24] sm:$0xf]
        %v8920 = vld [vmem:[%s8909 + $0x28] sm:$0xf]
        %v8921 = vld [vmem:[%s8909 + $0x2c] sm:$0xf]
        %v8922 = vld [vmem:[%s8909 + $0x30] sm:$0xf]
        %v8923 = vld [vmem:[%s8909 + $0x34] sm:$0xf]
        %v8924 = vld [vmem:[%s8909 + $0x38] sm:$0xf]
        %v8925 = vld [vmem:[%s8909 + $0x3c] sm:$0xf]
        %v8926 = vld [vmem:[#allocation2 + $0xa0] sm:$0x7]
        %s8927 = scalar_lea.vmem %s3, 448
        %v8928 = vld [vmem:[%s8927] sm:$0xf]
        %v8929 = vld [vmem:[%s8927 + $0x4] sm:$0xf]
        %v8930 = vld [vmem:[%s8927 + $0x8] sm:$0xf]
        %v8931 = vld [vmem:[%s8927 + $0xc] sm:$0xf]
        %v8932 = vld [vmem:[%s8927 + $0x10] sm:$0xf]
        %v8933 = vld [vmem:[%s8927 + $0x14] sm:$0xf]
        %v8934 = vld [vmem:[%s8927 + $0x18] sm:$0xf]
        %v8935 = vld [vmem:[%s8927 + $0x1c] sm:$0xf]
        %v8936 = vld [vmem:[%s8927 + $0x20] sm:$0xf]
        %v8937 = vld [vmem:[%s8927 + $0x24] sm:$0xf]
        %v8938 = vld [vmem:[%s8927 + $0x28] sm:$0xf]
        %v8939 = vld [vmem:[%s8927 + $0x2c] sm:$0xf]
        %v8940 = vld [vmem:[%s8927 + $0x30] sm:$0xf]
        %v8941 = vld [vmem:[%s8927 + $0x34] sm:$0xf]
        %v8942 = vld [vmem:[%s8927 + $0x38] sm:$0xf]
        %v8943 = vld [vmem:[%s8927 + $0x3c] sm:$0xf]
        %v8981 = vunpack.c.l.b16 %v8872
        %v8982 = vunpack.c.l.b16 %v8873
        %v8983 = vunpack.c.l.b16 %v8874
        %v8984 = vunpack.c.l.b16 %v8875
        %v8985 = vunpack.c.l.b16 %v8876
        %v8986 = vunpack.c.l.b16 %v8877
        %v8987 = vunpack.c.l.b16 %v8878
        %v8988 = vunpack.c.l.b16 %v8879
        %v8989 = vunpack.c.l.b16 %v8880
        %v8990 = vunpack.c.l.b16 %v8881
        %v8991 = vunpack.c.l.b16 %v8882
        %v8992 = vunpack.c.l.b16 %v8883
        %v8993 = vunpack.c.l.b16 %v8884
        %v8994 = vunpack.c.l.b16 %v8885
        %v8995 = vunpack.c.l.b16 %v8886
        %v8996 = vunpack.c.l.b16 %v8887
        %v8997 = vunpack.c.l.b16 %v8888
        %v8998 = vunpack.c.l.b16 %v8889
        %v8999 = vunpack.c.l.b16 %v8890
        %v9000 = vunpack.c.l.b16 %v8891
        %v9001 = vunpack.c.l.b16 %v8892
        %v9002 = vunpack.c.l.b16 %v8893
        %v9003 = vunpack.c.l.b16 %v8894
        %v9004 = vunpack.c.l.b16 %v8895
        %v9005 = vunpack.c.l.b16 %v8896
        %v9006 = vunpack.c.l.b16 %v8897
        %v9007 = vunpack.c.l.b16 %v8898
        %v9008 = vunpack.c.l.b16 %v8899
        %v9009 = vunpack.c.l.b16 %v8900
        %v9010 = vunpack.c.l.b16 %v8901
        %v9011 = vunpack.c.l.b16 %v8902
        %v9012 = vunpack.c.l.b16 %v8903
        %v9013 = vunpack.c.l.b16 %v8904
        %v9014 = vunpack.c.l.b16 %v8905
        %v9015 = vunpack.c.l.b16 %v8906
        %v9016 = vunpack.c.l.b16 %v8907
        %v9017 = vunpack.c.l.b16 %v8926
        %v9018 = vpack.c.b16 %v8982, %v8981
        %v9019 = vpack.c.b16 %v8984, %v8983
        %v9020 = vpack.c.b16 %v8986, %v8985
        %v9021 = vpack.c.b16 %v8988, %v8987
        %v9022 = vpack.c.b16 %v8990, %v8989
        %v9023 = vpack.c.b16 %v8992, %v8991
        %v9024 = vpack.c.b16 %v8994, %v8993
        %v9025 = vpack.c.b16 %v8996, %v8995
        %v9026 = vpack.c.b16 %v8998, %v8997
        %v9027 = vpack.c.b16 %v9000, %v8999
        %v9028 = vpack.c.b16 %v9002, %v9001
        %v9029 = vpack.c.b16 %v9004, %v9003
        %v9030 = vpack.c.b16 %v9006, %v9005
        %v9031 = vpack.c.b16 %v9008, %v9007
        %v9032 = vpack.c.b16 %v9010, %v9009
        %v9033 = vpack.c.b16 %v9012, %v9011
        %v9034 = vpack.c.b16 %v9014, %v9013
        %v9035 = vpack.c.b16 %v9016, %v9015
        %v9036 = vpack.c.b16 %v9017, %v9017
        %v9038 = vshrl.u32 %v9018, 16
        %v9040 = vrot.slane %v9038, 2
        %v9041 = vshll.u32 %v9018, 16
        %v9043 = vrot.slane %v9041, 3
        %v9044 = vor.u32 %v9040, %v9043
        %v9046 = vshrl.u32 %v9019, 16
        %v9048 = vrot.slane %v9046, 2
        %v9049 = vshll.u32 %v9019, 16
        %v9051 = vrot.slane %v9049, 3
        %v9052 = vor.u32 %v9048, %v9051
        %v9053 = vsel %vm4231, %v9044, %v9052
        %v9055 = vshrl.u32 %v9020, 16
        %v9057 = vrot.slane %v9055, 2
        %v9058 = vshll.u32 %v9020, 16
        %v9060 = vrot.slane %v9058, 3
        %v9061 = vor.u32 %v9057, %v9060
        %v9062 = vsel %vm4231, %v9052, %v9061
        %v9064 = vshrl.u32 %v9021, 16
        %v9066 = vrot.slane %v9064, 2
        %v9067 = vshll.u32 %v9021, 16
        %v9069 = vrot.slane %v9067, 3
        %v9070 = vor.u32 %v9066, %v9069
        %v9071 = vsel %vm4231, %v9061, %v9070
        %v9073 = vshrl.u32 %v9022, 16
        %v9075 = vrot.slane %v9073, 2
        %v9076 = vshll.u32 %v9022, 16
        %v9078 = vrot.slane %v9076, 3
        %v9079 = vor.u32 %v9075, %v9078
        %v9080 = vsel %vm4231, %v9070, %v9079
        %v9082 = vshrl.u32 %v9023, 16
        %v9084 = vrot.slane %v9082, 2
        %v9085 = vshll.u32 %v9023, 16
        %v9087 = vrot.slane %v9085, 3
        %v9088 = vor.u32 %v9084, %v9087
        %v9089 = vsel %vm4231, %v9079, %v9088
        %v9091 = vshrl.u32 %v9024, 16
        %v9093 = vrot.slane %v9091, 2
        %v9094 = vshll.u32 %v9024, 16
        %v9096 = vrot.slane %v9094, 3
        %v9097 = vor.u32 %v9093, %v9096
        %v9098 = vsel %vm4231, %v9088, %v9097
        %v9100 = vshrl.u32 %v9025, 16
        %v9102 = vrot.slane %v9100, 2
        %v9103 = vshll.u32 %v9025, 16
        %v9105 = vrot.slane %v9103, 3
        %v9106 = vor.u32 %v9102, %v9105
        %v9107 = vsel %vm4231, %v9097, %v9106
        %v9109 = vshrl.u32 %v9026, 16
        %v9111 = vrot.slane %v9109, 2
        %v9112 = vshll.u32 %v9026, 16
        %v9114 = vrot.slane %v9112, 3
        %v9115 = vor.u32 %v9111, %v9114
        %v9116 = vsel %vm4231, %v9106, %v9115
        %v9118 = vshrl.u32 %v9027, 16
        %v9120 = vrot.slane %v9118, 2
        %v9121 = vshll.u32 %v9027, 16
        %v9123 = vrot.slane %v9121, 3
        %v9124 = vor.u32 %v9120, %v9123
        %v9125 = vsel %vm4231, %v9115, %v9124
        %v9127 = vshrl.u32 %v9028, 16
        %v9129 = vrot.slane %v9127, 2
        %v9130 = vshll.u32 %v9028, 16
        %v9132 = vrot.slane %v9130, 3
        %v9133 = vor.u32 %v9129, %v9132
        %v9134 = vsel %vm4231, %v9124, %v9133
        %v9136 = vshrl.u32 %v9029, 16
        %v9138 = vrot.slane %v9136, 2
        %v9139 = vshll.u32 %v9029, 16
        %v9141 = vrot.slane %v9139, 3
        %v9142 = vor.u32 %v9138, %v9141
        %v9143 = vsel %vm4231, %v9133, %v9142
        %v9145 = vshrl.u32 %v9030, 16
        %v9147 = vrot.slane %v9145, 2
        %v9148 = vshll.u32 %v9030, 16
        %v9150 = vrot.slane %v9148, 3
        %v9151 = vor.u32 %v9147, %v9150
        %v9152 = vsel %vm4231, %v9142, %v9151
        %v9154 = vshrl.u32 %v9031, 16
        %v9156 = vrot.slane %v9154, 2
        %v9157 = vshll.u32 %v9031, 16
        %v9159 = vrot.slane %v9157, 3
        %v9160 = vor.u32 %v9156, %v9159
        %v9161 = vsel %vm4231, %v9151, %v9160
        %v9163 = vshrl.u32 %v9032, 16
        %v9165 = vrot.slane %v9163, 2
        %v9166 = vshll.u32 %v9032, 16
        %v9168 = vrot.slane %v9166, 3
        %v9169 = vor.u32 %v9165, %v9168
        %v9170 = vsel %vm4231, %v9160, %v9169
        %v9172 = vshrl.u32 %v9033, 16
        %v9174 = vrot.slane %v9172, 2
        %v9175 = vshll.u32 %v9033, 16
        %v9177 = vrot.slane %v9175, 3
        %v9178 = vor.u32 %v9174, %v9177
        %v9179 = vsel %vm4231, %v9169, %v9178
        %v9181 = vshrl.u32 %v9034, 16
        %v9183 = vrot.slane %v9181, 2
        %v9184 = vshll.u32 %v9034, 16
        %v9186 = vrot.slane %v9184, 3
        %v9187 = vor.u32 %v9183, %v9186
        %v9188 = vsel %vm4231, %v9178, %v9187
        %v9190 = vshrl.u32 %v9035, 16
        %v9192 = vrot.slane %v9190, 2
        %v9193 = vshll.u32 %v9035, 16
        %v9195 = vrot.slane %v9193, 3
        %v9196 = vor.u32 %v9192, %v9195
        %v9197 = vsel %vm4231, %v9187, %v9196
        %v9199 = vshrl.u32 %v9036, 16
        %v9201 = vrot.slane %v9199, 2
        %v9202 = vshll.u32 %v9036, 16
        %v9204 = vrot.slane %v9202, 3
        %v9205 = vor.u32 %v9201, %v9204
        %v9206 = vsel %vm4231, %v9196, %v9205
        %v9241 = vunpack.c.l.b16 %v8928
        %v9242 = vunpack.c.l.b16 %v8929
        %v9243 = vunpack.c.l.b16 %v8930
        %v9244 = vunpack.c.l.b16 %v8931
        %v9245 = vunpack.c.l.b16 %v8932
        %v9246 = vunpack.c.l.b16 %v8933
        %v9247 = vunpack.c.l.b16 %v8934
        %v9248 = vunpack.c.l.b16 %v8935
        %v9249 = vunpack.c.l.b16 %v8936
        %v9250 = vunpack.c.l.b16 %v8937
        %v9251 = vunpack.c.l.b16 %v8938
        %v9252 = vunpack.c.l.b16 %v8939
        %v9253 = vunpack.c.l.b16 %v8940
        %v9254 = vunpack.c.l.b16 %v8941
        %v9255 = vunpack.c.l.b16 %v8942
        %v9256 = vunpack.c.l.b16 %v8943
        %v9257 = vpack.c.b16 %v9242, %v9241
        %v9258 = vpack.c.b16 %v9244, %v9243
        %v9259 = vpack.c.b16 %v9246, %v9245
        %v9260 = vpack.c.b16 %v9248, %v9247
        %v9261 = vpack.c.b16 %v9250, %v9249
        %v9262 = vpack.c.b16 %v9252, %v9251
        %v9263 = vpack.c.b16 %v9254, %v9253
        %v9264 = vpack.c.b16 %v9256, %v9255
        %9273 = vmatprep.subr.bf16.mxu0 0
        %9274 = vmatpush1.bf16.msra.mxu0 %v9264
        %9275 = vmatprep.subr.bf16.mxu0 0
        %9276 = vmatpush1.bf16.msra.mxu0 %v9263
        %9277 = vmatprep.subr.bf16.mxu0 0
        %9278 = vmatpush1.bf16.msra.mxu0 %v9262
        %9279 = vmatprep.subr.bf16.mxu0 0
        %9280 = vmatpush1.bf16.msra.mxu0 %v9261
        %9281 = vmatprep.subr.bf16.mxu0 0
        %9282 = vmatpush1.bf16.msra.mxu0 %v9260
        %9283 = vmatprep.subr.bf16.mxu0 0
        %9284 = vmatpush1.bf16.msra.mxu0 %v9259
        %9285 = vmatprep.subr.bf16.mxu0 0
        %9286 = vmatpush1.bf16.msra.mxu0 %v9258
        %9287 = vmatprep.subr.bf16.mxu0 0
        %9288 = vmatpush1.bf16.msra.mxu0 %v9257
        %9289 = vmatprep.subr.bf16.mxu0 0
        %9290 = vmatpush2.bf16.msra.mxu0 0
        %9291 = vmatprep.subr.bf16.mxu0 0
        %9292 = vmatpush2.bf16.msra.mxu0 0
        %9293 = vmatprep.subr.bf16.mxu0 0
        %9294 = vmatpush2.bf16.msra.mxu0 0
        %9295 = vmatprep.subr.bf16.mxu0 0
        %9296 = vmatpush2.bf16.msra.mxu0 0
        %9297 = vmatprep.subr.bf16.mxu0 0
        %9298 = vmatpush2.bf16.msra.mxu0 0
        %9299 = vmatprep.subr.bf16.mxu0 0
        %9300 = vmatpush2.bf16.msra.mxu0 0
        %9301 = vmatprep.subr.bf16.mxu0 0
        %9302 = vmatpush2.bf16.msra.mxu0 0
        %9303 = vmatprep.subr.bf16.mxu0 0
        %9304 = vmatpush2.bf16.msra.mxu0 0
        %9305 = vmatprep.mubr.bf16.mxu0 0
        %9306 = vmatmul.mubr.bf16.gmra.mxu0 %v9053
        %v9307 = vpop.f32.mrf.mxu0
        %v9308 = vadd.f32 0.0, %v9307
        %v9309 = vpop.f32.mrf.mxu0
        %v9310 = vpop.f32.mrf.mxu0
        %v9311 = vadd.f32 0.0, %v9310
        %v9312 = vpop.f32.mrf.mxu0
        %9313 = vmatprep.mubr.bf16.mxu0 0
        %9314 = vmatmul.mubr.bf16.gmra.mxu0 %v9062
        %v9315 = vpop.f32.mrf.mxu0
        %v9316 = vadd.f32 0.0, %v9315
        %v9317 = vpop.f32.mrf.mxu0
        %v9318 = vpop.f32.mrf.mxu0
        %v9319 = vadd.f32 0.0, %v9318
        %v9320 = vpop.f32.mrf.mxu0
        %9321 = vmatprep.mubr.bf16.mxu0 0
        %9322 = vmatmul.mubr.bf16.gmra.mxu0 %v9071
        %v9323 = vpop.f32.mrf.mxu0
        %v9324 = vadd.f32 0.0, %v9323
        %v9325 = vpop.f32.mrf.mxu0
        %v9326 = vpop.f32.mrf.mxu0
        %v9327 = vadd.f32 0.0, %v9326
        %v9328 = vpop.f32.mrf.mxu0
        %9329 = vmatprep.mubr.bf16.mxu0 0
        %9330 = vmatmul.mubr.bf16.gmra.mxu0 %v9080
        %v9331 = vpop.f32.mrf.mxu0
        %v9332 = vadd.f32 0.0, %v9331
        %v9333 = vpop.f32.mrf.mxu0
        %v9334 = vpop.f32.mrf.mxu0
        %v9335 = vadd.f32 0.0, %v9334
        %v9336 = vpop.f32.mrf.mxu0
        %9337 = vmatprep.mubr.bf16.mxu0 0
        %9338 = vmatmul.mubr.bf16.gmra.mxu0 %v9089
        %v9339 = vpop.f32.mrf.mxu0
        %v9340 = vadd.f32 0.0, %v9339
        %v9341 = vpop.f32.mrf.mxu0
        %v9342 = vpop.f32.mrf.mxu0
        %v9343 = vadd.f32 0.0, %v9342
        %v9344 = vpop.f32.mrf.mxu0
        %9345 = vmatprep.mubr.bf16.mxu0 0
        %9346 = vmatmul.mubr.bf16.gmra.mxu0 %v9098
        %v9347 = vpop.f32.mrf.mxu0
        %v9348 = vadd.f32 0.0, %v9347
        %v9349 = vpop.f32.mrf.mxu0
        %v9350 = vpop.f32.mrf.mxu0
        %v9351 = vadd.f32 0.0, %v9350
        %v9352 = vpop.f32.mrf.mxu0
        %9353 = vmatprep.mubr.bf16.mxu0 0
        %9354 = vmatmul.mubr.bf16.gmra.mxu0 %v9107
        %v9355 = vpop.f32.mrf.mxu0
        %v9356 = vadd.f32 0.0, %v9355
        %v9357 = vpop.f32.mrf.mxu0
        %v9358 = vpop.f32.mrf.mxu0
        %v9359 = vadd.f32 0.0, %v9358
        %v9360 = vpop.f32.mrf.mxu0
        %9361 = vmatprep.mubr.bf16.mxu0 0
        %9362 = vmatmul.mubr.bf16.gmra.mxu0 %v9116
        %v9363 = vpop.f32.mrf.mxu0
        %v9364 = vadd.f32 0.0, %v9363
        %v9365 = vpop.f32.mrf.mxu0
        %v9366 = vpop.f32.mrf.mxu0
        %v9367 = vadd.f32 0.0, %v9366
        %v9368 = vpop.f32.mrf.mxu0
        %9369 = vmatprep.mubr.bf16.mxu0 0
        %9370 = vmatmul.mubr.bf16.gmra.mxu0 %v9125
        %v9371 = vpop.f32.mrf.mxu0
        %v9372 = vadd.f32 0.0, %v9371
        %v9373 = vpop.f32.mrf.mxu0
        %v9374 = vpop.f32.mrf.mxu0
        %v9375 = vadd.f32 0.0, %v9374
        %v9376 = vpop.f32.mrf.mxu0
        %9377 = vmatprep.mubr.bf16.mxu0 0
        %9378 = vmatmul.mubr.bf16.gmra.mxu0 %v9134
        %v9379 = vpop.f32.mrf.mxu0
        %v9380 = vadd.f32 0.0, %v9379
        %v9381 = vpop.f32.mrf.mxu0
        %v9382 = vpop.f32.mrf.mxu0
        %v9383 = vadd.f32 0.0, %v9382
        %v9384 = vpop.f32.mrf.mxu0
        %9385 = vmatprep.mubr.bf16.mxu0 0
        %9386 = vmatmul.mubr.bf16.gmra.mxu0 %v9143
        %v9387 = vpop.f32.mrf.mxu0
        %v9388 = vadd.f32 0.0, %v9387
        %v9389 = vpop.f32.mrf.mxu0
        %v9390 = vpop.f32.mrf.mxu0
        %v9391 = vadd.f32 0.0, %v9390
        %v9392 = vpop.f32.mrf.mxu0
        %9393 = vmatprep.mubr.bf16.mxu0 0
        %9394 = vmatmul.mubr.bf16.gmra.mxu0 %v9152
        %v9395 = vpop.f32.mrf.mxu0
        %v9396 = vadd.f32 0.0, %v9395
        %v9397 = vpop.f32.mrf.mxu0
        %v9398 = vpop.f32.mrf.mxu0
        %v9399 = vadd.f32 0.0, %v9398
        %v9400 = vpop.f32.mrf.mxu0
        %9401 = vmatprep.mubr.bf16.mxu0 0
        %9402 = vmatmul.mubr.bf16.gmra.mxu0 %v9161
        %v9403 = vpop.f32.mrf.mxu0
        %v9404 = vadd.f32 0.0, %v9403
        %v9405 = vpop.f32.mrf.mxu0
        %v9406 = vpop.f32.mrf.mxu0
        %v9407 = vadd.f32 0.0, %v9406
        %v9408 = vpop.f32.mrf.mxu0
        %9409 = vmatprep.mubr.bf16.mxu0 0
        %9410 = vmatmul.mubr.bf16.gmra.mxu0 %v9170
        %v9411 = vpop.f32.mrf.mxu0
        %v9412 = vadd.f32 0.0, %v9411
        %v9413 = vpop.f32.mrf.mxu0
        %v9414 = vpop.f32.mrf.mxu0
        %v9415 = vadd.f32 0.0, %v9414
        %v9416 = vpop.f32.mrf.mxu0
        %9417 = vmatprep.mubr.bf16.mxu0 0
        %9418 = vmatmul.mubr.bf16.gmra.mxu0 %v9179
        %v9419 = vpop.f32.mrf.mxu0
        %v9420 = vadd.f32 0.0, %v9419
        %v9421 = vpop.f32.mrf.mxu0
        %v9422 = vpop.f32.mrf.mxu0
        %v9423 = vadd.f32 0.0, %v9422
        %v9424 = vpop.f32.mrf.mxu0
        %9425 = vmatprep.mubr.bf16.mxu0 0
        %9426 = vmatmul.mubr.bf16.gmra.mxu0 %v9188
        %v9427 = vpop.f32.mrf.mxu0
        %v9428 = vadd.f32 0.0, %v9427
        %v9429 = vpop.f32.mrf.mxu0
        %v9430 = vpop.f32.mrf.mxu0
        %v9431 = vadd.f32 0.0, %v9430
        %v9432 = vpop.f32.mrf.mxu0
        %9433 = vmatprep.mubr.bf16.mxu0 0
        %9434 = vmatmul.mubr.bf16.gmra.mxu0 %v9197
        %v9435 = vpop.f32.mrf.mxu0
        %v9436 = vadd.f32 0.0, %v9435
        %v9437 = vpop.f32.mrf.mxu0
        %v9438 = vpop.f32.mrf.mxu0
        %v9439 = vadd.f32 0.0, %v9438
        %v9440 = vpop.f32.mrf.mxu0
        %9441 = vmatprep.mubr.bf16.mxu0 0
        %9442 = vmatmul.mubr.bf16.gmra.mxu0 %v9206
        %v9443 = vpop.f32.mrf.mxu0
        %v9444 = vadd.f32 0.0, %v9443
        %v9445 = vpop.f32.mrf.mxu0
        %v9446 = vpop.f32.mrf.mxu0
        %v9447 = vadd.f32 0.0, %v9446
        %v9448 = vpop.f32.mrf.mxu0
        %9449 = vdwg.mxu0
        %v9451 = vunpack.c.l.b16 %v8908
        %v9452 = vpack.c.b16 %v9451, %v9451
        %v9453 = vrot.slane %v9018, 2
        %v9454 = vrot.slane %v9019, 2
        %v9455 = vsel %vm3749, %v9453, %v9454
        %v9456 = vrot.slane %v9020, 2
        %v9457 = vsel %vm3749, %v9454, %v9456
        %v9458 = vrot.slane %v9021, 2
        %v9459 = vsel %vm3749, %v9456, %v9458
        %v9460 = vrot.slane %v9022, 2
        %v9461 = vsel %vm3749, %v9458, %v9460
        %v9462 = vrot.slane %v9023, 2
        %v9463 = vsel %vm3749, %v9460, %v9462
        %v9464 = vrot.slane %v9024, 2
        %v9465 = vsel %vm3749, %v9462, %v9464
        %v9466 = vrot.slane %v9025, 2
        %v9467 = vsel %vm3749, %v9464, %v9466
        %v9468 = vrot.slane %v9026, 2
        %v9469 = vsel %vm3749, %v9466, %v9468
        %v9470 = vrot.slane %v9027, 2
        %v9471 = vsel %vm3749, %v9468, %v9470
        %v9472 = vrot.slane %v9028, 2
        %v9473 = vsel %vm3749, %v9470, %v9472
        %v9474 = vrot.slane %v9029, 2
        %v9475 = vsel %vm3749, %v9472, %v9474
        %v9476 = vrot.slane %v9030, 2
        %v9477 = vsel %vm3749, %v9474, %v9476
        %v9478 = vrot.slane %v9031, 2
        %v9479 = vsel %vm3749, %v9476, %v9478
        %v9480 = vrot.slane %v9032, 2
        %v9481 = vsel %vm3749, %v9478, %v9480
        %v9482 = vrot.slane %v9033, 2
        %v9483 = vsel %vm3749, %v9480, %v9482
        %v9484 = vrot.slane %v9034, 2
        %v9485 = vsel %vm3749, %v9482, %v9484
        %v9486 = vrot.slane %v9035, 2
        %v9487 = vsel %vm3749, %v9484, %v9486
        %v9488 = vrot.slane %v9452, 2
        %v9489 = vsel %vm3749, %v9486, %v9488
        %v9524 = vunpack.c.l.b16 %v8910
        %v9525 = vunpack.c.l.b16 %v8911
        %v9526 = vunpack.c.l.b16 %v8912
        %v9527 = vunpack.c.l.b16 %v8913
        %v9528 = vunpack.c.l.b16 %v8914
        %v9529 = vunpack.c.l.b16 %v8915
        %v9530 = vunpack.c.l.b16 %v8916
        %v9531 = vunpack.c.l.b16 %v8917
        %v9532 = vunpack.c.l.b16 %v8918
        %v9533 = vunpack.c.l.b16 %v8919
        %v9534 = vunpack.c.l.b16 %v8920
        %v9535 = vunpack.c.l.b16 %v8921
        %v9536 = vunpack.c.l.b16 %v8922
        %v9537 = vunpack.c.l.b16 %v8923
        %v9538 = vunpack.c.l.b16 %v8924
        %v9539 = vunpack.c.l.b16 %v8925
        %v9540 = vpack.c.b16 %v9525, %v9524
        %v9541 = vpack.c.b16 %v9527, %v9526
        %v9542 = vpack.c.b16 %v9529, %v9528
        %v9543 = vpack.c.b16 %v9531, %v9530
        %v9544 = vpack.c.b16 %v9533, %v9532
        %v9545 = vpack.c.b16 %v9535, %v9534
        %v9546 = vpack.c.b16 %v9537, %v9536
        %v9547 = vpack.c.b16 %v9539, %v9538
        %9556 = vmatprep.subr.bf16.mxu0 0
        %9557 = vmatpush1.bf16.msra.mxu0 %v9547
        %9558 = vmatprep.subr.bf16.mxu0 0
        %9559 = vmatpush1.bf16.msra.mxu0 %v9546
        %9560 = vmatprep.subr.bf16.mxu0 0
        %9561 = vmatpush1.bf16.msra.mxu0 %v9545
        %9562 = vmatprep.subr.bf16.mxu0 0
        %9563 = vmatpush1.bf16.msra.mxu0 %v9544
        %9564 = vmatprep.subr.bf16.mxu0 0
        %9565 = vmatpush1.bf16.msra.mxu0 %v9543
        %9566 = vmatprep.subr.bf16.mxu0 0
        %9567 = vmatpush1.bf16.msra.mxu0 %v9542
        %9568 = vmatprep.subr.bf16.mxu0 0
        %9569 = vmatpush1.bf16.msra.mxu0 %v9541
        %9570 = vmatprep.subr.bf16.mxu0 0
        %9571 = vmatpush1.bf16.msra.mxu0 %v9540
        %9572 = vmatprep.subr.bf16.mxu0 0
        %9573 = vmatpush2.bf16.msra.mxu0 0
        %9574 = vmatprep.subr.bf16.mxu0 0
        %9575 = vmatpush2.bf16.msra.mxu0 0
        %9576 = vmatprep.subr.bf16.mxu0 0
        %9577 = vmatpush2.bf16.msra.mxu0 0
        %9578 = vmatprep.subr.bf16.mxu0 0
        %9579 = vmatpush2.bf16.msra.mxu0 0
        %9580 = vmatprep.subr.bf16.mxu0 0
        %9581 = vmatpush2.bf16.msra.mxu0 0
        %9582 = vmatprep.subr.bf16.mxu0 0
        %9583 = vmatpush2.bf16.msra.mxu0 0
        %9584 = vmatprep.subr.bf16.mxu0 0
        %9585 = vmatpush2.bf16.msra.mxu0 0
        %9586 = vmatprep.subr.bf16.mxu0 0
        %9587 = vmatpush2.bf16.msra.mxu0 0
        %9588 = vmatprep.mubr.bf16.mxu0 0
        %9589 = vmatmul.mubr.bf16.gmra.mxu0 %v9455
        %v9590 = vpop.f32.mrf.mxu0
        %v9591 = vadd.f32 %v9308, %v9590
        %v9592 = vpop.f32.mrf.mxu0
        %v9593 = vpop.f32.mrf.mxu0
        %v9594 = vadd.f32 %v9311, %v9593
        %v9595 = vpop.f32.mrf.mxu0
        %9596 = vmatprep.mubr.bf16.mxu0 0
        %9597 = vmatmul.mubr.bf16.gmra.mxu0 %v9457
        %v9598 = vpop.f32.mrf.mxu0
        %v9599 = vadd.f32 %v9316, %v9598
        %v9600 = vpop.f32.mrf.mxu0
        %v9601 = vpop.f32.mrf.mxu0
        %v9602 = vadd.f32 %v9319, %v9601
        %v9603 = vpop.f32.mrf.mxu0
        %9604 = vmatprep.mubr.bf16.mxu0 0
        %9605 = vmatmul.mubr.bf16.gmra.mxu0 %v9459
        %v9606 = vpop.f32.mrf.mxu0
        %v9607 = vadd.f32 %v9324, %v9606
        %v9608 = vpop.f32.mrf.mxu0
        %v9609 = vpop.f32.mrf.mxu0
        %v9610 = vadd.f32 %v9327, %v9609
        %v9611 = vpop.f32.mrf.mxu0
        %9612 = vmatprep.mubr.bf16.mxu0 0
        %9613 = vmatmul.mubr.bf16.gmra.mxu0 %v9461
        %v9614 = vpop.f32.mrf.mxu0
        %v9615 = vadd.f32 %v9332, %v9614
        %v9616 = vpop.f32.mrf.mxu0
        %v9617 = vpop.f32.mrf.mxu0
        %v9618 = vadd.f32 %v9335, %v9617
        %v9619 = vpop.f32.mrf.mxu0
        %9620 = vmatprep.mubr.bf16.mxu0 0
        %9621 = vmatmul.mubr.bf16.gmra.mxu0 %v9463
        %v9622 = vpop.f32.mrf.mxu0
        %v9623 = vadd.f32 %v9340, %v9622
        %v9624 = vpop.f32.mrf.mxu0
        %v9625 = vpop.f32.mrf.mxu0
        %v9626 = vadd.f32 %v9343, %v9625
        %v9627 = vpop.f32.mrf.mxu0
        %9628 = vmatprep.mubr.bf16.mxu0 0
        %9629 = vmatmul.mubr.bf16.gmra.mxu0 %v9465
        %v9630 = vpop.f32.mrf.mxu0
        %v9631 = vadd.f32 %v9348, %v9630
        %v9632 = vpop.f32.mrf.mxu0
        %v9633 = vpop.f32.mrf.mxu0
        %v9634 = vadd.f32 %v9351, %v9633
        %v9635 = vpop.f32.mrf.mxu0
        %9636 = vmatprep.mubr.bf16.mxu0 0
        %9637 = vmatmul.mubr.bf16.gmra.mxu0 %v9467
        %v9638 = vpop.f32.mrf.mxu0
        %v9639 = vadd.f32 %v9356, %v9638
        %v9640 = vpop.f32.mrf.mxu0
        %v9641 = vpop.f32.mrf.mxu0
        %v9642 = vadd.f32 %v9359, %v9641
        %v9643 = vpop.f32.mrf.mxu0
        %9644 = vmatprep.mubr.bf16.mxu0 0
        %9645 = vmatmul.mubr.bf16.gmra.mxu0 %v9469
        %v9646 = vpop.f32.mrf.mxu0
        %v9647 = vadd.f32 %v9364, %v9646
        %v9648 = vpop.f32.mrf.mxu0
        %v9649 = vpop.f32.mrf.mxu0
        %v9650 = vadd.f32 %v9367, %v9649
        %v9651 = vpop.f32.mrf.mxu0
        %9652 = vmatprep.mubr.bf16.mxu0 0
        %9653 = vmatmul.mubr.bf16.gmra.mxu0 %v9471
        %v9654 = vpop.f32.mrf.mxu0
        %v9655 = vadd.f32 %v9372, %v9654
        %v9656 = vpop.f32.mrf.mxu0
        %v9657 = vpop.f32.mrf.mxu0
        %v9658 = vadd.f32 %v9375, %v9657
        %v9659 = vpop.f32.mrf.mxu0
        %9660 = vmatprep.mubr.bf16.mxu0 0
        %9661 = vmatmul.mubr.bf16.gmra.mxu0 %v9473
        %v9662 = vpop.f32.mrf.mxu0
        %v9663 = vadd.f32 %v9380, %v9662
        %v9664 = vpop.f32.mrf.mxu0
        %v9665 = vpop.f32.mrf.mxu0
        %v9666 = vadd.f32 %v9383, %v9665
        %v9667 = vpop.f32.mrf.mxu0
        %9668 = vmatprep.mubr.bf16.mxu0 0
        %9669 = vmatmul.mubr.bf16.gmra.mxu0 %v9475
        %v9670 = vpop.f32.mrf.mxu0
        %v9671 = vadd.f32 %v9388, %v9670
        %v9672 = vpop.f32.mrf.mxu0
        %v9673 = vpop.f32.mrf.mxu0
        %v9674 = vadd.f32 %v9391, %v9673
        %v9675 = vpop.f32.mrf.mxu0
        %9676 = vmatprep.mubr.bf16.mxu0 0
        %9677 = vmatmul.mubr.bf16.gmra.mxu0 %v9477
        %v9678 = vpop.f32.mrf.mxu0
        %v9679 = vadd.f32 %v9396, %v9678
        %v9680 = vpop.f32.mrf.mxu0
        %v9681 = vpop.f32.mrf.mxu0
        %v9682 = vadd.f32 %v9399, %v9681
        %v9683 = vpop.f32.mrf.mxu0
        %9684 = vmatprep.mubr.bf16.mxu0 0
        %9685 = vmatmul.mubr.bf16.gmra.mxu0 %v9479
        %v9686 = vpop.f32.mrf.mxu0
        %v9687 = vadd.f32 %v9404, %v9686
        %v9688 = vpop.f32.mrf.mxu0
        %v9689 = vpop.f32.mrf.mxu0
        %v9690 = vadd.f32 %v9407, %v9689
        %v9691 = vpop.f32.mrf.mxu0
        %9692 = vmatprep.mubr.bf16.mxu0 0
        %9693 = vmatmul.mubr.bf16.gmra.mxu0 %v9481
        %v9694 = vpop.f32.mrf.mxu0
        %v9695 = vadd.f32 %v9412, %v9694
        %v9696 = vpop.f32.mrf.mxu0
        %v9697 = vpop.f32.mrf.mxu0
        %v9698 = vadd.f32 %v9415, %v9697
        %v9699 = vpop.f32.mrf.mxu0
        %9700 = vmatprep.mubr.bf16.mxu0 0
        %9701 = vmatmul.mubr.bf16.gmra.mxu0 %v9483
        %v9702 = vpop.f32.mrf.mxu0
        %v9703 = vadd.f32 %v9420, %v9702
        %v9704 = vpop.f32.mrf.mxu0
        %v9705 = vpop.f32.mrf.mxu0
        %v9706 = vadd.f32 %v9423, %v9705
        %v9707 = vpop.f32.mrf.mxu0
        %9708 = vmatprep.mubr.bf16.mxu0 0
        %9709 = vmatmul.mubr.bf16.gmra.mxu0 %v9485
        %v9710 = vpop.f32.mrf.mxu0
        %v9711 = vadd.f32 %v9428, %v9710
        %v9712 = vpop.f32.mrf.mxu0
        %v9713 = vpop.f32.mrf.mxu0
        %v9714 = vadd.f32 %v9431, %v9713
        %v9715 = vpop.f32.mrf.mxu0
        %9716 = vmatprep.mubr.bf16.mxu0 0
        %9717 = vmatmul.mubr.bf16.gmra.mxu0 %v9487
        %v9718 = vpop.f32.mrf.mxu0
        %v9719 = vadd.f32 %v9436, %v9718
        %v9720 = vpop.f32.mrf.mxu0
        %v9721 = vpop.f32.mrf.mxu0
        %v9722 = vadd.f32 %v9439, %v9721
        %v9723 = vpop.f32.mrf.mxu0
        %9724 = vmatprep.mubr.bf16.mxu0 0
        %9725 = vmatmul.mubr.bf16.gmra.mxu0 %v9489
        %v9726 = vpop.f32.mrf.mxu0
        %v9727 = vadd.f32 %v9444, %v9726
        %v9728 = vpop.f32.mrf.mxu0
        %v9729 = vpop.f32.mrf.mxu0
        %v9730 = vadd.f32 %v9447, %v9729
        %v9731 = vpop.f32.mrf.mxu0
        %9732 = vdwg.mxu0
        %v9733 = vld [vmem:[#allocation2 + $0x10] sm:$0x8]
        %s9734 = scalar_lea.vmem %s3, 512
        %v9735 = vld [vmem:[%s9734] sm:$0xf]
        %v9736 = vld [vmem:[%s9734 + $0x4] sm:$0xf]
        %v9737 = vld [vmem:[%s9734 + $0x8] sm:$0xf]
        %v9738 = vld [vmem:[%s9734 + $0xc] sm:$0xf]
        %v9739 = vld [vmem:[%s9734 + $0x10] sm:$0xf]
        %v9740 = vld [vmem:[%s9734 + $0x14] sm:$0xf]
        %v9741 = vld [vmem:[%s9734 + $0x18] sm:$0xf]
        %v9742 = vld [vmem:[%s9734 + $0x1c] sm:$0xf]
        %v9743 = vld [vmem:[%s9734 + $0x20] sm:$0xf]
        %v9744 = vld [vmem:[%s9734 + $0x24] sm:$0xf]
        %v9745 = vld [vmem:[%s9734 + $0x28] sm:$0xf]
        %v9746 = vld [vmem:[%s9734 + $0x2c] sm:$0xf]
        %v9747 = vld [vmem:[%s9734 + $0x30] sm:$0xf]
        %v9748 = vld [vmem:[%s9734 + $0x34] sm:$0xf]
        %v9749 = vld [vmem:[%s9734 + $0x38] sm:$0xf]
        %v9750 = vld [vmem:[%s9734 + $0x3c] sm:$0xf]
        %v9752 = vunpack.c.l.b16 %v9733
        %v9753 = vpack.c.b16 %v8982, %v9752
        %v9754 = vrot.slane %v9753, 3
        %v9755 = vrot.slane %v9019, 3
        %v9756 = vsel %vm4949, %v9754, %v9755
        %v9757 = vrot.slane %v9020, 3
        %v9758 = vsel %vm4949, %v9755, %v9757
        %v9759 = vrot.slane %v9021, 3
        %v9760 = vsel %vm4949, %v9757, %v9759
        %v9761 = vrot.slane %v9022, 3
        %v9762 = vsel %vm4949, %v9759, %v9761
        %v9763 = vrot.slane %v9023, 3
        %v9764 = vsel %vm4949, %v9761, %v9763
        %v9765 = vrot.slane %v9024, 3
        %v9766 = vsel %vm4949, %v9763, %v9765
        %v9767 = vrot.slane %v9025, 3
        %v9768 = vsel %vm4949, %v9765, %v9767
        %v9769 = vrot.slane %v9026, 3
        %v9770 = vsel %vm4949, %v9767, %v9769
        %v9771 = vrot.slane %v9027, 3
        %v9772 = vsel %vm4949, %v9769, %v9771
        %v9773 = vrot.slane %v9028, 3
        %v9774 = vsel %vm4949, %v9771, %v9773
        %v9775 = vrot.slane %v9029, 3
        %v9776 = vsel %vm4949, %v9773, %v9775
        %v9777 = vrot.slane %v9030, 3
        %v9778 = vsel %vm4949, %v9775, %v9777
        %v9779 = vrot.slane %v9031, 3
        %v9780 = vsel %vm4949, %v9777, %v9779
        %v9781 = vrot.slane %v9032, 3
        %v9782 = vsel %vm4949, %v9779, %v9781
        %v9783 = vrot.slane %v9033, 3
        %v9784 = vsel %vm4949, %v9781, %v9783
        %v9785 = vrot.slane %v9034, 3
        %v9786 = vsel %vm4949, %v9783, %v9785
        %v9787 = vrot.slane %v9035, 3
        %v9788 = vsel %vm4949, %v9785, %v9787
        %v9789 = vrot.slane %v9036, 3
        %v9790 = vsel %vm4949, %v9787, %v9789
        %v9825 = vunpack.c.l.b16 %v9735
        %v9826 = vunpack.c.l.b16 %v9736
        %v9827 = vunpack.c.l.b16 %v9737
        %v9828 = vunpack.c.l.b16 %v9738
        %v9829 = vunpack.c.l.b16 %v9739
        %v9830 = vunpack.c.l.b16 %v9740
        %v9831 = vunpack.c.l.b16 %v9741
        %v9832 = vunpack.c.l.b16 %v9742
        %v9833 = vunpack.c.l.b16 %v9743
        %v9834 = vunpack.c.l.b16 %v9744
        %v9835 = vunpack.c.l.b16 %v9745
        %v9836 = vunpack.c.l.b16 %v9746
        %v9837 = vunpack.c.l.b16 %v9747
        %v9838 = vunpack.c.l.b16 %v9748
        %v9839 = vunpack.c.l.b16 %v9749
        %v9840 = vunpack.c.l.b16 %v9750
        %v9841 = vpack.c.b16 %v9826, %v9825
        %v9842 = vpack.c.b16 %v9828, %v9827
        %v9843 = vpack.c.b16 %v9830, %v9829
        %v9844 = vpack.c.b16 %v9832, %v9831
        %v9845 = vpack.c.b16 %v9834, %v9833
        %v9846 = vpack.c.b16 %v9836, %v9835
        %v9847 = vpack.c.b16 %v9838, %v9837
        %v9848 = vpack.c.b16 %v9840, %v9839
        %9857 = vmatprep.subr.bf16.mxu0 0
        %9858 = vmatpush1.bf16.msra.mxu0 %v9848
        %9859 = vmatprep.subr.bf16.mxu0 0
        %9860 = vmatpush1.bf16.msra.mxu0 %v9847
        %9861 = vmatprep.subr.bf16.mxu0 0
        %9862 = vmatpush1.bf16.msra.mxu0 %v9846
        %9863 = vmatprep.subr.bf16.mxu0 0
        %9864 = vmatpush1.bf16.msra.mxu0 %v9845
        %9865 = vmatprep.subr.bf16.mxu0 0
        %9866 = vmatpush1.bf16.msra.mxu0 %v9844
        %9867 = vmatprep.subr.bf16.mxu0 0
        %9868 = vmatpush1.bf16.msra.mxu0 %v9843
        %9869 = vmatprep.subr.bf16.mxu0 0
        %9870 = vmatpush1.bf16.msra.mxu0 %v9842
        %9871 = vmatprep.subr.bf16.mxu0 0
        %9872 = vmatpush1.bf16.msra.mxu0 %v9841
        %9873 = vmatprep.subr.bf16.mxu0 0
        %9874 = vmatpush2.bf16.msra.mxu0 0
        %9875 = vmatprep.subr.bf16.mxu0 0
        %9876 = vmatpush2.bf16.msra.mxu0 0
        %9877 = vmatprep.subr.bf16.mxu0 0
        %9878 = vmatpush2.bf16.msra.mxu0 0
        %9879 = vmatprep.subr.bf16.mxu0 0
        %9880 = vmatpush2.bf16.msra.mxu0 0
        %9881 = vmatprep.subr.bf16.mxu0 0
        %9882 = vmatpush2.bf16.msra.mxu0 0
        %9883 = vmatprep.subr.bf16.mxu0 0
        %9884 = vmatpush2.bf16.msra.mxu0 0
        %9885 = vmatprep.subr.bf16.mxu0 0
        %9886 = vmatpush2.bf16.msra.mxu0 0
        %9887 = vmatprep.subr.bf16.mxu0 0
        %9888 = vmatpush2.bf16.msra.mxu0 0
        %9889 = vmatprep.mubr.bf16.mxu0 0
        %9890 = vmatmul.mubr.bf16.gmra.mxu0 %v9756
        %v9891 = vpop.f32.mrf.mxu0
        %v9892 = vadd.f32 0.0, %v9891
        %v9893 = vpop.f32.mrf.mxu0
        %v9894 = vpop.f32.mrf.mxu0
        %v9895 = vadd.f32 0.0, %v9894
        %v9896 = vpop.f32.mrf.mxu0
        %9897 = vmatprep.mubr.bf16.mxu0 0
        %9898 = vmatmul.mubr.bf16.gmra.mxu0 %v9758
        %v9899 = vpop.f32.mrf.mxu0
        %v9900 = vadd.f32 0.0, %v9899
        %v9901 = vpop.f32.mrf.mxu0
        %v9902 = vpop.f32.mrf.mxu0
        %v9903 = vadd.f32 0.0, %v9902
        %v9904 = vpop.f32.mrf.mxu0
        %9905 = vmatprep.mubr.bf16.mxu0 0
        %9906 = vmatmul.mubr.bf16.gmra.mxu0 %v9760
        %v9907 = vpop.f32.mrf.mxu0
        %v9908 = vadd.f32 0.0, %v9907
        %v9909 = vpop.f32.mrf.mxu0
        %v9910 = vpop.f32.mrf.mxu0
        %v9911 = vadd.f32 0.0, %v9910
        %v9912 = vpop.f32.mrf.mxu0
        %9913 = vmatprep.mubr.bf16.mxu0 0
        %9914 = vmatmul.mubr.bf16.gmra.mxu0 %v9762
        %v9915 = vpop.f32.mrf.mxu0
        %v9916 = vadd.f32 0.0, %v9915
        %v9917 = vpop.f32.mrf.mxu0
        %v9918 = vpop.f32.mrf.mxu0
        %v9919 = vadd.f32 0.0, %v9918
        %v9920 = vpop.f32.mrf.mxu0
        %9921 = vmatprep.mubr.bf16.mxu0 0
        %9922 = vmatmul.mubr.bf16.gmra.mxu0 %v9764
        %v9923 = vpop.f32.mrf.mxu0
        %v9924 = vadd.f32 0.0, %v9923
        %v9925 = vpop.f32.mrf.mxu0
        %v9926 = vpop.f32.mrf.mxu0
        %v9927 = vadd.f32 0.0, %v9926
        %v9928 = vpop.f32.mrf.mxu0
        %9929 = vmatprep.mubr.bf16.mxu0 0
        %9930 = vmatmul.mubr.bf16.gmra.mxu0 %v9766
        %v9931 = vpop.f32.mrf.mxu0
        %v9932 = vadd.f32 0.0, %v9931
        %v9933 = vpop.f32.mrf.mxu0
        %v9934 = vpop.f32.mrf.mxu0
        %v9935 = vadd.f32 0.0, %v9934
        %v9936 = vpop.f32.mrf.mxu0
        %9937 = vmatprep.mubr.bf16.mxu0 0
        %9938 = vmatmul.mubr.bf16.gmra.mxu0 %v9768
        %v9939 = vpop.f32.mrf.mxu0
        %v9940 = vadd.f32 0.0, %v9939
        %v9941 = vpop.f32.mrf.mxu0
        %v9942 = vpop.f32.mrf.mxu0
        %v9943 = vadd.f32 0.0, %v9942
        %v9944 = vpop.f32.mrf.mxu0
        %9945 = vmatprep.mubr.bf16.mxu0 0
        %9946 = vmatmul.mubr.bf16.gmra.mxu0 %v9770
        %v9947 = vpop.f32.mrf.mxu0
        %v9948 = vadd.f32 0.0, %v9947
        %v9949 = vpop.f32.mrf.mxu0
        %v9950 = vpop.f32.mrf.mxu0
        %v9951 = vadd.f32 0.0, %v9950
        %v9952 = vpop.f32.mrf.mxu0
        %9953 = vmatprep.mubr.bf16.mxu0 0
        %9954 = vmatmul.mubr.bf16.gmra.mxu0 %v9772
        %v9955 = vpop.f32.mrf.mxu0
        %v9956 = vadd.f32 0.0, %v9955
        %v9957 = vpop.f32.mrf.mxu0
        %v9958 = vpop.f32.mrf.mxu0
        %v9959 = vadd.f32 0.0, %v9958
        %v9960 = vpop.f32.mrf.mxu0
        %9961 = vmatprep.mubr.bf16.mxu0 0
        %9962 = vmatmul.mubr.bf16.gmra.mxu0 %v9774
        %v9963 = vpop.f32.mrf.mxu0
        %v9964 = vadd.f32 0.0, %v9963
        %v9965 = vpop.f32.mrf.mxu0
        %v9966 = vpop.f32.mrf.mxu0
        %v9967 = vadd.f32 0.0, %v9966
        %v9968 = vpop.f32.mrf.mxu0
        %9969 = vmatprep.mubr.bf16.mxu0 0
        %9970 = vmatmul.mubr.bf16.gmra.mxu0 %v9776
        %v9971 = vpop.f32.mrf.mxu0
        %v9972 = vadd.f32 0.0, %v9971
        %v9973 = vpop.f32.mrf.mxu0
        %v9974 = vpop.f32.mrf.mxu0
        %v9975 = vadd.f32 0.0, %v9974
        %v9976 = vpop.f32.mrf.mxu0
        %9977 = vmatprep.mubr.bf16.mxu0 0
        %9978 = vmatmul.mubr.bf16.gmra.mxu0 %v9778
        %v9979 = vpop.f32.mrf.mxu0
        %v9980 = vadd.f32 0.0, %v9979
        %v9981 = vpop.f32.mrf.mxu0
        %v9982 = vpop.f32.mrf.mxu0
        %v9983 = vadd.f32 0.0, %v9982
        %v9984 = vpop.f32.mrf.mxu0
        %9985 = vmatprep.mubr.bf16.mxu0 0
        %9986 = vmatmul.mubr.bf16.gmra.mxu0 %v9780
        %v9987 = vpop.f32.mrf.mxu0
        %v9988 = vadd.f32 0.0, %v9987
        %v9989 = vpop.f32.mrf.mxu0
        %v9990 = vpop.f32.mrf.mxu0
        %v9991 = vadd.f32 0.0, %v9990
        %v9992 = vpop.f32.mrf.mxu0
        %9993 = vmatprep.mubr.bf16.mxu0 0
        %9994 = vmatmul.mubr.bf16.gmra.mxu0 %v9782
        %v9995 = vpop.f32.mrf.mxu0
        %v9996 = vadd.f32 0.0, %v9995
        %v9997 = vpop.f32.mrf.mxu0
        %v9998 = vpop.f32.mrf.mxu0
        %v9999 = vadd.f32 0.0, %v9998
        %v10000 = vpop.f32.mrf.mxu0
        %10001 = vmatprep.mubr.bf16.mxu0 0
        %10002 = vmatmul.mubr.bf16.gmra.mxu0 %v9784
        %v10003 = vpop.f32.mrf.mxu0
        %v10004 = vadd.f32 0.0, %v10003
        %v10005 = vpop.f32.mrf.mxu0
        %v10006 = vpop.f32.mrf.mxu0
        %v10007 = vadd.f32 0.0, %v10006
        %v10008 = vpop.f32.mrf.mxu0
        %10009 = vmatprep.mubr.bf16.mxu0 0
        %10010 = vmatmul.mubr.bf16.gmra.mxu0 %v9786
        %v10011 = vpop.f32.mrf.mxu0
        %v10012 = vadd.f32 0.0, %v10011
        %v10013 = vpop.f32.mrf.mxu0
        %v10014 = vpop.f32.mrf.mxu0
        %v10015 = vadd.f32 0.0, %v10014
        %v10016 = vpop.f32.mrf.mxu0
        %10017 = vmatprep.mubr.bf16.mxu0 0
        %10018 = vmatmul.mubr.bf16.gmra.mxu0 %v9788
        %v10019 = vpop.f32.mrf.mxu0
        %v10020 = vadd.f32 0.0, %v10019
        %v10021 = vpop.f32.mrf.mxu0
        %v10022 = vpop.f32.mrf.mxu0
        %v10023 = vadd.f32 0.0, %v10022
        %v10024 = vpop.f32.mrf.mxu0
        %10025 = vmatprep.mubr.bf16.mxu0 0
        %10026 = vmatmul.mubr.bf16.gmra.mxu0 %v9790
        %v10027 = vpop.f32.mrf.mxu0
        %v10028 = vadd.f32 0.0, %v10027
        %v10029 = vpop.f32.mrf.mxu0
        %v10030 = vpop.f32.mrf.mxu0
        %v10031 = vadd.f32 0.0, %v10030
        %v10032 = vpop.f32.mrf.mxu0
        %10033 = vdwg.mxu0
        %v10034 = vadd.f32 %v9591, %v9892
        %v10035 = vadd.f32 %v9594, %v9895
        %v10036 = vadd.f32 %v9599, %v9900
        %v10037 = vadd.f32 %v9602, %v9903
        %v10038 = vadd.f32 %v9607, %v9908
        %v10039 = vadd.f32 %v9610, %v9911
        %v10040 = vadd.f32 %v9615, %v9916
        %v10041 = vadd.f32 %v9618, %v9919
        %v10042 = vadd.f32 %v9623, %v9924
        %v10043 = vadd.f32 %v9626, %v9927
        %v10044 = vadd.f32 %v9631, %v9932
        %v10045 = vadd.f32 %v9634, %v9935
        %v10046 = vadd.f32 %v9639, %v9940
        %v10047 = vadd.f32 %v9642, %v9943
        %v10048 = vadd.f32 %v9647, %v9948
        %v10049 = vadd.f32 %v9650, %v9951
        %v10050 = vadd.f32 %v9655, %v9956
        %v10051 = vadd.f32 %v9658, %v9959
        %v10052 = vadd.f32 %v9663, %v9964
        %v10053 = vadd.f32 %v9666, %v9967
        %v10054 = vadd.f32 %v9671, %v9972
        %v10055 = vadd.f32 %v9674, %v9975
        %v10056 = vadd.f32 %v9679, %v9980
        %v10057 = vadd.f32 %v9682, %v9983
        %v10058 = vadd.f32 %v9687, %v9988
        %v10059 = vadd.f32 %v9690, %v9991
        %v10060 = vadd.f32 %v9695, %v9996
        %v10061 = vadd.f32 %v9698, %v9999
        %v10062 = vadd.f32 %v9703, %v10004
        %v10063 = vadd.f32 %v9706, %v10007
        %v10064 = vadd.f32 %v9711, %v10012
        %v10065 = vadd.f32 %v9714, %v10015
        %v10066 = vadd.f32 %v9719, %v10020
        %v10067 = vadd.f32 %v9722, %v10023
        %v10068 = vadd.f32 %v9727, %v10028
        %v10069 = vadd.f32 %v9730, %v10031
        %v10070 = vadd.f32 %v7638, %v8836
        %v10071 = vadd.f32 %v7639, %v8837
        %v10072 = vadd.f32 %v7640, %v8838
        %v10073 = vadd.f32 %v7641, %v8839
        %v10074 = vadd.f32 %v7642, %v8840
        %v10075 = vadd.f32 %v7643, %v8841
        %v10076 = vadd.f32 %v7644, %v8842
        %v10077 = vadd.f32 %v7645, %v8843
        %v10078 = vadd.f32 %v7646, %v8844
        %v10079 = vadd.f32 %v7647, %v8845
        %v10080 = vadd.f32 %v7648, %v8846
        %v10081 = vadd.f32 %v7649, %v8847
        %v10082 = vadd.f32 %v7650, %v8848
        %v10083 = vadd.f32 %v7651, %v8849
        %v10084 = vadd.f32 %v7652, %v8850
        %v10085 = vadd.f32 %v7653, %v8851
        %v10086 = vadd.f32 %v7654, %v8852
        %v10087 = vadd.f32 %v7655, %v8853
        %v10088 = vadd.f32 %v7656, %v8854
        %v10089 = vadd.f32 %v7657, %v8855
        %v10090 = vadd.f32 %v7658, %v8856
        %v10091 = vadd.f32 %v7659, %v8857
        %v10092 = vadd.f32 %v7660, %v8858
        %v10093 = vadd.f32 %v7661, %v8859
        %v10094 = vadd.f32 %v7662, %v8860
        %v10095 = vadd.f32 %v7663, %v8861
        %v10096 = vadd.f32 %v7664, %v8862
        %v10097 = vadd.f32 %v7665, %v8863
        %v10098 = vadd.f32 %v7666, %v8864
        %v10099 = vadd.f32 %v7667, %v8865
        %v10100 = vadd.f32 %v7668, %v8866
        %v10101 = vadd.f32 %v7669, %v8867
        %v10102 = vadd.f32 %v7670, %v8868
        %v10103 = vadd.f32 %v7671, %v8869
        %v10104 = vadd.f32 %v7672, %v8870
        %v10105 = vadd.f32 %v7673, %v8871
        %v10106 = vadd.f32 %v10070, %v10034
        %v10107 = vadd.f32 %v10071, %v10035
        %v10108 = vadd.f32 %v10072, %v10036
        %v10109 = vadd.f32 %v10073, %v10037
        %v10110 = vadd.f32 %v10074, %v10038
        %v10111 = vadd.f32 %v10075, %v10039
        %v10112 = vadd.f32 %v10076, %v10040
        %v10113 = vadd.f32 %v10077, %v10041
        %v10114 = vadd.f32 %v10078, %v10042
        %v10115 = vadd.f32 %v10079, %v10043
        %v10116 = vadd.f32 %v10080, %v10044
        %v10117 = vadd.f32 %v10081, %v10045
        %v10118 = vadd.f32 %v10082, %v10046
        %v10119 = vadd.f32 %v10083, %v10047
        %v10120 = vadd.f32 %v10084, %v10048
        %v10121 = vadd.f32 %v10085, %v10049
        %v10122 = vadd.f32 %v10086, %v10050
        %v10123 = vadd.f32 %v10087, %v10051
        %v10124 = vadd.f32 %v10088, %v10052
        %v10125 = vadd.f32 %v10089, %v10053
        %v10126 = vadd.f32 %v10090, %v10054
        %v10127 = vadd.f32 %v10091, %v10055
        %v10128 = vadd.f32 %v10092, %v10056
        %v10129 = vadd.f32 %v10093, %v10057
        %v10130 = vadd.f32 %v10094, %v10058
        %v10131 = vadd.f32 %v10095, %v10059
        %v10132 = vadd.f32 %v10096, %v10060
        %v10133 = vadd.f32 %v10097, %v10061
        %v10134 = vadd.f32 %v10098, %v10062
        %v10135 = vadd.f32 %v10099, %v10063
        %v10136 = vadd.f32 %v10100, %v10064
        %v10137 = vadd.f32 %v10101, %v10065
        %v10138 = vadd.f32 %v10102, %v10066
        %v10139 = vadd.f32 %v10103, %v10067
        %v10140 = vadd.f32 %v10104, %v10068
        %v10141 = vadd.f32 %v10105, %v10069
        %v10142 = vld [vmem:[%s4] sm:$0x1]
        %v10144 = vlaneseq
        %v10145 = vshrl.u32 %v10144, 7
        %v10146 = vsub.s32 0, %v10145
        %v10147 = vrot.slane %v10142, %v10146
        %v10149 = vadd.f32 %v10106, %v10147
        %v10150 = vadd.f32 %v10107, %v10147
        %v10151 = vadd.f32 %v10108, %v10147
        %v10152 = vadd.f32 %v10109, %v10147
        %v10153 = vadd.f32 %v10110, %v10147
        %v10154 = vadd.f32 %v10111, %v10147
        %v10155 = vadd.f32 %v10112, %v10147
        %v10156 = vadd.f32 %v10113, %v10147
        %v10157 = vadd.f32 %v10114, %v10147
        %v10158 = vadd.f32 %v10115, %v10147
        %v10159 = vadd.f32 %v10116, %v10147
        %v10160 = vadd.f32 %v10117, %v10147
        %v10161 = vadd.f32 %v10118, %v10147
        %v10162 = vadd.f32 %v10119, %v10147
        %v10163 = vadd.f32 %v10120, %v10147
        %v10164 = vadd.f32 %v10121, %v10147
        %v10165 = vadd.f32 %v10122, %v10147
        %v10166 = vadd.f32 %v10123, %v10147
        %v10167 = vadd.f32 %v10124, %v10147
        %v10168 = vadd.f32 %v10125, %v10147
        %v10169 = vadd.f32 %v10126, %v10147
        %v10170 = vadd.f32 %v10127, %v10147
        %v10171 = vadd.f32 %v10128, %v10147
        %v10172 = vadd.f32 %v10129, %v10147
        %v10173 = vadd.f32 %v10130, %v10147
        %v10174 = vadd.f32 %v10131, %v10147
        %v10175 = vadd.f32 %v10132, %v10147
        %v10176 = vadd.f32 %v10133, %v10147
        %v10177 = vadd.f32 %v10134, %v10147
        %v10178 = vadd.f32 %v10135, %v10147
        %v10179 = vadd.f32 %v10136, %v10147
        %v10180 = vadd.f32 %v10137, %v10147
        %v10181 = vadd.f32 %v10138, %v10147
        %v10182 = vadd.f32 %v10139, %v10147
        %v10183 = vadd.f32 %v10140, %v10147
        %v10184 = vadd.f32 %v10141, %v10147
        %v10185 = vsel %vm5417, %v10149, 0.0
        %v10186 = vsel %vm5418, %v10150, 0.0
        %v10187 = vsel %vm5419, %v10151, 0.0
        %v10188 = vsel %vm5420, %v10152, 0.0
        %v10189 = vsel %vm5421, %v10153, 0.0
        %v10190 = vsel %vm5422, %v10154, 0.0
        %v10191 = vsel %vm5423, %v10155, 0.0
        %v10192 = vsel %vm5424, %v10156, 0.0
        %v10193 = vsel %vm5425, %v10157, 0.0
        %v10194 = vsel %vm5426, %v10158, 0.0
        %v10195 = vsel %vm5427, %v10159, 0.0
        %v10196 = vsel %vm5428, %v10160, 0.0
        %v10197 = vsel %vm5429, %v10161, 0.0
        %v10198 = vsel %vm5430, %v10162, 0.0
        %v10199 = vsel %vm5431, %v10163, 0.0
        %v10200 = vsel %vm5432, %v10164, 0.0
        %v10201 = vsel %vm5433, %v10165, 0.0
        %v10202 = vsel %vm5434, %v10166, 0.0
        %v10203 = vsel %vm5435, %v10167, 0.0
        %v10204 = vsel %vm5436, %v10168, 0.0
        %v10205 = vsel %vm5437, %v10169, 0.0
        %v10206 = vsel %vm5438, %v10170, 0.0
        %v10207 = vsel %vm5439, %v10171, 0.0
        %v10208 = vsel %vm5440, %v10172, 0.0
        %v10209 = vsel %vm5441, %v10173, 0.0
        %v10210 = vsel %vm5442, %v10174, 0.0
        %v10211 = vsel %vm5443, %v10175, 0.0
        %v10212 = vsel %vm5444, %v10176, 0.0
        %v10213 = vsel %vm5445, %v10177, 0.0
        %v10214 = vsel %vm5446, %v10178, 0.0
        %v10215 = vsel %vm5447, %v10179, 0.0
        %v10216 = vsel %vm5448, %v10180, 0.0
        %v10217 = vsel %vm5449, %v10181, 0.0
        %v10218 = vsel %vm5450, %v10182, 0.0
        %v10219 = vsel %vm5451, %v10183, 0.0
        %v10220 = vsel %vm5452, %v10184, 0.0
        %v10221 = vadd.f32 %v10185, %v10186
        %v10222 = vadd.f32 %v10221, %v10187
        %v10223 = vadd.f32 %v10222, %v10188
        %v10224 = vadd.f32 %v10223, %v10189
        %v10225 = vadd.f32 %v10224, %v10190
        %v10226 = vadd.f32 %v10225, %v10191
        %v10227 = vadd.f32 %v10226, %v10192
        %v10228 = vadd.f32 %v10227, %v10193
        %v10229 = vadd.f32 %v10228, %v10194
        %v10230 = vadd.f32 %v10229, %v10195
        %v10231 = vadd.f32 %v10230, %v10196
        %v10232 = vadd.f32 %v10231, %v10197
        %v10233 = vadd.f32 %v10232, %v10198
        %v10234 = vadd.f32 %v10233, %v10199
        %v10235 = vadd.f32 %v10234, %v10200
        %v10236 = vadd.f32 %v10235, %v10201
        %v10237 = vadd.f32 %v10236, %v10202
        %v10238 = vadd.f32 %v10237, %v10203
        %v10239 = vadd.f32 %v10238, %v10204
        %v10240 = vadd.f32 %v10239, %v10205
        %v10241 = vadd.f32 %v10240, %v10206
        %v10242 = vadd.f32 %v10241, %v10207
        %v10243 = vadd.f32 %v10242, %v10208
        %v10244 = vadd.f32 %v10243, %v10209
        %v10245 = vadd.f32 %v10244, %v10210
        %v10246 = vadd.f32 %v10245, %v10211
        %v10247 = vadd.f32 %v10246, %v10212
        %v10248 = vadd.f32 %v10247, %v10213
        %v10249 = vadd.f32 %v10248, %v10214
        %v10250 = vadd.f32 %v10249, %v10215
        %v10251 = vadd.f32 %v10250, %v10216
        %v10252 = vadd.f32 %v10251, %v10217
        %v10253 = vadd.f32 %v10252, %v10218
        %v10254 = vadd.f32 %v10253, %v10219
        %v10255 = vadd.f32 %v10254, %v10220
        %v10256 = vrot.slane %v10255, 4
        %v10257 = vadd.f32 %v10255, %v10256
        %v10258 = vrot.slane %v10257, 2
        %v10259 = vadd.f32 %v10257, %v10258
        %v10260 = vrot.slane %v10259, 1
        %v10261 = vadd.f32 %v10259, %v10260
        %v10262 = vmul.f32 %v10261, 0.00390625
        %v10263 = vmul.f32 %v10149, %v10149
        %v10264 = vmul.f32 %v10150, %v10150
        %v10265 = vmul.f32 %v10151, %v10151
        %v10266 = vmul.f32 %v10152, %v10152
        %v10267 = vmul.f32 %v10153, %v10153
        %v10268 = vmul.f32 %v10154, %v10154
        %v10269 = vmul.f32 %v10155, %v10155
        %v10270 = vmul.f32 %v10156, %v10156
        %v10271 = vmul.f32 %v10157, %v10157
        %v10272 = vmul.f32 %v10158, %v10158
        %v10273 = vmul.f32 %v10159, %v10159
        %v10274 = vmul.f32 %v10160, %v10160
        %v10275 = vmul.f32 %v10161, %v10161
        %v10276 = vmul.f32 %v10162, %v10162
        %v10277 = vmul.f32 %v10163, %v10163
        %v10278 = vmul.f32 %v10164, %v10164
        %v10279 = vmul.f32 %v10165, %v10165
        %v10280 = vmul.f32 %v10166, %v10166
        %v10281 = vmul.f32 %v10167, %v10167
        %v10282 = vmul.f32 %v10168, %v10168
        %v10283 = vmul.f32 %v10169, %v10169
        %v10284 = vmul.f32 %v10170, %v10170
        %v10285 = vmul.f32 %v10171, %v10171
        %v10286 = vmul.f32 %v10172, %v10172
        %v10287 = vmul.f32 %v10173, %v10173
        %v10288 = vmul.f32 %v10174, %v10174
        %v10289 = vmul.f32 %v10175, %v10175
        %v10290 = vmul.f32 %v10176, %v10176
        %v10291 = vmul.f32 %v10177, %v10177
        %v10292 = vmul.f32 %v10178, %v10178
        %v10293 = vmul.f32 %v10179, %v10179
        %v10294 = vmul.f32 %v10180, %v10180
        %v10295 = vmul.f32 %v10181, %v10181
        %v10296 = vmul.f32 %v10182, %v10182
        %v10297 = vmul.f32 %v10183, %v10183
        %v10298 = vmul.f32 %v10184, %v10184
        %v10299 = vsel %vm5417, %v10263, 0.0
        %v10300 = vsel %vm5418, %v10264, 0.0
        %v10301 = vsel %vm5419, %v10265, 0.0
        %v10302 = vsel %vm5420, %v10266, 0.0
        %v10303 = vsel %vm5421, %v10267, 0.0
        %v10304 = vsel %vm5422, %v10268, 0.0
        %v10305 = vsel %vm5423, %v10269, 0.0
        %v10306 = vsel %vm5424, %v10270, 0.0
        %v10307 = vsel %vm5425, %v10271, 0.0
        %v10308 = vsel %vm5426, %v10272, 0.0
        %v10309 = vsel %vm5427, %v10273, 0.0
        %v10310 = vsel %vm5428, %v10274, 0.0
        %v10311 = vsel %vm5429, %v10275, 0.0
        %v10312 = vsel %vm5430, %v10276, 0.0
        %v10313 = vsel %vm5431, %v10277, 0.0
        %v10314 = vsel %vm5432, %v10278, 0.0
        %v10315 = vsel %vm5433, %v10279, 0.0
        %v10316 = vsel %vm5434, %v10280, 0.0
        %v10317 = vsel %vm5435, %v10281, 0.0
        %v10318 = vsel %vm5436, %v10282, 0.0
        %v10319 = vsel %vm5437, %v10283, 0.0
        %v10320 = vsel %vm5438, %v10284, 0.0
        %v10321 = vsel %vm5439, %v10285, 0.0
        %v10322 = vsel %vm5440, %v10286, 0.0
        %v10323 = vsel %vm5441, %v10287, 0.0
        %v10324 = vsel %vm5442, %v10288, 0.0
        %v10325 = vsel %vm5443, %v10289, 0.0
        %v10326 = vsel %vm5444, %v10290, 0.0
        %v10327 = vsel %vm5445, %v10291, 0.0
        %v10328 = vsel %vm5446, %v10292, 0.0
        %v10329 = vsel %vm5447, %v10293, 0.0
        %v10330 = vsel %vm5448, %v10294, 0.0
        %v10331 = vsel %vm5449, %v10295, 0.0
        %v10332 = vsel %vm5450, %v10296, 0.0
        %v10333 = vsel %vm5451, %v10297, 0.0
        %v10334 = vsel %vm5452, %v10298, 0.0
        %v10335 = vadd.f32 %v10299, %v10300
        %v10336 = vadd.f32 %v10335, %v10301
        %v10337 = vadd.f32 %v10336, %v10302
        %v10338 = vadd.f32 %v10337, %v10303
        %v10339 = vadd.f32 %v10338, %v10304
        %v10340 = vadd.f32 %v10339, %v10305
        %v10341 = vadd.f32 %v10340, %v10306
        %v10342 = vadd.f32 %v10341, %v10307
        %v10343 = vadd.f32 %v10342, %v10308
        %v10344 = vadd.f32 %v10343, %v10309
        %v10345 = vadd.f32 %v10344, %v10310
        %v10346 = vadd.f32 %v10345, %v10311
        %v10347 = vadd.f32 %v10346, %v10312
        %v10348 = vadd.f32 %v10347, %v10313
        %v10349 = vadd.f32 %v10348, %v10314
        %v10350 = vadd.f32 %v10349, %v10315
        %v10351 = vadd.f32 %v10350, %v10316
        %v10352 = vadd.f32 %v10351, %v10317
        %v10353 = vadd.f32 %v10352, %v10318
        %v10354 = vadd.f32 %v10353, %v10319
        %v10355 = vadd.f32 %v10354, %v10320
        %v10356 = vadd.f32 %v10355, %v10321
        %v10357 = vadd.f32 %v10356, %v10322
        %v10358 = vadd.f32 %v10357, %v10323
        %v10359 = vadd.f32 %v10358, %v10324
        %v10360 = vadd.f32 %v10359, %v10325
        %v10361 = vadd.f32 %v10360, %v10326
        %v10362 = vadd.f32 %v10361, %v10327
        %v10363 = vadd.f32 %v10362, %v10328
        %v10364 = vadd.f32 %v10363, %v10329
        %v10365 = vadd.f32 %v10364, %v10330
        %v10366 = vadd.f32 %v10365, %v10331
        %v10367 = vadd.f32 %v10366, %v10332
        %v10368 = vadd.f32 %v10367, %v10333
        %v10369 = vadd.f32 %v10368, %v10334
        %v10370 = vrot.slane %v10369, 4
        %v10371 = vadd.f32 %v10369, %v10370
        %v10372 = vrot.slane %v10371, 2
        %v10373 = vadd.f32 %v10371, %v10372
        %v10374 = vrot.slane %v10373, 1
        %v10375 = vadd.f32 %v10373, %v10374
        %v10376 = vmul.f32 %v10375, 0.00390625
        %v10377 = vmul.f32 %v10262, %v10262
        %v10378 = vsub.f32 %v10376, %v10377
        %v10379 = vsub.f32 %v10149, %v10262
        %v10380 = vsub.f32 %v10150, %v10262
        %v10381 = vsub.f32 %v10151, %v10262
        %v10382 = vsub.f32 %v10152, %v10262
        %v10383 = vsub.f32 %v10153, %v10262
        %v10384 = vsub.f32 %v10154, %v10262
        %v10385 = vsub.f32 %v10155, %v10262
        %v10386 = vsub.f32 %v10156, %v10262
        %v10387 = vsub.f32 %v10157, %v10262
        %v10388 = vsub.f32 %v10158, %v10262
        %v10389 = vsub.f32 %v10159, %v10262
        %v10390 = vsub.f32 %v10160, %v10262
        %v10391 = vsub.f32 %v10161, %v10262
        %v10392 = vsub.f32 %v10162, %v10262
        %v10393 = vsub.f32 %v10163, %v10262
        %v10394 = vsub.f32 %v10164, %v10262
        %v10395 = vsub.f32 %v10165, %v10262
        %v10396 = vsub.f32 %v10166, %v10262
        %v10397 = vsub.f32 %v10167, %v10262
        %v10398 = vsub.f32 %v10168, %v10262
        %v10399 = vsub.f32 %v10169, %v10262
        %v10400 = vsub.f32 %v10170, %v10262
        %v10401 = vsub.f32 %v10171, %v10262
        %v10402 = vsub.f32 %v10172, %v10262
        %v10403 = vsub.f32 %v10173, %v10262
        %v10404 = vsub.f32 %v10174, %v10262
        %v10405 = vsub.f32 %v10175, %v10262
        %v10406 = vsub.f32 %v10176, %v10262
        %v10407 = vsub.f32 %v10177, %v10262
        %v10408 = vsub.f32 %v10178, %v10262
        %v10409 = vsub.f32 %v10179, %v10262
        %v10410 = vsub.f32 %v10180, %v10262
        %v10411 = vsub.f32 %v10181, %v10262
        %v10412 = vsub.f32 %v10182, %v10262
        %v10413 = vsub.f32 %v10183, %v10262
        %v10414 = vsub.f32 %v10184, %v10262
        %v10415 = vadd.f32 %v10378, 1e-05
        %v10416 = vrsqrt.pop %v10415
        %v10417 = vmul.f32 %v10379, %v10416
        %v10418 = vmul.f32 %v10380, %v10416
        %v10419 = vmul.f32 %v10381, %v10416
        %v10420 = vmul.f32 %v10382, %v10416
        %v10421 = vmul.f32 %v10383, %v10416
        %v10422 = vmul.f32 %v10384, %v10416
        %v10423 = vmul.f32 %v10385, %v10416
        %v10424 = vmul.f32 %v10386, %v10416
        %v10425 = vmul.f32 %v10387, %v10416
        %v10426 = vmul.f32 %v10388, %v10416
        %v10427 = vmul.f32 %v10389, %v10416
        %v10428 = vmul.f32 %v10390, %v10416
        %v10429 = vmul.f32 %v10391, %v10416
        %v10430 = vmul.f32 %v10392, %v10416
        %v10431 = vmul.f32 %v10393, %v10416
        %v10432 = vmul.f32 %v10394, %v10416
        %v10433 = vmul.f32 %v10395, %v10416
        %v10434 = vmul.f32 %v10396, %v10416
        %v10435 = vmul.f32 %v10397, %v10416
        %v10436 = vmul.f32 %v10398, %v10416
        %v10437 = vmul.f32 %v10399, %v10416
        %v10438 = vmul.f32 %v10400, %v10416
        %v10439 = vmul.f32 %v10401, %v10416
        %v10440 = vmul.f32 %v10402, %v10416
        %v10441 = vmul.f32 %v10403, %v10416
        %v10442 = vmul.f32 %v10404, %v10416
        %v10443 = vmul.f32 %v10405, %v10416
        %v10444 = vmul.f32 %v10406, %v10416
        %v10445 = vmul.f32 %v10407, %v10416
        %v10446 = vmul.f32 %v10408, %v10416
        %v10447 = vmul.f32 %v10409, %v10416
        %v10448 = vmul.f32 %v10410, %v10416
        %v10449 = vmul.f32 %v10411, %v10416
        %v10450 = vmul.f32 %v10412, %v10416
        %v10451 = vmul.f32 %v10413, %v10416
        %v10452 = vmul.f32 %v10414, %v10416
        %v10453 = vld [vmem:[%s222] sm:$0xff]
        %v10454 = vld [vmem:[%s222 + $0x8] sm:$0xff]
        %v10455 = vadd.f32 %v10453, %v10417
        %v10456 = vadd.f32 %v10454, %v10418
        %10457 = vst [vmem:[%s217] sm:$0xff] %v10455
        %10458 = vst [vmem:[%s217 + $0x8] sm:$0xff] %v10456
        %s10459 = scalar_lea.vmem %s222, 16
        %v10460 = vld [vmem:[%s10459] sm:$0xff]
        %v10461 = vld [vmem:[%s10459 + $0x8] sm:$0xff]
        %vm10465 = vcmask 1045504
        %v10466 = vrot.slane %v10419, 2
        %v10467 = vrot.slane %v10420, 2
        %v10468 = vsel %vm10465, %v10466, %v10467
        %v10469 = vrot.slane %v10421, 2
        %v10470 = vsel %vm10465, %v10467, %v10469
        %v10473 = vadd.f32 %v10460, %v10468
        %v10474 = vadd.f32 %v10461, %v10470
        %s10475 = scalar_lea.vmem %s217, 16 [#allocation3]
        %10476 = vst [vmem:[%s10475] sm:$0xff] %v10473
        %10477 = vst [vmem:[%s10475 + $0x8] sm:$0xff] %v10474
        %s10478 = scalar_lea.vmem %s222, 32
        %v10479 = vld [vmem:[%s10478] sm:$0xff]
        %v10480 = vld [vmem:[%s10478 + $0x8] sm:$0xff]
        %vm10483 = vcmask 1043456
        %v10484 = vrot.slane %v10421, 4
        %v10485 = vrot.slane %v10422, 4
        %v10486 = vsel %vm10483, %v10484, %v10485
        %v10487 = vrot.slane %v10423, 4
        %v10488 = vsel %vm10483, %v10485, %v10487
        %v10491 = vadd.f32 %v10479, %v10486
        %v10492 = vadd.f32 %v10480, %v10488
        %s10493 = scalar_lea.vmem %s217, 32 [#allocation3]
        %10494 = vst [vmem:[%s10493] sm:$0xff] %v10491
        %10495 = vst [vmem:[%s10493 + $0x8] sm:$0xff] %v10492
        %s10496 = scalar_lea.vmem %s222, 48
        %v10497 = vld [vmem:[%s10496] sm:$0xff]
        %v10498 = vld [vmem:[%s10496 + $0x8] sm:$0xff]
        %vm10501 = vcmask 1041408
        %v10502 = vrot.slane %v10423, 6
        %v10503 = vrot.slane %v10424, 6
        %v10504 = vsel %vm10501, %v10502, %v10503
        %v10505 = vrot.slane %v10425, 6
        %v10506 = vsel %vm10501, %v10503, %v10505
        %v10509 = vadd.f32 %v10497, %v10504
        %v10510 = vadd.f32 %v10498, %v10506
        %s10511 = scalar_lea.vmem %s217, 48 [#allocation3]
        %10512 = vst [vmem:[%s10511] sm:$0xff] %v10509
        %10513 = vst [vmem:[%s10511 + $0x8] sm:$0xff] %v10510
        %s10514 = scalar_lea.vmem %s222, 64
        %v10515 = vld [vmem:[%s10514] sm:$0xff]
        %v10516 = vld [vmem:[%s10514 + $0x8] sm:$0xff]
        %v10517 = vadd.f32 %v10515, %v10426
        %v10518 = vadd.f32 %v10516, %v10427
        %s10519 = scalar_lea.vmem %s217, 64 [#allocation3]
        %10520 = vst [vmem:[%s10519] sm:$0xff] %v10517
        %10521 = vst [vmem:[%s10519 + $0x8] sm:$0xff] %v10518
        %s10522 = scalar_lea.vmem %s222, 80
        %v10523 = vld [vmem:[%s10522] sm:$0xff]
        %v10524 = vld [vmem:[%s10522 + $0x8] sm:$0xff]
        %v10528 = vrot.slane %v10428, 2
        %v10529 = vrot.slane %v10429, 2
        %v10530 = vsel %vm10465, %v10528, %v10529
        %v10531 = vrot.slane %v10430, 2
        %v10532 = vsel %vm10465, %v10529, %v10531
        %v10535 = vadd.f32 %v10523, %v10530
        %v10536 = vadd.f32 %v10524, %v10532
        %s10537 = scalar_lea.vmem %s217, 80 [#allocation3]
        %10538 = vst [vmem:[%s10537] sm:$0xff] %v10535
        %10539 = vst [vmem:[%s10537 + $0x8] sm:$0xff] %v10536
        %s10540 = scalar_lea.vmem %s222, 96
        %v10541 = vld [vmem:[%s10540] sm:$0xff]
        %v10542 = vld [vmem:[%s10540 + $0x8] sm:$0xff]
        %v10545 = vrot.slane %v10430, 4
        %v10546 = vrot.slane %v10431, 4
        %v10547 = vsel %vm10483, %v10545, %v10546
        %v10548 = vrot.slane %v10432, 4
        %v10549 = vsel %vm10483, %v10546, %v10548
        %v10552 = vadd.f32 %v10541, %v10547
        %v10553 = vadd.f32 %v10542, %v10549
        %s10554 = scalar_lea.vmem %s217, 96 [#allocation3]
        %10555 = vst [vmem:[%s10554] sm:$0xff] %v10552
        %10556 = vst [vmem:[%s10554 + $0x8] sm:$0xff] %v10553
        %s10557 = scalar_lea.vmem %s222, 112
        %v10558 = vld [vmem:[%s10557] sm:$0xff]
        %v10559 = vld [vmem:[%s10557 + $0x8] sm:$0xff]
        %v10562 = vrot.slane %v10432, 6
        %v10563 = vrot.slane %v10433, 6
        %v10564 = vsel %vm10501, %v10562, %v10563
        %v10565 = vrot.slane %v10434, 6
        %v10566 = vsel %vm10501, %v10563, %v10565
        %v10569 = vadd.f32 %v10558, %v10564
        %v10570 = vadd.f32 %v10559, %v10566
        %s10571 = scalar_lea.vmem %s217, 112 [#allocation3]
        %10572 = vst [vmem:[%s10571] sm:$0xff] %v10569
        %10573 = vst [vmem:[%s10571 + $0x8] sm:$0xff] %v10570
        %s10574 = scalar_lea.vmem %s222, 128
        %v10575 = vld [vmem:[%s10574] sm:$0xff]
        %v10576 = vld [vmem:[%s10574 + $0x8] sm:$0xff]
        %v10577 = vadd.f32 %v10575, %v10435
        %v10578 = vadd.f32 %v10576, %v10436
        %s10579 = scalar_lea.vmem %s217, 128 [#allocation3]
        %10580 = vst [vmem:[%s10579] sm:$0xff] %v10577
        %10581 = vst [vmem:[%s10579 + $0x8] sm:$0xff] %v10578
        %s10582 = scalar_lea.vmem %s222, 144
        %v10583 = vld [vmem:[%s10582] sm:$0xff]
        %v10584 = vld [vmem:[%s10582 + $0x8] sm:$0xff]
        %v10588 = vrot.slane %v10437, 2
        %v10589 = vrot.slane %v10438, 2
        %v10590 = vsel %vm10465, %v10588, %v10589
        %v10591 = vrot.slane %v10439, 2
        %v10592 = vsel %vm10465, %v10589, %v10591
        %v10595 = vadd.f32 %v10583, %v10590
        %v10596 = vadd.f32 %v10584, %v10592
        %s10597 = scalar_lea.vmem %s217, 144 [#allocation3]
        %10598 = vst [vmem:[%s10597] sm:$0xff] %v10595
        %10599 = vst [vmem:[%s10597 + $0x8] sm:$0xff] %v10596
        %s10600 = scalar_lea.vmem %s222, 160
        %v10601 = vld [vmem:[%s10600] sm:$0xff]
        %v10602 = vld [vmem:[%s10600 + $0x8] sm:$0xff]
        %v10605 = vrot.slane %v10439, 4
        %v10606 = vrot.slane %v10440, 4
        %v10607 = vsel %vm10483, %v10605, %v10606
        %v10608 = vrot.slane %v10441, 4
        %v10609 = vsel %vm10483, %v10606, %v10608
        %v10612 = vadd.f32 %v10601, %v10607
        %v10613 = vadd.f32 %v10602, %v10609
        %s10614 = scalar_lea.vmem %s217, 160 [#allocation3]
        %10615 = vst [vmem:[%s10614] sm:$0xff] %v10612
        %10616 = vst [vmem:[%s10614 + $0x8] sm:$0xff] %v10613
        %s10617 = scalar_lea.vmem %s222, 176
        %v10618 = vld [vmem:[%s10617] sm:$0xff]
        %v10619 = vld [vmem:[%s10617 + $0x8] sm:$0xff]
        %v10622 = vrot.slane %v10441, 6
        %v10623 = vrot.slane %v10442, 6
        %v10624 = vsel %vm10501, %v10622, %v10623
        %v10625 = vrot.slane %v10443, 6
        %v10626 = vsel %vm10501, %v10623, %v10625
        %v10629 = vadd.f32 %v10618, %v10624
        %v10630 = vadd.f32 %v10619, %v10626
        %s10631 = scalar_lea.vmem %s217, 176 [#allocation3]
        %10632 = vst [vmem:[%s10631] sm:$0xff] %v10629
        %10633 = vst [vmem:[%s10631 + $0x8] sm:$0xff] %v10630
        %s10634 = scalar_lea.vmem %s222, 192
        %v10635 = vld [vmem:[%s10634] sm:$0xff]
        %v10636 = vld [vmem:[%s10634 + $0x8] sm:$0xff]
        %v10637 = vadd.f32 %v10635, %v10444
        %v10638 = vadd.f32 %v10636, %v10445
        %s10639 = scalar_lea.vmem %s217, 192 [#allocation3]
        %10640 = vst [vmem:[%s10639] sm:$0xff] %v10637
        %10641 = vst [vmem:[%s10639 + $0x8] sm:$0xff] %v10638
        %s10642 = scalar_lea.vmem %s222, 208
        %v10643 = vld [vmem:[%s10642] sm:$0xff]
        %v10644 = vld [vmem:[%s10642 + $0x8] sm:$0xff]
        %v10648 = vrot.slane %v10446, 2
        %v10649 = vrot.slane %v10447, 2
        %v10650 = vsel %vm10465, %v10648, %v10649
        %v10651 = vrot.slane %v10448, 2
        %v10652 = vsel %vm10465, %v10649, %v10651
        %v10655 = vadd.f32 %v10643, %v10650
        %v10656 = vadd.f32 %v10644, %v10652
        %s10657 = scalar_lea.vmem %s217, 208 [#allocation3]
        %10658 = vst [vmem:[%s10657] sm:$0xff] %v10655
        %10659 = vst [vmem:[%s10657 + $0x8] sm:$0xff] %v10656
        %s10660 = scalar_lea.vmem %s222, 224
        %v10661 = vld [vmem:[%s10660] sm:$0xff]
        %v10662 = vld [vmem:[%s10660 + $0x8] sm:$0xff]
        %v10665 = vrot.slane %v10448, 4
        %v10666 = vrot.slane %v10449, 4
        %v10667 = vsel %vm10483, %v10665, %v10666
        %v10668 = vrot.slane %v10450, 4
        %v10669 = vsel %vm10483, %v10666, %v10668
        %v10672 = vadd.f32 %v10661, %v10667
        %v10673 = vadd.f32 %v10662, %v10669
        %s10674 = scalar_lea.vmem %s217, 224 [#allocation3]
        %10675 = vst [vmem:[%s10674] sm:$0xff] %v10672
        %10676 = vst [vmem:[%s10674 + $0x8] sm:$0xff] %v10673
        %s10677 = scalar_lea.vmem %s222, 240
        %v10678 = vld [vmem:[%s10677] sm:$0xff]
        %v10679 = vld [vmem:[%s10677 + $0x8] sm:$0xff]
        %v10682 = vrot.slane %v10450, 6
        %v10683 = vrot.slane %v10451, 6
        %v10684 = vsel %vm10501, %v10682, %v10683
        %v10685 = vrot.slane %v10452, 6
        %v10686 = vsel %vm10501, %v10683, %v10685
        %v10689 = vadd.f32 %v10678, %v10684
        %v10690 = vadd.f32 %v10679, %v10686
        %s10691 = scalar_lea.vmem %s217, 240 [#allocation3]
        %10692 = vst [vmem:[%s10691] sm:$0xff] %v10689
        %10693 = vst [vmem:[%s10691 + $0x8] sm:$0xff] %v10690
        %s10694 = sand.u32 %s137, 1
        %s10695 = scalar_lea.sflag [#allocation4], %s10694
        %s10696 = sand.u32 %s137, 1
        %s10697 = smul.addr %s10696, 256
        %s10698 = scalar_lea.vmem [#allocation3], %s10697
        // Predicated region
        $region41: #{resnet_block_forward.1} parent=39 // pred_check
          %p10699 = pneg %p147
        $region42: #{resnet_block_forward.1} parent=39 // pred_check_branch
          %10701 = sbr.rel (%p10699) target = $region44
        $region43: #{resnet_block_forward.1} parent=39 // pred_region
          %s10703 = ssub.s32 4096, 4096
          %10704 = vsyncadd %s10695, %s10703
          %s10705 = smul.addr %s19, 32
          %s10706 = smul.addr %s10705, 128
          %s10707 = scalar_lea.hbm %s5, %s10706
          %s10708 = sshll.u32 %s10698, 4
          %s10709 = int_to_ptr.vmem [resolvable:$true] %s10708
          %10714 = dma.vmem_to_hbm [thread:$0]  %s10709, 4096, %s10707, %s10695, 128, 128, 8
        $region44: #{resnet_block_forward.1} parent=39 // pred_fallthru
          _
      $region40: #{resnet_block_forward.1} parent=5 // pred_fallthru
        _
      %p10715 = scmp.le.s32.totalorder 2, %s14
      // Predicated region
      $region45: #{resnet_block_forward.1} parent=5 // pred_check
        %p10716 = pneg %p10715
      $region46: #{resnet_block_forward.1} parent=5 // pred_check_branch
        %10718 = sbr.rel (%p10716) target = $region48
      $region47: #{resnet_block_forward.1} parent=5 // pred_region
        %s10719 = ssub.s32 %s14, 2
        // Predicated region
        $region49: #{resnet_block_forward.1} parent=47 // pred_check
          %p10720 = pneg %p153
        $region50: #{resnet_block_forward.1} parent=47 // pred_check_branch
          %10722 = sbr.rel (%p10720) target = $region52
        $region51: #{resnet_block_forward.1} parent=47 // pred_region
          %s10723 = sand.u32 %s138, 1
          %s10724 = scalar_lea.sflag [#allocation4], %s10723
          %s10725 = sand.u32 %s138, 1
          %s10726 = smul.addr %s10725, 256
          %s10727 = scalar_lea.vmem [#allocation3], %s10726
          %10728 = dma.done %s10724, 4096
        $region52: #{resnet_block_forward.1} parent=47 // pred_fallthru
          _
      $region48: #{resnet_block_forward.1} parent=5 // pred_fallthru
        _
    $region6: #{resnet_block_forward.1} parent=1 // loop_footer
      %s18 = sadd.s32 1, %s14
    $region7: #{resnet_block_forward.1} parent=1 // loop_footer_branch
      %13 = sbr.rel target = $region3
    $region8: #{resnet_block_forward.1} parent=1 // loop_exit
      _
    %10729 = vsyncpa [#allocation4], 1
    %s10730 = scalar_lea.sflag [#allocation4], 1
    %10731 = vsyncpa %s10730, 1

</llo_original>
